<compile_context>
chip_gen: v7x
topology: tpu7x:2x2x1
jax: 0.10.0
libtpu: 0.0.40
codegen_flags: <defaults>
</compile_context>

<pallas_src>
import functools
import math

import jax
import jax.numpy as jnp
from jax import lax
from jax.experimental import pallas as pl
from jax.experimental.pallas import tpu as pltpu

MASK_VALUE = -1e30          # finite "-inf": avoids NaN from (-inf) arithmetic on masked rows
LN_EPS = 1e-5


# ----------------------------- in-kernel helpers -----------------------------

def _layernorm(x, g, b, eps=LN_EPS):
    mean = jnp.mean(x, axis=-1, keepdims=True)
    var = jnp.mean((x - mean) ** 2, axis=-1, keepdims=True)
    return (x - mean) * lax.rsqrt(var + eps) * g + b


def _activation(x, kind):
    if kind == "relu":
        return jnp.maximum(x, 0.0)
    if kind == "gelu":
        # TODO(synk): tanh-approx GELU (EUP friendly); PyTorch nn.GELU default is exact erf.
        c = math.sqrt(2.0 / math.pi)
        return 0.5 * x * (1.0 + jnp.tanh(c * (x + 0.044715 * x * x * x)))
    return x


def _mha(xq, xkv, wq, bq, wk, bk, wv, bv, wo, bo, kbias, causal):
    """Head-major multi-head attention, fully in vregs/VMEM.

    xq: (Tq, D) bf16 (already LayerNorm'ed), xkv: (Tk, D) bf16.
    wq/wk/wv: (H, D, dh) bf16 (softmax scale folded into wq/bq), wo: (H, dh, D) bf16.
    kbias: (1, Tk) additive key-padding bias.  Returns (Tq, D) f32.
    """
    H, D, dh = wq.shape
    Tq, Tk = xq.shape[0], xkv.shape[0]
    xq_b = jnp.broadcast_to(xq[None], (H, Tq, D))
    xkv_b = jnp.broadcast_to(xkv[None], (H, Tk, D))
    q = jnp.einsum("htd,hde->hte", xq_b, wq, preferred_element_type=jnp.float32) + bq
    k = jnp.einsum("htd,hde->hte", xkv_b, wk, preferred_element_type=jnp.float32) + bk
    v = jnp.einsum("htd,hde->hte", xkv_b, wv, preferred_element_type=jnp.float32) + bv

    s = jnp.einsum("hqe,hke->hqk", q.astype(jnp.bfloat16), k.astype(jnp.bfloat16),
                   preferred_element_type=jnp.float32)          # (H, Tq, Tk)
    bias = kbias
    if causal:
        rows = lax.broadcasted_iota(jnp.int32, (Tq, Tk), 0)
        cols = lax.broadcasted_iota(jnp.int32, (Tq, Tk), 1)
        bias = bias + jnp.where(cols > rows, MASK_VALUE, 0.0)
    s = s + bias                                                 # broadcast over heads

    m = jnp.max(s, axis=-1, keepdims=True)
    p = jnp.exp(s - m)
    denom = jnp.sum(p, axis=-1, keepdims=True)
    o = jnp.einsum("hqk,hke->hqe", p.astype(jnp.bfloat16), v.astype(jnp.bfloat16),
                   preferred_element_type=jnp.float32) / denom   # exact softmax normalize
    out = jnp.einsum("hqe,hef->hqf", o.astype(jnp.bfloat16), wo,
                     preferred_element_type=jnp.float32)         # (H, Tq, D)
    return jnp.sum(out, axis=0) + bo                             # sum heads == concat+Wo


# ----------------------------- BlockSpec helpers -----------------------------

def _const_index_map(nd):
    def imap(b):
        return (0,) * nd
    return imap


def _batch_index_map(nd):
    def imap(b):
        return (b,) + (0,) * (nd - 1)
    return imap


def _weight_specs(weights):
    return [pl.BlockSpec(w.shape, _const_index_map(w.ndim)) for w in weights]


# ----------------------------- fused encoder layer -----------------------------

def _enc_layer_kernel(*refs, causal):
    (x_ref, kpad_ref,
     g1, b1, wq, bq, wk, bk, wv, bv, wo, bo,
     g2, b2, w1, c1, w2, c2, o_ref) = refs

    x = x_ref[0].astype(jnp.float32)                  # (T, D) residual stream, f32
    kbias = kpad_ref[0] * MASK_VALUE                  # (1, T) additive key-pad bias

    # --- pre-LN self attention + residual ---
    xn = _layernorm(x, g1[...], b1[...]).astype(jnp.bfloat16)
    x = x + _mha(xn, xn, wq[...], bq[...], wk[...], bk[...], wv[...], bv[...],
                 wo[...], bo[...], kbias, causal)

    # --- pre-LN FFN (ReLU) + residual ---
    xn = _layernorm(x, g2[...], b2[...]).astype(jnp.bfloat16)
    h = jnp.maximum(jnp.dot(xn, w1[...], preferred_element_type=jnp.float32) + c1[...], 0.0)
    f = jnp.dot(h.astype(jnp.bfloat16), w2[...], preferred_element_type=jnp.float32) + c2[...]
    o_ref[0] = (x + f).astype(o_ref.dtype)


def encoder_layer(x, kpad, p):
    B, T, D = x.shape
    sa, ffn = p["sa"], p["ffn"]
    weights = [p["ln1_g"], p["ln1_b"],
               sa["wq"], sa["bq"], sa["wk"], sa["bk"], sa["wv"], sa["bv"], sa["wo"], sa["bo"],
               p["ln2_g"], p["ln2_b"],
               ffn["w1"], ffn["b1"], ffn["w2"], ffn["b2"]]
    in_specs = ([pl.BlockSpec((1, T, D), _batch_index_map(3)),
                 pl.BlockSpec((1, 1, T), _batch_index_map(3))]
                + _weight_specs(weights))
    return pl.pallas_call(
        functools.partial(_enc_layer_kernel, causal=False),
        out_shape=jax.ShapeDtypeStruct((B, T, D), jnp.float32),
        grid=(B,),
        in_specs=in_specs,
        out_specs=pl.BlockSpec((1, T, D), _batch_index_map(3)),
        compiler_params=pltpu.CompilerParams(dimension_semantics=("parallel",)),
    )(x, kpad, *weights)


# ----------------------------- fused decoder layer -----------------------------

def _dec_layer_kernel(*refs):
    (x_ref, mem_ref, skpad_ref, ckpad_ref,
     g1, b1, wq, bq, wk, bk, wv, bv, wo, bo,
     g2, b2, eg, eb, cwq, cbq, cwk, cbk, cwv, cbv, cwo, cbo,
     g3, b3, w1, c1, w2, c2, o_ref) = refs

    x = x_ref[0].astype(jnp.float32)                  # (S, D)
    skbias = skpad_ref[0] * MASK_VALUE                # (1, S)
    ckbias = ckpad_ref[0] * MASK_VALUE                # (1, Tk)

    # --- causal self attention ---
    xn = _layernorm(x, g1[...], b1[...]).astype(jnp.bfloat16)
    x = x + _mha(xn, xn, wq[...], bq[...], wk[...], bk[...], wv[...], bv[...],
                 wo[...], bo[...], skbias, True)

    # --- cross attention (encoder-final LayerNorm fused into the K/V source) ---
    xn = _layernorm(x, g2[...], b2[...]).astype(jnp.bfloat16)
    mem = _layernorm(mem_ref[0].astype(jnp.float32), eg[...], eb[...]).astype(jnp.bfloat16)
    x = x + _mha(xn, mem, cwq[...], cbq[...], cwk[...], cbk[...], cwv[...], cbv[...],
                 cwo[...], cbo[...], ckbias, False)

    # --- FFN ---
    xn = _layernorm(x, g3[...], b3[...]).astype(jnp.bfloat16)
    h = jnp.maximum(jnp.dot(xn, w1[...], preferred_element_type=jnp.float32) + c1[...], 0.0)
    f = jnp.dot(h.astype(jnp.bfloat16), w2[...], preferred_element_type=jnp.float32) + c2[...]
    o_ref[0] = (x + f).astype(o_ref.dtype)


def decoder_layer(x, memory, self_kpad, cross_kpad, p, enc_ln):
    B, S, D = x.shape
    Tk = memory.shape[1]
    sa, ca, ffn = p["sa"], p["ca"], p["ffn"]
    weights = [p["ln1_g"], p["ln1_b"],
               sa["wq"], sa["bq"], sa["wk"], sa["bk"], sa["wv"], sa["bv"], sa["wo"], sa["bo"],
               p["ln2_g"], p["ln2_b"], enc_ln[0], enc_ln[1],
               ca["wq"], ca["bq"], ca["wk"], ca["bk"], ca["wv"], ca["bv"], ca["wo"], ca["bo"],
               p["ln3_g"], p["ln3_b"],
               ffn["w1"], ffn["b1"], ffn["w2"], ffn["b2"]]
    in_specs = ([pl.BlockSpec((1, S, D), _batch_index_map(3)),
                 pl.BlockSpec((1, Tk, D), _batch_index_map(3)),
                 pl.BlockSpec((1, 1, S), _batch_index_map(3)),
                 pl.BlockSpec((1, 1, Tk), _batch_index_map(3))]
                + _weight_specs(weights))
    return pl.pallas_call(
        _dec_layer_kernel,
        out_shape=jax.ShapeDtypeStruct((B, S, D), jnp.float32),
        grid=(B,),
        in_specs=in_specs,
        out_specs=pl.BlockSpec((1, S, D), _batch_index_map(3)),
        compiler_params=pltpu.CompilerParams(dimension_semantics=("parallel",)),
    )(x, memory, self_kpad, cross_kpad, *weights)


# ----------------------------- fused conv1d kernel -----------------------------
# Conv1d as K full-block accumulating matmuls over pre-gathered taps + GELU
# (+ LayerNorm + positional encoding), one grid step per batch item.

def _conv_kernel(*refs, K, activation, final_ln):
    if final_ln:
        x_ref, w_ref, b_ref, g_ref, lb_ref, pe_ref, o_ref = refs
    else:
        x_ref, w_ref, b_ref, o_ref = refs
    acc = jnp.dot(x_ref[0, 0].astype(jnp.bfloat16), w_ref[0],
                  preferred_element_type=jnp.float32)
    for k in range(1, K):                             # static tap loop, aligned full-slab reads
        acc = acc + jnp.dot(x_ref[0, k].astype(jnp.bfloat16), w_ref[k],
                            preferred_element_type=jnp.float32)
    acc = acc + b_ref[...]
    acc = _activation(acc, activation)
    if final_ln:
        acc = _layernorm(acc, g_ref[...], lb_ref[...]) + pe_ref[...]
    o_ref[0] = acc.astype(o_ref.dtype)


def conv1d_fused(x, w, b, *, stride, pad, activation="gelu",
                 ln_params=None, pe=None, out_dtype=jnp.bfloat16):
    """x: (B, L, C); w: (K, C, O) bf16; b: (1, O) f32  ->  (B, L_out, O)."""
    B, L, C = x.shape
    K, _, O = w.shape
    L_out = (L + 2 * pad - K) // stride + 1

    # im2col-lite in the wrapper: (B, K, L_out, C) so every in-kernel read is aligned.
    xp = jnp.pad(x, ((0, 0), (pad, pad), (0, 0)))
    idx = jnp.arange(L_out)[:, None] * stride + jnp.arange(K)[None, :]   # (L_out, K)
    xtaps = jnp.transpose(xp[:, idx, :], (0, 2, 1, 3)).astype(jnp.bfloat16)

    final_ln = ln_params is not None
    in_specs = [pl.BlockSpec((1, K, L_out, C), _batch_index_map(4)),
                pl.BlockSpec((K, C, O), _const_index_map(3)),
                pl.BlockSpec((1, O), _const_index_map(2))]
    args = [xtaps, w, b]
    if final_ln:
        g, lb = ln_params
        in_specs += [pl.BlockSpec((1, O), _const_index_map(2)),
                     pl.BlockSpec((1, O), _const_index_map(2)),
                     pl.BlockSpec((L_out, O), _const_index_map(2))]
        args += [g, lb, pe]

    kern = functools.partial(_conv_kernel, K=K, activation=activation, final_ln=final_ln)
    return pl.pallas_call(
        kern,
        out_shape=jax.ShapeDtypeStruct((B, L_out, O), out_dtype),
        grid=(B,),
        in_specs=in_specs,
        out_specs=pl.BlockSpec((1, L_out, O), _batch_index_map(3)),
        compiler_params=pltpu.CompilerParams(dimension_semantics=("parallel",)),
    )(*args)


# ----------------------------- fused final LN + tied logits -----------------------------

def _ln_logits_kernel(x_ref, g_ref, b_ref, w_ref, o_ref):
    xn = _layernorm(x_ref[0].astype(jnp.float32), g_ref[...], b_ref[...])
    o_ref[0] = jnp.dot(xn.astype(jnp.bfloat16), w_ref[...],
                       preferred_element_type=jnp.float32).astype(o_ref.dtype)


def ln_logits(x, g, b, w):
    """x: (B, S, D); w: (D, Vp) bf16 (Vp multiple of 128) -> (B, S, Vp) f32 lane-dense."""
    B, S, D = x.shape
    Vp = w.shape[1]
    return pl.pallas_call(
        _ln_logits_kernel,
        out_shape=jax.ShapeDtypeStruct((B, S, Vp), jnp.float32),
        grid=(B,),
        in_specs=[pl.BlockSpec((1, S, D), _batch_index_map(3)),
                  pl.BlockSpec((1, D), _const_index_map(2)),
                  pl.BlockSpec((1, D), _const_index_map(2)),
                  pl.BlockSpec((D, Vp), _const_index_map(2))],
        out_specs=pl.BlockSpec((1, S, Vp), _batch_index_map(3)),
        compiler_params=pltpu.CompilerParams(dimension_semantics=("parallel",)),
    )(x, g, b, w)


# ----------------------------- small XLA glue -----------------------------

def maxpool1d(x, kernel, stride, pad):
    """PyTorch F.max_pool1d on a (B, L) float mask."""
    B, L = x.shape
    xp = jnp.pad(x, ((0, 0), (pad, pad)), constant_values=-jnp.inf)
    L_out = (L + 2 * pad - kernel) // stride + 1
    starts = jnp.arange(L_out) * stride
    win = xp[:, starts[:, None] + jnp.arange(kernel)[None, :]]
    return jnp.max(win, axis=-1)


def sinusoidal_pe(T, D):
    # TODO(synk): PositionalEncoding class not given in source; standard sinusoidal assumed.
    pos = jnp.arange(T, dtype=jnp.float32)[:, None]
    div = jnp.exp(jnp.arange(0, D, 2, dtype=jnp.float32) * (-math.log(10000.0) / D))
    pe = jnp.zeros((T, D), jnp.float32)
    pe = pe.at[:, 0::2].set(jnp.sin(pos * div))
    pe = pe.at[:, 1::2].set(jnp.cos(pos * div))
    return pe


# ----------------------------- forward pass -----------------------------

def encoder_forward(params, mels, mel_mask, cfg):
    D = cfg["d_model"]
    x = jnp.transpose(mels, (0, 2, 1))                            # (B, L, n_mels) channel-last
    # Conv1d(k=5,p=2)+GELU  (Dropout = identity in eval)
    x = conv1d_fused(x, params["conv1_w"], params["conv1_b"], stride=1, pad=2,
                     activation="gelu", out_dtype=jnp.bfloat16)
    # Conv1d(k=5,p=2,s=2)+GELU + conv LayerNorm + positional encoding, all fused
    L1 = x.shape[1]
    T = (L1 + 4 - 5) // 2 + 1
    x = conv1d_fused(x, params["conv2_w"], params["conv2_b"], stride=2, pad=2,
                     activation="gelu",
                     ln_params=(params["conv_ln_g"], params["conv_ln_b"]),
                     pe=sinusoidal_pe(T, D), out_dtype=jnp.float32)

    # mask downsampling: max_pool1d(k=3, pad=1, stride=2); >0.5 => padded frame
    pooled = maxpool1d(mel_mask, kernel=3, stride=2, pad=1)       # (B, T)
    enc_kpad = (pooled > 0.5).astype(jnp.float32)[:, None, :]     # (B, 1, T)

    for lp in params["enc_layers"]:
        x = encoder_layer(x, enc_kpad, lp)
    # final encoder LayerNorm is fused into each decoder layer's K/V source (memory is
    # only ever consumed through cross-attention K/V, so semantics are identical).
    return x, enc_kpad


def decoder_forward(params, tokens, memory, enc_kpad, token_mask, cfg):
    B, S = tokens.shape
    x = params["emb"][tokens] + params["pos_emb"][:S, :]          # gather + pos add (XLA glue)
    self_kpad = token_mask.astype(jnp.float32)[:, None, :]        # (B, 1, S)
    enc_ln = (params["enc_ln_g"], params["enc_ln_b"])

    for lp in params["dec_layers"]:
        x = decoder_layer(x, memory, self_kpad, enc_kpad, lp, enc_ln)

    # final decoder LayerNorm fused with the tied-embedding logits projection;
    # vocab is zero-padded to a 128-lane multiple for a lane-dense output store.
    logits = ln_logits(x, params["dec_ln_g"], params["dec_ln_b"], params["logits_w"])
    return logits[:, :, :cfg["vocab_size"]]


def transformer_forward(params, mels, tokens, mel_mask, token_mask, cfg):
    memory, enc_kpad = encoder_forward(params, mels, mel_mask, cfg)
    return decoder_forward(params, tokens, memory, enc_kpad, token_mask, cfg)


# ----------------------------- parameter init -----------------------------

def init_params(key, cfg):
    D, F, V = cfg["d_model"], cfg["d_ff"], cfg["vocab_size"]
    keys = iter(jax.random.split(key, 256))

    def rnd(shape, scale=0.02):
        return scale * jax.random.normal(next(keys), shape, jnp.float32)

    def zeros(*shape):
        return jnp.zeros(shape, jnp.float32)

    def ln_pair(n=D):
        return jnp.ones((1, n), jnp.float32), jnp.zeros((1, n), jnp.float32)

    def attn_p(n_heads):
        # Head-major weights.  NOTE: 1/sqrt(d_head) softmax scale is folded into wq (and
        # would need to be folded into bq too when loading real PyTorch checkpoints).
        dh = D // n_heads
        scale = 1.0 / math.sqrt(dh)
        return {"wq": (rnd((n_heads, D, dh)) * scale).astype(jnp.bfloat16),
                "bq": zeros(n_heads, 1, dh),
                "wk": rnd((n_heads, D, dh)).astype(jnp.bfloat16), "bk": zeros(n_heads, 1, dh),
                "wv": rnd((n_heads, D, dh)).astype(jnp.bfloat16), "bv": zeros(n_heads, 1, dh),
                "wo": rnd((n_heads, dh, D)).astype(jnp.bfloat16), "bo": zeros(1, D)}

    def ffn_p():
        return {"w1": rnd((D, F)).astype(jnp.bfloat16), "b1": zeros(1, F),
                "w2": rnd((F, D)).astype(jnp.bfloat16), "b2": zeros(1, D)}

    def enc_layer_p():
        (g1, b1), (g2, b2) = ln_pair(), ln_pair()
        return {"ln1_g": g1, "ln1_b": b1, "ln2_g": g2, "ln2_b": b2,
                "sa": attn_p(cfg["n_enc_heads"]), "ffn": ffn_p()}

    def dec_layer_p():
        (g1, b1), (g2, b2), (g3, b3) = ln_pair(), ln_pair(), ln_pair()
        return {"ln1_g": g1, "ln1_b": b1, "ln2_g": g2, "ln2_b": b2,
                "ln3_g": g3, "ln3_b": b3,
                "sa": attn_p(cfg["n_dec_heads"]),
                "ca": attn_p(cfg["n_dec_heads"]), "ffn": ffn_p()}

    conv_g, conv_b = ln_pair()
    enc_g, enc_b = ln_pair()
    dec_g, dec_b = ln_pair()

    emb = jax.random.normal(next(keys), (V, D), jnp.float32)
    Vp = ((V + 127) // 128) * 128
    # Tied-embedding logits weight: transposed, bf16, zero-padded to 128-lane multiple at init.
    logits_w = jnp.zeros((D, Vp), jnp.float32).at[:, :V].set(emb.T).astype(jnp.bfloat16)

    return {
        # conv weights stored (K, C_in, C_out): w[k] is a (C_in, C_out) matmul tap
        "conv1_w": rnd((5, cfg["n_mels"], D)).astype(jnp.bfloat16), "conv1_b": zeros(1, D),
        "conv2_w": rnd((5, D, D)).astype(jnp.bfloat16), "conv2_b": zeros(1, D),
        "conv_ln_g": conv_g, "conv_ln_b": conv_b,
        "enc_layers": [enc_layer_p() for _ in range(cfg["n_enc_layers"])],
        "enc_ln_g": enc_g, "enc_ln_b": enc_b,
        "emb": emb,
        "logits_w": logits_w,
        "pos_emb": 0.1 * jax.random.normal(next(keys), (cfg["max_seq_length"], D), jnp.float32),
        "dec_layers": [dec_layer_p() for _ in range(cfg["n_dec_layers"])],
        "dec_ln_g": dec_g, "dec_ln_b": dec_b,
    }


# ----------------------------- main -----------------------------

if __name__ == "__main__":
    cfg = dict(vocab_size=50, d_model=32, d_ff=64,
               n_enc_heads=2, n_enc_layers=2,
               n_dec_heads=2, n_dec_layers=2,
               n_mels=16, max_mel_length=16, max_seq_length=8)

    key = jax.random.PRNGKey(0)
    pkey, mkey, tkey = jax.random.split(key, 3)
    params = init_params(pkey, cfg)

    B, L, S = 2, 16, 8
    mels = jax.random.normal(mkey, (B, cfg["n_mels"], L), jnp.float32)          # (B, n_mels, L)
    tokens = jax.random.randint(tkey, (B, S), 0, cfg["vocab_size"], jnp.int32)  # (B, S)
    # mel_mask: float 0/1, 1 = padded frame (pooled -> encoder key padding)
    mel_mask = jnp.zeros((B, L), jnp.float32).at[1, 12:].set(1.0)
    # token_mask: bool, True = padded token
    token_mask = jnp.zeros((B, S), dtype=bool).at[1, 6:].set(True)

    fwd = jax.jit(functools.partial(transformer_forward, cfg=cfg))
    logits = jax.block_until_ready(fwd(params, mels, tokens, mel_mask, token_mask))

    assert logits.shape == (B, S, cfg["vocab_size"])
    assert bool(jnp.all(jnp.isfinite(logits)))
    print("KERNEL_OK")
</pallas_src>

<mosaic_0001>
module attributes {stable_mosaic.version = 11 : i64} {
  func.func @_conv_kernel(%arg0: i32, %arg1: memref<1x5x16x16xbf16, #tpu.memory_space<vmem>>, %arg2: memref<5x16x32xbf16, #tpu.memory_space<vmem>>, %arg3: memref<1x32xf32, #tpu.memory_space<vmem>>, %arg4: memref<1x16x32xbf16, #tpu.memory_space<vmem>>) attributes {dimension_semantics = [#tpu.dimension_semantics<parallel>], iteration_bounds = array<i64: 2>, scalar_prefetch = 0 : i64, scratch_operands = 0 : i64, tpu.core_type = #tpu.core_type<tc>, window_params = [{transform_indices = @transform_0, window_bounds = array<i64: 1, 5, 16, 16>}, {pipeline_mode = #tpu.pipeline_mode<synchronous>, transform_indices = @transform_1, window_bounds = array<i64: 5, 16, 32>}, {pipeline_mode = #tpu.pipeline_mode<synchronous>, transform_indices = @transform_2, window_bounds = array<i64: 1, 32>}, {transform_indices = @transform_3, window_bounds = array<i64: 1, 16, 32>}]} {
    %c0 = arith.constant 0 : index
    %c0_0 = arith.constant 0 : index
    %c0_1 = arith.constant 0 : index
    %c0_2 = arith.constant 0 : index
    %0 = vector.load %arg1[%c0, %c0_0, %c0_1, %c0_2] : memref<1x5x16x16xbf16, #tpu.memory_space<vmem>>, vector<1x1x16x16xbf16>
    %1 = vector.shape_cast %0 : vector<1x1x16x16xbf16> to vector<16x16xbf16>
    %c0_3 = arith.constant 0 : index
    %c0_4 = arith.constant 0 : index
    %c0_5 = arith.constant 0 : index
    %2 = vector.load %arg2[%c0_3, %c0_4, %c0_5] : memref<5x16x32xbf16, #tpu.memory_space<vmem>>, vector<1x16x32xbf16>
    %3 = vector.shape_cast %2 : vector<1x16x32xbf16> to vector<16x32xbf16>
    %cst = arith.constant dense<0.000000e+00> : vector<16x32xf32>
    %4 = tpu.matmul %1, %3, %cst {dimension_numbers = #tpu.dot_dimension_numbers<[1], [0], [0], [1], [0, 0, 1, 1], [], []>} : vector<16x16xbf16>, vector<16x32xbf16>, vector<16x32xf32> -> vector<16x32xf32>
    %c0_6 = arith.constant 0 : index
    %c1 = arith.constant 1 : index
    %c0_7 = arith.constant 0 : index
    %c0_8 = arith.constant 0 : index
    %5 = vector.load %arg1[%c0_6, %c1, %c0_7, %c0_8] : memref<1x5x16x16xbf16, #tpu.memory_space<vmem>>, vector<1x1x16x16xbf16>
    %6 = vector.shape_cast %5 : vector<1x1x16x16xbf16> to vector<16x16xbf16>
    %c1_9 = arith.constant 1 : index
    %c0_10 = arith.constant 0 : index
    %c0_11 = arith.constant 0 : index
    %7 = vector.load %arg2[%c1_9, %c0_10, %c0_11] : memref<5x16x32xbf16, #tpu.memory_space<vmem>>, vector<1x16x32xbf16>
    %8 = vector.shape_cast %7 : vector<1x16x32xbf16> to vector<16x32xbf16>
    %cst_12 = arith.constant dense<0.000000e+00> : vector<16x32xf32>
    %9 = tpu.matmul %6, %8, %cst_12 {dimension_numbers = #tpu.dot_dimension_numbers<[1], [0], [0], [1], [0, 0, 1, 1], [], []>} : vector<16x16xbf16>, vector<16x32xbf16>, vector<16x32xf32> -> vector<16x32xf32>
    %10 = arith.addf %4, %9 : vector<16x32xf32>
    %c0_13 = arith.constant 0 : index
    %c2 = arith.constant 2 : index
    %c0_14 = arith.constant 0 : index
    %c0_15 = arith.constant 0 : index
    %11 = vector.load %arg1[%c0_13, %c2, %c0_14, %c0_15] : memref<1x5x16x16xbf16, #tpu.memory_space<vmem>>, vector<1x1x16x16xbf16>
    %12 = vector.shape_cast %11 : vector<1x1x16x16xbf16> to vector<16x16xbf16>
    %c2_16 = arith.constant 2 : index
    %c0_17 = arith.constant 0 : index
    %c0_18 = arith.constant 0 : index
    %13 = vector.load %arg2[%c2_16, %c0_17, %c0_18] : memref<5x16x32xbf16, #tpu.memory_space<vmem>>, vector<1x16x32xbf16>
    %14 = vector.shape_cast %13 : vector<1x16x32xbf16> to vector<16x32xbf16>
    %cst_19 = arith.constant dense<0.000000e+00> : vector<16x32xf32>
    %15 = tpu.matmul %12, %14, %cst_19 {dimension_numbers = #tpu.dot_dimension_numbers<[1], [0], [0], [1], [0, 0, 1, 1], [], []>} : vector<16x16xbf16>, vector<16x32xbf16>, vector<16x32xf32> -> vector<16x32xf32>
    %16 = arith.addf %10, %15 : vector<16x32xf32>
    %c0_20 = arith.constant 0 : index
    %c3 = arith.constant 3 : index
    %c0_21 = arith.constant 0 : index
    %c0_22 = arith.constant 0 : index
    %17 = vector.load %arg1[%c0_20, %c3, %c0_21, %c0_22] : memref<1x5x16x16xbf16, #tpu.memory_space<vmem>>, vector<1x1x16x16xbf16>
    %18 = vector.shape_cast %17 : vector<1x1x16x16xbf16> to vector<16x16xbf16>
    %c3_23 = arith.constant 3 : index
    %c0_24 = arith.constant 0 : index
    %c0_25 = arith.constant 0 : index
    %19 = vector.load %arg2[%c3_23, %c0_24, %c0_25] : memref<5x16x32xbf16, #tpu.memory_space<vmem>>, vector<1x16x32xbf16>
    %20 = vector.shape_cast %19 : vector<1x16x32xbf16> to vector<16x32xbf16>
    %cst_26 = arith.constant dense<0.000000e+00> : vector<16x32xf32>
    %21 = tpu.matmul %18, %20, %cst_26 {dimension_numbers = #tpu.dot_dimension_numbers<[1], [0], [0], [1], [0, 0, 1, 1], [], []>} : vector<16x16xbf16>, vector<16x32xbf16>, vector<16x32xf32> -> vector<16x32xf32>
    %22 = arith.addf %16, %21 : vector<16x32xf32>
    %c0_27 = arith.constant 0 : index
    %c4 = arith.constant 4 : index
    %c0_28 = arith.constant 0 : index
    %c0_29 = arith.constant 0 : index
    %23 = vector.load %arg1[%c0_27, %c4, %c0_28, %c0_29] : memref<1x5x16x16xbf16, #tpu.memory_space<vmem>>, vector<1x1x16x16xbf16>
    %24 = vector.shape_cast %23 : vector<1x1x16x16xbf16> to vector<16x16xbf16>
    %c4_30 = arith.constant 4 : index
    %c0_31 = arith.constant 0 : index
    %c0_32 = arith.constant 0 : index
    %25 = vector.load %arg2[%c4_30, %c0_31, %c0_32] : memref<5x16x32xbf16, #tpu.memory_space<vmem>>, vector<1x16x32xbf16>
    %26 = vector.shape_cast %25 : vector<1x16x32xbf16> to vector<16x32xbf16>
    %cst_33 = arith.constant dense<0.000000e+00> : vector<16x32xf32>
    %27 = tpu.matmul %24, %26, %cst_33 {dimension_numbers = #tpu.dot_dimension_numbers<[1], [0], [0], [1], [0, 0, 1, 1], [], []>} : vector<16x16xbf16>, vector<16x32xbf16>, vector<16x32xf32> -> vector<16x32xf32>
    %28 = arith.addf %22, %27 : vector<16x32xf32>
    %c0_34 = arith.constant 0 : index
    %c0_35 = arith.constant 0 : index
    %29 = vector.load %arg3[%c0_34, %c0_35] : memref<1x32xf32, #tpu.memory_space<vmem>>, vector<1x32xf32>
    %30 = vector.broadcast %29 : vector<1x32xf32> to vector<16x32xf32>
    %31 = arith.addf %28, %30 : vector<16x32xf32>
    %cst_36 = arith.constant 5.000000e-01 : f32
    %32 = vector.broadcast %cst_36 : f32 to vector<16x32xf32>
    %33 = arith.mulf %32, %31 : vector<16x32xf32>
    %cst_37 = arith.constant 4.471500e-02 : f32
    %34 = vector.broadcast %cst_37 : f32 to vector<16x32xf32>
    %35 = arith.mulf %34, %31 : vector<16x32xf32>
    %36 = arith.mulf %35, %31 : vector<16x32xf32>
    %37 = arith.mulf %36, %31 : vector<16x32xf32>
    %38 = arith.addf %31, %37 : vector<16x32xf32>
    %cst_38 = arith.constant 0.797884583 : f32
    %39 = vector.broadcast %cst_38 : f32 to vector<16x32xf32>
    %40 = arith.mulf %39, %38 : vector<16x32xf32>
    %41 = math.tanh %40 : vector<16x32xf32>
    %cst_39 = arith.constant 1.000000e+00 : f32
    %42 = vector.broadcast %cst_39 : f32 to vector<16x32xf32>
    %43 = arith.addf %42, %41 : vector<16x32xf32>
    %44 = arith.mulf %33, %43 : vector<16x32xf32>
    %45 = arith.truncf %44 : vector<16x32xf32> to vector<16x32xbf16>
    %c0_40 = arith.constant 0 : index
    %c0_41 = arith.constant 0 : index
    %c0_42 = arith.constant 0 : index
    %46 = vector.load %arg4[%c0_40, %c0_41, %c0_42] : memref<1x16x32xbf16, #tpu.memory_space<vmem>>, vector<1x16x32xbf16>
    %47 = vector.shape_cast %46 : vector<1x16x32xbf16> to vector<16x32xbf16>
    %48 = vector.shape_cast %45 : vector<16x32xbf16> to vector<1x16x32xbf16>
    tpu.vector_store %arg4[%c0_40, %c0_41, %c0_42], %48 {strides = array<i32>} : memref<1x16x32xbf16, #tpu.memory_space<vmem>>, vector<1x16x32xbf16>,
    return
  }
  func.func @transform_0(%arg0: i32) -> (i32, i32, i32, i32) {
    %c0_i32 = arith.constant 0 : i32
    %c0_i32_0 = arith.constant 0 : i32
    %c0_i32_1 = arith.constant 0 : i32
    %c0_i32_2 = arith.constant 0 : i32
    return %arg0, %c0_i32, %c0_i32_0, %c0_i32_1 : i32, i32, i32, i32
  }
  func.func @transform_1(%arg0: i32) -> (i32, i32, i32) {
    %c0_i32 = arith.constant 0 : i32
    %c0_i32_0 = arith.constant 0 : i32
    %c0_i32_1 = arith.constant 0 : i32
    %c0_i32_2 = arith.constant 0 : i32
    return %c0_i32, %c0_i32_0, %c0_i32_1 : i32, i32, i32
  }
  func.func @transform_2(%arg0: i32) -> (i32, i32) {
    %c0_i32 = arith.constant 0 : i32
    %c0_i32_0 = arith.constant 0 : i32
    %c0_i32_1 = arith.constant 0 : i32
    return %c0_i32, %c0_i32_0 : i32, i32
  }
  func.func @transform_3(%arg0: i32) -> (i32, i32, i32) {
    %c0_i32 = arith.constant 0 : i32
    %c0_i32_0 = arith.constant 0 : i32
    %c0_i32_1 = arith.constant 0 : i32
    return %arg0, %c0_i32, %c0_i32_0 : i32, i32, i32
  }
}

module attributes {stable_mosaic.version = 11 : i64} {
  func.func @_conv_kernel(%arg0: i32, %arg1: memref<1x5x8x32xbf16, #tpu.memory_space<vmem>>, %arg2: memref<5x32x32xbf16, #tpu.memory_space<vmem>>, %arg3: memref<1x32xf32, #tpu.memory_space<vmem>>, %arg4: memref<1x32xf32, #tpu.memory_space<vmem>>, %arg5: memref<1x32xf32, #tpu.memory_space<vmem>>, %arg6: memref<8x32xf32, #tpu.memory_space<vmem>>, %arg7: memref<1x8x32xf32, #tpu.memory_space<vmem>>) attributes {dimension_semantics = [#tpu.dimension_semantics<parallel>], iteration_bounds = array<i64: 2>, scalar_prefetch = 0 : i64, scratch_operands = 0 : i64, tpu.core_type = #tpu.core_type<tc>, window_params = [{transform_indices = @transform_0, window_bounds = array<i64: 1, 5, 8, 32>}, {pipeline_mode = #tpu.pipeline_mode<synchronous>, transform_indices = @transform_1, window_bounds = array<i64: 5, 32, 32>}, {pipeline_mode = #tpu.pipeline_mode<synchronous>, transform_indices = @transform_2, window_bounds = array<i64: 1, 32>}, {pipeline_mode = #tpu.pipeline_mode<synchronous>, transform_indices = @transform_3, window_bounds = array<i64: 1, 32>}, {pipeline_mode = #tpu.pipeline_mode<synchronous>, transform_indices = @transform_4, window_bounds = array<i64: 1, 32>}, {pipeline_mode = #tpu.pipeline_mode<synchronous>, transform_indices = @transform_5, window_bounds = array<i64: 8, 32>}, {transform_indices = @transform_6, window_bounds = array<i64: 1, 8, 32>}]} {
    %c0 = arith.constant 0 : index
    %c0_0 = arith.constant 0 : index
    %c0_1 = arith.constant 0 : index
    %c0_2 = arith.constant 0 : index
    %0 = vector.load %arg1[%c0, %c0_0, %c0_1, %c0_2] : memref<1x5x8x32xbf16, #tpu.memory_space<vmem>>, vector<1x1x8x32xbf16>
    %1 = vector.shape_cast %0 : vector<1x1x8x32xbf16> to vector<8x32xbf16>
    %c0_3 = arith.constant 0 : index
    %c0_4 = arith.constant 0 : index
    %c0_5 = arith.constant 0 : index
    %2 = vector.load %arg2[%c0_3, %c0_4, %c0_5] : memref<5x32x32xbf16, #tpu.memory_space<vmem>>, vector<1x32x32xbf16>
    %3 = vector.shape_cast %2 : vector<1x32x32xbf16> to vector<32x32xbf16>
    %cst = arith.constant dense<0.000000e+00> : vector<8x32xf32>
    %4 = tpu.matmul %1, %3, %cst {dimension_numbers = #tpu.dot_dimension_numbers<[1], [0], [0], [1], [0, 0, 1, 1], [], []>} : vector<8x32xbf16>, vector<32x32xbf16>, vector<8x32xf32> -> vector<8x32xf32>
    %c0_6 = arith.constant 0 : index
    %c1 = arith.constant 1 : index
    %c0_7 = arith.constant 0 : index
    %c0_8 = arith.constant 0 : index
    %5 = vector.load %arg1[%c0_6, %c1, %c0_7, %c0_8] : memref<1x5x8x32xbf16, #tpu.memory_space<vmem>>, vector<1x1x8x32xbf16>
    %6 = vector.shape_cast %5 : vector<1x1x8x32xbf16> to vector<8x32xbf16>
    %c1_9 = arith.constant 1 : index
    %c0_10 = arith.constant 0 : index
    %c0_11 = arith.constant 0 : index
    %7 = vector.load %arg2[%c1_9, %c0_10, %c0_11] : memref<5x32x32xbf16, #tpu.memory_space<vmem>>, vector<1x32x32xbf16>
    %8 = vector.shape_cast %7 : vector<1x32x32xbf16> to vector<32x32xbf16>
    %cst_12 = arith.constant dense<0.000000e+00> : vector<8x32xf32>
    %9 = tpu.matmul %6, %8, %cst_12 {dimension_numbers = #tpu.dot_dimension_numbers<[1], [0], [0], [1], [0, 0, 1, 1], [], []>} : vector<8x32xbf16>, vector<32x32xbf16>, vector<8x32xf32> -> vector<8x32xf32>
    %10 = arith.addf %4, %9 : vector<8x32xf32>
    %c0_13 = arith.constant 0 : index
    %c2 = arith.constant 2 : index
    %c0_14 = arith.constant 0 : index
    %c0_15 = arith.constant 0 : index
    %11 = vector.load %arg1[%c0_13, %c2, %c0_14, %c0_15] : memref<1x5x8x32xbf16, #tpu.memory_space<vmem>>, vector<1x1x8x32xbf16>
    %12 = vector.shape_cast %11 : vector<1x1x8x32xbf16> to vector<8x32xbf16>
    %c2_16 = arith.constant 2 : index
    %c0_17 = arith.constant 0 : index
    %c0_18 = arith.constant 0 : index
    %13 = vector.load %arg2[%c2_16, %c0_17, %c0_18] : memref<5x32x32xbf16, #tpu.memory_space<vmem>>, vector<1x32x32xbf16>
    %14 = vector.shape_cast %13 : vector<1x32x32xbf16> to vector<32x32xbf16>
    %cst_19 = arith.constant dense<0.000000e+00> : vector<8x32xf32>
    %15 = tpu.matmul %12, %14, %cst_19 {dimension_numbers = #tpu.dot_dimension_numbers<[1], [0], [0], [1], [0, 0, 1, 1], [], []>} : vector<8x32xbf16>, vector<32x32xbf16>, vector<8x32xf32> -> vector<8x32xf32>
    %16 = arith.addf %10, %15 : vector<8x32xf32>
    %c0_20 = arith.constant 0 : index
    %c3 = arith.constant 3 : index
    %c0_21 = arith.constant 0 : index
    %c0_22 = arith.constant 0 : index
    %17 = vector.load %arg1[%c0_20, %c3, %c0_21, %c0_22] : memref<1x5x8x32xbf16, #tpu.memory_space<vmem>>, vector<1x1x8x32xbf16>
    %18 = vector.shape_cast %17 : vector<1x1x8x32xbf16> to vector<8x32xbf16>
    %c3_23 = arith.constant 3 : index
    %c0_24 = arith.constant 0 : index
    %c0_25 = arith.constant 0 : index
    %19 = vector.load %arg2[%c3_23, %c0_24, %c0_25] : memref<5x32x32xbf16, #tpu.memory_space<vmem>>, vector<1x32x32xbf16>
    %20 = vector.shape_cast %19 : vector<1x32x32xbf16> to vector<32x32xbf16>
    %cst_26 = arith.constant dense<0.000000e+00> : vector<8x32xf32>
    %21 = tpu.matmul %18, %20, %cst_26 {dimension_numbers = #tpu.dot_dimension_numbers<[1], [0], [0], [1], [0, 0, 1, 1], [], []>} : vector<8x32xbf16>, vector<32x32xbf16>, vector<8x32xf32> -> vector<8x32xf32>
    %22 = arith.addf %16, %21 : vector<8x32xf32>
    %c0_27 = arith.constant 0 : index
    %c4 = arith.constant 4 : index
    %c0_28 = arith.constant 0 : index
    %c0_29 = arith.constant 0 : index
    %23 = vector.load %arg1[%c0_27, %c4, %c0_28, %c0_29] : memref<1x5x8x32xbf16, #tpu.memory_space<vmem>>, vector<1x1x8x32xbf16>
    %24 = vector.shape_cast %23 : vector<1x1x8x32xbf16> to vector<8x32xbf16>
    %c4_30 = arith.constant 4 : index
    %c0_31 = arith.constant 0 : index
    %c0_32 = arith.constant 0 : index
    %25 = vector.load %arg2[%c4_30, %c0_31, %c0_32] : memref<5x32x32xbf16, #tpu.memory_space<vmem>>, vector<1x32x32xbf16>
    %26 = vector.shape_cast %25 : vector<1x32x32xbf16> to vector<32x32xbf16>
    %cst_33 = arith.constant dense<0.000000e+00> : vector<8x32xf32>
    %27 = tpu.matmul %24, %26, %cst_33 {dimension_numbers = #tpu.dot_dimension_numbers<[1], [0], [0], [1], [0, 0, 1, 1], [], []>} : vector<8x32xbf16>, vector<32x32xbf16>, vector<8x32xf32> -> vector<8x32xf32>
    %28 = arith.addf %22, %27 : vector<8x32xf32>
    %c0_34 = arith.constant 0 : index
    %c0_35 = arith.constant 0 : index
    %29 = vector.load %arg3[%c0_34, %c0_35] : memref<1x32xf32, #tpu.memory_space<vmem>>, vector<1x32xf32>
    %30 = vector.broadcast %29 : vector<1x32xf32> to vector<8x32xf32>
    %31 = arith.addf %28, %30 : vector<8x32xf32>
    %cst_36 = arith.constant 5.000000e-01 : f32
    %32 = vector.broadcast %cst_36 : f32 to vector<8x32xf32>
    %33 = arith.mulf %32, %31 : vector<8x32xf32>
    %cst_37 = arith.constant 4.471500e-02 : f32
    %34 = vector.broadcast %cst_37 : f32 to vector<8x32xf32>
    %35 = arith.mulf %34, %31 : vector<8x32xf32>
    %36 = arith.mulf %35, %31 : vector<8x32xf32>
    %37 = arith.mulf %36, %31 : vector<8x32xf32>
    %38 = arith.addf %31, %37 : vector<8x32xf32>
    %cst_38 = arith.constant 0.797884583 : f32
    %39 = vector.broadcast %cst_38 : f32 to vector<8x32xf32>
    %40 = arith.mulf %39, %38 : vector<8x32xf32>
    %41 = math.tanh %40 : vector<8x32xf32>
    %cst_39 = arith.constant 1.000000e+00 : f32
    %42 = vector.broadcast %cst_39 : f32 to vector<8x32xf32>
    %43 = arith.addf %42, %41 : vector<8x32xf32>
    %44 = arith.mulf %33, %43 : vector<8x32xf32>
    %c0_40 = arith.constant 0 : index
    %c0_41 = arith.constant 0 : index
    %45 = vector.load %arg4[%c0_40, %c0_41] : memref<1x32xf32, #tpu.memory_space<vmem>>, vector<1x32xf32>
    %c0_42 = arith.constant 0 : index
    %c0_43 = arith.constant 0 : index
    %46 = vector.load %arg5[%c0_42, %c0_43] : memref<1x32xf32, #tpu.memory_space<vmem>>, vector<1x32xf32>
    %cst_44 = arith.constant dense<0.000000e+00> : vector<8xf32>
    %47 = vector.multi_reduction <add>, %44, %cst_44 [1] : vector<8x32xf32> to vector<8xf32>
    %48 = vector.shape_cast %47 : vector<8xf32> to vector<8x1xf32>
    %cst_45 = arith.constant 3.200000e+01 : f32
    %49 = vector.broadcast %cst_45 : f32 to vector<8x1xf32>
    %50 = arith.divf %48, %49 : vector<8x1xf32>
    %51 = vector.broadcast %50 : vector<8x1xf32> to vector<8x32xf32>
    %52 = arith.subf %44, %51 : vector<8x32xf32>
    %53 = arith.mulf %52, %52 : vector<8x32xf32>
    %cst_46 = arith.constant dense<0.000000e+00> : vector<8xf32>
    %54 = vector.multi_reduction <add>, %53, %cst_46 [1] : vector<8x32xf32> to vector<8xf32>
    %55 = vector.shape_cast %54 : vector<8xf32> to vector<8x1xf32>
    %cst_47 = arith.constant 3.200000e+01 : f32
    %56 = vector.broadcast %cst_47 : f32 to vector<8x1xf32>
    %57 = arith.divf %55, %56 : vector<8x1xf32>
    %58 = vector.broadcast %50 : vector<8x1xf32> to vector<8x32xf32>
    %59 = arith.subf %44, %58 : vector<8x32xf32>
    %cst_48 = arith.constant 9.99999974E-6 : f32
    %60 = vector.broadcast %cst_48 : f32 to vector<8x1xf32>
    %61 = arith.addf %57, %60 : vector<8x1xf32>
    %62 = math.rsqrt %61 : vector<8x1xf32>
    %63 = vector.broadcast %62 : vector<8x1xf32> to vector<8x32xf32>
    %64 = arith.mulf %59, %63 : vector<8x32xf32>
    %65 = vector.broadcast %45 : vector<1x32xf32> to vector<8x32xf32>
    %66 = arith.mulf %64, %65 : vector<8x32xf32>
    %67 = vector.broadcast %46 : vector<1x32xf32> to vector<8x32xf32>
    %68 = arith.addf %66, %67 : vector<8x32xf32>
    %c0_49 = arith.constant 0 : index
    %c0_50 = arith.constant 0 : index
    %69 = vector.load %arg6[%c0_49, %c0_50] : memref<8x32xf32, #tpu.memory_space<vmem>>, vector<8x32xf32>
    %70 = arith.addf %68, %69 : vector<8x32xf32>
    %c0_51 = arith.constant 0 : index
    %c0_52 = arith.constant 0 : index
    %c0_53 = arith.constant 0 : index
    %71 = vector.load %arg7[%c0_51, %c0_52, %c0_53] : memref<1x8x32xf32, #tpu.memory_space<vmem>>, vector<1x8x32xf32>
    %72 = vector.shape_cast %71 : vector<1x8x32xf32> to vector<8x32xf32>
    %73 = vector.shape_cast %70 : vector<8x32xf32> to vector<1x8x32xf32>
    tpu.vector_store %arg7[%c0_51, %c0_52, %c0_53], %73 {strides = array<i32>} : memref<1x8x32xf32, #tpu.memory_space<vmem>>, vector<1x8x32xf32>,
    return
  }
  func.func @transform_0(%arg0: i32) -> (i32, i32, i32, i32) {
    %c0_i32 = arith.constant 0 : i32
    %c0_i32_0 = arith.constant 0 : i32
    %c0_i32_1 = arith.constant 0 : i32
    %c0_i32_2 = arith.constant 0 : i32
    return %arg0, %c0_i32, %c0_i32_0, %c0_i32_1 : i32, i32, i32, i32
  }
  func.func @transform_1(%arg0: i32) -> (i32, i32, i32) {
    %c0_i32 = arith.constant 0 : i32
    %c0_i32_0 = arith.constant 0 : i32
    %c0_i32_1 = arith.constant 0 : i32
    %c0_i32_2 = arith.constant 0 : i32
    return %c0_i32, %c0_i32_0, %c0_i32_1 : i32, i32, i32
  }
  func.func @transform_2(%arg0: i32) -> (i32, i32) {
    %c0_i32 = arith.constant 0 : i32
    %c0_i32_0 = arith.constant 0 : i32
    %c0_i32_1 = arith.constant 0 : i32
    return %c0_i32, %c0_i32_0 : i32, i32
  }
  func.func @transform_3(%arg0: i32) -> (i32, i32) {
    %c0_i32 = arith.constant 0 : i32
    %c0_i32_0 = arith.constant 0 : i32
    %c0_i32_1 = arith.constant 0 : i32
    return %c0_i32, %c0_i32_0 : i32, i32
  }
  func.func @transform_4(%arg0: i32) -> (i32, i32) {
    %c0_i32 = arith.constant 0 : i32
    %c0_i32_0 = arith.constant 0 : i32
    %c0_i32_1 = arith.constant 0 : i32
    return %c0_i32, %c0_i32_0 : i32, i32
  }
  func.func @transform_5(%arg0: i32) -> (i32, i32) {
    %c0_i32 = arith.constant 0 : i32
    %c0_i32_0 = arith.constant 0 : i32
    %c0_i32_1 = arith.constant 0 : i32
    return %c0_i32, %c0_i32_0 : i32, i32
  }
  func.func @transform_6(%arg0: i32) -> (i32, i32, i32) {
    %c0_i32 = arith.constant 0 : i32
    %c0_i32_0 = arith.constant 0 : i32
    %c0_i32_1 = arith.constant 0 : i32
    return %arg0, %c0_i32, %c0_i32_0 : i32, i32, i32
  }
}

module attributes {stable_mosaic.version = 11 : i64} {
  func.func @_enc_layer_kernel(%arg0: i32, %arg1: memref<1x8x32xf32, #tpu.memory_space<vmem>>, %arg2: memref<1x1x8xf32, #tpu.memory_space<vmem>>, %arg3: memref<1x32xf32, #tpu.memory_space<vmem>>, %arg4: memref<1x32xf32, #tpu.memory_space<vmem>>, %arg5: memref<2x32x16xbf16, #tpu.memory_space<vmem>>, %arg6: memref<2x1x16xf32, #tpu.memory_space<vmem>>, %arg7: memref<2x32x16xbf16, #tpu.memory_space<vmem>>, %arg8: memref<2x1x16xf32, #tpu.memory_space<vmem>>, %arg9: memref<2x32x16xbf16, #tpu.memory_space<vmem>>, %arg10: memref<2x1x16xf32, #tpu.memory_space<vmem>>, %arg11: memref<2x16x32xbf16, #tpu.memory_space<vmem>>, %arg12: memref<1x32xf32, #tpu.memory_space<vmem>>, %arg13: memref<1x32xf32, #tpu.memory_space<vmem>>, %arg14: memref<1x32xf32, #tpu.memory_space<vmem>>, %arg15: memref<32x64xbf16, #tpu.memory_space<vmem>>, %arg16: memref<1x64xf32, #tpu.memory_space<vmem>>, %arg17: memref<64x32xbf16, #tpu.memory_space<vmem>>, %arg18: memref<1x32xf32, #tpu.memory_space<vmem>>, %arg19: memref<1x8x32xf32, #tpu.memory_space<vmem>>) attributes {dimension_semantics = [#tpu.dimension_semantics<parallel>], iteration_bounds = array<i64: 2>, scalar_prefetch = 0 : i64, scratch_operands = 0 : i64, tpu.core_type = #tpu.core_type<tc>, window_params = [{transform_indices = @transform_0, window_bounds = array<i64: 1, 8, 32>}, {transform_indices = @transform_1, window_bounds = array<i64: 1, 1, 8>}, {pipeline_mode = #tpu.pipeline_mode<synchronous>, transform_indices = @transform_2, window_bounds = array<i64: 1, 32>}, {pipeline_mode = #tpu.pipeline_mode<synchronous>, transform_indices = @transform_3, window_bounds = array<i64: 1, 32>}, {pipeline_mode = #tpu.pipeline_mode<synchronous>, transform_indices = @transform_4, window_bounds = array<i64: 2, 32, 16>}, {pipeline_mode = #tpu.pipeline_mode<synchronous>, transform_indices = @transform_5, window_bounds = array<i64: 2, 1, 16>}, {pipeline_mode = #tpu.pipeline_mode<synchronous>, transform_indices = @transform_6, window_bounds = array<i64: 2, 32, 16>}, {pipeline_mode = #tpu.pipeline_mode<synchronous>, transform_indices = @transform_7, window_bounds = array<i64: 2, 1, 16>}, {pipeline_mode = #tpu.pipeline_mode<synchronous>, transform_indices = @transform_8, window_bounds = array<i64: 2, 32, 16>}, {pipeline_mode = #tpu.pipeline_mode<synchronous>, transform_indices = @transform_9, window_bounds = array<i64: 2, 1, 16>}, {pipeline_mode = #tpu.pipeline_mode<synchronous>, transform_indices = @transform_10, window_bounds = array<i64: 2, 16, 32>}, {pipeline_mode = #tpu.pipeline_mode<synchronous>, transform_indices = @transform_11, window_bounds = array<i64: 1, 32>}, {pipeline_mode = #tpu.pipeline_mode<synchronous>, transform_indices = @transform_12, window_bounds = array<i64: 1, 32>}, {pipeline_mode = #tpu.pipeline_mode<synchronous>, transform_indices = @transform_13, window_bounds = array<i64: 1, 32>}, {pipeline_mode = #tpu.pipeline_mode<synchronous>, transform_indices = @transform_14, window_bounds = array<i64: 32, 64>}, {pipeline_mode = #tpu.pipeline_mode<synchronous>, transform_indices = @transform_15, window_bounds = array<i64: 1, 64>}, {pipeline_mode = #tpu.pipeline_mode<synchronous>, transform_indices = @transform_16, window_bounds = array<i64: 64, 32>}, {pipeline_mode = #tpu.pipeline_mode<synchronous>, transform_indices = @transform_17, window_bounds = array<i64: 1, 32>}, {transform_indices = @transform_18, window_bounds = array<i64: 1, 8, 32>}]} {
    %c0 = arith.constant 0 : index
    %c0_0 = arith.constant 0 : index
    %c0_1 = arith.constant 0 : index
    %0 = vector.load %arg1[%c0, %c0_0, %c0_1] : memref<1x8x32xf32, #tpu.memory_space<vmem>>, vector<1x8x32xf32>
    %1 = vector.shape_cast %0 : vector<1x8x32xf32> to vector<8x32xf32>
    %c0_2 = arith.constant 0 : index
    %c0_3 = arith.constant 0 : index
    %c0_4 = arith.constant 0 : index
    %2 = vector.load %arg2[%c0_2, %c0_3, %c0_4] : memref<1x1x8xf32, #tpu.memory_space<vmem>>, vector<1x1x8xf32>
    %3 = vector.shape_cast %2 : vector<1x1x8xf32> to vector<1x8xf32>
    %cst = arith.constant -1.000000e+30 : f32
    %4 = vector.broadcast %cst : f32 to vector<1x8xf32>
    %5 = arith.mulf %3, %4 : vector<1x8xf32>
    %c0_5 = arith.constant 0 : index
    %c0_6 = arith.constant 0 : index
    %6 = vector.load %arg3[%c0_5, %c0_6] : memref<1x32xf32, #tpu.memory_space<vmem>>, vector<1x32xf32>
    %c0_7 = arith.constant 0 : index
    %c0_8 = arith.constant 0 : index
    %7 = vector.load %arg4[%c0_7, %c0_8] : memref<1x32xf32, #tpu.memory_space<vmem>>, vector<1x32xf32>
    %cst_9 = arith.constant dense<0.000000e+00> : vector<8xf32>
    %8 = vector.multi_reduction <add>, %1, %cst_9 [1] : vector<8x32xf32> to vector<8xf32>
    %9 = vector.shape_cast %8 : vector<8xf32> to vector<8x1xf32>
    %cst_10 = arith.constant 3.200000e+01 : f32
    %10 = vector.broadcast %cst_10 : f32 to vector<8x1xf32>
    %11 = arith.divf %9, %10 : vector<8x1xf32>
    %12 = vector.broadcast %11 : vector<8x1xf32> to vector<8x32xf32>
    %13 = arith.subf %1, %12 : vector<8x32xf32>
    %14 = arith.mulf %13, %13 : vector<8x32xf32>
    %cst_11 = arith.constant dense<0.000000e+00> : vector<8xf32>
    %15 = vector.multi_reduction <add>, %14, %cst_11 [1] : vector<8x32xf32> to vector<8xf32>
    %16 = vector.shape_cast %15 : vector<8xf32> to vector<8x1xf32>
    %cst_12 = arith.constant 3.200000e+01 : f32
    %17 = vector.broadcast %cst_12 : f32 to vector<8x1xf32>
    %18 = arith.divf %16, %17 : vector<8x1xf32>
    %19 = vector.broadcast %11 : vector<8x1xf32> to vector<8x32xf32>
    %20 = arith.subf %1, %19 : vector<8x32xf32>
    %cst_13 = arith.constant 9.99999974E-6 : f32
    %21 = vector.broadcast %cst_13 : f32 to vector<8x1xf32>
    %22 = arith.addf %18, %21 : vector<8x1xf32>
    %23 = math.rsqrt %22 : vector<8x1xf32>
    %24 = vector.broadcast %23 : vector<8x1xf32> to vector<8x32xf32>
    %25 = arith.mulf %20, %24 : vector<8x32xf32>
    %26 = vector.broadcast %6 : vector<1x32xf32> to vector<8x32xf32>
    %27 = arith.mulf %25, %26 : vector<8x32xf32>
    %28 = vector.broadcast %7 : vector<1x32xf32> to vector<8x32xf32>
    %29 = arith.addf %27, %28 : vector<8x32xf32>
    %30 = arith.truncf %29 : vector<8x32xf32> to vector<8x32xbf16>
    %c0_14 = arith.constant 0 : index
    %c0_15 = arith.constant 0 : index
    %c0_16 = arith.constant 0 : index
    %31 = vector.load %arg5[%c0_14, %c0_15, %c0_16] : memref<2x32x16xbf16, #tpu.memory_space<vmem>>, vector<2x32x16xbf16>
    %c0_17 = arith.constant 0 : index
    %c0_18 = arith.constant 0 : index
    %c0_19 = arith.constant 0 : index
    %32 = vector.load %arg6[%c0_17, %c0_18, %c0_19] : memref<2x1x16xf32, #tpu.memory_space<vmem>>, vector<2x1x16xf32>
    %c0_20 = arith.constant 0 : index
    %c0_21 = arith.constant 0 : index
    %c0_22 = arith.constant 0 : index
    %33 = vector.load %arg7[%c0_20, %c0_21, %c0_22] : memref<2x32x16xbf16, #tpu.memory_space<vmem>>, vector<2x32x16xbf16>
    %c0_23 = arith.constant 0 : index
    %c0_24 = arith.constant 0 : index
    %c0_25 = arith.constant 0 : index
    %34 = vector.load %arg8[%c0_23, %c0_24, %c0_25] : memref<2x1x16xf32, #tpu.memory_space<vmem>>, vector<2x1x16xf32>
    %c0_26 = arith.constant 0 : index
    %c0_27 = arith.constant 0 : index
    %c0_28 = arith.constant 0 : index
    %35 = vector.load %arg9[%c0_26, %c0_27, %c0_28] : memref<2x32x16xbf16, #tpu.memory_space<vmem>>, vector<2x32x16xbf16>
    %c0_29 = arith.constant 0 : index
    %c0_30 = arith.constant 0 : index
    %c0_31 = arith.constant 0 : index
    %36 = vector.load %arg10[%c0_29, %c0_30, %c0_31] : memref<2x1x16xf32, #tpu.memory_space<vmem>>, vector<2x1x16xf32>
    %c0_32 = arith.constant 0 : index
    %c0_33 = arith.constant 0 : index
    %c0_34 = arith.constant 0 : index
    %37 = vector.load %arg11[%c0_32, %c0_33, %c0_34] : memref<2x16x32xbf16, #tpu.memory_space<vmem>>, vector<2x16x32xbf16>
    %c0_35 = arith.constant 0 : index
    %c0_36 = arith.constant 0 : index
    %38 = vector.load %arg12[%c0_35, %c0_36] : memref<1x32xf32, #tpu.memory_space<vmem>>, vector<1x32xf32>
    %39 = vector.shape_cast %30 : vector<8x32xbf16> to vector<1x8x32xbf16>
    %40 = vector.shape_cast %39 : vector<1x8x32xbf16> to vector<1x8x32xbf16>
    %41 = vector.broadcast %40 : vector<1x8x32xbf16> to vector<2x8x32xbf16>
    %42 = vector.shape_cast %30 : vector<8x32xbf16> to vector<1x8x32xbf16>
    %43 = vector.shape_cast %42 : vector<1x8x32xbf16> to vector<1x8x32xbf16>
    %44 = vector.broadcast %43 : vector<1x8x32xbf16> to vector<2x8x32xbf16>
    "tpu.trace_start"() <{level = 10 : i32, message = "htd,hde->hte"}> : () -> ()
    %cst_37 = arith.constant dense<0.000000e+00> : vector<2x8x16xf32>
    %45 = tpu.matmul %41, %31, %cst_37 {dimension_numbers = #tpu.dot_dimension_numbers<[2], [1], [1], [2], [0, 0, 0, 1, 1, 2], [0], [0]>} : vector<2x8x32xbf16>, vector<2x32x16xbf16>, vector<2x8x16xf32> -> vector<2x8x16xf32>
    "tpu.trace_stop"() : () -> ()
    %46 = vector.broadcast %32 : vector<2x1x16xf32> to vector<2x8x16xf32>
    %47 = arith.addf %45, %46 : vector<2x8x16xf32>
    "tpu.trace_start"() <{level = 10 : i32, message = "htd,hde->hte"}> : () -> ()
    %cst_38 = arith.constant dense<0.000000e+00> : vector<2x8x16xf32>
    %48 = tpu.matmul %44, %33, %cst_38 {dimension_numbers = #tpu.dot_dimension_numbers<[2], [1], [1], [2], [0, 0, 0, 1, 1, 2], [0], [0]>} : vector<2x8x32xbf16>, vector<2x32x16xbf16>, vector<2x8x16xf32> -> vector<2x8x16xf32>
    "tpu.trace_stop"() : () -> ()
    %49 = vector.broadcast %34 : vector<2x1x16xf32> to vector<2x8x16xf32>
    %50 = arith.addf %48, %49 : vector<2x8x16xf32>
    "tpu.trace_start"() <{level = 10 : i32, message = "htd,hde->hte"}> : () -> ()
    %cst_39 = arith.constant dense<0.000000e+00> : vector<2x8x16xf32>
    %51 = tpu.matmul %44, %35, %cst_39 {dimension_numbers = #tpu.dot_dimension_numbers<[2], [1], [1], [2], [0, 0, 0, 1, 1, 2], [0], [0]>} : vector<2x8x32xbf16>, vector<2x32x16xbf16>, vector<2x8x16xf32> -> vector<2x8x16xf32>
    "tpu.trace_stop"() : () -> ()
    %52 = vector.broadcast %36 : vector<2x1x16xf32> to vector<2x8x16xf32>
    %53 = arith.addf %51, %52 : vector<2x8x16xf32>
    %54 = arith.truncf %47 : vector<2x8x16xf32> to vector<2x8x16xbf16>
    %55 = arith.truncf %50 : vector<2x8x16xf32> to vector<2x8x16xbf16>
    "tpu.trace_start"() <{level = 10 : i32, message = "hqe,hke->hqk"}> : () -> ()
    %cst_40 = arith.constant dense<0.000000e+00> : vector<2x8x8xf32>
    %56 = tpu.matmul %54, %55, %cst_40 {dimension_numbers = #tpu.dot_dimension_numbers<[2], [2], [1], [1], [0, 0, 0, 1, 1, 1], [0], [0]>} : vector<2x8x16xbf16>, vector<2x8x16xbf16>, vector<2x8x8xf32> -> vector<2x8x8xf32>
    "tpu.trace_stop"() : () -> ()
    %57 = vector.shape_cast %5 : vector<1x8xf32> to vector<1x1x8xf32>
    %58 = vector.broadcast %57 : vector<1x1x8xf32> to vector<2x8x8xf32>
    %59 = arith.addf %56, %58 : vector<2x8x8xf32>
    %cst_41 = arith.constant dense<0xFF800000> : vector<2x8xf32>
    %60 = vector.multi_reduction <maximumf>, %59, %cst_41 [2] : vector<2x8x8xf32> to vector<2x8xf32>
    %61 = vector.shape_cast %60 : vector<2x8xf32> to vector<2x8x1xf32>
    %62 = vector.broadcast %61 : vector<2x8x1xf32> to vector<2x8x8xf32>
    %63 = arith.subf %59, %62 : vector<2x8x8xf32>
    %64 = math.exp %63 : vector<2x8x8xf32>
    %cst_42 = arith.constant dense<0.000000e+00> : vector<2x8xf32>
    %65 = vector.multi_reduction <add>, %64, %cst_42 [2] : vector<2x8x8xf32> to vector<2x8xf32>
    %66 = vector.shape_cast %65 : vector<2x8xf32> to vector<2x8x1xf32>
    %67 = arith.truncf %64 : vector<2x8x8xf32> to vector<2x8x8xbf16>
    %68 = arith.truncf %53 : vector<2x8x16xf32> to vector<2x8x16xbf16>
    "tpu.trace_start"() <{level = 10 : i32, message = "hqk,hke->hqe"}> : () -> ()
    %cst_43 = arith.constant dense<0.000000e+00> : vector<2x8x16xf32>
    %69 = tpu.matmul %67, %68, %cst_43 {dimension_numbers = #tpu.dot_dimension_numbers<[2], [1], [1], [2], [0, 0, 0, 1, 1, 2], [0], [0]>} : vector<2x8x8xbf16>, vector<2x8x16xbf16>, vector<2x8x16xf32> -> vector<2x8x16xf32>
    "tpu.trace_stop"() : () -> ()
    %70 = vector.broadcast %66 : vector<2x8x1xf32> to vector<2x8x16xf32>
    %71 = arith.divf %69, %70 : vector<2x8x16xf32>
    %72 = arith.truncf %71 : vector<2x8x16xf32> to vector<2x8x16xbf16>
    "tpu.trace_start"() <{level = 10 : i32, message = "hqe,hef->hqf"}> : () -> ()
    %cst_44 = arith.constant dense<0.000000e+00> : vector<2x8x32xf32>
    %73 = tpu.matmul %72, %37, %cst_44 {dimension_numbers = #tpu.dot_dimension_numbers<[2], [1], [1], [2], [0, 0, 0, 1, 1, 2], [0], [0]>} : vector<2x8x16xbf16>, vector<2x16x32xbf16>, vector<2x8x32xf32> -> vector<2x8x32xf32>
    "tpu.trace_stop"() : () -> ()
    %cst_45 = arith.constant dense<0.000000e+00> : vector<8x32xf32>
    %74 = vector.multi_reduction <add>, %73, %cst_45 [0] : vector<2x8x32xf32> to vector<8x32xf32>
    %75 = vector.broadcast %38 : vector<1x32xf32> to vector<8x32xf32>
    %76 = arith.addf %74, %75 : vector<8x32xf32>
    %77 = arith.addf %1, %76 : vector<8x32xf32>
    %c0_46 = arith.constant 0 : index
    %c0_47 = arith.constant 0 : index
    %78 = vector.load %arg13[%c0_46, %c0_47] : memref<1x32xf32, #tpu.memory_space<vmem>>, vector<1x32xf32>
    %c0_48 = arith.constant 0 : index
    %c0_49 = arith.constant 0 : index
    %79 = vector.load %arg14[%c0_48, %c0_49] : memref<1x32xf32, #tpu.memory_space<vmem>>, vector<1x32xf32>
    %cst_50 = arith.constant dense<0.000000e+00> : vector<8xf32>
    %80 = vector.multi_reduction <add>, %77, %cst_50 [1] : vector<8x32xf32> to vector<8xf32>
    %81 = vector.shape_cast %80 : vector<8xf32> to vector<8x1xf32>
    %cst_51 = arith.constant 3.200000e+01 : f32
    %82 = vector.broadcast %cst_51 : f32 to vector<8x1xf32>
    %83 = arith.divf %81, %82 : vector<8x1xf32>
    %84 = vector.broadcast %83 : vector<8x1xf32> to vector<8x32xf32>
    %85 = arith.subf %77, %84 : vector<8x32xf32>
    %86 = arith.mulf %85, %85 : vector<8x32xf32>
    %cst_52 = arith.constant dense<0.000000e+00> : vector<8xf32>
    %87 = vector.multi_reduction <add>, %86, %cst_52 [1] : vector<8x32xf32> to vector<8xf32>
    %88 = vector.shape_cast %87 : vector<8xf32> to vector<8x1xf32>
    %cst_53 = arith.constant 3.200000e+01 : f32
    %89 = vector.broadcast %cst_53 : f32 to vector<8x1xf32>
    %90 = arith.divf %88, %89 : vector<8x1xf32>
    %91 = vector.broadcast %83 : vector<8x1xf32> to vector<8x32xf32>
    %92 = arith.subf %77, %91 : vector<8x32xf32>
    %cst_54 = arith.constant 9.99999974E-6 : f32
    %93 = vector.broadcast %cst_54 : f32 to vector<8x1xf32>
    %94 = arith.addf %90, %93 : vector<8x1xf32>
    %95 = math.rsqrt %94 : vector<8x1xf32>
    %96 = vector.broadcast %95 : vector<8x1xf32> to vector<8x32xf32>
    %97 = arith.mulf %92, %96 : vector<8x32xf32>
    %98 = vector.broadcast %78 : vector<1x32xf32> to vector<8x32xf32>
    %99 = arith.mulf %97, %98 : vector<8x32xf32>
    %100 = vector.broadcast %79 : vector<1x32xf32> to vector<8x32xf32>
    %101 = arith.addf %99, %100 : vector<8x32xf32>
    %102 = arith.truncf %101 : vector<8x32xf32> to vector<8x32xbf16>
    %c0_55 = arith.constant 0 : index
    %c0_56 = arith.constant 0 : index
    %103 = vector.load %arg15[%c0_55, %c0_56] : memref<32x64xbf16, #tpu.memory_space<vmem>>, vector<32x64xbf16>
    %cst_57 = arith.constant dense<0.000000e+00> : vector<8x64xf32>
    %104 = tpu.matmul %102, %103, %cst_57 {dimension_numbers = #tpu.dot_dimension_numbers<[1], [0], [0], [1], [0, 0, 1, 1], [], []>} : vector<8x32xbf16>, vector<32x64xbf16>, vector<8x64xf32> -> vector<8x64xf32>
    %c0_58 = arith.constant 0 : index
    %c0_59 = arith.constant 0 : index
    %105 = vector.load %arg16[%c0_58, %c0_59] : memref<1x64xf32, #tpu.memory_space<vmem>>, vector<1x64xf32>
    %106 = vector.broadcast %105 : vector<1x64xf32> to vector<8x64xf32>
    %107 = arith.addf %104, %106 : vector<8x64xf32>
    %cst_60 = arith.constant 0.000000e+00 : f32
    %108 = vector.broadcast %cst_60 : f32 to vector<8x64xf32>
    %109 = arith.maximumf %107, %108 : vector<8x64xf32>
    %110 = arith.truncf %109 : vector<8x64xf32> to vector<8x64xbf16>
    %c0_61 = arith.constant 0 : index
    %c0_62 = arith.constant 0 : index
    %111 = vector.load %arg17[%c0_61, %c0_62] : memref<64x32xbf16, #tpu.memory_space<vmem>>, vector<64x32xbf16>
    %cst_63 = arith.constant dense<0.000000e+00> : vector<8x32xf32>
    %112 = tpu.matmul %110, %111, %cst_63 {dimension_numbers = #tpu.dot_dimension_numbers<[1], [0], [0], [1], [0, 0, 1, 1], [], []>} : vector<8x64xbf16>, vector<64x32xbf16>, vector<8x32xf32> -> vector<8x32xf32>
    %c0_64 = arith.constant 0 : index
    %c0_65 = arith.constant 0 : index
    %113 = vector.load %arg18[%c0_64, %c0_65] : memref<1x32xf32, #tpu.memory_space<vmem>>, vector<1x32xf32>
    %114 = vector.broadcast %113 : vector<1x32xf32> to vector<8x32xf32>
    %115 = arith.addf %112, %114 : vector<8x32xf32>
    %116 = arith.addf %77, %115 : vector<8x32xf32>
    %c0_66 = arith.constant 0 : index
    %c0_67 = arith.constant 0 : index
    %c0_68 = arith.constant 0 : index
    %117 = vector.load %arg19[%c0_66, %c0_67, %c0_68] : memref<1x8x32xf32, #tpu.memory_space<vmem>>, vector<1x8x32xf32>
    %118 = vector.shape_cast %117 : vector<1x8x32xf32> to vector<8x32xf32>
    %119 = vector.shape_cast %116 : vector<8x32xf32> to vector<1x8x32xf32>
    tpu.vector_store %arg19[%c0_66, %c0_67, %c0_68], %119 {strides = array<i32>} : memref<1x8x32xf32, #tpu.memory_space<vmem>>, vector<1x8x32xf32>,
    return
  }
  func.func @transform_0(%arg0: i32) -> (i32, i32, i32) {
    %c0_i32 = arith.constant 0 : i32
    %c0_i32_0 = arith.constant 0 : i32
    %c0_i32_1 = arith.constant 0 : i32
    return %arg0, %c0_i32, %c0_i32_0 : i32, i32, i32
  }
  func.func @transform_1(%arg0: i32) -> (i32, i32, i32) {
    %c0_i32 = arith.constant 0 : i32
    %c0_i32_0 = arith.constant 0 : i32
    %c0_i32_1 = arith.constant 0 : i32
    return %arg0, %c0_i32, %c0_i32_0 : i32, i32, i32
  }
  func.func @transform_2(%arg0: i32) -> (i32, i32) {
    %c0_i32 = arith.constant 0 : i32
    %c0_i32_0 = arith.constant 0 : i32
    %c0_i32_1 = arith.constant 0 : i32
    return %c0_i32, %c0_i32_0 : i32, i32
  }
  func.func @transform_3(%arg0: i32) -> (i32, i32) {
    %c0_i32 = arith.constant 0 : i32
    %c0_i32_0 = arith.constant 0 : i32
    %c0_i32_1 = arith.constant 0 : i32
    return %c0_i32, %c0_i32_0 : i32, i32
  }
  func.func @transform_4(%arg0: i32) -> (i32, i32, i32) {
    %c0_i32 = arith.constant 0 : i32
    %c0_i32_0 = arith.constant 0 : i32
    %c0_i32_1 = arith.constant 0 : i32
    %c0_i32_2 = arith.constant 0 : i32
    return %c0_i32, %c0_i32_0, %c0_i32_1 : i32, i32, i32
  }
  func.func @transform_5(%arg0: i32) -> (i32, i32, i32) {
    %c0_i32 = arith.constant 0 : i32
    %c0_i32_0 = arith.constant 0 : i32
    %c0_i32_1 = arith.constant 0 : i32
    %c0_i32_2 = arith.constant 0 : i32
    return %c0_i32, %c0_i32_0, %c0_i32_1 : i32, i32, i32
  }
  func.func @transform_6(%arg0: i32) -> (i32, i32, i32) {
    %c0_i32 = arith.constant 0 : i32
    %c0_i32_0 = arith.constant 0 : i32
    %c0_i32_1 = arith.constant 0 : i32
    %c0_i32_2 = arith.constant 0 : i32
    return %c0_i32, %c0_i32_0, %c0_i32_1 : i32, i32, i32
  }
  func.func @transform_7(%arg0: i32) -> (i32, i32, i32) {
    %c0_i32 = arith.constant 0 : i32
    %c0_i32_0 = arith.constant 0 : i32
    %c0_i32_1 = arith.constant 0 : i32
    %c0_i32_2 = arith.constant 0 : i32
    return %c0_i32, %c0_i32_0, %c0_i32_1 : i32, i32, i32
  }
  func.func @transform_8(%arg0: i32) -> (i32, i32, i32) {
    %c0_i32 = arith.constant 0 : i32
    %c0_i32_0 = arith.constant 0 : i32
    %c0_i32_1 = arith.constant 0 : i32
    %c0_i32_2 = arith.constant 0 : i32
    return %c0_i32, %c0_i32_0, %c0_i32_1 : i32, i32, i32
  }
  func.func @transform_9(%arg0: i32) -> (i32, i32, i32) {
    %c0_i32 = arith.constant 0 : i32
    %c0_i32_0 = arith.constant 0 : i32
    %c0_i32_1 = arith.constant 0 : i32
    %c0_i32_2 = arith.constant 0 : i32
    return %c0_i32, %c0_i32_0, %c0_i32_1 : i32, i32, i32
  }
  func.func @transform_10(%arg0: i32) -> (i32, i32, i32) {
    %c0_i32 = arith.constant 0 : i32
    %c0_i32_0 = arith.constant 0 : i32
    %c0_i32_1 = arith.constant 0 : i32
    %c0_i32_2 = arith.constant 0 : i32
    return %c0_i32, %c0_i32_0, %c0_i32_1 : i32, i32, i32
  }
  func.func @transform_11(%arg0: i32) -> (i32, i32) {
    %c0_i32 = arith.constant 0 : i32
    %c0_i32_0 = arith.constant 0 : i32
    %c0_i32_1 = arith.constant 0 : i32
    return %c0_i32, %c0_i32_0 : i32, i32
  }
  func.func @transform_12(%arg0: i32) -> (i32, i32) {
    %c0_i32 = arith.constant 0 : i32
    %c0_i32_0 = arith.constant 0 : i32
    %c0_i32_1 = arith.constant 0 : i32
    return %c0_i32, %c0_i32_0 : i32, i32
  }
  func.func @transform_13(%arg0: i32) -> (i32, i32) {
    %c0_i32 = arith.constant 0 : i32
    %c0_i32_0 = arith.constant 0 : i32
    %c0_i32_1 = arith.constant 0 : i32
    return %c0_i32, %c0_i32_0 : i32, i32
  }
  func.func @transform_14(%arg0: i32) -> (i32, i32) {
    %c0_i32 = arith.constant 0 : i32
    %c0_i32_0 = arith.constant 0 : i32
    %c0_i32_1 = arith.constant 0 : i32
    return %c0_i32, %c0_i32_0 : i32, i32
  }
  func.func @transform_15(%arg0: i32) -> (i32, i32) {
    %c0_i32 = arith.constant 0 : i32
    %c0_i32_0 = arith.constant 0 : i32
    %c0_i32_1 = arith.constant 0 : i32
    return %c0_i32, %c0_i32_0 : i32, i32
  }
  func.func @transform_16(%arg0: i32) -> (i32, i32) {
    %c0_i32 = arith.constant 0 : i32
    %c0_i32_0 = arith.constant 0 : i32
    %c0_i32_1 = arith.constant 0 : i32
    return %c0_i32, %c0_i32_0 : i32, i32
  }
  func.func @transform_17(%arg0: i32) -> (i32, i32) {
    %c0_i32 = arith.constant 0 : i32
    %c0_i32_0 = arith.constant 0 : i32
    %c0_i32_1 = arith.constant 0 : i32
    return %c0_i32, %c0_i32_0 : i32, i32
  }
  func.func @transform_18(%arg0: i32) -> (i32, i32, i32) {
    %c0_i32 = arith.constant 0 : i32
    %c0_i32_0 = arith.constant 0 : i32
    %c0_i32_1 = arith.constant 0 : i32
    return %arg0, %c0_i32, %c0_i32_0 : i32, i32, i32
  }
}

module attributes {stable_mosaic.version = 11 : i64} {
  func.func @_ln_logits_kernel(%arg0: i32, %arg1: memref<1x8x32xf32, #tpu.memory_space<vmem>>, %arg2: memref<1x32xf32, #tpu.memory_space<vmem>>, %arg3: memref<1x32xf32, #tpu.memory_space<vmem>>, %arg4: memref<32x128xbf16, #tpu.memory_space<vmem>>, %arg5: memref<1x8x128xf32, #tpu.memory_space<vmem>>) attributes {dimension_semantics = [#tpu.dimension_semantics<parallel>], iteration_bounds = array<i64: 2>, scalar_prefetch = 0 : i64, scratch_operands = 0 : i64, tpu.core_type = #tpu.core_type<tc>, window_params = [{transform_indices = @transform_0, window_bounds = array<i64: 1, 8, 32>}, {pipeline_mode = #tpu.pipeline_mode<synchronous>, transform_indices = @transform_1, window_bounds = array<i64: 1, 32>}, {pipeline_mode = #tpu.pipeline_mode<synchronous>, transform_indices = @transform_2, window_bounds = array<i64: 1, 32>}, {pipeline_mode = #tpu.pipeline_mode<synchronous>, transform_indices = @transform_3, window_bounds = array<i64: 32, 128>}, {transform_indices = @transform_4, window_bounds = array<i64: 1, 8, 128>}]} {
    %c0 = arith.constant 0 : index
    %c0_0 = arith.constant 0 : index
    %c0_1 = arith.constant 0 : index
    %0 = vector.load %arg1[%c0, %c0_0, %c0_1] : memref<1x8x32xf32, #tpu.memory_space<vmem>>, vector<1x8x32xf32>
    %1 = vector.shape_cast %0 : vector<1x8x32xf32> to vector<8x32xf32>
    %c0_2 = arith.constant 0 : index
    %c0_3 = arith.constant 0 : index
    %2 = vector.load %arg2[%c0_2, %c0_3] : memref<1x32xf32, #tpu.memory_space<vmem>>, vector<1x32xf32>
    %c0_4 = arith.constant 0 : index
    %c0_5 = arith.constant 0 : index
    %3 = vector.load %arg3[%c0_4, %c0_5] : memref<1x32xf32, #tpu.memory_space<vmem>>, vector<1x32xf32>
    %cst = arith.constant dense<0.000000e+00> : vector<8xf32>
    %4 = vector.multi_reduction <add>, %1, %cst [1] : vector<8x32xf32> to vector<8xf32>
    %5 = vector.shape_cast %4 : vector<8xf32> to vector<8x1xf32>
    %cst_6 = arith.constant 3.200000e+01 : f32
    %6 = vector.broadcast %cst_6 : f32 to vector<8x1xf32>
    %7 = arith.divf %5, %6 : vector<8x1xf32>
    %8 = vector.broadcast %7 : vector<8x1xf32> to vector<8x32xf32>
    %9 = arith.subf %1, %8 : vector<8x32xf32>
    %10 = arith.mulf %9, %9 : vector<8x32xf32>
    %cst_7 = arith.constant dense<0.000000e+00> : vector<8xf32>
    %11 = vector.multi_reduction <add>, %10, %cst_7 [1] : vector<8x32xf32> to vector<8xf32>
    %12 = vector.shape_cast %11 : vector<8xf32> to vector<8x1xf32>
    %cst_8 = arith.constant 3.200000e+01 : f32
    %13 = vector.broadcast %cst_8 : f32 to vector<8x1xf32>
    %14 = arith.divf %12, %13 : vector<8x1xf32>
    %15 = vector.broadcast %7 : vector<8x1xf32> to vector<8x32xf32>
    %16 = arith.subf %1, %15 : vector<8x32xf32>
    %cst_9 = arith.constant 9.99999974E-6 : f32
    %17 = vector.broadcast %cst_9 : f32 to vector<8x1xf32>
    %18 = arith.addf %14, %17 : vector<8x1xf32>
    %19 = math.rsqrt %18 : vector<8x1xf32>
    %20 = vector.broadcast %19 : vector<8x1xf32> to vector<8x32xf32>
    %21 = arith.mulf %16, %20 : vector<8x32xf32>
    %22 = vector.broadcast %2 : vector<1x32xf32> to vector<8x32xf32>
    %23 = arith.mulf %21, %22 : vector<8x32xf32>
    %24 = vector.broadcast %3 : vector<1x32xf32> to vector<8x32xf32>
    %25 = arith.addf %23, %24 : vector<8x32xf32>
    %26 = arith.truncf %25 : vector<8x32xf32> to vector<8x32xbf16>
    %c0_10 = arith.constant 0 : index
    %c0_11 = arith.constant 0 : index
    %27 = vector.load %arg4[%c0_10, %c0_11] : memref<32x128xbf16, #tpu.memory_space<vmem>>, vector<32x128xbf16>
    %cst_12 = arith.constant dense<0.000000e+00> : vector<8x128xf32>
    %28 = tpu.matmul %26, %27, %cst_12 {dimension_numbers = #tpu.dot_dimension_numbers<[1], [0], [0], [1], [0, 0, 1, 1], [], []>} : vector<8x32xbf16>, vector<32x128xbf16>, vector<8x128xf32> -> vector<8x128xf32>
    %c0_13 = arith.constant 0 : index
    %c0_14 = arith.constant 0 : index
    %c0_15 = arith.constant 0 : index
    %29 = vector.load %arg5[%c0_13, %c0_14, %c0_15] : memref<1x8x128xf32, #tpu.memory_space<vmem>>, vector<1x8x128xf32>
    %30 = vector.shape_cast %29 : vector<1x8x128xf32> to vector<8x128xf32>
    %31 = vector.shape_cast %28 : vector<8x128xf32> to vector<1x8x128xf32>
    tpu.vector_store %arg5[%c0_13, %c0_14, %c0_15], %31 {strides = array<i32>} : memref<1x8x128xf32, #tpu.memory_space<vmem>>, vector<1x8x128xf32>,
    return
  }
  func.func @transform_0(%arg0: i32) -> (i32, i32, i32) {
    %c0_i32 = arith.constant 0 : i32
    %c0_i32_0 = arith.constant 0 : i32
    %c0_i32_1 = arith.constant 0 : i32
    return %arg0, %c0_i32, %c0_i32_0 : i32, i32, i32
  }
  func.func @transform_1(%arg0: i32) -> (i32, i32) {
    %c0_i32 = arith.constant 0 : i32
    %c0_i32_0 = arith.constant 0 : i32
    %c0_i32_1 = arith.constant 0 : i32
    return %c0_i32, %c0_i32_0 : i32, i32
  }
  func.func @transform_2(%arg0: i32) -> (i32, i32) {
    %c0_i32 = arith.constant 0 : i32
    %c0_i32_0 = arith.constant 0 : i32
    %c0_i32_1 = arith.constant 0 : i32
    return %c0_i32, %c0_i32_0 : i32, i32
  }
  func.func @transform_3(%arg0: i32) -> (i32, i32) {
    %c0_i32 = arith.constant 0 : i32
    %c0_i32_0 = arith.constant 0 : i32
    %c0_i32_1 = arith.constant 0 : i32
    return %c0_i32, %c0_i32_0 : i32, i32
  }
  func.func @transform_4(%arg0: i32) -> (i32, i32, i32) {
    %c0_i32 = arith.constant 0 : i32
    %c0_i32_0 = arith.constant 0 : i32
    %c0_i32_1 = arith.constant 0 : i32
    return %arg0, %c0_i32, %c0_i32_0 : i32, i32, i32
  }
}

module attributes {stable_mosaic.version = 11 : i64} {
  func.func @_dec_layer_kernel(%arg0: i32, %arg1: memref<1x8x32xf32, #tpu.memory_space<vmem>>, %arg2: memref<1x8x32xf32, #tpu.memory_space<vmem>>, %arg3: memref<1x1x8xf32, #tpu.memory_space<vmem>>, %arg4: memref<1x1x8xf32, #tpu.memory_space<vmem>>, %arg5: memref<1x32xf32, #tpu.memory_space<vmem>>, %arg6: memref<1x32xf32, #tpu.memory_space<vmem>>, %arg7: memref<2x32x16xbf16, #tpu.memory_space<vmem>>, %arg8: memref<2x1x16xf32, #tpu.memory_space<vmem>>, %arg9: memref<2x32x16xbf16, #tpu.memory_space<vmem>>, %arg10: memref<2x1x16xf32, #tpu.memory_space<vmem>>, %arg11: memref<2x32x16xbf16, #tpu.memory_space<vmem>>, %arg12: memref<2x1x16xf32, #tpu.memory_space<vmem>>, %arg13: memref<2x16x32xbf16, #tpu.memory_space<vmem>>, %arg14: memref<1x32xf32, #tpu.memory_space<vmem>>, %arg15: memref<1x32xf32, #tpu.memory_space<vmem>>, %arg16: memref<1x32xf32, #tpu.memory_space<vmem>>, %arg17: memref<1x32xf32, #tpu.memory_space<vmem>>, %arg18: memref<1x32xf32, #tpu.memory_space<vmem>>, %arg19: memref<2x32x16xbf16, #tpu.memory_space<vmem>>, %arg20: memref<2x1x16xf32, #tpu.memory_space<vmem>>, %arg21: memref<2x32x16xbf16, #tpu.memory_space<vmem>>, %arg22: memref<2x1x16xf32, #tpu.memory_space<vmem>>, %arg23: memref<2x32x16xbf16, #tpu.memory_space<vmem>>, %arg24: memref<2x1x16xf32, #tpu.memory_space<vmem>>, %arg25: memref<2x16x32xbf16, #tpu.memory_space<vmem>>, %arg26: memref<1x32xf32, #tpu.memory_space<vmem>>, %arg27: memref<1x32xf32, #tpu.memory_space<vmem>>, %arg28: memref<1x32xf32, #tpu.memory_space<vmem>>, %arg29: memref<32x64xbf16, #tpu.memory_space<vmem>>, %arg30: memref<1x64xf32, #tpu.memory_space<vmem>>, %arg31: memref<64x32xbf16, #tpu.memory_space<vmem>>, %arg32: memref<1x32xf32, #tpu.memory_space<vmem>>, %arg33: memref<1x8x32xf32, #tpu.memory_space<vmem>>) attributes {dimension_semantics = [#tpu.dimension_semantics<parallel>], iteration_bounds = array<i64: 2>, scalar_prefetch = 0 : i64, scratch_operands = 0 : i64, tpu.core_type = #tpu.core_type<tc>, window_params = [{transform_indices = @transform_0, window_bounds = array<i64: 1, 8, 32>}, {transform_indices = @transform_1, window_bounds = array<i64: 1, 8, 32>}, {transform_indices = @transform_2, window_bounds = array<i64: 1, 1, 8>}, {transform_indices = @transform_3, window_bounds = array<i64: 1, 1, 8>}, {pipeline_mode = #tpu.pipeline_mode<synchronous>, transform_indices = @transform_4, window_bounds = array<i64: 1, 32>}, {pipeline_mode = #tpu.pipeline_mode<synchronous>, transform_indices = @transform_5, window_bounds = array<i64: 1, 32>}, {pipeline_mode = #tpu.pipeline_mode<synchronous>, transform_indices = @transform_6, window_bounds = array<i64: 2, 32, 16>}, {pipeline_mode = #tpu.pipeline_mode<synchronous>, transform_indices = @transform_7, window_bounds = array<i64: 2, 1, 16>}, {pipeline_mode = #tpu.pipeline_mode<synchronous>, transform_indices = @transform_8, window_bounds = array<i64: 2, 32, 16>}, {pipeline_mode = #tpu.pipeline_mode<synchronous>, transform_indices = @transform_9, window_bounds = array<i64: 2, 1, 16>}, {pipeline_mode = #tpu.pipeline_mode<synchronous>, transform_indices = @transform_10, window_bounds = array<i64: 2, 32, 16>}, {pipeline_mode = #tpu.pipeline_mode<synchronous>, transform_indices = @transform_11, window_bounds = array<i64: 2, 1, 16>}, {pipeline_mode = #tpu.pipeline_mode<synchronous>, transform_indices = @transform_12, window_bounds = array<i64: 2, 16, 32>}, {pipeline_mode = #tpu.pipeline_mode<synchronous>, transform_indices = @transform_13, window_bounds = array<i64: 1, 32>}, {pipeline_mode = #tpu.pipeline_mode<synchronous>, transform_indices = @transform_14, window_bounds = array<i64: 1, 32>}, {pipeline_mode = #tpu.pipeline_mode<synchronous>, transform_indices = @transform_15, window_bounds = array<i64: 1, 32>}, {pipeline_mode = #tpu.pipeline_mode<synchronous>, transform_indices = @transform_16, window_bounds = array<i64: 1, 32>}, {pipeline_mode = #tpu.pipeline_mode<synchronous>, transform_indices = @transform_17, window_bounds = array<i64: 1, 32>}, {pipeline_mode = #tpu.pipeline_mode<synchronous>, transform_indices = @transform_18, window_bounds = array<i64: 2, 32, 16>}, {pipeline_mode = #tpu.pipeline_mode<synchronous>, transform_indices = @transform_19, window_bounds = array<i64: 2, 1, 16>}, {pipeline_mode = #tpu.pipeline_mode<synchronous>, transform_indices = @transform_20, window_bounds = array<i64: 2, 32, 16>}, {pipeline_mode = #tpu.pipeline_mode<synchronous>, transform_indices = @transform_21, window_bounds = array<i64: 2, 1, 16>}, {pipeline_mode = #tpu.pipeline_mode<synchronous>, transform_indices = @transform_22, window_bounds = array<i64: 2, 32, 16>}, {pipeline_mode = #tpu.pipeline_mode<synchronous>, transform_indices = @transform_23, window_bounds = array<i64: 2, 1, 16>}, {pipeline_mode = #tpu.pipeline_mode<synchronous>, transform_indices = @transform_24, window_bounds = array<i64: 2, 16, 32>}, {pipeline_mode = #tpu.pipeline_mode<synchronous>, transform_indices = @transform_25, window_bounds = array<i64: 1, 32>}, {pipeline_mode = #tpu.pipeline_mode<synchronous>, transform_indices = @transform_26, window_bounds = array<i64: 1, 32>}, {pipeline_mode = #tpu.pipeline_mode<synchronous>, transform_indices = @transform_27, window_bounds = array<i64: 1, 32>}, {pipeline_mode = #tpu.pipeline_mode<synchronous>, transform_indices = @transform_28, window_bounds = array<i64: 32, 64>}, {pipeline_mode = #tpu.pipeline_mode<synchronous>, transform_indices = @transform_29, window_bounds = array<i64: 1, 64>}, {pipeline_mode = #tpu.pipeline_mode<synchronous>, transform_indices = @transform_30, window_bounds = array<i64: 64, 32>}, {pipeline_mode = #tpu.pipeline_mode<synchronous>, transform_indices = @transform_31, window_bounds = array<i64: 1, 32>}, {transform_indices = @transform_32, window_bounds = array<i64: 1, 8, 32>}]} {
    %c0 = arith.constant 0 : index
    %c0_0 = arith.constant 0 : index
    %c0_1 = arith.constant 0 : index
    %0 = vector.load %arg1[%c0, %c0_0, %c0_1] : memref<1x8x32xf32, #tpu.memory_space<vmem>>, vector<1x8x32xf32>
    %1 = vector.shape_cast %0 : vector<1x8x32xf32> to vector<8x32xf32>
    %c0_2 = arith.constant 0 : index
    %c0_3 = arith.constant 0 : index
    %c0_4 = arith.constant 0 : index
    %2 = vector.load %arg3[%c0_2, %c0_3, %c0_4] : memref<1x1x8xf32, #tpu.memory_space<vmem>>, vector<1x1x8xf32>
    %3 = vector.shape_cast %2 : vector<1x1x8xf32> to vector<1x8xf32>
    %cst = arith.constant -1.000000e+30 : f32
    %4 = vector.broadcast %cst : f32 to vector<1x8xf32>
    %5 = arith.mulf %3, %4 : vector<1x8xf32>
    %c0_5 = arith.constant 0 : index
    %c0_6 = arith.constant 0 : index
    %c0_7 = arith.constant 0 : index
    %6 = vector.load %arg4[%c0_5, %c0_6, %c0_7] : memref<1x1x8xf32, #tpu.memory_space<vmem>>, vector<1x1x8xf32>
    %7 = vector.shape_cast %6 : vector<1x1x8xf32> to vector<1x8xf32>
    %cst_8 = arith.constant -1.000000e+30 : f32
    %8 = vector.broadcast %cst_8 : f32 to vector<1x8xf32>
    %9 = arith.mulf %7, %8 : vector<1x8xf32>
    %c0_9 = arith.constant 0 : index
    %c0_10 = arith.constant 0 : index
    %10 = vector.load %arg5[%c0_9, %c0_10] : memref<1x32xf32, #tpu.memory_space<vmem>>, vector<1x32xf32>
    %c0_11 = arith.constant 0 : index
    %c0_12 = arith.constant 0 : index
    %11 = vector.load %arg6[%c0_11, %c0_12] : memref<1x32xf32, #tpu.memory_space<vmem>>, vector<1x32xf32>
    %cst_13 = arith.constant dense<0.000000e+00> : vector<8xf32>
    %12 = vector.multi_reduction <add>, %1, %cst_13 [1] : vector<8x32xf32> to vector<8xf32>
    %13 = vector.shape_cast %12 : vector<8xf32> to vector<8x1xf32>
    %cst_14 = arith.constant 3.200000e+01 : f32
    %14 = vector.broadcast %cst_14 : f32 to vector<8x1xf32>
    %15 = arith.divf %13, %14 : vector<8x1xf32>
    %16 = vector.broadcast %15 : vector<8x1xf32> to vector<8x32xf32>
    %17 = arith.subf %1, %16 : vector<8x32xf32>
    %18 = arith.mulf %17, %17 : vector<8x32xf32>
    %cst_15 = arith.constant dense<0.000000e+00> : vector<8xf32>
    %19 = vector.multi_reduction <add>, %18, %cst_15 [1] : vector<8x32xf32> to vector<8xf32>
    %20 = vector.shape_cast %19 : vector<8xf32> to vector<8x1xf32>
    %cst_16 = arith.constant 3.200000e+01 : f32
    %21 = vector.broadcast %cst_16 : f32 to vector<8x1xf32>
    %22 = arith.divf %20, %21 : vector<8x1xf32>
    %23 = vector.broadcast %15 : vector<8x1xf32> to vector<8x32xf32>
    %24 = arith.subf %1, %23 : vector<8x32xf32>
    %cst_17 = arith.constant 9.99999974E-6 : f32
    %25 = vector.broadcast %cst_17 : f32 to vector<8x1xf32>
    %26 = arith.addf %22, %25 : vector<8x1xf32>
    %27 = math.rsqrt %26 : vector<8x1xf32>
    %28 = vector.broadcast %27 : vector<8x1xf32> to vector<8x32xf32>
    %29 = arith.mulf %24, %28 : vector<8x32xf32>
    %30 = vector.broadcast %10 : vector<1x32xf32> to vector<8x32xf32>
    %31 = arith.mulf %29, %30 : vector<8x32xf32>
    %32 = vector.broadcast %11 : vector<1x32xf32> to vector<8x32xf32>
    %33 = arith.addf %31, %32 : vector<8x32xf32>
    %34 = arith.truncf %33 : vector<8x32xf32> to vector<8x32xbf16>
    %c0_18 = arith.constant 0 : index
    %c0_19 = arith.constant 0 : index
    %c0_20 = arith.constant 0 : index
    %35 = vector.load %arg7[%c0_18, %c0_19, %c0_20] : memref<2x32x16xbf16, #tpu.memory_space<vmem>>, vector<2x32x16xbf16>
    %c0_21 = arith.constant 0 : index
    %c0_22 = arith.constant 0 : index
    %c0_23 = arith.constant 0 : index
    %36 = vector.load %arg8[%c0_21, %c0_22, %c0_23] : memref<2x1x16xf32, #tpu.memory_space<vmem>>, vector<2x1x16xf32>
    %c0_24 = arith.constant 0 : index
    %c0_25 = arith.constant 0 : index
    %c0_26 = arith.constant 0 : index
    %37 = vector.load %arg9[%c0_24, %c0_25, %c0_26] : memref<2x32x16xbf16, #tpu.memory_space<vmem>>, vector<2x32x16xbf16>
    %c0_27 = arith.constant 0 : index
    %c0_28 = arith.constant 0 : index
    %c0_29 = arith.constant 0 : index
    %38 = vector.load %arg10[%c0_27, %c0_28, %c0_29] : memref<2x1x16xf32, #tpu.memory_space<vmem>>, vector<2x1x16xf32>
    %c0_30 = arith.constant 0 : index
    %c0_31 = arith.constant 0 : index
    %c0_32 = arith.constant 0 : index
    %39 = vector.load %arg11[%c0_30, %c0_31, %c0_32] : memref<2x32x16xbf16, #tpu.memory_space<vmem>>, vector<2x32x16xbf16>
    %c0_33 = arith.constant 0 : index
    %c0_34 = arith.constant 0 : index
    %c0_35 = arith.constant 0 : index
    %40 = vector.load %arg12[%c0_33, %c0_34, %c0_35] : memref<2x1x16xf32, #tpu.memory_space<vmem>>, vector<2x1x16xf32>
    %c0_36 = arith.constant 0 : index
    %c0_37 = arith.constant 0 : index
    %c0_38 = arith.constant 0 : index
    %41 = vector.load %arg13[%c0_36, %c0_37, %c0_38] : memref<2x16x32xbf16, #tpu.memory_space<vmem>>, vector<2x16x32xbf16>
    %c0_39 = arith.constant 0 : index
    %c0_40 = arith.constant 0 : index
    %42 = vector.load %arg14[%c0_39, %c0_40] : memref<1x32xf32, #tpu.memory_space<vmem>>, vector<1x32xf32>
    %43 = vector.shape_cast %34 : vector<8x32xbf16> to vector<1x8x32xbf16>
    %44 = vector.shape_cast %43 : vector<1x8x32xbf16> to vector<1x8x32xbf16>
    %45 = vector.broadcast %44 : vector<1x8x32xbf16> to vector<2x8x32xbf16>
    %46 = vector.shape_cast %34 : vector<8x32xbf16> to vector<1x8x32xbf16>
    %47 = vector.shape_cast %46 : vector<1x8x32xbf16> to vector<1x8x32xbf16>
    %48 = vector.broadcast %47 : vector<1x8x32xbf16> to vector<2x8x32xbf16>
    "tpu.trace_start"() <{level = 10 : i32, message = "htd,hde->hte"}> : () -> ()
    %cst_41 = arith.constant dense<0.000000e+00> : vector<2x8x16xf32>
    %49 = tpu.matmul %45, %35, %cst_41 {dimension_numbers = #tpu.dot_dimension_numbers<[2], [1], [1], [2], [0, 0, 0, 1, 1, 2], [0], [0]>} : vector<2x8x32xbf16>, vector<2x32x16xbf16>, vector<2x8x16xf32> -> vector<2x8x16xf32>
    "tpu.trace_stop"() : () -> ()
    %50 = vector.broadcast %36 : vector<2x1x16xf32> to vector<2x8x16xf32>
    %51 = arith.addf %49, %50 : vector<2x8x16xf32>
    "tpu.trace_start"() <{level = 10 : i32, message = "htd,hde->hte"}> : () -> ()
    %cst_42 = arith.constant dense<0.000000e+00> : vector<2x8x16xf32>
    %52 = tpu.matmul %48, %37, %cst_42 {dimension_numbers = #tpu.dot_dimension_numbers<[2], [1], [1], [2], [0, 0, 0, 1, 1, 2], [0], [0]>} : vector<2x8x32xbf16>, vector<2x32x16xbf16>, vector<2x8x16xf32> -> vector<2x8x16xf32>
    "tpu.trace_stop"() : () -> ()
    %53 = vector.broadcast %38 : vector<2x1x16xf32> to vector<2x8x16xf32>
    %54 = arith.addf %52, %53 : vector<2x8x16xf32>
    "tpu.trace_start"() <{level = 10 : i32, message = "htd,hde->hte"}> : () -> ()
    %cst_43 = arith.constant dense<0.000000e+00> : vector<2x8x16xf32>
    %55 = tpu.matmul %48, %39, %cst_43 {dimension_numbers = #tpu.dot_dimension_numbers<[2], [1], [1], [2], [0, 0, 0, 1, 1, 2], [0], [0]>} : vector<2x8x32xbf16>, vector<2x32x16xbf16>, vector<2x8x16xf32> -> vector<2x8x16xf32>
    "tpu.trace_stop"() : () -> ()
    %56 = vector.broadcast %40 : vector<2x1x16xf32> to vector<2x8x16xf32>
    %57 = arith.addf %55, %56 : vector<2x8x16xf32>
    %58 = arith.truncf %51 : vector<2x8x16xf32> to vector<2x8x16xbf16>
    %59 = arith.truncf %54 : vector<2x8x16xf32> to vector<2x8x16xbf16>
    "tpu.trace_start"() <{level = 10 : i32, message = "hqe,hke->hqk"}> : () -> ()
    %cst_44 = arith.constant dense<0.000000e+00> : vector<2x8x8xf32>
    %60 = tpu.matmul %58, %59, %cst_44 {dimension_numbers = #tpu.dot_dimension_numbers<[2], [2], [1], [1], [0, 0, 0, 1, 1, 1], [0], [0]>} : vector<2x8x16xbf16>, vector<2x8x16xbf16>, vector<2x8x8xf32> -> vector<2x8x8xf32>
    "tpu.trace_stop"() : () -> ()
    %61 = tpu.iota {dimensions = array<i32: 0>} : vector<8x8xi32>
    %62 = tpu.iota {dimensions = array<i32: 1>} : vector<8x8xi32>
    %63 = arith.cmpi sgt, %62, %61 : vector<8x8xi32>
    %cst_45 = arith.constant -1.000000e+30 : f32
    %cst_46 = arith.constant 0.000000e+00 : f32
    %64 = vector.broadcast %cst_45 : f32 to vector<8x8xf32>
    %65 = vector.broadcast %cst_46 : f32 to vector<8x8xf32>
    %66 = arith.select %63, %64, %65 : vector<8x8xi1>, vector<8x8xf32>
    %67 = vector.broadcast %5 : vector<1x8xf32> to vector<8x8xf32>
    %68 = arith.addf %67, %66 : vector<8x8xf32>
    %69 = vector.shape_cast %68 : vector<8x8xf32> to vector<1x8x8xf32>
    %70 = vector.broadcast %69 : vector<1x8x8xf32> to vector<2x8x8xf32>
    %71 = arith.addf %60, %70 : vector<2x8x8xf32>
    %cst_47 = arith.constant dense<0xFF800000> : vector<2x8xf32>
    %72 = vector.multi_reduction <maximumf>, %71, %cst_47 [2] : vector<2x8x8xf32> to vector<2x8xf32>
    %73 = vector.shape_cast %72 : vector<2x8xf32> to vector<2x8x1xf32>
    %74 = vector.broadcast %73 : vector<2x8x1xf32> to vector<2x8x8xf32>
    %75 = arith.subf %71, %74 : vector<2x8x8xf32>
    %76 = math.exp %75 : vector<2x8x8xf32>
    %cst_48 = arith.constant dense<0.000000e+00> : vector<2x8xf32>
    %77 = vector.multi_reduction <add>, %76, %cst_48 [2] : vector<2x8x8xf32> to vector<2x8xf32>
    %78 = vector.shape_cast %77 : vector<2x8xf32> to vector<2x8x1xf32>
    %79 = arith.truncf %76 : vector<2x8x8xf32> to vector<2x8x8xbf16>
    %80 = arith.truncf %57 : vector<2x8x16xf32> to vector<2x8x16xbf16>
    "tpu.trace_start"() <{level = 10 : i32, message = "hqk,hke->hqe"}> : () -> ()
    %cst_49 = arith.constant dense<0.000000e+00> : vector<2x8x16xf32>
    %81 = tpu.matmul %79, %80, %cst_49 {dimension_numbers = #tpu.dot_dimension_numbers<[2], [1], [1], [2], [0, 0, 0, 1, 1, 2], [0], [0]>} : vector<2x8x8xbf16>, vector<2x8x16xbf16>, vector<2x8x16xf32> -> vector<2x8x16xf32>
    "tpu.trace_stop"() : () -> ()
    %82 = vector.broadcast %78 : vector<2x8x1xf32> to vector<2x8x16xf32>
    %83 = arith.divf %81, %82 : vector<2x8x16xf32>
    %84 = arith.truncf %83 : vector<2x8x16xf32> to vector<2x8x16xbf16>
    "tpu.trace_start"() <{level = 10 : i32, message = "hqe,hef->hqf"}> : () -> ()
    %cst_50 = arith.constant dense<0.000000e+00> : vector<2x8x32xf32>
    %85 = tpu.matmul %84, %41, %cst_50 {dimension_numbers = #tpu.dot_dimension_numbers<[2], [1], [1], [2], [0, 0, 0, 1, 1, 2], [0], [0]>} : vector<2x8x16xbf16>, vector<2x16x32xbf16>, vector<2x8x32xf32> -> vector<2x8x32xf32>
    "tpu.trace_stop"() : () -> ()
    %cst_51 = arith.constant dense<0.000000e+00> : vector<8x32xf32>
    %86 = vector.multi_reduction <add>, %85, %cst_51 [0] : vector<2x8x32xf32> to vector<8x32xf32>
    %87 = vector.broadcast %42 : vector<1x32xf32> to vector<8x32xf32>
    %88 = arith.addf %86, %87 : vector<8x32xf32>
    %89 = arith.addf %1, %88 : vector<8x32xf32>
    %c0_52 = arith.constant 0 : index
    %c0_53 = arith.constant 0 : index
    %90 = vector.load %arg15[%c0_52, %c0_53] : memref<1x32xf32, #tpu.memory_space<vmem>>, vector<1x32xf32>
    %c0_54 = arith.constant 0 : index
    %c0_55 = arith.constant 0 : index
    %91 = vector.load %arg16[%c0_54, %c0_55] : memref<1x32xf32, #tpu.memory_space<vmem>>, vector<1x32xf32>
    %cst_56 = arith.constant dense<0.000000e+00> : vector<8xf32>
    %92 = vector.multi_reduction <add>, %89, %cst_56 [1] : vector<8x32xf32> to vector<8xf32>
    %93 = vector.shape_cast %92 : vector<8xf32> to vector<8x1xf32>
    %cst_57 = arith.constant 3.200000e+01 : f32
    %94 = vector.broadcast %cst_57 : f32 to vector<8x1xf32>
    %95 = arith.divf %93, %94 : vector<8x1xf32>
    %96 = vector.broadcast %95 : vector<8x1xf32> to vector<8x32xf32>
    %97 = arith.subf %89, %96 : vector<8x32xf32>
    %98 = arith.mulf %97, %97 : vector<8x32xf32>
    %cst_58 = arith.constant dense<0.000000e+00> : vector<8xf32>
    %99 = vector.multi_reduction <add>, %98, %cst_58 [1] : vector<8x32xf32> to vector<8xf32>
    %100 = vector.shape_cast %99 : vector<8xf32> to vector<8x1xf32>
    %cst_59 = arith.constant 3.200000e+01 : f32
    %101 = vector.broadcast %cst_59 : f32 to vector<8x1xf32>
    %102 = arith.divf %100, %101 : vector<8x1xf32>
    %103 = vector.broadcast %95 : vector<8x1xf32> to vector<8x32xf32>
    %104 = arith.subf %89, %103 : vector<8x32xf32>
    %cst_60 = arith.constant 9.99999974E-6 : f32
    %105 = vector.broadcast %cst_60 : f32 to vector<8x1xf32>
    %106 = arith.addf %102, %105 : vector<8x1xf32>
    %107 = math.rsqrt %106 : vector<8x1xf32>
    %108 = vector.broadcast %107 : vector<8x1xf32> to vector<8x32xf32>
    %109 = arith.mulf %104, %108 : vector<8x32xf32>
    %110 = vector.broadcast %90 : vector<1x32xf32> to vector<8x32xf32>
    %111 = arith.mulf %109, %110 : vector<8x32xf32>
    %112 = vector.broadcast %91 : vector<1x32xf32> to vector<8x32xf32>
    %113 = arith.addf %111, %112 : vector<8x32xf32>
    %114 = arith.truncf %113 : vector<8x32xf32> to vector<8x32xbf16>
    %c0_61 = arith.constant 0 : index
    %c0_62 = arith.constant 0 : index
    %c0_63 = arith.constant 0 : index
    %115 = vector.load %arg2[%c0_61, %c0_62, %c0_63] : memref<1x8x32xf32, #tpu.memory_space<vmem>>, vector<1x8x32xf32>
    %116 = vector.shape_cast %115 : vector<1x8x32xf32> to vector<8x32xf32>
    %c0_64 = arith.constant 0 : index
    %c0_65 = arith.constant 0 : index
    %117 = vector.load %arg17[%c0_64, %c0_65] : memref<1x32xf32, #tpu.memory_space<vmem>>, vector<1x32xf32>
    %c0_66 = arith.constant 0 : index
    %c0_67 = arith.constant 0 : index
    %118 = vector.load %arg18[%c0_66, %c0_67] : memref<1x32xf32, #tpu.memory_space<vmem>>, vector<1x32xf32>
    %cst_68 = arith.constant dense<0.000000e+00> : vector<8xf32>
    %119 = vector.multi_reduction <add>, %116, %cst_68 [1] : vector<8x32xf32> to vector<8xf32>
    %120 = vector.shape_cast %119 : vector<8xf32> to vector<8x1xf32>
    %cst_69 = arith.constant 3.200000e+01 : f32
    %121 = vector.broadcast %cst_69 : f32 to vector<8x1xf32>
    %122 = arith.divf %120, %121 : vector<8x1xf32>
    %123 = vector.broadcast %122 : vector<8x1xf32> to vector<8x32xf32>
    %124 = arith.subf %116, %123 : vector<8x32xf32>
    %125 = arith.mulf %124, %124 : vector<8x32xf32>
    %cst_70 = arith.constant dense<0.000000e+00> : vector<8xf32>
    %126 = vector.multi_reduction <add>, %125, %cst_70 [1] : vector<8x32xf32> to vector<8xf32>
    %127 = vector.shape_cast %126 : vector<8xf32> to vector<8x1xf32>
    %cst_71 = arith.constant 3.200000e+01 : f32
    %128 = vector.broadcast %cst_71 : f32 to vector<8x1xf32>
    %129 = arith.divf %127, %128 : vector<8x1xf32>
    %130 = vector.broadcast %122 : vector<8x1xf32> to vector<8x32xf32>
    %131 = arith.subf %116, %130 : vector<8x32xf32>
    %cst_72 = arith.constant 9.99999974E-6 : f32
    %132 = vector.broadcast %cst_72 : f32 to vector<8x1xf32>
    %133 = arith.addf %129, %132 : vector<8x1xf32>
    %134 = math.rsqrt %133 : vector<8x1xf32>
    %135 = vector.broadcast %134 : vector<8x1xf32> to vector<8x32xf32>
    %136 = arith.mulf %131, %135 : vector<8x32xf32>
    %137 = vector.broadcast %117 : vector<1x32xf32> to vector<8x32xf32>
    %138 = arith.mulf %136, %137 : vector<8x32xf32>
    %139 = vector.broadcast %118 : vector<1x32xf32> to vector<8x32xf32>
    %140 = arith.addf %138, %139 : vector<8x32xf32>
    %141 = arith.truncf %140 : vector<8x32xf32> to vector<8x32xbf16>
    %c0_73 = arith.constant 0 : index
    %c0_74 = arith.constant 0 : index
    %c0_75 = arith.constant 0 : index
    %142 = vector.load %arg19[%c0_73, %c0_74, %c0_75] : memref<2x32x16xbf16, #tpu.memory_space<vmem>>, vector<2x32x16xbf16>
    %c0_76 = arith.constant 0 : index
    %c0_77 = arith.constant 0 : index
    %c0_78 = arith.constant 0 : index
    %143 = vector.load %arg20[%c0_76, %c0_77, %c0_78] : memref<2x1x16xf32, #tpu.memory_space<vmem>>, vector<2x1x16xf32>
    %c0_79 = arith.constant 0 : index
    %c0_80 = arith.constant 0 : index
    %c0_81 = arith.constant 0 : index
    %144 = vector.load %arg21[%c0_79, %c0_80, %c0_81] : memref<2x32x16xbf16, #tpu.memory_space<vmem>>, vector<2x32x16xbf16>
    %c0_82 = arith.constant 0 : index
    %c0_83 = arith.constant 0 : index
    %c0_84 = arith.constant 0 : index
    %145 = vector.load %arg22[%c0_82, %c0_83, %c0_84] : memref<2x1x16xf32, #tpu.memory_space<vmem>>, vector<2x1x16xf32>
    %c0_85 = arith.constant 0 : index
    %c0_86 = arith.constant 0 : index
    %c0_87 = arith.constant 0 : index
    %146 = vector.load %arg23[%c0_85, %c0_86, %c0_87] : memref<2x32x16xbf16, #tpu.memory_space<vmem>>, vector<2x32x16xbf16>
    %c0_88 = arith.constant 0 : index
    %c0_89 = arith.constant 0 : index
    %c0_90 = arith.constant 0 : index
    %147 = vector.load %arg24[%c0_88, %c0_89, %c0_90] : memref<2x1x16xf32, #tpu.memory_space<vmem>>, vector<2x1x16xf32>
    %c0_91 = arith.constant 0 : index
    %c0_92 = arith.constant 0 : index
    %c0_93 = arith.constant 0 : index
    %148 = vector.load %arg25[%c0_91, %c0_92, %c0_93] : memref<2x16x32xbf16, #tpu.memory_space<vmem>>, vector<2x16x32xbf16>
    %c0_94 = arith.constant 0 : index
    %c0_95 = arith.constant 0 : index
    %149 = vector.load %arg26[%c0_94, %c0_95] : memref<1x32xf32, #tpu.memory_space<vmem>>, vector<1x32xf32>
    %150 = vector.shape_cast %114 : vector<8x32xbf16> to vector<1x8x32xbf16>
    %151 = vector.shape_cast %150 : vector<1x8x32xbf16> to vector<1x8x32xbf16>
    %152 = vector.broadcast %151 : vector<1x8x32xbf16> to vector<2x8x32xbf16>
    %153 = vector.shape_cast %141 : vector<8x32xbf16> to vector<1x8x32xbf16>
    %154 = vector.shape_cast %153 : vector<1x8x32xbf16> to vector<1x8x32xbf16>
    %155 = vector.broadcast %154 : vector<1x8x32xbf16> to vector<2x8x32xbf16>
    "tpu.trace_start"() <{level = 10 : i32, message = "htd,hde->hte"}> : () -> ()
    %cst_96 = arith.constant dense<0.000000e+00> : vector<2x8x16xf32>
    %156 = tpu.matmul %152, %142, %cst_96 {dimension_numbers = #tpu.dot_dimension_numbers<[2], [1], [1], [2], [0, 0, 0, 1, 1, 2], [0], [0]>} : vector<2x8x32xbf16>, vector<2x32x16xbf16>, vector<2x8x16xf32> -> vector<2x8x16xf32>
    "tpu.trace_stop"() : () -> ()
    %157 = vector.broadcast %143 : vector<2x1x16xf32> to vector<2x8x16xf32>
    %158 = arith.addf %156, %157 : vector<2x8x16xf32>
    "tpu.trace_start"() <{level = 10 : i32, message = "htd,hde->hte"}> : () -> ()
    %cst_97 = arith.constant dense<0.000000e+00> : vector<2x8x16xf32>
    %159 = tpu.matmul %155, %144, %cst_97 {dimension_numbers = #tpu.dot_dimension_numbers<[2], [1], [1], [2], [0, 0, 0, 1, 1, 2], [0], [0]>} : vector<2x8x32xbf16>, vector<2x32x16xbf16>, vector<2x8x16xf32> -> vector<2x8x16xf32>
    "tpu.trace_stop"() : () -> ()
    %160 = vector.broadcast %145 : vector<2x1x16xf32> to vector<2x8x16xf32>
    %161 = arith.addf %159, %160 : vector<2x8x16xf32>
    "tpu.trace_start"() <{level = 10 : i32, message = "htd,hde->hte"}> : () -> ()
    %cst_98 = arith.constant dense<0.000000e+00> : vector<2x8x16xf32>
    %162 = tpu.matmul %155, %146, %cst_98 {dimension_numbers = #tpu.dot_dimension_numbers<[2], [1], [1], [2], [0, 0, 0, 1, 1, 2], [0], [0]>} : vector<2x8x32xbf16>, vector<2x32x16xbf16>, vector<2x8x16xf32> -> vector<2x8x16xf32>
    "tpu.trace_stop"() : () -> ()
    %163 = vector.broadcast %147 : vector<2x1x16xf32> to vector<2x8x16xf32>
    %164 = arith.addf %162, %163 : vector<2x8x16xf32>
    %165 = arith.truncf %158 : vector<2x8x16xf32> to vector<2x8x16xbf16>
    %166 = arith.truncf %161 : vector<2x8x16xf32> to vector<2x8x16xbf16>
    "tpu.trace_start"() <{level = 10 : i32, message = "hqe,hke->hqk"}> : () -> ()
    %cst_99 = arith.constant dense<0.000000e+00> : vector<2x8x8xf32>
    %167 = tpu.matmul %165, %166, %cst_99 {dimension_numbers = #tpu.dot_dimension_numbers<[2], [2], [1], [1], [0, 0, 0, 1, 1, 1], [0], [0]>} : vector<2x8x16xbf16>, vector<2x8x16xbf16>, vector<2x8x8xf32> -> vector<2x8x8xf32>
    "tpu.trace_stop"() : () -> ()
    %168 = vector.shape_cast %9 : vector<1x8xf32> to vector<1x1x8xf32>
    %169 = vector.broadcast %168 : vector<1x1x8xf32> to vector<2x8x8xf32>
    %170 = arith.addf %167, %169 : vector<2x8x8xf32>
    %cst_100 = arith.constant dense<0xFF800000> : vector<2x8xf32>
    %171 = vector.multi_reduction <maximumf>, %170, %cst_100 [2] : vector<2x8x8xf32> to vector<2x8xf32>
    %172 = vector.shape_cast %171 : vector<2x8xf32> to vector<2x8x1xf32>
    %173 = vector.broadcast %172 : vector<2x8x1xf32> to vector<2x8x8xf32>
    %174 = arith.subf %170, %173 : vector<2x8x8xf32>
    %175 = math.exp %174 : vector<2x8x8xf32>
    %cst_101 = arith.constant dense<0.000000e+00> : vector<2x8xf32>
    %176 = vector.multi_reduction <add>, %175, %cst_101 [2] : vector<2x8x8xf32> to vector<2x8xf32>
    %177 = vector.shape_cast %176 : vector<2x8xf32> to vector<2x8x1xf32>
    %178 = arith.truncf %175 : vector<2x8x8xf32> to vector<2x8x8xbf16>
    %179 = arith.truncf %164 : vector<2x8x16xf32> to vector<2x8x16xbf16>
    "tpu.trace_start"() <{level = 10 : i32, message = "hqk,hke->hqe"}> : () -> ()
    %cst_102 = arith.constant dense<0.000000e+00> : vector<2x8x16xf32>
    %180 = tpu.matmul %178, %179, %cst_102 {dimension_numbers = #tpu.dot_dimension_numbers<[2], [1], [1], [2], [0, 0, 0, 1, 1, 2], [0], [0]>} : vector<2x8x8xbf16>, vector<2x8x16xbf16>, vector<2x8x16xf32> -> vector<2x8x16xf32>
    "tpu.trace_stop"() : () -> ()
    %181 = vector.broadcast %177 : vector<2x8x1xf32> to vector<2x8x16xf32>
    %182 = arith.divf %180, %181 : vector<2x8x16xf32>
    %183 = arith.truncf %182 : vector<2x8x16xf32> to vector<2x8x16xbf16>
    "tpu.trace_start"() <{level = 10 : i32, message = "hqe,hef->hqf"}> : () -> ()
    %cst_103 = arith.constant dense<0.000000e+00> : vector<2x8x32xf32>
    %184 = tpu.matmul %183, %148, %cst_103 {dimension_numbers = #tpu.dot_dimension_numbers<[2], [1], [1], [2], [0, 0, 0, 1, 1, 2], [0], [0]>} : vector<2x8x16xbf16>, vector<2x16x32xbf16>, vector<2x8x32xf32> -> vector<2x8x32xf32>
    "tpu.trace_stop"() : () -> ()
    %cst_104 = arith.constant dense<0.000000e+00> : vector<8x32xf32>
    %185 = vector.multi_reduction <add>, %184, %cst_104 [0] : vector<2x8x32xf32> to vector<8x32xf32>
    %186 = vector.broadcast %149 : vector<1x32xf32> to vector<8x32xf32>
    %187 = arith.addf %185, %186 : vector<8x32xf32>
    %188 = arith.addf %89, %187 : vector<8x32xf32>
    %c0_105 = arith.constant 0 : index
    %c0_106 = arith.constant 0 : index
    %189 = vector.load %arg27[%c0_105, %c0_106] : memref<1x32xf32, #tpu.memory_space<vmem>>, vector<1x32xf32>
    %c0_107 = arith.constant 0 : index
    %c0_108 = arith.constant 0 : index
    %190 = vector.load %arg28[%c0_107, %c0_108] : memref<1x32xf32, #tpu.memory_space<vmem>>, vector<1x32xf32>
    %cst_109 = arith.constant dense<0.000000e+00> : vector<8xf32>
    %191 = vector.multi_reduction <add>, %188, %cst_109 [1] : vector<8x32xf32> to vector<8xf32>
    %192 = vector.shape_cast %191 : vector<8xf32> to vector<8x1xf32>
    %cst_110 = arith.constant 3.200000e+01 : f32
    %193 = vector.broadcast %cst_110 : f32 to vector<8x1xf32>
    %194 = arith.divf %192, %193 : vector<8x1xf32>
    %195 = vector.broadcast %194 : vector<8x1xf32> to vector<8x32xf32>
    %196 = arith.subf %188, %195 : vector<8x32xf32>
    %197 = arith.mulf %196, %196 : vector<8x32xf32>
    %cst_111 = arith.constant dense<0.000000e+00> : vector<8xf32>
    %198 = vector.multi_reduction <add>, %197, %cst_111 [1] : vector<8x32xf32> to vector<8xf32>
    %199 = vector.shape_cast %198 : vector<8xf32> to vector<8x1xf32>
    %cst_112 = arith.constant 3.200000e+01 : f32
    %200 = vector.broadcast %cst_112 : f32 to vector<8x1xf32>
    %201 = arith.divf %199, %200 : vector<8x1xf32>
    %202 = vector.broadcast %194 : vector<8x1xf32> to vector<8x32xf32>
    %203 = arith.subf %188, %202 : vector<8x32xf32>
    %cst_113 = arith.constant 9.99999974E-6 : f32
    %204 = vector.broadcast %cst_113 : f32 to vector<8x1xf32>
    %205 = arith.addf %201, %204 : vector<8x1xf32>
    %206 = math.rsqrt %205 : vector<8x1xf32>
    %207 = vector.broadcast %206 : vector<8x1xf32> to vector<8x32xf32>
    %208 = arith.mulf %203, %207 : vector<8x32xf32>
    %209 = vector.broadcast %189 : vector<1x32xf32> to vector<8x32xf32>
    %210 = arith.mulf %208, %209 : vector<8x32xf32>
    %211 = vector.broadcast %190 : vector<1x32xf32> to vector<8x32xf32>
    %212 = arith.addf %210, %211 : vector<8x32xf32>
    %213 = arith.truncf %212 : vector<8x32xf32> to vector<8x32xbf16>
    %c0_114 = arith.constant 0 : index
    %c0_115 = arith.constant 0 : index
    %214 = vector.load %arg29[%c0_114, %c0_115] : memref<32x64xbf16, #tpu.memory_space<vmem>>, vector<32x64xbf16>
    %cst_116 = arith.constant dense<0.000000e+00> : vector<8x64xf32>
    %215 = tpu.matmul %213, %214, %cst_116 {dimension_numbers = #tpu.dot_dimension_numbers<[1], [0], [0], [1], [0, 0, 1, 1], [], []>} : vector<8x32xbf16>, vector<32x64xbf16>, vector<8x64xf32> -> vector<8x64xf32>
    %c0_117 = arith.constant 0 : index
    %c0_118 = arith.constant 0 : index
    %216 = vector.load %arg30[%c0_117, %c0_118] : memref<1x64xf32, #tpu.memory_space<vmem>>, vector<1x64xf32>
    %217 = vector.broadcast %216 : vector<1x64xf32> to vector<8x64xf32>
    %218 = arith.addf %215, %217 : vector<8x64xf32>
    %cst_119 = arith.constant 0.000000e+00 : f32
    %219 = vector.broadcast %cst_119 : f32 to vector<8x64xf32>
    %220 = arith.maximumf %218, %219 : vector<8x64xf32>
    %221 = arith.truncf %220 : vector<8x64xf32> to vector<8x64xbf16>
    %c0_120 = arith.constant 0 : index
    %c0_121 = arith.constant 0 : index
    %222 = vector.load %arg31[%c0_120, %c0_121] : memref<64x32xbf16, #tpu.memory_space<vmem>>, vector<64x32xbf16>
    %cst_122 = arith.constant dense<0.000000e+00> : vector<8x32xf32>
    %223 = tpu.matmul %221, %222, %cst_122 {dimension_numbers = #tpu.dot_dimension_numbers<[1], [0], [0], [1], [0, 0, 1, 1], [], []>} : vector<8x64xbf16>, vector<64x32xbf16>, vector<8x32xf32> -> vector<8x32xf32>
    %c0_123 = arith.constant 0 : index
    %c0_124 = arith.constant 0 : index
    %224 = vector.load %arg32[%c0_123, %c0_124] : memref<1x32xf32, #tpu.memory_space<vmem>>, vector<1x32xf32>
    %225 = vector.broadcast %224 : vector<1x32xf32> to vector<8x32xf32>
    %226 = arith.addf %223, %225 : vector<8x32xf32>
    %227 = arith.addf %188, %226 : vector<8x32xf32>
    %c0_125 = arith.constant 0 : index
    %c0_126 = arith.constant 0 : index
    %c0_127 = arith.constant 0 : index
    %228 = vector.load %arg33[%c0_125, %c0_126, %c0_127] : memref<1x8x32xf32, #tpu.memory_space<vmem>>, vector<1x8x32xf32>
    %229 = vector.shape_cast %228 : vector<1x8x32xf32> to vector<8x32xf32>
    %230 = vector.shape_cast %227 : vector<8x32xf32> to vector<1x8x32xf32>
    tpu.vector_store %arg33[%c0_125, %c0_126, %c0_127], %230 {strides = array<i32>} : memref<1x8x32xf32, #tpu.memory_space<vmem>>, vector<1x8x32xf32>,
    return
  }
  func.func @transform_0(%arg0: i32) -> (i32, i32, i32) {
    %c0_i32 = arith.constant 0 : i32
    %c0_i32_0 = arith.constant 0 : i32
    %c0_i32_1 = arith.constant 0 : i32
    return %arg0, %c0_i32, %c0_i32_0 : i32, i32, i32
  }
  func.func @transform_1(%arg0: i32) -> (i32, i32, i32) {
    %c0_i32 = arith.constant 0 : i32
    %c0_i32_0 = arith.constant 0 : i32
    %c0_i32_1 = arith.constant 0 : i32
    return %arg0, %c0_i32, %c0_i32_0 : i32, i32, i32
  }
  func.func @transform_2(%arg0: i32) -> (i32, i32, i32) {
    %c0_i32 = arith.constant 0 : i32
    %c0_i32_0 = arith.constant 0 : i32
    %c0_i32_1 = arith.constant 0 : i32
    return %arg0, %c0_i32, %c0_i32_0 : i32, i32, i32
  }
  func.func @transform_3(%arg0: i32) -> (i32, i32, i32) {
    %c0_i32 = arith.constant 0 : i32
    %c0_i32_0 = arith.constant 0 : i32
    %c0_i32_1 = arith.constant 0 : i32
    return %arg0, %c0_i32, %c0_i32_0 : i32, i32, i32
  }
  func.func @transform_4(%arg0: i32) -> (i32, i32) {
    %c0_i32 = arith.constant 0 : i32
    %c0_i32_0 = arith.constant 0 : i32
    %c0_i32_1 = arith.constant 0 : i32
    return %c0_i32, %c0_i32_0 : i32, i32
  }
  func.func @transform_5(%arg0: i32) -> (i32, i32) {
    %c0_i32 = arith.constant 0 : i32
    %c0_i32_0 = arith.constant 0 : i32
    %c0_i32_1 = arith.constant 0 : i32
    return %c0_i32, %c0_i32_0 : i32, i32
  }
  func.func @transform_6(%arg0: i32) -> (i32, i32, i32) {
    %c0_i32 = arith.constant 0 : i32
    %c0_i32_0 = arith.constant 0 : i32
    %c0_i32_1 = arith.constant 0 : i32
    %c0_i32_2 = arith.constant 0 : i32
    return %c0_i32, %c0_i32_0, %c0_i32_1 : i32, i32, i32
  }
  func.func @transform_7(%arg0: i32) -> (i32, i32, i32) {
    %c0_i32 = arith.constant 0 : i32
    %c0_i32_0 = arith.constant 0 : i32
    %c0_i32_1 = arith.constant 0 : i32
    %c0_i32_2 = arith.constant 0 : i32
    return %c0_i32, %c0_i32_0, %c0_i32_1 : i32, i32, i32
  }
  func.func @transform_8(%arg0: i32) -> (i32, i32, i32) {
    %c0_i32 = arith.constant 0 : i32
    %c0_i32_0 = arith.constant 0 : i32
    %c0_i32_1 = arith.constant 0 : i32
    %c0_i32_2 = arith.constant 0 : i32
    return %c0_i32, %c0_i32_0, %c0_i32_1 : i32, i32, i32
  }
  func.func @transform_9(%arg0: i32) -> (i32, i32, i32) {
    %c0_i32 = arith.constant 0 : i32
    %c0_i32_0 = arith.constant 0 : i32
    %c0_i32_1 = arith.constant 0 : i32
    %c0_i32_2 = arith.constant 0 : i32
    return %c0_i32, %c0_i32_0, %c0_i32_1 : i32, i32, i32
  }
  func.func @transform_10(%arg0: i32) -> (i32, i32, i32) {
    %c0_i32 = arith.constant 0 : i32
    %c0_i32_0 = arith.constant 0 : i32
    %c0_i32_1 = arith.constant 0 : i32
    %c0_i32_2 = arith.constant 0 : i32
    return %c0_i32, %c0_i32_0, %c0_i32_1 : i32, i32, i32
  }
  func.func @transform_11(%arg0: i32) -> (i32, i32, i32) {
    %c0_i32 = arith.constant 0 : i32
    %c0_i32_0 = arith.constant 0 : i32
    %c0_i32_1 = arith.constant 0 : i32
    %c0_i32_2 = arith.constant 0 : i32
    return %c0_i32, %c0_i32_0, %c0_i32_1 : i32, i32, i32
  }
  func.func @transform_12(%arg0: i32) -> (i32, i32, i32) {
    %c0_i32 = arith.constant 0 : i32
    %c0_i32_0 = arith.constant 0 : i32
    %c0_i32_1 = arith.constant 0 : i32
    %c0_i32_2 = arith.constant 0 : i32
    return %c0_i32, %c0_i32_0, %c0_i32_1 : i32, i32, i32
  }
  func.func @transform_13(%arg0: i32) -> (i32, i32) {
    %c0_i32 = arith.constant 0 : i32
    %c0_i32_0 = arith.constant 0 : i32
    %c0_i32_1 = arith.constant 0 : i32
    return %c0_i32, %c0_i32_0 : i32, i32
  }
  func.func @transform_14(%arg0: i32) -> (i32, i32) {
    %c0_i32 = arith.constant 0 : i32
    %c0_i32_0 = arith.constant 0 : i32
    %c0_i32_1 = arith.constant 0 : i32
    return %c0_i32, %c0_i32_0 : i32, i32
  }
  func.func @transform_15(%arg0: i32) -> (i32, i32) {
    %c0_i32 = arith.constant 0 : i32
    %c0_i32_0 = arith.constant 0 : i32
    %c0_i32_1 = arith.constant 0 : i32
    return %c0_i32, %c0_i32_0 : i32, i32
  }
  func.func @transform_16(%arg0: i32) -> (i32, i32) {
    %c0_i32 = arith.constant 0 : i32
    %c0_i32_0 = arith.constant 0 : i32
    %c0_i32_1 = arith.constant 0 : i32
    return %c0_i32, %c0_i32_0 : i32, i32
  }
  func.func @transform_17(%arg0: i32) -> (i32, i32) {
    %c0_i32 = arith.constant 0 : i32
    %c0_i32_0 = arith.constant 0 : i32
    %c0_i32_1 = arith.constant 0 : i32
    return %c0_i32, %c0_i32_0 : i32, i32
  }
  func.func @transform_18(%arg0: i32) -> (i32, i32, i32) {
    %c0_i32 = arith.constant 0 : i32
    %c0_i32_0 = arith.constant 0 : i32
    %c0_i32_1 = arith.constant 0 : i32
    %c0_i32_2 = arith.constant 0 : i32
    return %c0_i32, %c0_i32_0, %c0_i32_1 : i32, i32, i32
  }
  func.func @transform_19(%arg0: i32) -> (i32, i32, i32) {
    %c0_i32 = arith.constant 0 : i32
    %c0_i32_0 = arith.constant 0 : i32
    %c0_i32_1 = arith.constant 0 : i32
    %c0_i32_2 = arith.constant 0 : i32
    return %c0_i32, %c0_i32_0, %c0_i32_1 : i32, i32, i32
  }
  func.func @transform_20(%arg0: i32) -> (i32, i32, i32) {
    %c0_i32 = arith.constant 0 : i32
    %c0_i32_0 = arith.constant 0 : i32
    %c0_i32_1 = arith.constant 0 : i32
    %c0_i32_2 = arith.constant 0 : i32
    return %c0_i32, %c0_i32_0, %c0_i32_1 : i32, i32, i32
  }
  func.func @transform_21(%arg0: i32) -> (i32, i32, i32) {
    %c0_i32 = arith.constant 0 : i32
    %c0_i32_0 = arith.constant 0 : i32
    %c0_i32_1 = arith.constant 0 : i32
    %c0_i32_2 = arith.constant 0 : i32
    return %c0_i32, %c0_i32_0, %c0_i32_1 : i32, i32, i32
  }
  func.func @transform_22(%arg0: i32) -> (i32, i32, i32) {
    %c0_i32 = arith.constant 0 : i32
    %c0_i32_0 = arith.constant 0 : i32
    %c0_i32_1 = arith.constant 0 : i32
    %c0_i32_2 = arith.constant 0 : i32
    return %c0_i32, %c0_i32_0, %c0_i32_1 : i32, i32, i32
  }
  func.func @transform_23(%arg0: i32) -> (i32, i32, i32) {
    %c0_i32 = arith.constant 0 : i32
    %c0_i32_0 = arith.constant 0 : i32
    %c0_i32_1 = arith.constant 0 : i32
    %c0_i32_2 = arith.constant 0 : i32
    return %c0_i32, %c0_i32_0, %c0_i32_1 : i32, i32, i32
  }
  func.func @transform_24(%arg0: i32) -> (i32, i32, i32) {
    %c0_i32 = arith.constant 0 : i32
    %c0_i32_0 = arith.constant 0 : i32
    %c0_i32_1 = arith.constant 0 : i32
    %c0_i32_2 = arith.constant 0 : i32
    return %c0_i32, %c0_i32_0, %c0_i32_1 : i32, i32, i32
  }
  func.func @transform_25(%arg0: i32) -> (i32, i32) {
    %c0_i32 = arith.constant 0 : i32
    %c0_i32_0 = arith.constant 0 : i32
    %c0_i32_1 = arith.constant 0 : i32
    return %c0_i32, %c0_i32_0 : i32, i32
  }
  func.func @transform_26(%arg0: i32) -> (i32, i32) {
    %c0_i32 = arith.constant 0 : i32
    %c0_i32_0 = arith.constant 0 : i32
    %c0_i32_1 = arith.constant 0 : i32
    return %c0_i32, %c0_i32_0 : i32, i32
  }
  func.func @transform_27(%arg0: i32) -> (i32, i32) {
    %c0_i32 = arith.constant 0 : i32
    %c0_i32_0 = arith.constant 0 : i32
    %c0_i32_1 = arith.constant 0 : i32
    return %c0_i32, %c0_i32_0 : i32, i32
  }
  func.func @transform_28(%arg0: i32) -> (i32, i32) {
    %c0_i32 = arith.constant 0 : i32
    %c0_i32_0 = arith.constant 0 : i32
    %c0_i32_1 = arith.constant 0 : i32
    return %c0_i32, %c0_i32_0 : i32, i32
  }
  func.func @transform_29(%arg0: i32) -> (i32, i32) {
    %c0_i32 = arith.constant 0 : i32
    %c0_i32_0 = arith.constant 0 : i32
    %c0_i32_1 = arith.constant 0 : i32
    return %c0_i32, %c0_i32_0 : i32, i32
  }
  func.func @transform_30(%arg0: i32) -> (i32, i32) {
    %c0_i32 = arith.constant 0 : i32
    %c0_i32_0 = arith.constant 0 : i32
    %c0_i32_1 = arith.constant 0 : i32
    return %c0_i32, %c0_i32_0 : i32, i32
  }
  func.func @transform_31(%arg0: i32) -> (i32, i32) {
    %c0_i32 = arith.constant 0 : i32
    %c0_i32_0 = arith.constant 0 : i32
    %c0_i32_1 = arith.constant 0 : i32
    return %c0_i32, %c0_i32_0 : i32, i32
  }
  func.func @transform_32(%arg0: i32) -> (i32, i32, i32) {
    %c0_i32 = arith.constant 0 : i32
    %c0_i32_0 = arith.constant 0 : i32
    %c0_i32_1 = arith.constant 0 : i32
    return %arg0, %c0_i32, %c0_i32_0 : i32, i32, i32
  }
}

</mosaic_0001>

<llo_original>
// kernel: transformer_forward.7
$region0: #{transformer_forward.7}
  #allocation0 [shape = 'u32[]', space=smem, size = 0x4, offset = 0x4, fixed_abs, tag = 'smem constant byte address 0x4 - core index']
  #allocation1 [shape = 'u32[144,128]{1,0:T(1,128)}', space=vmem, size = 0x12000, scoped, tag = 'internal scratch']
  %s0 = inlined_call_operand.vmem [shape: bf16[2,5,16,16], index: 0, kind: input, shape index: {}]
  %s1 = inlined_call_operand.vmem [shape: bf16[5,16,32], index: 1, kind: input, shape index: {}]
  %s2 = inlined_call_operand.vmem [shape: f32[1,32], index: 2, kind: input, shape index: {}]
  %s3 = inlined_call_operand.vmem [shape: bf16[2,16,32], index: 3, kind: output, shape index: {}]
  %s4 = sld [smem:[#allocation0]]
  $region45: #{transformer_forward.7} parent=0
    _
  %s6 = ssub.s32 1, %s4
  %s7 = scalar_select 0, %s6, %s4
  loop: start=0, step=1, limit=4
  $region2: #{transformer_forward.7} parent=0 // loop_pre_header
    _
  $region3: #{transformer_forward.7} parent=0 // loop_header
    %s9 = sphi 0, %s13
    %p10 = scmp.ge.s32.totalorder %s9, 4
    %s19 = sphi 0, %s21
    %s22 = sphi 0, %s19
    %s23 = sphi 0, %s22
    %s39 = sphi 0, %s23
    %s43 = sphi 0, %s43
    %s45 = sphi 0, %s43
    %s46 = sphi 0, %s45
    %s60 = sphi 0, %s46
    %s64 = sphi 0, %s64
    %s66 = sphi 0, %s64
    %s67 = sphi 0, %s66
    %s81 = sphi 0, %s67
    %s87 = sphi 0, %s89
    %s90 = sphi 0, %s87
    %s91 = sphi 0, %s90
    %s107 = sphi 0, %s91
  $region4: #{transformer_forward.7} parent=0 // loop_header_branch
    %12 = sbr.rel (%p10) target = $region8
  $region5: #{transformer_forward.7} parent=0 // loop_body
    %s14 = ssub.s32 %s9, 1
    %s15 = ssub.s32 %s9, 2
    %s16 = sadd.s32 %s9, 1
    %s17 = ssub.s32 %s9, %s16
    %p18 = scmp.eq.s32.totalorder %s17, 0
    %s20 = sadd.s32 %s19, 1
    %s21 = scalar_select %p18, %s19, %s20
    %p24 = pneg %p18
    %p25 = scmp.eq.s32.totalorder %s9, 1
    %p26 = por %p24, %p25
    %p27 = scmp.ne.s32.totalorder %s19, %s22
    %p28 = scmp.eq.s32.totalorder %s9, 0
    %p29 = por %p27, %p28
    %p30 = scmp.ne.s32.totalorder %s19, %s22
    %p31 = scmp.eq.s32.totalorder %s14, 1
    %p32 = por %p30, %p31
    %p33 = scmp.ne.s32.totalorder %s22, %s23
    %p34 = scmp.eq.s32.totalorder %s14, 0
    %p35 = por %p33, %p34
    %p36 = scmp.ne.s32.totalorder %s22, %s23
    %p37 = scmp.eq.s32.totalorder %s15, 1
    %p38 = por %p36, %p37
    %p40 = scmp.ne.s32.totalorder %s23, %s39
    %p41 = scmp.eq.s32.totalorder %s15, 0
    %p42 = por %p40, %p41
    %s44 = sadd.s32 %s43, 1
    %p47 = scmp.eq.s32.totalorder %s9, 1
    %p48 = scmp.ne.s32.totalorder %s43, %s45
    %p49 = scmp.eq.s32.totalorder %s9, 0
    %p50 = por %p48, %p49
    %p51 = scmp.ne.s32.totalorder %s43, %s45
    %p52 = scmp.eq.s32.totalorder %s14, 1
    %p53 = por %p51, %p52
    %p54 = scmp.ne.s32.totalorder %s45, %s46
    %p55 = scmp.eq.s32.totalorder %s14, 0
    %p56 = por %p54, %p55
    %p57 = scmp.ne.s32.totalorder %s45, %s46
    %p58 = scmp.eq.s32.totalorder %s15, 1
    %p59 = por %p57, %p58
    %p61 = scmp.ne.s32.totalorder %s46, %s60
    %p62 = scmp.eq.s32.totalorder %s15, 0
    %p63 = por %p61, %p62
    %s65 = sadd.s32 %s64, 1
    %p68 = scmp.eq.s32.totalorder %s9, 1
    %p69 = scmp.ne.s32.totalorder %s64, %s66
    %p70 = scmp.eq.s32.totalorder %s9, 0
    %p71 = por %p69, %p70
    %p72 = scmp.ne.s32.totalorder %s64, %s66
    %p73 = scmp.eq.s32.totalorder %s14, 1
    %p74 = por %p72, %p73
    %p75 = scmp.ne.s32.totalorder %s66, %s67
    %p76 = scmp.eq.s32.totalorder %s14, 0
    %p77 = por %p75, %p76
    %p78 = scmp.ne.s32.totalorder %s66, %s67
    %p79 = scmp.eq.s32.totalorder %s15, 1
    %p80 = por %p78, %p79
    %p82 = scmp.ne.s32.totalorder %s67, %s81
    %p83 = scmp.eq.s32.totalorder %s15, 0
    %p84 = por %p82, %p83
    %s85 = ssub.s32 %s9, %s16
    %p86 = scmp.eq.s32.totalorder %s85, 0
    %s88 = sadd.s32 %s87, 1
    %s89 = scalar_select %p86, %s87, %s88
    %p92 = pneg %p86
    %p93 = scmp.eq.s32.totalorder %s9, 1
    %p94 = por %p92, %p93
    %p95 = scmp.ne.s32.totalorder %s87, %s90
    %p96 = scmp.eq.s32.totalorder %s9, 0
    %p97 = por %p95, %p96
    %p98 = scmp.ne.s32.totalorder %s87, %s90
    %p99 = scmp.eq.s32.totalorder %s14, 1
    %p100 = por %p98, %p99
    %p101 = scmp.ne.s32.totalorder %s90, %s91
    %p102 = scmp.eq.s32.totalorder %s14, 0
    %p103 = por %p101, %p102
    %p104 = scmp.ne.s32.totalorder %s90, %s91
    %p105 = scmp.eq.s32.totalorder %s15, 1
    %p106 = por %p104, %p105
    %p108 = scmp.ne.s32.totalorder %s91, %s107
    %p109 = scmp.eq.s32.totalorder %s15, 0
    %p110 = por %p108, %p109
    %p111 = scmp.le.s32.totalorder 1, %s9
    %p112 = scmp.lt.s32.totalorder %s9, 3
    %p113 = pnand %p111, %p112
    %p114 = pneg %p113
    // Predicated region
    $region9: #{transformer_forward.7} parent=5 // pred_check
      _
    $region10: #{transformer_forward.7} parent=5 // pred_check_branch
      %116 = sbr.rel (%p113) target = $region12
    $region11: #{transformer_forward.7} parent=5 // pred_region
      %s117 = ssub.s32 %s9, 1
      // Predicated region
      $region13: #{transformer_forward.7} parent=11 // pred_check
        %p118 = pneg %p56
      $region14: #{transformer_forward.7} parent=11 // pred_check_branch
        %120 = sbr.rel (%p118) target = $region16
      $region15: #{transformer_forward.7} parent=11 // pred_region
        _
      $region16: #{transformer_forward.7} parent=11 // pred_fallthru
        _
      // Predicated region
      $region17: #{transformer_forward.7} parent=11 // pred_check
        %p121 = pneg %p77
      $region18: #{transformer_forward.7} parent=11 // pred_check_branch
        %123 = sbr.rel (%p121) target = $region20
      $region19: #{transformer_forward.7} parent=11 // pred_region
        _
      $region20: #{transformer_forward.7} parent=11 // pred_fallthru
        _
    $region12: #{transformer_forward.7} parent=5 // pred_fallthru
      _
    %p124 = scmp.lt.s32.totalorder %s9, 2
    // Predicated region
    $region21: #{transformer_forward.7} parent=5 // pred_check
      %p125 = pneg %p124
    $region22: #{transformer_forward.7} parent=5 // pred_check_branch
      %127 = sbr.rel (%p125) target = $region24
    $region23: #{transformer_forward.7} parent=5 // pred_region
      // Predicated region
      $region25: #{transformer_forward.7} parent=23 // pred_check
        %p128 = pneg %p29
      $region26: #{transformer_forward.7} parent=23 // pred_check_branch
        %130 = sbr.rel (%p128) target = $region28
      $region27: #{transformer_forward.7} parent=23 // pred_region
        %p131 = scmp.lt.s32.totalorder %s9, 1
        %s132 = scalar_select %p131, %s9, 1
        %s133 = smul.addr %s132, 10
        %s134 = smul.addr %s133, 4
        %s135 = scalar_lea.vmem %s0, %s134
      $region28: #{transformer_forward.7} parent=23 // pred_fallthru
        _
    $region24: #{transformer_forward.7} parent=5 // pred_fallthru
      _
    %p136 = scmp.le.s32.totalorder 1, %s9
    %p137 = scmp.lt.s32.totalorder %s9, 3
    %p138 = pnand %p136, %p137
    %p139 = pneg %p138
    // Predicated region
    $region29: #{transformer_forward.7} parent=5 // pred_check
      _
    $region30: #{transformer_forward.7} parent=5 // pred_check_branch
      %141 = sbr.rel (%p138) target = $region32
    $region31: #{transformer_forward.7} parent=5 // pred_region
      %s142 = ssub.s32 %s9, 1
      %p143 = scmp.lt.s32.totalorder %s14, 1
      %s144 = scalar_select %p143, %s14, 1
      %s145 = smul.addr %s144, 10
      %s146 = smul.addr %s145, 4
      %s147 = scalar_lea.vmem %s0, %s146
      %p148 = pneg %p35
      %p149 = pneg %p32
      %p150 = pneg %p56
      %p151 = pneg %p53
      %p152 = pneg %p77
      %p153 = pneg %p74
      %p154 = pneg %p103
      %p155 = pneg %p100
      %p156 = scmp.lt.s32.totalorder %s14, 1
      %s157 = scalar_select %p156, %s14, 1
      %s158 = smul.addr %s157, 2
      %s159 = smul.addr %s158, 4
      %s160 = scalar_lea.vmem %s3, %s159
      %p161 = scmp.lt.s32.totalorder %s14, 1
      %s162 = scalar_select %p161, %s14, 1
      %s163 = smul.addr %s162, 10
      %s164 = smul.addr %s163, 4
      %s165 = scalar_lea.vmem %s0, %s164
      %p166 = scmp.lt.s32.totalorder %s14, 1
      %s167 = scalar_select %p166, %s14, 1
      %s168 = smul.addr %s167, 2
      %s169 = smul.addr %s168, 4
      %s170 = scalar_lea.vmem %s3, %s169
      %v172 = vld [vmem:[%s165] sm:$0xf]
      %v173 = vld [vmem:[%s165 + $0x4] sm:$0xf]
      %v174 = vld [vmem:[%s1] sm:$0xf]
      %v175 = vld [vmem:[%s1 + $0x4] sm:$0xf]
      %s176 = scalar_lea.vmem %s165, 8
      %v177 = vld [vmem:[%s176] sm:$0xf]
      %v178 = vld [vmem:[%s176 + $0x4] sm:$0xf]
      %s179 = scalar_lea.vmem %s1, 8
      %v180 = vld [vmem:[%s179] sm:$0xf]
      %v181 = vld [vmem:[%s179 + $0x4] sm:$0xf]
      %v184 = vunpack.c.l.b16 %v177
      %v185 = vunpack.c.l.b16 %v178
      %v186 = vpack.c.b16 %v185, %v184
      %v189 = vunpack.c.l.b16 %v180
      %v190 = vunpack.c.l.b16 %v181
      %v191 = vpack.c.b16 %v190, %v189
      %vm193 = vcmask 130048
      %v195 = vsel %vm193, %v186, 0
      %197 = vmatprep.subr.bf16.mxu0 0
      %198 = vmatpush1.bf16.msra.mxu0 %v191
      %199 = vmatprep.subr.bf16.mxu0 0
      %200 = vmatpush1.bf16.msra.mxu0 0
      %201 = vmatprep.subr.bf16.mxu0 0
      %202 = vmatpush1.bf16.msra.mxu0 0
      %203 = vmatprep.subr.bf16.mxu0 0
      %204 = vmatpush1.bf16.msra.mxu0 0
      %205 = vmatprep.subr.bf16.mxu0 0
      %206 = vmatpush1.bf16.msra.mxu0 0
      %207 = vmatprep.subr.bf16.mxu0 0
      %208 = vmatpush1.bf16.msra.mxu0 0
      %209 = vmatprep.subr.bf16.mxu0 0
      %210 = vmatpush1.bf16.msra.mxu0 0
      %211 = vmatprep.subr.bf16.mxu0 0
      %212 = vmatpush1.bf16.msra.mxu0 0
      %213 = vmatprep.subr.bf16.mxu0 0
      %214 = vmatpush1.bf16.msra.mxu0 0
      %215 = vmatprep.subr.bf16.mxu0 0
      %216 = vmatpush1.bf16.msra.mxu0 0
      %217 = vmatprep.subr.bf16.mxu0 0
      %218 = vmatpush1.bf16.msra.mxu0 0
      %219 = vmatprep.subr.bf16.mxu0 0
      %220 = vmatpush1.bf16.msra.mxu0 0
      %221 = vmatprep.subr.bf16.mxu0 0
      %222 = vmatpush1.bf16.msra.mxu0 0
      %223 = vmatprep.subr.bf16.mxu0 0
      %224 = vmatpush1.bf16.msra.mxu0 0
      %225 = vmatprep.subr.bf16.mxu0 0
      %226 = vmatpush1.bf16.msra.mxu0 0
      %227 = vmatprep.subr.bf16.mxu0 0
      %228 = vmatpush1.bf16.msra.mxu0 0
      %229 = vmatprep.mubr.bf16.mxu0 0
      %230 = vmatmul.mubr.bf16.gmra.mrb[0].mxu0 %v195
      %v231 = vpop.f32.mrb[0].mxu0
      %v232 = vadd.f32 0.0, %v231
      %v233 = vpop.f32.mrb[0].mxu0
      %v234 = vpop.f32.mrb[0].mxu0
      %v235 = vadd.f32 0.0, %v234
      %v236 = vpop.f32.mrb[0].mxu0
      %237 = vdwg.mxu0
      %v240 = vunpack.c.l.b16 %v172
      %v241 = vunpack.c.l.b16 %v173
      %v242 = vpack.c.b16 %v241, %v240
      %v245 = vunpack.c.l.b16 %v174
      %v246 = vunpack.c.l.b16 %v175
      %v247 = vpack.c.b16 %v246, %v245
      %v250 = vsel %vm193, %v242, 0
      %252 = vmatprep.subr.bf16.mxu0 0
      %253 = vmatpush1.bf16.msra.mxu0 %v247
      %254 = vmatprep.subr.bf16.mxu0 0
      %255 = vmatpush1.bf16.msra.mxu0 0
      %256 = vmatprep.subr.bf16.mxu0 0
      %257 = vmatpush1.bf16.msra.mxu0 0
      %258 = vmatprep.subr.bf16.mxu0 0
      %259 = vmatpush1.bf16.msra.mxu0 0
      %260 = vmatprep.subr.bf16.mxu0 0
      %261 = vmatpush1.bf16.msra.mxu0 0
      %262 = vmatprep.subr.bf16.mxu0 0
      %263 = vmatpush1.bf16.msra.mxu0 0
      %264 = vmatprep.subr.bf16.mxu0 0
      %265 = vmatpush1.bf16.msra.mxu0 0
      %266 = vmatprep.subr.bf16.mxu0 0
      %267 = vmatpush1.bf16.msra.mxu0 0
      %268 = vmatprep.subr.bf16.mxu0 0
      %269 = vmatpush1.bf16.msra.mxu0 0
      %270 = vmatprep.subr.bf16.mxu0 0
      %271 = vmatpush1.bf16.msra.mxu0 0
      %272 = vmatprep.subr.bf16.mxu0 0
      %273 = vmatpush1.bf16.msra.mxu0 0
      %274 = vmatprep.subr.bf16.mxu0 0
      %275 = vmatpush1.bf16.msra.mxu0 0
      %276 = vmatprep.subr.bf16.mxu0 0
      %277 = vmatpush1.bf16.msra.mxu0 0
      %278 = vmatprep.subr.bf16.mxu0 0
      %279 = vmatpush1.bf16.msra.mxu0 0
      %280 = vmatprep.subr.bf16.mxu0 0
      %281 = vmatpush1.bf16.msra.mxu0 0
      %282 = vmatprep.subr.bf16.mxu0 0
      %283 = vmatpush1.bf16.msra.mxu0 0
      %284 = vmatprep.mubr.bf16.mxu0 0
      %285 = vmatmul.mubr.bf16.gmra.mrb[0].mxu0 %v250
      %v286 = vpop.f32.mrb[0].mxu0
      %v287 = vadd.f32 %v232, %v286
      %v288 = vpop.f32.mrb[0].mxu0
      %v289 = vpop.f32.mrb[0].mxu0
      %v290 = vadd.f32 %v235, %v289
      %v291 = vpop.f32.mrb[0].mxu0
      %292 = vdwg.mxu0
      %s293 = scalar_lea.vmem %s165, 16
      %v294 = vld [vmem:[%s293] sm:$0xf]
      %v295 = vld [vmem:[%s293 + $0x4] sm:$0xf]
      %s296 = scalar_lea.vmem %s1, 16
      %v297 = vld [vmem:[%s296] sm:$0xf]
      %v298 = vld [vmem:[%s296 + $0x4] sm:$0xf]
      %v301 = vunpack.c.l.b16 %v294
      %v302 = vunpack.c.l.b16 %v295
      %v303 = vpack.c.b16 %v302, %v301
      %v306 = vunpack.c.l.b16 %v297
      %v307 = vunpack.c.l.b16 %v298
      %v308 = vpack.c.b16 %v307, %v306
      %v311 = vsel %vm193, %v303, 0
      %313 = vmatprep.subr.bf16.mxu0 0
      %314 = vmatpush1.bf16.msra.mxu0 %v308
      %315 = vmatprep.subr.bf16.mxu0 0
      %316 = vmatpush1.bf16.msra.mxu0 0
      %317 = vmatprep.subr.bf16.mxu0 0
      %318 = vmatpush1.bf16.msra.mxu0 0
      %319 = vmatprep.subr.bf16.mxu0 0
      %320 = vmatpush1.bf16.msra.mxu0 0
      %321 = vmatprep.subr.bf16.mxu0 0
      %322 = vmatpush1.bf16.msra.mxu0 0
      %323 = vmatprep.subr.bf16.mxu0 0
      %324 = vmatpush1.bf16.msra.mxu0 0
      %325 = vmatprep.subr.bf16.mxu0 0
      %326 = vmatpush1.bf16.msra.mxu0 0
      %327 = vmatprep.subr.bf16.mxu0 0
      %328 = vmatpush1.bf16.msra.mxu0 0
      %329 = vmatprep.subr.bf16.mxu0 0
      %330 = vmatpush1.bf16.msra.mxu0 0
      %331 = vmatprep.subr.bf16.mxu0 0
      %332 = vmatpush1.bf16.msra.mxu0 0
      %333 = vmatprep.subr.bf16.mxu0 0
      %334 = vmatpush1.bf16.msra.mxu0 0
      %335 = vmatprep.subr.bf16.mxu0 0
      %336 = vmatpush1.bf16.msra.mxu0 0
      %337 = vmatprep.subr.bf16.mxu0 0
      %338 = vmatpush1.bf16.msra.mxu0 0
      %339 = vmatprep.subr.bf16.mxu0 0
      %340 = vmatpush1.bf16.msra.mxu0 0
      %341 = vmatprep.subr.bf16.mxu0 0
      %342 = vmatpush1.bf16.msra.mxu0 0
      %343 = vmatprep.subr.bf16.mxu0 0
      %344 = vmatpush1.bf16.msra.mxu0 0
      %345 = vmatprep.mubr.bf16.mxu0 0
      %346 = vmatmul.mubr.bf16.gmra.mrb[0].mxu0 %v311
      %v347 = vpop.f32.mrb[0].mxu0
      %v348 = vadd.f32 0.0, %v347
      %v349 = vpop.f32.mrb[0].mxu0
      %v350 = vpop.f32.mrb[0].mxu0
      %v351 = vadd.f32 0.0, %v350
      %v352 = vpop.f32.mrb[0].mxu0
      %353 = vdwg.mxu0
      %v354 = vadd.f32 %v287, %v348
      %v355 = vadd.f32 %v290, %v351
      %s356 = scalar_lea.vmem %s165, 24
      %v357 = vld [vmem:[%s356] sm:$0xf]
      %v358 = vld [vmem:[%s356 + $0x4] sm:$0xf]
      %s359 = scalar_lea.vmem %s1, 24
      %v360 = vld [vmem:[%s359] sm:$0xf]
      %v361 = vld [vmem:[%s359 + $0x4] sm:$0xf]
      %v364 = vunpack.c.l.b16 %v357
      %v365 = vunpack.c.l.b16 %v358
      %v366 = vpack.c.b16 %v365, %v364
      %v369 = vunpack.c.l.b16 %v360
      %v370 = vunpack.c.l.b16 %v361
      %v371 = vpack.c.b16 %v370, %v369
      %v374 = vsel %vm193, %v366, 0
      %376 = vmatprep.subr.bf16.mxu0 0
      %377 = vmatpush1.bf16.msra.mxu0 %v371
      %378 = vmatprep.subr.bf16.mxu0 0
      %379 = vmatpush1.bf16.msra.mxu0 0
      %380 = vmatprep.subr.bf16.mxu0 0
      %381 = vmatpush1.bf16.msra.mxu0 0
      %382 = vmatprep.subr.bf16.mxu0 0
      %383 = vmatpush1.bf16.msra.mxu0 0
      %384 = vmatprep.subr.bf16.mxu0 0
      %385 = vmatpush1.bf16.msra.mxu0 0
      %386 = vmatprep.subr.bf16.mxu0 0
      %387 = vmatpush1.bf16.msra.mxu0 0
      %388 = vmatprep.subr.bf16.mxu0 0
      %389 = vmatpush1.bf16.msra.mxu0 0
      %390 = vmatprep.subr.bf16.mxu0 0
      %391 = vmatpush1.bf16.msra.mxu0 0
      %392 = vmatprep.subr.bf16.mxu0 0
      %393 = vmatpush1.bf16.msra.mxu0 0
      %394 = vmatprep.subr.bf16.mxu0 0
      %395 = vmatpush1.bf16.msra.mxu0 0
      %396 = vmatprep.subr.bf16.mxu0 0
      %397 = vmatpush1.bf16.msra.mxu0 0
      %398 = vmatprep.subr.bf16.mxu0 0
      %399 = vmatpush1.bf16.msra.mxu0 0
      %400 = vmatprep.subr.bf16.mxu0 0
      %401 = vmatpush1.bf16.msra.mxu0 0
      %402 = vmatprep.subr.bf16.mxu0 0
      %403 = vmatpush1.bf16.msra.mxu0 0
      %404 = vmatprep.subr.bf16.mxu0 0
      %405 = vmatpush1.bf16.msra.mxu0 0
      %406 = vmatprep.subr.bf16.mxu0 0
      %407 = vmatpush1.bf16.msra.mxu0 0
      %408 = vmatprep.mubr.bf16.mxu0 0
      %409 = vmatmul.mubr.bf16.gmra.mrb[0].mxu0 %v374
      %v410 = vpop.f32.mrb[0].mxu0
      %v411 = vadd.f32 0.0, %v410
      %v412 = vpop.f32.mrb[0].mxu0
      %v413 = vpop.f32.mrb[0].mxu0
      %v414 = vadd.f32 0.0, %v413
      %v415 = vpop.f32.mrb[0].mxu0
      %416 = vdwg.mxu0
      %v417 = vadd.f32 %v354, %v411
      %v418 = vadd.f32 %v355, %v414
      %s419 = scalar_lea.vmem %s165, 32
      %v420 = vld [vmem:[%s419] sm:$0xf]
      %v421 = vld [vmem:[%s419 + $0x4] sm:$0xf]
      %s422 = scalar_lea.vmem %s1, 32
      %v423 = vld [vmem:[%s422] sm:$0xf]
      %v424 = vld [vmem:[%s422 + $0x4] sm:$0xf]
      %v427 = vunpack.c.l.b16 %v420
      %v428 = vunpack.c.l.b16 %v421
      %v429 = vpack.c.b16 %v428, %v427
      %v432 = vunpack.c.l.b16 %v423
      %v433 = vunpack.c.l.b16 %v424
      %v434 = vpack.c.b16 %v433, %v432
      %v437 = vsel %vm193, %v429, 0
      %439 = vmatprep.subr.bf16.mxu0 0
      %440 = vmatpush1.bf16.msra.mxu0 %v434
      %441 = vmatprep.subr.bf16.mxu0 0
      %442 = vmatpush1.bf16.msra.mxu0 0
      %443 = vmatprep.subr.bf16.mxu0 0
      %444 = vmatpush1.bf16.msra.mxu0 0
      %445 = vmatprep.subr.bf16.mxu0 0
      %446 = vmatpush1.bf16.msra.mxu0 0
      %447 = vmatprep.subr.bf16.mxu0 0
      %448 = vmatpush1.bf16.msra.mxu0 0
      %449 = vmatprep.subr.bf16.mxu0 0
      %450 = vmatpush1.bf16.msra.mxu0 0
      %451 = vmatprep.subr.bf16.mxu0 0
      %452 = vmatpush1.bf16.msra.mxu0 0
      %453 = vmatprep.subr.bf16.mxu0 0
      %454 = vmatpush1.bf16.msra.mxu0 0
      %455 = vmatprep.subr.bf16.mxu0 0
      %456 = vmatpush1.bf16.msra.mxu0 0
      %457 = vmatprep.subr.bf16.mxu0 0
      %458 = vmatpush1.bf16.msra.mxu0 0
      %459 = vmatprep.subr.bf16.mxu0 0
      %460 = vmatpush1.bf16.msra.mxu0 0
      %461 = vmatprep.subr.bf16.mxu0 0
      %462 = vmatpush1.bf16.msra.mxu0 0
      %463 = vmatprep.subr.bf16.mxu0 0
      %464 = vmatpush1.bf16.msra.mxu0 0
      %465 = vmatprep.subr.bf16.mxu0 0
      %466 = vmatpush1.bf16.msra.mxu0 0
      %467 = vmatprep.subr.bf16.mxu0 0
      %468 = vmatpush1.bf16.msra.mxu0 0
      %469 = vmatprep.subr.bf16.mxu0 0
      %470 = vmatpush1.bf16.msra.mxu0 0
      %471 = vmatprep.mubr.bf16.mxu0 0
      %472 = vmatmul.mubr.bf16.gmra.mrb[0].mxu0 %v437
      %v473 = vpop.f32.mrb[0].mxu0
      %v474 = vadd.f32 0.0, %v473
      %v475 = vpop.f32.mrb[0].mxu0
      %v476 = vpop.f32.mrb[0].mxu0
      %v477 = vadd.f32 0.0, %v476
      %v478 = vpop.f32.mrb[0].mxu0
      %479 = vdwg.mxu0
      %v480 = vadd.f32 %v417, %v474
      %v481 = vadd.f32 %v418, %v477
      %v482 = vld [vmem:[%s2] sm:$0x1]
      %v484 = vlaneseq
      %v485 = vshrl.u32 %v484, 7
      %v486 = vsub.s32 0, %v485
      %v487 = vrot.slane %v482, %v486
      %v489 = vadd.f32 %v480, %v487
      %v490 = vadd.f32 %v481, %v487
      %v491 = vmul.f32 %v489, 0.5
      %v492 = vmul.f32 %v490, 0.5
      %v493 = vmul.f32 %v489, 0.044715
      %v494 = vmul.f32 %v490, 0.044715
      %v495 = vmul.f32 %v493, %v489
      %v496 = vmul.f32 %v494, %v490
      %v497 = vmul.f32 %v495, %v489
      %v498 = vmul.f32 %v496, %v490
      %v499 = vadd.f32 %v489, %v497
      %v500 = vadd.f32 %v490, %v498
      %v501 = vmul.f32 %v499, 0.7978846
      %v502 = vmul.f32 %v500, 0.7978846
      %v503 = vtanh.pop %v501
      %v504 = vtanh.pop %v502
      %v505 = vadd.f32 %v503, 1.0
      %v506 = vadd.f32 %v504, 1.0
      %v507 = vmul.f32 %v491, %v505
      %v508 = vmul.f32 %v492, %v506
      %v509 = vpack.c.bf16 %v508, %v507
      %v511 = vunpack.c.l.b16 %v509
      %v512 = vunpack.c.h.b16 %v509
      %v513 = vpack.c.b16 %v511, %v511
      %v514 = vpack.c.b16 %v512, %v512
      %vm517 = vcmask 257024
      %518 = vst.msk [vmem:[%s170] sm:$0xf] %vm517, %v513
      %519 = vst.msk [vmem:[%s170 + $0x4] sm:$0xf] %vm517, %v514
      %p520 = scmp.lt.s32.totalorder %s14, 1
      %s521 = scalar_select %p520, %s14, 1
      %s522 = smul.addr %s521, 2
      %s523 = smul.addr %s522, 4
      %s524 = scalar_lea.vmem %s3, %s523
      // Predicated region
      $region33: #{transformer_forward.7} parent=31 // pred_check
        %p525 = pneg %p100
      $region34: #{transformer_forward.7} parent=31 // pred_check_branch
        %527 = sbr.rel (%p525) target = $region36
      $region35: #{transformer_forward.7} parent=31 // pred_region
        _
      $region36: #{transformer_forward.7} parent=31 // pred_fallthru
        _
    $region32: #{transformer_forward.7} parent=5 // pred_fallthru
      _
    %p528 = scmp.le.s32.totalorder 2, %s9
    // Predicated region
    $region37: #{transformer_forward.7} parent=5 // pred_check
      %p529 = pneg %p528
    $region38: #{transformer_forward.7} parent=5 // pred_check_branch
      %531 = sbr.rel (%p529) target = $region40
    $region39: #{transformer_forward.7} parent=5 // pred_region
      %s532 = ssub.s32 %s9, 2
      // Predicated region
      $region41: #{transformer_forward.7} parent=39 // pred_check
        %p533 = pneg %p106
      $region42: #{transformer_forward.7} parent=39 // pred_check_branch
        %535 = sbr.rel (%p533) target = $region44
      $region43: #{transformer_forward.7} parent=39 // pred_region
        %p536 = scmp.lt.s32.totalorder %s15, 1
        %s537 = scalar_select %p536, %s15, 1
        %s538 = smul.addr %s537, 2
        %s539 = smul.addr %s538, 4
        %s540 = scalar_lea.vmem %s3, %s539
      $region44: #{transformer_forward.7} parent=39 // pred_fallthru
        _
    $region40: #{transformer_forward.7} parent=5 // pred_fallthru
      _
  $region6: #{transformer_forward.7} parent=0 // loop_footer
    %s13 = sadd.s32 1, %s9
  $region7: #{transformer_forward.7} parent=0 // loop_footer_branch
    %8 = sbr.rel target = $region3
  $region8: #{transformer_forward.7} parent=0 // loop_exit
    _

// kernel: transformer_forward.8
$region0: #{transformer_forward.8}
  #allocation0 [shape = 'u32[]', space=smem, size = 0x4, offset = 0x4, fixed_abs, tag = 'smem constant byte address 0x4 - core index']
  #allocation1 [shape = 'u32[144,128]{1,0:T(1,128)}', space=vmem, size = 0x12000, scoped, tag = 'internal scratch']
  %s0 = inlined_call_operand.vmem [shape: bf16[2,5,8,32], index: 0, kind: input, shape index: {}]
  %s1 = inlined_call_operand.vmem [shape: bf16[5,32,32], index: 1, kind: input, shape index: {}]
  %s2 = inlined_call_operand.vmem [shape: f32[1,32], index: 2, kind: input, shape index: {}]
  %s3 = inlined_call_operand.vmem [shape: f32[1,32], index: 3, kind: input, shape index: {}]
  %s4 = inlined_call_operand.vmem [shape: f32[1,32], index: 4, kind: input, shape index: {}]
  %s5 = inlined_call_operand.vmem [shape: f32[8,32], index: 5, kind: input, shape index: {}]
  %s6 = inlined_call_operand.vmem [shape: f32[2,8,32], index: 6, kind: output, shape index: {}]
  %s7 = sld [smem:[#allocation0]]
  $region57: #{transformer_forward.8} parent=0
    _
  %s9 = ssub.s32 1, %s7
  %s10 = scalar_select 0, %s9, %s7
  loop: start=0, step=1, limit=4
  $region2: #{transformer_forward.8} parent=0 // loop_pre_header
    _
  $region3: #{transformer_forward.8} parent=0 // loop_header
    %s12 = sphi 0, %s16
    %p13 = scmp.ge.s32.totalorder %s12, 4
    %s22 = sphi 0, %s24
    %s25 = sphi 0, %s22
    %s26 = sphi 0, %s25
    %s42 = sphi 0, %s26
    %s46 = sphi 0, %s46
    %s48 = sphi 0, %s46
    %s49 = sphi 0, %s48
    %s63 = sphi 0, %s49
    %s67 = sphi 0, %s67
    %s69 = sphi 0, %s67
    %s70 = sphi 0, %s69
    %s84 = sphi 0, %s70
    %s88 = sphi 0, %s88
    %s90 = sphi 0, %s88
    %s91 = sphi 0, %s90
    %s105 = sphi 0, %s91
    %s109 = sphi 0, %s109
    %s111 = sphi 0, %s109
    %s112 = sphi 0, %s111
    %s126 = sphi 0, %s112
    %s130 = sphi 0, %s130
    %s132 = sphi 0, %s130
    %s133 = sphi 0, %s132
    %s147 = sphi 0, %s133
    %s153 = sphi 0, %s155
    %s156 = sphi 0, %s153
    %s157 = sphi 0, %s156
    %s173 = sphi 0, %s157
  $region4: #{transformer_forward.8} parent=0 // loop_header_branch
    %15 = sbr.rel (%p13) target = $region8
  $region5: #{transformer_forward.8} parent=0 // loop_body
    %s17 = ssub.s32 %s12, 1
    %s18 = ssub.s32 %s12, 2
    %s19 = sadd.s32 %s12, 1
    %s20 = ssub.s32 %s12, %s19
    %p21 = scmp.eq.s32.totalorder %s20, 0
    %s23 = sadd.s32 %s22, 1
    %s24 = scalar_select %p21, %s22, %s23
    %p27 = pneg %p21
    %p28 = scmp.eq.s32.totalorder %s12, 1
    %p29 = por %p27, %p28
    %p30 = scmp.ne.s32.totalorder %s22, %s25
    %p31 = scmp.eq.s32.totalorder %s12, 0
    %p32 = por %p30, %p31
    %p33 = scmp.ne.s32.totalorder %s22, %s25
    %p34 = scmp.eq.s32.totalorder %s17, 1
    %p35 = por %p33, %p34
    %p36 = scmp.ne.s32.totalorder %s25, %s26
    %p37 = scmp.eq.s32.totalorder %s17, 0
    %p38 = por %p36, %p37
    %p39 = scmp.ne.s32.totalorder %s25, %s26
    %p40 = scmp.eq.s32.totalorder %s18, 1
    %p41 = por %p39, %p40
    %p43 = scmp.ne.s32.totalorder %s26, %s42
    %p44 = scmp.eq.s32.totalorder %s18, 0
    %p45 = por %p43, %p44
    %s47 = sadd.s32 %s46, 1
    %p50 = scmp.eq.s32.totalorder %s12, 1
    %p51 = scmp.ne.s32.totalorder %s46, %s48
    %p52 = scmp.eq.s32.totalorder %s12, 0
    %p53 = por %p51, %p52
    %p54 = scmp.ne.s32.totalorder %s46, %s48
    %p55 = scmp.eq.s32.totalorder %s17, 1
    %p56 = por %p54, %p55
    %p57 = scmp.ne.s32.totalorder %s48, %s49
    %p58 = scmp.eq.s32.totalorder %s17, 0
    %p59 = por %p57, %p58
    %p60 = scmp.ne.s32.totalorder %s48, %s49
    %p61 = scmp.eq.s32.totalorder %s18, 1
    %p62 = por %p60, %p61
    %p64 = scmp.ne.s32.totalorder %s49, %s63
    %p65 = scmp.eq.s32.totalorder %s18, 0
    %p66 = por %p64, %p65
    %s68 = sadd.s32 %s67, 1
    %p71 = scmp.eq.s32.totalorder %s12, 1
    %p72 = scmp.ne.s32.totalorder %s67, %s69
    %p73 = scmp.eq.s32.totalorder %s12, 0
    %p74 = por %p72, %p73
    %p75 = scmp.ne.s32.totalorder %s67, %s69
    %p76 = scmp.eq.s32.totalorder %s17, 1
    %p77 = por %p75, %p76
    %p78 = scmp.ne.s32.totalorder %s69, %s70
    %p79 = scmp.eq.s32.totalorder %s17, 0
    %p80 = por %p78, %p79
    %p81 = scmp.ne.s32.totalorder %s69, %s70
    %p82 = scmp.eq.s32.totalorder %s18, 1
    %p83 = por %p81, %p82
    %p85 = scmp.ne.s32.totalorder %s70, %s84
    %p86 = scmp.eq.s32.totalorder %s18, 0
    %p87 = por %p85, %p86
    %s89 = sadd.s32 %s88, 1
    %p92 = scmp.eq.s32.totalorder %s12, 1
    %p93 = scmp.ne.s32.totalorder %s88, %s90
    %p94 = scmp.eq.s32.totalorder %s12, 0
    %p95 = por %p93, %p94
    %p96 = scmp.ne.s32.totalorder %s88, %s90
    %p97 = scmp.eq.s32.totalorder %s17, 1
    %p98 = por %p96, %p97
    %p99 = scmp.ne.s32.totalorder %s90, %s91
    %p100 = scmp.eq.s32.totalorder %s17, 0
    %p101 = por %p99, %p100
    %p102 = scmp.ne.s32.totalorder %s90, %s91
    %p103 = scmp.eq.s32.totalorder %s18, 1
    %p104 = por %p102, %p103
    %p106 = scmp.ne.s32.totalorder %s91, %s105
    %p107 = scmp.eq.s32.totalorder %s18, 0
    %p108 = por %p106, %p107
    %s110 = sadd.s32 %s109, 1
    %p113 = scmp.eq.s32.totalorder %s12, 1
    %p114 = scmp.ne.s32.totalorder %s109, %s111
    %p115 = scmp.eq.s32.totalorder %s12, 0
    %p116 = por %p114, %p115
    %p117 = scmp.ne.s32.totalorder %s109, %s111
    %p118 = scmp.eq.s32.totalorder %s17, 1
    %p119 = por %p117, %p118
    %p120 = scmp.ne.s32.totalorder %s111, %s112
    %p121 = scmp.eq.s32.totalorder %s17, 0
    %p122 = por %p120, %p121
    %p123 = scmp.ne.s32.totalorder %s111, %s112
    %p124 = scmp.eq.s32.totalorder %s18, 1
    %p125 = por %p123, %p124
    %p127 = scmp.ne.s32.totalorder %s112, %s126
    %p128 = scmp.eq.s32.totalorder %s18, 0
    %p129 = por %p127, %p128
    %s131 = sadd.s32 %s130, 1
    %p134 = scmp.eq.s32.totalorder %s12, 1
    %p135 = scmp.ne.s32.totalorder %s130, %s132
    %p136 = scmp.eq.s32.totalorder %s12, 0
    %p137 = por %p135, %p136
    %p138 = scmp.ne.s32.totalorder %s130, %s132
    %p139 = scmp.eq.s32.totalorder %s17, 1
    %p140 = por %p138, %p139
    %p141 = scmp.ne.s32.totalorder %s132, %s133
    %p142 = scmp.eq.s32.totalorder %s17, 0
    %p143 = por %p141, %p142
    %p144 = scmp.ne.s32.totalorder %s132, %s133
    %p145 = scmp.eq.s32.totalorder %s18, 1
    %p146 = por %p144, %p145
    %p148 = scmp.ne.s32.totalorder %s133, %s147
    %p149 = scmp.eq.s32.totalorder %s18, 0
    %p150 = por %p148, %p149
    %s151 = ssub.s32 %s12, %s19
    %p152 = scmp.eq.s32.totalorder %s151, 0
    %s154 = sadd.s32 %s153, 1
    %s155 = scalar_select %p152, %s153, %s154
    %p158 = pneg %p152
    %p159 = scmp.eq.s32.totalorder %s12, 1
    %p160 = por %p158, %p159
    %p161 = scmp.ne.s32.totalorder %s153, %s156
    %p162 = scmp.eq.s32.totalorder %s12, 0
    %p163 = por %p161, %p162
    %p164 = scmp.ne.s32.totalorder %s153, %s156
    %p165 = scmp.eq.s32.totalorder %s17, 1
    %p166 = por %p164, %p165
    %p167 = scmp.ne.s32.totalorder %s156, %s157
    %p168 = scmp.eq.s32.totalorder %s17, 0
    %p169 = por %p167, %p168
    %p170 = scmp.ne.s32.totalorder %s156, %s157
    %p171 = scmp.eq.s32.totalorder %s18, 1
    %p172 = por %p170, %p171
    %p174 = scmp.ne.s32.totalorder %s157, %s173
    %p175 = scmp.eq.s32.totalorder %s18, 0
    %p176 = por %p174, %p175
    %p177 = scmp.le.s32.totalorder 1, %s12
    %p178 = scmp.lt.s32.totalorder %s12, 3
    %p179 = pnand %p177, %p178
    %p180 = pneg %p179
    // Predicated region
    $region9: #{transformer_forward.8} parent=5 // pred_check
      _
    $region10: #{transformer_forward.8} parent=5 // pred_check_branch
      %182 = sbr.rel (%p179) target = $region12
    $region11: #{transformer_forward.8} parent=5 // pred_region
      %s183 = ssub.s32 %s12, 1
      // Predicated region
      $region13: #{transformer_forward.8} parent=11 // pred_check
        %p184 = pneg %p59
      $region14: #{transformer_forward.8} parent=11 // pred_check_branch
        %186 = sbr.rel (%p184) target = $region16
      $region15: #{transformer_forward.8} parent=11 // pred_region
        _
      $region16: #{transformer_forward.8} parent=11 // pred_fallthru
        _
      // Predicated region
      $region17: #{transformer_forward.8} parent=11 // pred_check
        %p187 = pneg %p80
      $region18: #{transformer_forward.8} parent=11 // pred_check_branch
        %189 = sbr.rel (%p187) target = $region20
      $region19: #{transformer_forward.8} parent=11 // pred_region
        _
      $region20: #{transformer_forward.8} parent=11 // pred_fallthru
        _
      // Predicated region
      $region21: #{transformer_forward.8} parent=11 // pred_check
        %p190 = pneg %p101
      $region22: #{transformer_forward.8} parent=11 // pred_check_branch
        %192 = sbr.rel (%p190) target = $region24
      $region23: #{transformer_forward.8} parent=11 // pred_region
        _
      $region24: #{transformer_forward.8} parent=11 // pred_fallthru
        _
      // Predicated region
      $region25: #{transformer_forward.8} parent=11 // pred_check
        %p193 = pneg %p122
      $region26: #{transformer_forward.8} parent=11 // pred_check_branch
        %195 = sbr.rel (%p193) target = $region28
      $region27: #{transformer_forward.8} parent=11 // pred_region
        _
      $region28: #{transformer_forward.8} parent=11 // pred_fallthru
        _
      // Predicated region
      $region29: #{transformer_forward.8} parent=11 // pred_check
        %p196 = pneg %p143
      $region30: #{transformer_forward.8} parent=11 // pred_check_branch
        %198 = sbr.rel (%p196) target = $region32
      $region31: #{transformer_forward.8} parent=11 // pred_region
        _
      $region32: #{transformer_forward.8} parent=11 // pred_fallthru
        _
    $region12: #{transformer_forward.8} parent=5 // pred_fallthru
      _
    %p199 = scmp.lt.s32.totalorder %s12, 2
    // Predicated region
    $region33: #{transformer_forward.8} parent=5 // pred_check
      %p200 = pneg %p199
    $region34: #{transformer_forward.8} parent=5 // pred_check_branch
      %202 = sbr.rel (%p200) target = $region36
    $region35: #{transformer_forward.8} parent=5 // pred_region
      // Predicated region
      $region37: #{transformer_forward.8} parent=35 // pred_check
        %p203 = pneg %p32
      $region38: #{transformer_forward.8} parent=35 // pred_check_branch
        %205 = sbr.rel (%p203) target = $region40
      $region39: #{transformer_forward.8} parent=35 // pred_region
        %p206 = scmp.lt.s32.totalorder %s12, 1
        %s207 = scalar_select %p206, %s12, 1
        %s208 = smul.addr %s207, 5
        %s209 = smul.addr %s208, 4
        %s210 = scalar_lea.vmem %s0, %s209
      $region40: #{transformer_forward.8} parent=35 // pred_fallthru
        _
    $region36: #{transformer_forward.8} parent=5 // pred_fallthru
      _
    %p211 = scmp.le.s32.totalorder 1, %s12
    %p212 = scmp.lt.s32.totalorder %s12, 3
    %p213 = pnand %p211, %p212
    %p214 = pneg %p213
    // Predicated region
    $region41: #{transformer_forward.8} parent=5 // pred_check
      _
    $region42: #{transformer_forward.8} parent=5 // pred_check_branch
      %216 = sbr.rel (%p213) target = $region44
    $region43: #{transformer_forward.8} parent=5 // pred_region
      %s217 = ssub.s32 %s12, 1
      %p218 = scmp.lt.s32.totalorder %s17, 1
      %s219 = scalar_select %p218, %s17, 1
      %s220 = smul.addr %s219, 5
      %s221 = smul.addr %s220, 4
      %s222 = scalar_lea.vmem %s0, %s221
      %p223 = pneg %p38
      %p224 = pneg %p35
      %p225 = pneg %p59
      %p226 = pneg %p56
      %p227 = pneg %p80
      %p228 = pneg %p77
      %p229 = pneg %p101
      %p230 = pneg %p98
      %p231 = pneg %p122
      %p232 = pneg %p119
      %p233 = pneg %p143
      %p234 = pneg %p140
      %p235 = pneg %p169
      %p236 = pneg %p166
      %p237 = scmp.lt.s32.totalorder %s17, 1
      %s238 = scalar_select %p237, %s17, 1
      %s239 = smul.addr %s238, 8
      %s240 = scalar_lea.vmem %s6, %s239
      %p241 = scmp.lt.s32.totalorder %s17, 1
      %s242 = scalar_select %p241, %s17, 1
      %s243 = smul.addr %s242, 5
      %s244 = smul.addr %s243, 4
      %s245 = scalar_lea.vmem %s0, %s244
      %p246 = scmp.lt.s32.totalorder %s17, 1
      %s247 = scalar_select %p246, %s17, 1
      %s248 = smul.addr %s247, 8
      %s249 = scalar_lea.vmem %s6, %s248
      %v251 = vld [vmem:[%s245] sm:$0xf]
      %v252 = vld [vmem:[%s1] sm:$0xf]
      %v253 = vld [vmem:[%s1 + $0x4] sm:$0xf]
      %v254 = vld [vmem:[%s1 + $0x8] sm:$0xf]
      %v255 = vld [vmem:[%s1 + $0xc] sm:$0xf]
      %s256 = scalar_lea.vmem %s245, 4
      %v257 = vld [vmem:[%s256] sm:$0xf]
      %s258 = scalar_lea.vmem %s1, 16
      %v259 = vld [vmem:[%s258] sm:$0xf]
      %v260 = vld [vmem:[%s258 + $0x4] sm:$0xf]
      %v261 = vld [vmem:[%s258 + $0x8] sm:$0xf]
      %v262 = vld [vmem:[%s258 + $0xc] sm:$0xf]
      %v267 = vunpack.c.l.b16 %v259
      %v268 = vunpack.c.l.b16 %v260
      %v269 = vunpack.c.l.b16 %v261
      %v270 = vunpack.c.l.b16 %v262
      %v271 = vpack.c.b16 %v268, %v267
      %v272 = vpack.c.b16 %v270, %v269
      %vm275 = vcmask 261120
      %v277 = vsel %vm275, %v257, 0
      %279 = vmatprep.subr.bf16.mxu0 0
      %280 = vmatpush1.bf16.msra.mxu0 %v271
      %281 = vmatprep.subr.bf16.mxu0 0
      %282 = vmatpush1.bf16.msra.mxu0 %v272
      %283 = vmatprep.subr.bf16.mxu0 0
      %284 = vmatpush1.bf16.msra.mxu0 0
      %285 = vmatprep.subr.bf16.mxu0 0
      %286 = vmatpush1.bf16.msra.mxu0 0
      %287 = vmatprep.subr.bf16.mxu0 0
      %288 = vmatpush1.bf16.msra.mxu0 0
      %289 = vmatprep.subr.bf16.mxu0 0
      %290 = vmatpush1.bf16.msra.mxu0 0
      %291 = vmatprep.subr.bf16.mxu0 0
      %292 = vmatpush1.bf16.msra.mxu0 0
      %293 = vmatprep.subr.bf16.mxu0 0
      %294 = vmatpush1.bf16.msra.mxu0 0
      %295 = vmatprep.subr.bf16.mxu0 0
      %296 = vmatpush1.bf16.msra.mxu0 0
      %297 = vmatprep.subr.bf16.mxu0 0
      %298 = vmatpush1.bf16.msra.mxu0 0
      %299 = vmatprep.subr.bf16.mxu0 0
      %300 = vmatpush1.bf16.msra.mxu0 0
      %301 = vmatprep.subr.bf16.mxu0 0
      %302 = vmatpush1.bf16.msra.mxu0 0
      %303 = vmatprep.subr.bf16.mxu0 0
      %304 = vmatpush1.bf16.msra.mxu0 0
      %305 = vmatprep.subr.bf16.mxu0 0
      %306 = vmatpush1.bf16.msra.mxu0 0
      %307 = vmatprep.subr.bf16.mxu0 0
      %308 = vmatpush1.bf16.msra.mxu0 0
      %309 = vmatprep.subr.bf16.mxu0 0
      %310 = vmatpush1.bf16.msra.mxu0 0
      %311 = vmatprep.mubr.bf16.mxu0 0
      %312 = vmatmul.mubr.bf16.gmra.mrb[0].mxu0 %v277
      %v313 = vpop.f32.mrb[0].mxu0
      %v314 = vadd.f32 0.0, %v313
      %v315 = vpop.f32.mrb[0].mxu0
      %v316 = vpop.f32.mrb[0].mxu0
      %v317 = vpop.f32.mrb[0].mxu0
      %318 = vdwg.mxu0
      %v323 = vunpack.c.l.b16 %v252
      %v324 = vunpack.c.l.b16 %v253
      %v325 = vunpack.c.l.b16 %v254
      %v326 = vunpack.c.l.b16 %v255
      %v327 = vpack.c.b16 %v324, %v323
      %v328 = vpack.c.b16 %v326, %v325
      %v332 = vsel %vm275, %v251, 0
      %334 = vmatprep.subr.bf16.mxu0 0
      %335 = vmatpush1.bf16.msra.mxu0 %v327
      %336 = vmatprep.subr.bf16.mxu0 0
      %337 = vmatpush1.bf16.msra.mxu0 %v328
      %338 = vmatprep.subr.bf16.mxu0 0
      %339 = vmatpush1.bf16.msra.mxu0 0
      %340 = vmatprep.subr.bf16.mxu0 0
      %341 = vmatpush1.bf16.msra.mxu0 0
      %342 = vmatprep.subr.bf16.mxu0 0
      %343 = vmatpush1.bf16.msra.mxu0 0
      %344 = vmatprep.subr.bf16.mxu0 0
      %345 = vmatpush1.bf16.msra.mxu0 0
      %346 = vmatprep.subr.bf16.mxu0 0
      %347 = vmatpush1.bf16.msra.mxu0 0
      %348 = vmatprep.subr.bf16.mxu0 0
      %349 = vmatpush1.bf16.msra.mxu0 0
      %350 = vmatprep.subr.bf16.mxu0 0
      %351 = vmatpush1.bf16.msra.mxu0 0
      %352 = vmatprep.subr.bf16.mxu0 0
      %353 = vmatpush1.bf16.msra.mxu0 0
      %354 = vmatprep.subr.bf16.mxu0 0
      %355 = vmatpush1.bf16.msra.mxu0 0
      %356 = vmatprep.subr.bf16.mxu0 0
      %357 = vmatpush1.bf16.msra.mxu0 0
      %358 = vmatprep.subr.bf16.mxu0 0
      %359 = vmatpush1.bf16.msra.mxu0 0
      %360 = vmatprep.subr.bf16.mxu0 0
      %361 = vmatpush1.bf16.msra.mxu0 0
      %362 = vmatprep.subr.bf16.mxu0 0
      %363 = vmatpush1.bf16.msra.mxu0 0
      %364 = vmatprep.subr.bf16.mxu0 0
      %365 = vmatpush1.bf16.msra.mxu0 0
      %366 = vmatprep.mubr.bf16.mxu0 0
      %367 = vmatmul.mubr.bf16.gmra.mrb[0].mxu0 %v332
      %v368 = vpop.f32.mrb[0].mxu0
      %v369 = vadd.f32 %v314, %v368
      %v370 = vpop.f32.mrb[0].mxu0
      %v371 = vpop.f32.mrb[0].mxu0
      %v372 = vpop.f32.mrb[0].mxu0
      %373 = vdwg.mxu0
      %s374 = scalar_lea.vmem %s245, 8
      %v375 = vld [vmem:[%s374] sm:$0xf]
      %s376 = scalar_lea.vmem %s1, 32
      %v377 = vld [vmem:[%s376] sm:$0xf]
      %v378 = vld [vmem:[%s376 + $0x4] sm:$0xf]
      %v379 = vld [vmem:[%s376 + $0x8] sm:$0xf]
      %v380 = vld [vmem:[%s376 + $0xc] sm:$0xf]
      %v385 = vunpack.c.l.b16 %v377
      %v386 = vunpack.c.l.b16 %v378
      %v387 = vunpack.c.l.b16 %v379
      %v388 = vunpack.c.l.b16 %v380
      %v389 = vpack.c.b16 %v386, %v385
      %v390 = vpack.c.b16 %v388, %v387
      %v394 = vsel %vm275, %v375, 0
      %396 = vmatprep.subr.bf16.mxu0 0
      %397 = vmatpush1.bf16.msra.mxu0 %v389
      %398 = vmatprep.subr.bf16.mxu0 0
      %399 = vmatpush1.bf16.msra.mxu0 %v390
      %400 = vmatprep.subr.bf16.mxu0 0
      %401 = vmatpush1.bf16.msra.mxu0 0
      %402 = vmatprep.subr.bf16.mxu0 0
      %403 = vmatpush1.bf16.msra.mxu0 0
      %404 = vmatprep.subr.bf16.mxu0 0
      %405 = vmatpush1.bf16.msra.mxu0 0
      %406 = vmatprep.subr.bf16.mxu0 0
      %407 = vmatpush1.bf16.msra.mxu0 0
      %408 = vmatprep.subr.bf16.mxu0 0
      %409 = vmatpush1.bf16.msra.mxu0 0
      %410 = vmatprep.subr.bf16.mxu0 0
      %411 = vmatpush1.bf16.msra.mxu0 0
      %412 = vmatprep.subr.bf16.mxu0 0
      %413 = vmatpush1.bf16.msra.mxu0 0
      %414 = vmatprep.subr.bf16.mxu0 0
      %415 = vmatpush1.bf16.msra.mxu0 0
      %416 = vmatprep.subr.bf16.mxu0 0
      %417 = vmatpush1.bf16.msra.mxu0 0
      %418 = vmatprep.subr.bf16.mxu0 0
      %419 = vmatpush1.bf16.msra.mxu0 0
      %420 = vmatprep.subr.bf16.mxu0 0
      %421 = vmatpush1.bf16.msra.mxu0 0
      %422 = vmatprep.subr.bf16.mxu0 0
      %423 = vmatpush1.bf16.msra.mxu0 0
      %424 = vmatprep.subr.bf16.mxu0 0
      %425 = vmatpush1.bf16.msra.mxu0 0
      %426 = vmatprep.subr.bf16.mxu0 0
      %427 = vmatpush1.bf16.msra.mxu0 0
      %428 = vmatprep.mubr.bf16.mxu0 0
      %429 = vmatmul.mubr.bf16.gmra.mrb[0].mxu0 %v394
      %v430 = vpop.f32.mrb[0].mxu0
      %v431 = vadd.f32 0.0, %v430
      %v432 = vpop.f32.mrb[0].mxu0
      %v433 = vpop.f32.mrb[0].mxu0
      %v434 = vpop.f32.mrb[0].mxu0
      %435 = vdwg.mxu0
      %v436 = vadd.f32 %v369, %v431
      %s437 = scalar_lea.vmem %s245, 12
      %v438 = vld [vmem:[%s437] sm:$0xf]
      %s439 = scalar_lea.vmem %s1, 48
      %v440 = vld [vmem:[%s439] sm:$0xf]
      %v441 = vld [vmem:[%s439 + $0x4] sm:$0xf]
      %v442 = vld [vmem:[%s439 + $0x8] sm:$0xf]
      %v443 = vld [vmem:[%s439 + $0xc] sm:$0xf]
      %v448 = vunpack.c.l.b16 %v440
      %v449 = vunpack.c.l.b16 %v441
      %v450 = vunpack.c.l.b16 %v442
      %v451 = vunpack.c.l.b16 %v443
      %v452 = vpack.c.b16 %v449, %v448
      %v453 = vpack.c.b16 %v451, %v450
      %v457 = vsel %vm275, %v438, 0
      %459 = vmatprep.subr.bf16.mxu0 0
      %460 = vmatpush1.bf16.msra.mxu0 %v452
      %461 = vmatprep.subr.bf16.mxu0 0
      %462 = vmatpush1.bf16.msra.mxu0 %v453
      %463 = vmatprep.subr.bf16.mxu0 0
      %464 = vmatpush1.bf16.msra.mxu0 0
      %465 = vmatprep.subr.bf16.mxu0 0
      %466 = vmatpush1.bf16.msra.mxu0 0
      %467 = vmatprep.subr.bf16.mxu0 0
      %468 = vmatpush1.bf16.msra.mxu0 0
      %469 = vmatprep.subr.bf16.mxu0 0
      %470 = vmatpush1.bf16.msra.mxu0 0
      %471 = vmatprep.subr.bf16.mxu0 0
      %472 = vmatpush1.bf16.msra.mxu0 0
      %473 = vmatprep.subr.bf16.mxu0 0
      %474 = vmatpush1.bf16.msra.mxu0 0
      %475 = vmatprep.subr.bf16.mxu0 0
      %476 = vmatpush1.bf16.msra.mxu0 0
      %477 = vmatprep.subr.bf16.mxu0 0
      %478 = vmatpush1.bf16.msra.mxu0 0
      %479 = vmatprep.subr.bf16.mxu0 0
      %480 = vmatpush1.bf16.msra.mxu0 0
      %481 = vmatprep.subr.bf16.mxu0 0
      %482 = vmatpush1.bf16.msra.mxu0 0
      %483 = vmatprep.subr.bf16.mxu0 0
      %484 = vmatpush1.bf16.msra.mxu0 0
      %485 = vmatprep.subr.bf16.mxu0 0
      %486 = vmatpush1.bf16.msra.mxu0 0
      %487 = vmatprep.subr.bf16.mxu0 0
      %488 = vmatpush1.bf16.msra.mxu0 0
      %489 = vmatprep.subr.bf16.mxu0 0
      %490 = vmatpush1.bf16.msra.mxu0 0
      %491 = vmatprep.mubr.bf16.mxu0 0
      %492 = vmatmul.mubr.bf16.gmra.mrb[0].mxu0 %v457
      %v493 = vpop.f32.mrb[0].mxu0
      %v494 = vadd.f32 0.0, %v493
      %v495 = vpop.f32.mrb[0].mxu0
      %v496 = vpop.f32.mrb[0].mxu0
      %v497 = vpop.f32.mrb[0].mxu0
      %498 = vdwg.mxu0
      %v499 = vadd.f32 %v436, %v494
      %s500 = scalar_lea.vmem %s245, 16
      %v501 = vld [vmem:[%s500] sm:$0xf]
      %s502 = scalar_lea.vmem %s1, 64
      %v503 = vld [vmem:[%s502] sm:$0xf]
      %v504 = vld [vmem:[%s502 + $0x4] sm:$0xf]
      %v505 = vld [vmem:[%s502 + $0x8] sm:$0xf]
      %v506 = vld [vmem:[%s502 + $0xc] sm:$0xf]
      %v511 = vunpack.c.l.b16 %v503
      %v512 = vunpack.c.l.b16 %v504
      %v513 = vunpack.c.l.b16 %v505
      %v514 = vunpack.c.l.b16 %v506
      %v515 = vpack.c.b16 %v512, %v511
      %v516 = vpack.c.b16 %v514, %v513
      %v520 = vsel %vm275, %v501, 0
      %522 = vmatprep.subr.bf16.mxu0 0
      %523 = vmatpush1.bf16.msra.mxu0 %v515
      %524 = vmatprep.subr.bf16.mxu0 0
      %525 = vmatpush1.bf16.msra.mxu0 %v516
      %526 = vmatprep.subr.bf16.mxu0 0
      %527 = vmatpush1.bf16.msra.mxu0 0
      %528 = vmatprep.subr.bf16.mxu0 0
      %529 = vmatpush1.bf16.msra.mxu0 0
      %530 = vmatprep.subr.bf16.mxu0 0
      %531 = vmatpush1.bf16.msra.mxu0 0
      %532 = vmatprep.subr.bf16.mxu0 0
      %533 = vmatpush1.bf16.msra.mxu0 0
      %534 = vmatprep.subr.bf16.mxu0 0
      %535 = vmatpush1.bf16.msra.mxu0 0
      %536 = vmatprep.subr.bf16.mxu0 0
      %537 = vmatpush1.bf16.msra.mxu0 0
      %538 = vmatprep.subr.bf16.mxu0 0
      %539 = vmatpush1.bf16.msra.mxu0 0
      %540 = vmatprep.subr.bf16.mxu0 0
      %541 = vmatpush1.bf16.msra.mxu0 0
      %542 = vmatprep.subr.bf16.mxu0 0
      %543 = vmatpush1.bf16.msra.mxu0 0
      %544 = vmatprep.subr.bf16.mxu0 0
      %545 = vmatpush1.bf16.msra.mxu0 0
      %546 = vmatprep.subr.bf16.mxu0 0
      %547 = vmatpush1.bf16.msra.mxu0 0
      %548 = vmatprep.subr.bf16.mxu0 0
      %549 = vmatpush1.bf16.msra.mxu0 0
      %550 = vmatprep.subr.bf16.mxu0 0
      %551 = vmatpush1.bf16.msra.mxu0 0
      %552 = vmatprep.subr.bf16.mxu0 0
      %553 = vmatpush1.bf16.msra.mxu0 0
      %554 = vmatprep.mubr.bf16.mxu0 0
      %555 = vmatmul.mubr.bf16.gmra.mrb[0].mxu0 %v520
      %v556 = vpop.f32.mrb[0].mxu0
      %v557 = vadd.f32 0.0, %v556
      %v558 = vpop.f32.mrb[0].mxu0
      %v559 = vpop.f32.mrb[0].mxu0
      %v560 = vpop.f32.mrb[0].mxu0
      %561 = vdwg.mxu0
      %v562 = vadd.f32 %v499, %v557
      %v563 = vld [vmem:[%s2] sm:$0x1]
      %v565 = vlaneseq
      %v566 = vshrl.u32 %v565, 7
      %v567 = vsub.s32 0, %v566
      %v568 = vrot.slane %v563, %v567
      %v570 = vadd.f32 %v562, %v568
      %v571 = vmul.f32 %v570, 0.5
      %v572 = vmul.f32 %v570, 0.044715
      %v573 = vmul.f32 %v572, %v570
      %v574 = vmul.f32 %v573, %v570
      %v575 = vadd.f32 %v570, %v574
      %v576 = vmul.f32 %v575, 0.7978846
      %v577 = vtanh.pop %v576
      %v578 = vadd.f32 %v577, 1.0
      %v579 = vmul.f32 %v571, %v578
      %v580 = vld [vmem:[%s3] sm:$0x1]
      %v581 = vld [vmem:[%s4] sm:$0x1]
      %v582 = vsel %vm275, %v579, 0.0
      %583 = vadd.xlane.f32.xlu0 %v582
      %v584 = vpop.xlane.xlu0 %583
      %v585 = vrcp.pop 32.0
      %v586 = vmul.f32 %v584, %v585
      %v587 = vsub.f32 %v579, %v586
      %v588 = vmul.f32 %v587, %v587
      %v589 = vsel %vm275, %v588, 0.0
      %590 = vadd.xlane.f32.xlu0 %v589
      %v591 = vpop.xlane.xlu0 %590
      %v592 = vmul.f32 %v591, %v585
      %v593 = vadd.f32 %v592, 1e-05
      %v594 = vrsqrt.pop %v593
      %v595 = vmul.f32 %v587, %v594
      %v597 = vlaneseq
      %v598 = vshrl.u32 %v597, 7
      %v599 = vsub.s32 0, %v598
      %v600 = vrot.slane %v580, %v599
      %v602 = vmul.f32 %v595, %v600
      %v604 = vlaneseq
      %v605 = vshrl.u32 %v604, 7
      %v606 = vsub.s32 0, %v605
      %v607 = vrot.slane %v581, %v606
      %v609 = vadd.f32 %v602, %v607
      %v610 = vld [vmem:[%s5] sm:$0xff]
      %v611 = vadd.f32 %v609, %v610
      %612 = vst.msk [vmem:[%s249] sm:$0xff] %vm275, %v611
      %p613 = scmp.lt.s32.totalorder %s17, 1
      %s614 = scalar_select %p613, %s17, 1
      %s615 = smul.addr %s614, 8
      %s616 = scalar_lea.vmem %s6, %s615
      // Predicated region
      $region45: #{transformer_forward.8} parent=43 // pred_check
        %p617 = pneg %p166
      $region46: #{transformer_forward.8} parent=43 // pred_check_branch
        %619 = sbr.rel (%p617) target = $region48
      $region47: #{transformer_forward.8} parent=43 // pred_region
        _
      $region48: #{transformer_forward.8} parent=43 // pred_fallthru
        _
    $region44: #{transformer_forward.8} parent=5 // pred_fallthru
      _
    %p620 = scmp.le.s32.totalorder 2, %s12
    // Predicated region
    $region49: #{transformer_forward.8} parent=5 // pred_check
      %p621 = pneg %p620
    $region50: #{transformer_forward.8} parent=5 // pred_check_branch
      %623 = sbr.rel (%p621) target = $region52
    $region51: #{transformer_forward.8} parent=5 // pred_region
      %s624 = ssub.s32 %s12, 2
      // Predicated region
      $region53: #{transformer_forward.8} parent=51 // pred_check
        %p625 = pneg %p172
      $region54: #{transformer_forward.8} parent=51 // pred_check_branch
        %627 = sbr.rel (%p625) target = $region56
      $region55: #{transformer_forward.8} parent=51 // pred_region
        %p628 = scmp.lt.s32.totalorder %s18, 1
        %s629 = scalar_select %p628, %s18, 1
        %s630 = smul.addr %s629, 8
        %s631 = scalar_lea.vmem %s6, %s630
      $region56: #{transformer_forward.8} parent=51 // pred_fallthru
        _
    $region52: #{transformer_forward.8} parent=5 // pred_fallthru
      _
  $region6: #{transformer_forward.8} parent=0 // loop_footer
    %s16 = sadd.s32 1, %s12
  $region7: #{transformer_forward.8} parent=0 // loop_footer_branch
    %11 = sbr.rel target = $region3
  $region8: #{transformer_forward.8} parent=0 // loop_exit
    _

// kernel: transformer_forward.13
$region0: #{transformer_forward.13}
  #allocation0 [shape = 'u32[]', space=smem, size = 0x4, offset = 0x4, fixed_abs, tag = 'smem constant byte address 0x4 - core index']
  #allocation1 [shape = 'u32[144,128]{1,0:T(1,128)}', space=vmem, size = 0x12000, scoped, tag = 'internal scratch']
  %s0 = inlined_call_operand.vmem [shape: f32[2,8,32], index: 0, kind: input, shape index: {}]
  %s1 = inlined_call_operand.vmem [shape: f32[1,32], index: 1, kind: input, shape index: {}]
  %s2 = inlined_call_operand.vmem [shape: f32[1,32], index: 2, kind: input, shape index: {}]
  %s3 = inlined_call_operand.vmem [shape: bf16[32,128], index: 3, kind: input, shape index: {}]
  %s4 = inlined_call_operand.hbm [shape: f32[2,8,128], index: 4, kind: output, shape index: {}]
  %s5 = sld [smem:[#allocation0]]
  $region49: #{transformer_forward.13} parent=0
    _
  %s7 = ssub.s32 1, %s5
  %s8 = scalar_select 0, %s7, %s5
  $region1: #{transformer_forward.13} parent=0
    #allocation2 [shape = 'u8[8192]{0}', space=vmem, size = 0x2000, scoped, tag = 'output window, operand 0']
    #allocation3 [shape = 's32[2]{0}', space=sflag, size = 0x8, scoped, tag = 'scoped memory for transformer_forward.13']
    %9 = vsyncpa [#allocation3], 0
    %s10 = scalar_lea.sflag [#allocation3], 1
    %11 = vsyncpa %s10, 0
    loop: start=0, step=1, limit=4
    $region2: #{transformer_forward.13} parent=1 // loop_pre_header
      _
    $region3: #{transformer_forward.13} parent=1 // loop_header
      %s13 = sphi 0, %s17
      %p14 = scmp.ge.s32.totalorder %s13, 4
      %s23 = sphi 0, %s25
      %s26 = sphi 0, %s23
      %s27 = sphi 0, %s26
      %s43 = sphi 0, %s27
      %s47 = sphi 0, %s47
      %s49 = sphi 0, %s47
      %s50 = sphi 0, %s49
      %s64 = sphi 0, %s50
      %s68 = sphi 0, %s68
      %s70 = sphi 0, %s68
      %s71 = sphi 0, %s70
      %s85 = sphi 0, %s71
      %s89 = sphi 0, %s89
      %s91 = sphi 0, %s89
      %s92 = sphi 0, %s91
      %s106 = sphi 0, %s92
      %s112 = sphi 0, %s114
      %s115 = sphi 0, %s112
      %s116 = sphi 0, %s115
      %s132 = sphi 0, %s116
    $region4: #{transformer_forward.13} parent=1 // loop_header_branch
      %16 = sbr.rel (%p14) target = $region8
    $region5: #{transformer_forward.13} parent=1 // loop_body
      %s18 = ssub.s32 %s13, 1
      %s19 = ssub.s32 %s13, 2
      %s20 = sadd.s32 %s13, 1
      %s21 = ssub.s32 %s13, %s20
      %p22 = scmp.eq.s32.totalorder %s21, 0
      %s24 = sadd.s32 %s23, 1
      %s25 = scalar_select %p22, %s23, %s24
      %p28 = pneg %p22
      %p29 = scmp.eq.s32.totalorder %s13, 1
      %p30 = por %p28, %p29
      %p31 = scmp.ne.s32.totalorder %s23, %s26
      %p32 = scmp.eq.s32.totalorder %s13, 0
      %p33 = por %p31, %p32
      %p34 = scmp.ne.s32.totalorder %s23, %s26
      %p35 = scmp.eq.s32.totalorder %s18, 1
      %p36 = por %p34, %p35
      %p37 = scmp.ne.s32.totalorder %s26, %s27
      %p38 = scmp.eq.s32.totalorder %s18, 0
      %p39 = por %p37, %p38
      %p40 = scmp.ne.s32.totalorder %s26, %s27
      %p41 = scmp.eq.s32.totalorder %s19, 1
      %p42 = por %p40, %p41
      %p44 = scmp.ne.s32.totalorder %s27, %s43
      %p45 = scmp.eq.s32.totalorder %s19, 0
      %p46 = por %p44, %p45
      %s48 = sadd.s32 %s47, 1
      %p51 = scmp.eq.s32.totalorder %s13, 1
      %p52 = scmp.ne.s32.totalorder %s47, %s49
      %p53 = scmp.eq.s32.totalorder %s13, 0
      %p54 = por %p52, %p53
      %p55 = scmp.ne.s32.totalorder %s47, %s49
      %p56 = scmp.eq.s32.totalorder %s18, 1
      %p57 = por %p55, %p56
      %p58 = scmp.ne.s32.totalorder %s49, %s50
      %p59 = scmp.eq.s32.totalorder %s18, 0
      %p60 = por %p58, %p59
      %p61 = scmp.ne.s32.totalorder %s49, %s50
      %p62 = scmp.eq.s32.totalorder %s19, 1
      %p63 = por %p61, %p62
      %p65 = scmp.ne.s32.totalorder %s50, %s64
      %p66 = scmp.eq.s32.totalorder %s19, 0
      %p67 = por %p65, %p66
      %s69 = sadd.s32 %s68, 1
      %p72 = scmp.eq.s32.totalorder %s13, 1
      %p73 = scmp.ne.s32.totalorder %s68, %s70
      %p74 = scmp.eq.s32.totalorder %s13, 0
      %p75 = por %p73, %p74
      %p76 = scmp.ne.s32.totalorder %s68, %s70
      %p77 = scmp.eq.s32.totalorder %s18, 1
      %p78 = por %p76, %p77
      %p79 = scmp.ne.s32.totalorder %s70, %s71
      %p80 = scmp.eq.s32.totalorder %s18, 0
      %p81 = por %p79, %p80
      %p82 = scmp.ne.s32.totalorder %s70, %s71
      %p83 = scmp.eq.s32.totalorder %s19, 1
      %p84 = por %p82, %p83
      %p86 = scmp.ne.s32.totalorder %s71, %s85
      %p87 = scmp.eq.s32.totalorder %s19, 0
      %p88 = por %p86, %p87
      %s90 = sadd.s32 %s89, 1
      %p93 = scmp.eq.s32.totalorder %s13, 1
      %p94 = scmp.ne.s32.totalorder %s89, %s91
      %p95 = scmp.eq.s32.totalorder %s13, 0
      %p96 = por %p94, %p95
      %p97 = scmp.ne.s32.totalorder %s89, %s91
      %p98 = scmp.eq.s32.totalorder %s18, 1
      %p99 = por %p97, %p98
      %p100 = scmp.ne.s32.totalorder %s91, %s92
      %p101 = scmp.eq.s32.totalorder %s18, 0
      %p102 = por %p100, %p101
      %p103 = scmp.ne.s32.totalorder %s91, %s92
      %p104 = scmp.eq.s32.totalorder %s19, 1
      %p105 = por %p103, %p104
      %p107 = scmp.ne.s32.totalorder %s92, %s106
      %p108 = scmp.eq.s32.totalorder %s19, 0
      %p109 = por %p107, %p108
      %s110 = ssub.s32 %s13, %s20
      %p111 = scmp.eq.s32.totalorder %s110, 0
      %s113 = sadd.s32 %s112, 1
      %s114 = scalar_select %p111, %s112, %s113
      %p117 = pneg %p111
      %p118 = scmp.eq.s32.totalorder %s13, 1
      %p119 = por %p117, %p118
      %p120 = scmp.ne.s32.totalorder %s112, %s115
      %p121 = scmp.eq.s32.totalorder %s13, 0
      %p122 = por %p120, %p121
      %p123 = scmp.ne.s32.totalorder %s112, %s115
      %p124 = scmp.eq.s32.totalorder %s18, 1
      %p125 = por %p123, %p124
      %p126 = scmp.ne.s32.totalorder %s115, %s116
      %p127 = scmp.eq.s32.totalorder %s18, 0
      %p128 = por %p126, %p127
      %p129 = scmp.ne.s32.totalorder %s115, %s116
      %p130 = scmp.eq.s32.totalorder %s19, 1
      %p131 = por %p129, %p130
      %p133 = scmp.ne.s32.totalorder %s116, %s132
      %p134 = scmp.eq.s32.totalorder %s19, 0
      %p135 = por %p133, %p134
      %p136 = scmp.le.s32.totalorder 1, %s13
      %p137 = scmp.lt.s32.totalorder %s13, 3
      %p138 = pnand %p136, %p137
      %p139 = pneg %p138
      // Predicated region
      $region9: #{transformer_forward.13} parent=5 // pred_check
        _
      $region10: #{transformer_forward.13} parent=5 // pred_check_branch
        %141 = sbr.rel (%p138) target = $region12
      $region11: #{transformer_forward.13} parent=5 // pred_region
        %s142 = ssub.s32 %s13, 1
        // Predicated region
        $region13: #{transformer_forward.13} parent=11 // pred_check
          %p143 = pneg %p60
        $region14: #{transformer_forward.13} parent=11 // pred_check_branch
          %145 = sbr.rel (%p143) target = $region16
        $region15: #{transformer_forward.13} parent=11 // pred_region
          _
        $region16: #{transformer_forward.13} parent=11 // pred_fallthru
          _
        // Predicated region
        $region17: #{transformer_forward.13} parent=11 // pred_check
          %p146 = pneg %p81
        $region18: #{transformer_forward.13} parent=11 // pred_check_branch
          %148 = sbr.rel (%p146) target = $region20
        $region19: #{transformer_forward.13} parent=11 // pred_region
          _
        $region20: #{transformer_forward.13} parent=11 // pred_fallthru
          _
        // Predicated region
        $region21: #{transformer_forward.13} parent=11 // pred_check
          %p149 = pneg %p102
        $region22: #{transformer_forward.13} parent=11 // pred_check_branch
          %151 = sbr.rel (%p149) target = $region24
        $region23: #{transformer_forward.13} parent=11 // pred_region
          _
        $region24: #{transformer_forward.13} parent=11 // pred_fallthru
          _
      $region12: #{transformer_forward.13} parent=5 // pred_fallthru
        _
      %p152 = scmp.lt.s32.totalorder %s13, 2
      // Predicated region
      $region25: #{transformer_forward.13} parent=5 // pred_check
        %p153 = pneg %p152
      $region26: #{transformer_forward.13} parent=5 // pred_check_branch
        %155 = sbr.rel (%p153) target = $region28
      $region27: #{transformer_forward.13} parent=5 // pred_region
        // Predicated region
        $region29: #{transformer_forward.13} parent=27 // pred_check
          %p156 = pneg %p33
        $region30: #{transformer_forward.13} parent=27 // pred_check_branch
          %158 = sbr.rel (%p156) target = $region32
        $region31: #{transformer_forward.13} parent=27 // pred_region
          %p159 = scmp.lt.s32.totalorder %s13, 1
          %s160 = scalar_select %p159, %s13, 1
          %s161 = smul.addr %s160, 8
          %s162 = scalar_lea.vmem %s0, %s161
        $region32: #{transformer_forward.13} parent=27 // pred_fallthru
          _
      $region28: #{transformer_forward.13} parent=5 // pred_fallthru
        _
      %p163 = scmp.le.s32.totalorder 1, %s13
      %p164 = scmp.lt.s32.totalorder %s13, 3
      %p165 = pnand %p163, %p164
      %p166 = pneg %p165
      // Predicated region
      $region33: #{transformer_forward.13} parent=5 // pred_check
        _
      $region34: #{transformer_forward.13} parent=5 // pred_check_branch
        %168 = sbr.rel (%p165) target = $region36
      $region35: #{transformer_forward.13} parent=5 // pred_region
        %s169 = ssub.s32 %s13, 1
        %p170 = scmp.lt.s32.totalorder %s18, 1
        %s171 = scalar_select %p170, %s18, 1
        %s172 = smul.addr %s171, 8
        %s173 = scalar_lea.vmem %s0, %s172
        %p174 = pneg %p39
        %p175 = pneg %p36
        %p176 = pneg %p60
        %p177 = pneg %p57
        %p178 = pneg %p81
        %p179 = pneg %p78
        %p180 = pneg %p102
        %p181 = pneg %p99
        %p182 = pneg %p128
        %p183 = pneg %p125
        %s184 = sand.u32 %s115, 1
        %s185 = scalar_lea.sflag [#allocation3], %s184
        %s186 = sand.u32 %s115, 1
        %s187 = smul.addr %s186, 8
        %s188 = scalar_lea.vmem [#allocation2], %s187
        %p189 = scmp.lt.s32.totalorder %s18, 1
        %s190 = scalar_select %p189, %s18, 1
        %s191 = smul.addr %s190, 8
        %s192 = scalar_lea.vmem %s0, %s191
        %v194 = vld [vmem:[%s192] sm:$0xff]
        %v195 = vld [vmem:[%s1] sm:$0x1]
        %v196 = vld [vmem:[%s2] sm:$0x1]
        %vm197 = vcmask 261120
        %v198 = vsel %vm197, %v194, 0.0
        %199 = vadd.xlane.f32.xlu0 %v198
        %v200 = vpop.xlane.xlu0 %199
        %v201 = vrcp.pop 32.0
        %v202 = vmul.f32 %v200, %v201
        %v203 = vsub.f32 %v194, %v202
        %v204 = vmul.f32 %v203, %v203
        %v205 = vsel %vm197, %v204, 0.0
        %206 = vadd.xlane.f32.xlu0 %v205
        %v207 = vpop.xlane.xlu0 %206
        %v208 = vmul.f32 %v207, %v201
        %v209 = vadd.f32 %v208, 1e-05
        %v210 = vrsqrt.pop %v209
        %v211 = vmul.f32 %v203, %v210
        %v213 = vlaneseq
        %v214 = vshrl.u32 %v213, 7
        %v215 = vsub.s32 0, %v214
        %v216 = vrot.slane %v195, %v215
        %v218 = vmul.f32 %v211, %v216
        %v220 = vlaneseq
        %v221 = vshrl.u32 %v220, 7
        %v222 = vsub.s32 0, %v221
        %v223 = vrot.slane %v196, %v222
        %v225 = vadd.f32 %v218, %v223
        %v226 = vpack.c.bf16 %v225, %v225
        %v227 = vld [vmem:[%s3] sm:$0xf]
        %v228 = vld [vmem:[%s3 + $0x4] sm:$0xf]
        %v229 = vld [vmem:[%s3 + $0x8] sm:$0xf]
        %v230 = vld [vmem:[%s3 + $0xc] sm:$0xf]
        %v235 = vunpack.c.l.b16 %v227
        %v236 = vunpack.c.l.b16 %v228
        %v237 = vunpack.c.l.b16 %v229
        %v238 = vunpack.c.l.b16 %v230
        %v239 = vpack.c.b16 %v236, %v235
        %v240 = vpack.c.b16 %v238, %v237
        %v244 = vsel %vm197, %v226, 0
        %246 = vmatprep.subr.bf16.mxu0 0
        %247 = vmatpush1.bf16.msra.mxu0 %v239
        %248 = vmatprep.subr.bf16.mxu0 0
        %249 = vmatpush1.bf16.msra.mxu0 %v240
        %250 = vmatprep.subr.bf16.mxu0 0
        %251 = vmatpush1.bf16.msra.mxu0 0
        %252 = vmatprep.subr.bf16.mxu0 0
        %253 = vmatpush1.bf16.msra.mxu0 0
        %254 = vmatprep.subr.bf16.mxu0 0
        %255 = vmatpush1.bf16.msra.mxu0 0
        %256 = vmatprep.subr.bf16.mxu0 0
        %257 = vmatpush1.bf16.msra.mxu0 0
        %258 = vmatprep.subr.bf16.mxu0 0
        %259 = vmatpush1.bf16.msra.mxu0 0
        %260 = vmatprep.subr.bf16.mxu0 0
        %261 = vmatpush1.bf16.msra.mxu0 0
        %262 = vmatprep.subr.bf16.mxu0 0
        %263 = vmatpush1.bf16.msra.mxu0 0
        %264 = vmatprep.subr.bf16.mxu0 0
        %265 = vmatpush1.bf16.msra.mxu0 0
        %266 = vmatprep.subr.bf16.mxu0 0
        %267 = vmatpush1.bf16.msra.mxu0 0
        %268 = vmatprep.subr.bf16.mxu0 0
        %269 = vmatpush1.bf16.msra.mxu0 0
        %270 = vmatprep.subr.bf16.mxu0 0
        %271 = vmatpush1.bf16.msra.mxu0 0
        %272 = vmatprep.subr.bf16.mxu0 0
        %273 = vmatpush1.bf16.msra.mxu0 0
        %274 = vmatprep.subr.bf16.mxu0 0
        %275 = vmatpush1.bf16.msra.mxu0 0
        %276 = vmatprep.subr.bf16.mxu0 0
        %277 = vmatpush1.bf16.msra.mxu0 0
        %278 = vmatprep.mubr.bf16.mxu0 0
        %279 = vmatmul.mubr.bf16.gmra.mrb[0].mxu0 %v244
        %v280 = vpop.f32.mrb[0].mxu0
        %v281 = vadd.f32 0.0, %v280
        %v282 = vpop.f32.mrb[0].mxu0
        %v283 = vpop.f32.mrb[0].mxu0
        %v284 = vpop.f32.mrb[0].mxu0
        %285 = vdwg.mxu0
        %286 = vst [vmem:[%s188] sm:$0xff] %v281
        %s287 = sand.u32 %s115, 1
        %s288 = scalar_lea.sflag [#allocation3], %s287
        %s289 = sand.u32 %s115, 1
        %s290 = smul.addr %s289, 8
        %s291 = scalar_lea.vmem [#allocation2], %s290
        // Predicated region
        $region37: #{transformer_forward.13} parent=35 // pred_check
          %p292 = pneg %p125
        $region38: #{transformer_forward.13} parent=35 // pred_check_branch
          %294 = sbr.rel (%p292) target = $region40
        $region39: #{transformer_forward.13} parent=35 // pred_region
          %s296 = ssub.s32 128, 128
          %297 = vsyncadd %s288, %s296
          %s298 = smul.addr %s18, 128
          %s299 = scalar_lea.hbm %s4, %s298
          %s301 = sshll.u32 %s291, 4
          %s302 = int_to_ptr.vmem [resolvable:$true] %s301
          %304 = dma.vmem_to_hbm [thread:$0]  %s302, 128, %s299, %s288
        $region40: #{transformer_forward.13} parent=35 // pred_fallthru
          _
      $region36: #{transformer_forward.13} parent=5 // pred_fallthru
        _
      %p305 = scmp.le.s32.totalorder 2, %s13
      // Predicated region
      $region41: #{transformer_forward.13} parent=5 // pred_check
        %p306 = pneg %p305
      $region42: #{transformer_forward.13} parent=5 // pred_check_branch
        %308 = sbr.rel (%p306) target = $region44
      $region43: #{transformer_forward.13} parent=5 // pred_region
        %s309 = ssub.s32 %s13, 2
        // Predicated region
        $region45: #{transformer_forward.13} parent=43 // pred_check
          %p310 = pneg %p131
        $region46: #{transformer_forward.13} parent=43 // pred_check_branch
          %312 = sbr.rel (%p310) target = $region48
        $region47: #{transformer_forward.13} parent=43 // pred_region
          %s313 = sand.u32 %s116, 1
          %s314 = scalar_lea.sflag [#allocation3], %s313
          %s315 = sand.u32 %s116, 1
          %s316 = smul.addr %s315, 8
          %s317 = scalar_lea.vmem [#allocation2], %s316
          %318 = dma.done %s314, 128
        $region48: #{transformer_forward.13} parent=43 // pred_fallthru
          _
      $region44: #{transformer_forward.13} parent=5 // pred_fallthru
        _
    $region6: #{transformer_forward.13} parent=1 // loop_footer
      %s17 = sadd.s32 1, %s13
    $region7: #{transformer_forward.13} parent=1 // loop_footer_branch
      %12 = sbr.rel target = $region3
    $region8: #{transformer_forward.13} parent=1 // loop_exit
      _
    %319 = vsyncpa [#allocation3], 1
    %s320 = scalar_lea.sflag [#allocation3], 1
    %321 = vsyncpa %s320, 1

// kernel: transformer_forward.9
$region0: #{transformer_forward.9}
  #allocation0 [shape = 'u32[]', space=smem, size = 0x4, offset = 0x4, fixed_abs, tag = 'smem constant byte address 0x4 - core index']
  #allocation1 [shape = 'u32[144,128]{1,0:T(1,128)}', space=vmem, size = 0x12000, scoped, tag = 'internal scratch']
  %s0 = inlined_call_operand.vmem [shape: f32[2,8,32], index: 0, kind: input, shape index: {}]
  %s1 = inlined_call_operand.vmem [shape: f32[2,1,8], index: 1, kind: input, shape index: {}]
  %s2 = inlined_call_operand.vmem [shape: f32[1,32], index: 2, kind: input, shape index: {}]
  %s3 = inlined_call_operand.vmem [shape: f32[1,32], index: 3, kind: input, shape index: {}]
  %s4 = inlined_call_operand.vmem [shape: bf16[2,32,16], index: 4, kind: input, shape index: {}]
  %s5 = inlined_call_operand.vmem [shape: f32[2,1,16], index: 5, kind: input, shape index: {}]
  %s6 = inlined_call_operand.vmem [shape: bf16[2,32,16], index: 6, kind: input, shape index: {}]
  %s7 = inlined_call_operand.vmem [shape: f32[2,1,16], index: 7, kind: input, shape index: {}]
  %s8 = inlined_call_operand.vmem [shape: bf16[2,32,16], index: 8, kind: input, shape index: {}]
  %s9 = inlined_call_operand.vmem [shape: f32[2,1,16], index: 9, kind: input, shape index: {}]
  %s10 = inlined_call_operand.vmem [shape: bf16[2,16,32], index: 10, kind: input, shape index: {}]
  %s11 = inlined_call_operand.vmem [shape: f32[1,32], index: 11, kind: input, shape index: {}]
  %s12 = inlined_call_operand.vmem [shape: f32[1,32], index: 12, kind: input, shape index: {}]
  %s13 = inlined_call_operand.vmem [shape: f32[1,32], index: 13, kind: input, shape index: {}]
  %s14 = inlined_call_operand.vmem [shape: bf16[32,64], index: 14, kind: input, shape index: {}]
  %s15 = inlined_call_operand.vmem [shape: f32[1,64], index: 15, kind: input, shape index: {}]
  %s16 = inlined_call_operand.vmem [shape: bf16[64,32], index: 16, kind: input, shape index: {}]
  %s17 = inlined_call_operand.vmem [shape: f32[1,32], index: 17, kind: input, shape index: {}]
  %s18 = inlined_call_operand.vmem [shape: f32[2,8,32], index: 18, kind: output, shape index: {}]
  %s19 = sld [smem:[#allocation0]]
  $region105: #{transformer_forward.9} parent=0
    _
  %s21 = ssub.s32 1, %s19
  %s22 = scalar_select 0, %s21, %s19
  loop: start=0, step=1, limit=4
  $region2: #{transformer_forward.9} parent=0 // loop_pre_header
    _
  $region3: #{transformer_forward.9} parent=0 // loop_header
    %s24 = sphi 0, %s28
    %p25 = scmp.ge.s32.totalorder %s24, 4
    %s34 = sphi 0, %s36
    %s37 = sphi 0, %s34
    %s38 = sphi 0, %s37
    %s54 = sphi 0, %s38
    %s60 = sphi 0, %s62
    %s63 = sphi 0, %s60
    %s64 = sphi 0, %s63
    %s80 = sphi 0, %s64
    %s84 = sphi 0, %s84
    %s86 = sphi 0, %s84
    %s87 = sphi 0, %s86
    %s101 = sphi 0, %s87
    %s105 = sphi 0, %s105
    %s107 = sphi 0, %s105
    %s108 = sphi 0, %s107
    %s122 = sphi 0, %s108
    %s126 = sphi 0, %s126
    %s128 = sphi 0, %s126
    %s129 = sphi 0, %s128
    %s143 = sphi 0, %s129
    %s147 = sphi 0, %s147
    %s149 = sphi 0, %s147
    %s150 = sphi 0, %s149
    %s164 = sphi 0, %s150
    %s168 = sphi 0, %s168
    %s170 = sphi 0, %s168
    %s171 = sphi 0, %s170
    %s185 = sphi 0, %s171
    %s189 = sphi 0, %s189
    %s191 = sphi 0, %s189
    %s192 = sphi 0, %s191
    %s206 = sphi 0, %s192
    %s210 = sphi 0, %s210
    %s212 = sphi 0, %s210
    %s213 = sphi 0, %s212
    %s227 = sphi 0, %s213
    %s231 = sphi 0, %s231
    %s233 = sphi 0, %s231
    %s234 = sphi 0, %s233
    %s248 = sphi 0, %s234
    %s252 = sphi 0, %s252
    %s254 = sphi 0, %s252
    %s255 = sphi 0, %s254
    %s269 = sphi 0, %s255
    %s273 = sphi 0, %s273
    %s275 = sphi 0, %s273
    %s276 = sphi 0, %s275
    %s290 = sphi 0, %s276
    %s294 = sphi 0, %s294
    %s296 = sphi 0, %s294
    %s297 = sphi 0, %s296
    %s311 = sphi 0, %s297
    %s315 = sphi 0, %s315
    %s317 = sphi 0, %s315
    %s318 = sphi 0, %s317
    %s332 = sphi 0, %s318
    %s336 = sphi 0, %s336
    %s338 = sphi 0, %s336
    %s339 = sphi 0, %s338
    %s353 = sphi 0, %s339
    %s357 = sphi 0, %s357
    %s359 = sphi 0, %s357
    %s360 = sphi 0, %s359
    %s374 = sphi 0, %s360
    %s378 = sphi 0, %s378
    %s380 = sphi 0, %s378
    %s381 = sphi 0, %s380
    %s395 = sphi 0, %s381
    %s399 = sphi 0, %s399
    %s401 = sphi 0, %s399
    %s402 = sphi 0, %s401
    %s416 = sphi 0, %s402
    %s422 = sphi 0, %s424
    %s425 = sphi 0, %s422
    %s426 = sphi 0, %s425
    %s442 = sphi 0, %s426
  $region4: #{transformer_forward.9} parent=0 // loop_header_branch
    %27 = sbr.rel (%p25) target = $region8
  $region5: #{transformer_forward.9} parent=0 // loop_body
    %s29 = ssub.s32 %s24, 1
    %s30 = ssub.s32 %s24, 2
    %s31 = sadd.s32 %s24, 1
    %s32 = ssub.s32 %s24, %s31
    %p33 = scmp.eq.s32.totalorder %s32, 0
    %s35 = sadd.s32 %s34, 1
    %s36 = scalar_select %p33, %s34, %s35
    %p39 = pneg %p33
    %p40 = scmp.eq.s32.totalorder %s24, 1
    %p41 = por %p39, %p40
    %p42 = scmp.ne.s32.totalorder %s34, %s37
    %p43 = scmp.eq.s32.totalorder %s24, 0
    %p44 = por %p42, %p43
    %p45 = scmp.ne.s32.totalorder %s34, %s37
    %p46 = scmp.eq.s32.totalorder %s29, 1
    %p47 = por %p45, %p46
    %p48 = scmp.ne.s32.totalorder %s37, %s38
    %p49 = scmp.eq.s32.totalorder %s29, 0
    %p50 = por %p48, %p49
    %p51 = scmp.ne.s32.totalorder %s37, %s38
    %p52 = scmp.eq.s32.totalorder %s30, 1
    %p53 = por %p51, %p52
    %p55 = scmp.ne.s32.totalorder %s38, %s54
    %p56 = scmp.eq.s32.totalorder %s30, 0
    %p57 = por %p55, %p56
    %s58 = ssub.s32 %s24, %s31
    %p59 = scmp.eq.s32.totalorder %s58, 0
    %s61 = sadd.s32 %s60, 1
    %s62 = scalar_select %p59, %s60, %s61
    %p65 = pneg %p59
    %p66 = scmp.eq.s32.totalorder %s24, 1
    %p67 = por %p65, %p66
    %p68 = scmp.ne.s32.totalorder %s60, %s63
    %p69 = scmp.eq.s32.totalorder %s24, 0
    %p70 = por %p68, %p69
    %p71 = scmp.ne.s32.totalorder %s60, %s63
    %p72 = scmp.eq.s32.totalorder %s29, 1
    %p73 = por %p71, %p72
    %p74 = scmp.ne.s32.totalorder %s63, %s64
    %p75 = scmp.eq.s32.totalorder %s29, 0
    %p76 = por %p74, %p75
    %p77 = scmp.ne.s32.totalorder %s63, %s64
    %p78 = scmp.eq.s32.totalorder %s30, 1
    %p79 = por %p77, %p78
    %p81 = scmp.ne.s32.totalorder %s64, %s80
    %p82 = scmp.eq.s32.totalorder %s30, 0
    %p83 = por %p81, %p82
    %s85 = sadd.s32 %s84, 1
    %p88 = scmp.eq.s32.totalorder %s24, 1
    %p89 = scmp.ne.s32.totalorder %s84, %s86
    %p90 = scmp.eq.s32.totalorder %s24, 0
    %p91 = por %p89, %p90
    %p92 = scmp.ne.s32.totalorder %s84, %s86
    %p93 = scmp.eq.s32.totalorder %s29, 1
    %p94 = por %p92, %p93
    %p95 = scmp.ne.s32.totalorder %s86, %s87
    %p96 = scmp.eq.s32.totalorder %s29, 0
    %p97 = por %p95, %p96
    %p98 = scmp.ne.s32.totalorder %s86, %s87
    %p99 = scmp.eq.s32.totalorder %s30, 1
    %p100 = por %p98, %p99
    %p102 = scmp.ne.s32.totalorder %s87, %s101
    %p103 = scmp.eq.s32.totalorder %s30, 0
    %p104 = por %p102, %p103
    %s106 = sadd.s32 %s105, 1
    %p109 = scmp.eq.s32.totalorder %s24, 1
    %p110 = scmp.ne.s32.totalorder %s105, %s107
    %p111 = scmp.eq.s32.totalorder %s24, 0
    %p112 = por %p110, %p111
    %p113 = scmp.ne.s32.totalorder %s105, %s107
    %p114 = scmp.eq.s32.totalorder %s29, 1
    %p115 = por %p113, %p114
    %p116 = scmp.ne.s32.totalorder %s107, %s108
    %p117 = scmp.eq.s32.totalorder %s29, 0
    %p118 = por %p116, %p117
    %p119 = scmp.ne.s32.totalorder %s107, %s108
    %p120 = scmp.eq.s32.totalorder %s30, 1
    %p121 = por %p119, %p120
    %p123 = scmp.ne.s32.totalorder %s108, %s122
    %p124 = scmp.eq.s32.totalorder %s30, 0
    %p125 = por %p123, %p124
    %s127 = sadd.s32 %s126, 1
    %p130 = scmp.eq.s32.totalorder %s24, 1
    %p131 = scmp.ne.s32.totalorder %s126, %s128
    %p132 = scmp.eq.s32.totalorder %s24, 0
    %p133 = por %p131, %p132
    %p134 = scmp.ne.s32.totalorder %s126, %s128
    %p135 = scmp.eq.s32.totalorder %s29, 1
    %p136 = por %p134, %p135
    %p137 = scmp.ne.s32.totalorder %s128, %s129
    %p138 = scmp.eq.s32.totalorder %s29, 0
    %p139 = por %p137, %p138
    %p140 = scmp.ne.s32.totalorder %s128, %s129
    %p141 = scmp.eq.s32.totalorder %s30, 1
    %p142 = por %p140, %p141
    %p144 = scmp.ne.s32.totalorder %s129, %s143
    %p145 = scmp.eq.s32.totalorder %s30, 0
    %p146 = por %p144, %p145
    %s148 = sadd.s32 %s147, 1
    %p151 = scmp.eq.s32.totalorder %s24, 1
    %p152 = scmp.ne.s32.totalorder %s147, %s149
    %p153 = scmp.eq.s32.totalorder %s24, 0
    %p154 = por %p152, %p153
    %p155 = scmp.ne.s32.totalorder %s147, %s149
    %p156 = scmp.eq.s32.totalorder %s29, 1
    %p157 = por %p155, %p156
    %p158 = scmp.ne.s32.totalorder %s149, %s150
    %p159 = scmp.eq.s32.totalorder %s29, 0
    %p160 = por %p158, %p159
    %p161 = scmp.ne.s32.totalorder %s149, %s150
    %p162 = scmp.eq.s32.totalorder %s30, 1
    %p163 = por %p161, %p162
    %p165 = scmp.ne.s32.totalorder %s150, %s164
    %p166 = scmp.eq.s32.totalorder %s30, 0
    %p167 = por %p165, %p166
    %s169 = sadd.s32 %s168, 1
    %p172 = scmp.eq.s32.totalorder %s24, 1
    %p173 = scmp.ne.s32.totalorder %s168, %s170
    %p174 = scmp.eq.s32.totalorder %s24, 0
    %p175 = por %p173, %p174
    %p176 = scmp.ne.s32.totalorder %s168, %s170
    %p177 = scmp.eq.s32.totalorder %s29, 1
    %p178 = por %p176, %p177
    %p179 = scmp.ne.s32.totalorder %s170, %s171
    %p180 = scmp.eq.s32.totalorder %s29, 0
    %p181 = por %p179, %p180
    %p182 = scmp.ne.s32.totalorder %s170, %s171
    %p183 = scmp.eq.s32.totalorder %s30, 1
    %p184 = por %p182, %p183
    %p186 = scmp.ne.s32.totalorder %s171, %s185
    %p187 = scmp.eq.s32.totalorder %s30, 0
    %p188 = por %p186, %p187
    %s190 = sadd.s32 %s189, 1
    %p193 = scmp.eq.s32.totalorder %s24, 1
    %p194 = scmp.ne.s32.totalorder %s189, %s191
    %p195 = scmp.eq.s32.totalorder %s24, 0
    %p196 = por %p194, %p195
    %p197 = scmp.ne.s32.totalorder %s189, %s191
    %p198 = scmp.eq.s32.totalorder %s29, 1
    %p199 = por %p197, %p198
    %p200 = scmp.ne.s32.totalorder %s191, %s192
    %p201 = scmp.eq.s32.totalorder %s29, 0
    %p202 = por %p200, %p201
    %p203 = scmp.ne.s32.totalorder %s191, %s192
    %p204 = scmp.eq.s32.totalorder %s30, 1
    %p205 = por %p203, %p204
    %p207 = scmp.ne.s32.totalorder %s192, %s206
    %p208 = scmp.eq.s32.totalorder %s30, 0
    %p209 = por %p207, %p208
    %s211 = sadd.s32 %s210, 1
    %p214 = scmp.eq.s32.totalorder %s24, 1
    %p215 = scmp.ne.s32.totalorder %s210, %s212
    %p216 = scmp.eq.s32.totalorder %s24, 0
    %p217 = por %p215, %p216
    %p218 = scmp.ne.s32.totalorder %s210, %s212
    %p219 = scmp.eq.s32.totalorder %s29, 1
    %p220 = por %p218, %p219
    %p221 = scmp.ne.s32.totalorder %s212, %s213
    %p222 = scmp.eq.s32.totalorder %s29, 0
    %p223 = por %p221, %p222
    %p224 = scmp.ne.s32.totalorder %s212, %s213
    %p225 = scmp.eq.s32.totalorder %s30, 1
    %p226 = por %p224, %p225
    %p228 = scmp.ne.s32.totalorder %s213, %s227
    %p229 = scmp.eq.s32.totalorder %s30, 0
    %p230 = por %p228, %p229
    %s232 = sadd.s32 %s231, 1
    %p235 = scmp.eq.s32.totalorder %s24, 1
    %p236 = scmp.ne.s32.totalorder %s231, %s233
    %p237 = scmp.eq.s32.totalorder %s24, 0
    %p238 = por %p236, %p237
    %p239 = scmp.ne.s32.totalorder %s231, %s233
    %p240 = scmp.eq.s32.totalorder %s29, 1
    %p241 = por %p239, %p240
    %p242 = scmp.ne.s32.totalorder %s233, %s234
    %p243 = scmp.eq.s32.totalorder %s29, 0
    %p244 = por %p242, %p243
    %p245 = scmp.ne.s32.totalorder %s233, %s234
    %p246 = scmp.eq.s32.totalorder %s30, 1
    %p247 = por %p245, %p246
    %p249 = scmp.ne.s32.totalorder %s234, %s248
    %p250 = scmp.eq.s32.totalorder %s30, 0
    %p251 = por %p249, %p250
    %s253 = sadd.s32 %s252, 1
    %p256 = scmp.eq.s32.totalorder %s24, 1
    %p257 = scmp.ne.s32.totalorder %s252, %s254
    %p258 = scmp.eq.s32.totalorder %s24, 0
    %p259 = por %p257, %p258
    %p260 = scmp.ne.s32.totalorder %s252, %s254
    %p261 = scmp.eq.s32.totalorder %s29, 1
    %p262 = por %p260, %p261
    %p263 = scmp.ne.s32.totalorder %s254, %s255
    %p264 = scmp.eq.s32.totalorder %s29, 0
    %p265 = por %p263, %p264
    %p266 = scmp.ne.s32.totalorder %s254, %s255
    %p267 = scmp.eq.s32.totalorder %s30, 1
    %p268 = por %p266, %p267
    %p270 = scmp.ne.s32.totalorder %s255, %s269
    %p271 = scmp.eq.s32.totalorder %s30, 0
    %p272 = por %p270, %p271
    %s274 = sadd.s32 %s273, 1
    %p277 = scmp.eq.s32.totalorder %s24, 1
    %p278 = scmp.ne.s32.totalorder %s273, %s275
    %p279 = scmp.eq.s32.totalorder %s24, 0
    %p280 = por %p278, %p279
    %p281 = scmp.ne.s32.totalorder %s273, %s275
    %p282 = scmp.eq.s32.totalorder %s29, 1
    %p283 = por %p281, %p282
    %p284 = scmp.ne.s32.totalorder %s275, %s276
    %p285 = scmp.eq.s32.totalorder %s29, 0
    %p286 = por %p284, %p285
    %p287 = scmp.ne.s32.totalorder %s275, %s276
    %p288 = scmp.eq.s32.totalorder %s30, 1
    %p289 = por %p287, %p288
    %p291 = scmp.ne.s32.totalorder %s276, %s290
    %p292 = scmp.eq.s32.totalorder %s30, 0
    %p293 = por %p291, %p292
    %s295 = sadd.s32 %s294, 1
    %p298 = scmp.eq.s32.totalorder %s24, 1
    %p299 = scmp.ne.s32.totalorder %s294, %s296
    %p300 = scmp.eq.s32.totalorder %s24, 0
    %p301 = por %p299, %p300
    %p302 = scmp.ne.s32.totalorder %s294, %s296
    %p303 = scmp.eq.s32.totalorder %s29, 1
    %p304 = por %p302, %p303
    %p305 = scmp.ne.s32.totalorder %s296, %s297
    %p306 = scmp.eq.s32.totalorder %s29, 0
    %p307 = por %p305, %p306
    %p308 = scmp.ne.s32.totalorder %s296, %s297
    %p309 = scmp.eq.s32.totalorder %s30, 1
    %p310 = por %p308, %p309
    %p312 = scmp.ne.s32.totalorder %s297, %s311
    %p313 = scmp.eq.s32.totalorder %s30, 0
    %p314 = por %p312, %p313
    %s316 = sadd.s32 %s315, 1
    %p319 = scmp.eq.s32.totalorder %s24, 1
    %p320 = scmp.ne.s32.totalorder %s315, %s317
    %p321 = scmp.eq.s32.totalorder %s24, 0
    %p322 = por %p320, %p321
    %p323 = scmp.ne.s32.totalorder %s315, %s317
    %p324 = scmp.eq.s32.totalorder %s29, 1
    %p325 = por %p323, %p324
    %p326 = scmp.ne.s32.totalorder %s317, %s318
    %p327 = scmp.eq.s32.totalorder %s29, 0
    %p328 = por %p326, %p327
    %p329 = scmp.ne.s32.totalorder %s317, %s318
    %p330 = scmp.eq.s32.totalorder %s30, 1
    %p331 = por %p329, %p330
    %p333 = scmp.ne.s32.totalorder %s318, %s332
    %p334 = scmp.eq.s32.totalorder %s30, 0
    %p335 = por %p333, %p334
    %s337 = sadd.s32 %s336, 1
    %p340 = scmp.eq.s32.totalorder %s24, 1
    %p341 = scmp.ne.s32.totalorder %s336, %s338
    %p342 = scmp.eq.s32.totalorder %s24, 0
    %p343 = por %p341, %p342
    %p344 = scmp.ne.s32.totalorder %s336, %s338
    %p345 = scmp.eq.s32.totalorder %s29, 1
    %p346 = por %p344, %p345
    %p347 = scmp.ne.s32.totalorder %s338, %s339
    %p348 = scmp.eq.s32.totalorder %s29, 0
    %p349 = por %p347, %p348
    %p350 = scmp.ne.s32.totalorder %s338, %s339
    %p351 = scmp.eq.s32.totalorder %s30, 1
    %p352 = por %p350, %p351
    %p354 = scmp.ne.s32.totalorder %s339, %s353
    %p355 = scmp.eq.s32.totalorder %s30, 0
    %p356 = por %p354, %p355
    %s358 = sadd.s32 %s357, 1
    %p361 = scmp.eq.s32.totalorder %s24, 1
    %p362 = scmp.ne.s32.totalorder %s357, %s359
    %p363 = scmp.eq.s32.totalorder %s24, 0
    %p364 = por %p362, %p363
    %p365 = scmp.ne.s32.totalorder %s357, %s359
    %p366 = scmp.eq.s32.totalorder %s29, 1
    %p367 = por %p365, %p366
    %p368 = scmp.ne.s32.totalorder %s359, %s360
    %p369 = scmp.eq.s32.totalorder %s29, 0
    %p370 = por %p368, %p369
    %p371 = scmp.ne.s32.totalorder %s359, %s360
    %p372 = scmp.eq.s32.totalorder %s30, 1
    %p373 = por %p371, %p372
    %p375 = scmp.ne.s32.totalorder %s360, %s374
    %p376 = scmp.eq.s32.totalorder %s30, 0
    %p377 = por %p375, %p376
    %s379 = sadd.s32 %s378, 1
    %p382 = scmp.eq.s32.totalorder %s24, 1
    %p383 = scmp.ne.s32.totalorder %s378, %s380
    %p384 = scmp.eq.s32.totalorder %s24, 0
    %p385 = por %p383, %p384
    %p386 = scmp.ne.s32.totalorder %s378, %s380
    %p387 = scmp.eq.s32.totalorder %s29, 1
    %p388 = por %p386, %p387
    %p389 = scmp.ne.s32.totalorder %s380, %s381
    %p390 = scmp.eq.s32.totalorder %s29, 0
    %p391 = por %p389, %p390
    %p392 = scmp.ne.s32.totalorder %s380, %s381
    %p393 = scmp.eq.s32.totalorder %s30, 1
    %p394 = por %p392, %p393
    %p396 = scmp.ne.s32.totalorder %s381, %s395
    %p397 = scmp.eq.s32.totalorder %s30, 0
    %p398 = por %p396, %p397
    %s400 = sadd.s32 %s399, 1
    %p403 = scmp.eq.s32.totalorder %s24, 1
    %p404 = scmp.ne.s32.totalorder %s399, %s401
    %p405 = scmp.eq.s32.totalorder %s24, 0
    %p406 = por %p404, %p405
    %p407 = scmp.ne.s32.totalorder %s399, %s401
    %p408 = scmp.eq.s32.totalorder %s29, 1
    %p409 = por %p407, %p408
    %p410 = scmp.ne.s32.totalorder %s401, %s402
    %p411 = scmp.eq.s32.totalorder %s29, 0
    %p412 = por %p410, %p411
    %p413 = scmp.ne.s32.totalorder %s401, %s402
    %p414 = scmp.eq.s32.totalorder %s30, 1
    %p415 = por %p413, %p414
    %p417 = scmp.ne.s32.totalorder %s402, %s416
    %p418 = scmp.eq.s32.totalorder %s30, 0
    %p419 = por %p417, %p418
    %s420 = ssub.s32 %s24, %s31
    %p421 = scmp.eq.s32.totalorder %s420, 0
    %s423 = sadd.s32 %s422, 1
    %s424 = scalar_select %p421, %s422, %s423
    %p427 = pneg %p421
    %p428 = scmp.eq.s32.totalorder %s24, 1
    %p429 = por %p427, %p428
    %p430 = scmp.ne.s32.totalorder %s422, %s425
    %p431 = scmp.eq.s32.totalorder %s24, 0
    %p432 = por %p430, %p431
    %p433 = scmp.ne.s32.totalorder %s422, %s425
    %p434 = scmp.eq.s32.totalorder %s29, 1
    %p435 = por %p433, %p434
    %p436 = scmp.ne.s32.totalorder %s425, %s426
    %p437 = scmp.eq.s32.totalorder %s29, 0
    %p438 = por %p436, %p437
    %p439 = scmp.ne.s32.totalorder %s425, %s426
    %p440 = scmp.eq.s32.totalorder %s30, 1
    %p441 = por %p439, %p440
    %p443 = scmp.ne.s32.totalorder %s426, %s442
    %p444 = scmp.eq.s32.totalorder %s30, 0
    %p445 = por %p443, %p444
    %p446 = scmp.le.s32.totalorder 1, %s24
    %p447 = scmp.lt.s32.totalorder %s24, 3
    %p448 = pnand %p446, %p447
    %p449 = pneg %p448
    // Predicated region
    $region9: #{transformer_forward.9} parent=5 // pred_check
      _
    $region10: #{transformer_forward.9} parent=5 // pred_check_branch
      %451 = sbr.rel (%p448) target = $region12
    $region11: #{transformer_forward.9} parent=5 // pred_region
      %s452 = ssub.s32 %s24, 1
      // Predicated region
      $region13: #{transformer_forward.9} parent=11 // pred_check
        %p453 = pneg %p97
      $region14: #{transformer_forward.9} parent=11 // pred_check_branch
        %455 = sbr.rel (%p453) target = $region16
      $region15: #{transformer_forward.9} parent=11 // pred_region
        _
      $region16: #{transformer_forward.9} parent=11 // pred_fallthru
        _
      // Predicated region
      $region17: #{transformer_forward.9} parent=11 // pred_check
        %p456 = pneg %p118
      $region18: #{transformer_forward.9} parent=11 // pred_check_branch
        %458 = sbr.rel (%p456) target = $region20
      $region19: #{transformer_forward.9} parent=11 // pred_region
        _
      $region20: #{transformer_forward.9} parent=11 // pred_fallthru
        _
      // Predicated region
      $region21: #{transformer_forward.9} parent=11 // pred_check
        %p459 = pneg %p139
      $region22: #{transformer_forward.9} parent=11 // pred_check_branch
        %461 = sbr.rel (%p459) target = $region24
      $region23: #{transformer_forward.9} parent=11 // pred_region
        _
      $region24: #{transformer_forward.9} parent=11 // pred_fallthru
        _
      // Predicated region
      $region25: #{transformer_forward.9} parent=11 // pred_check
        %p462 = pneg %p160
      $region26: #{transformer_forward.9} parent=11 // pred_check_branch
        %464 = sbr.rel (%p462) target = $region28
      $region27: #{transformer_forward.9} parent=11 // pred_region
        _
      $region28: #{transformer_forward.9} parent=11 // pred_fallthru
        _
      // Predicated region
      $region29: #{transformer_forward.9} parent=11 // pred_check
        %p465 = pneg %p181
      $region30: #{transformer_forward.9} parent=11 // pred_check_branch
        %467 = sbr.rel (%p465) target = $region32
      $region31: #{transformer_forward.9} parent=11 // pred_region
        _
      $region32: #{transformer_forward.9} parent=11 // pred_fallthru
        _
      // Predicated region
      $region33: #{transformer_forward.9} parent=11 // pred_check
        %p468 = pneg %p202
      $region34: #{transformer_forward.9} parent=11 // pred_check_branch
        %470 = sbr.rel (%p468) target = $region36
      $region35: #{transformer_forward.9} parent=11 // pred_region
        _
      $region36: #{transformer_forward.9} parent=11 // pred_fallthru
        _
      // Predicated region
      $region37: #{transformer_forward.9} parent=11 // pred_check
        %p471 = pneg %p223
      $region38: #{transformer_forward.9} parent=11 // pred_check_branch
        %473 = sbr.rel (%p471) target = $region40
      $region39: #{transformer_forward.9} parent=11 // pred_region
        _
      $region40: #{transformer_forward.9} parent=11 // pred_fallthru
        _
      // Predicated region
      $region41: #{transformer_forward.9} parent=11 // pred_check
        %p474 = pneg %p244
      $region42: #{transformer_forward.9} parent=11 // pred_check_branch
        %476 = sbr.rel (%p474) target = $region44
      $region43: #{transformer_forward.9} parent=11 // pred_region
        _
      $region44: #{transformer_forward.9} parent=11 // pred_fallthru
        _
      // Predicated region
      $region45: #{transformer_forward.9} parent=11 // pred_check
        %p477 = pneg %p265
      $region46: #{transformer_forward.9} parent=11 // pred_check_branch
        %479 = sbr.rel (%p477) target = $region48
      $region47: #{transformer_forward.9} parent=11 // pred_region
        _
      $region48: #{transformer_forward.9} parent=11 // pred_fallthru
        _
      // Predicated region
      $region49: #{transformer_forward.9} parent=11 // pred_check
        %p480 = pneg %p286
      $region50: #{transformer_forward.9} parent=11 // pred_check_branch
        %482 = sbr.rel (%p480) target = $region52
      $region51: #{transformer_forward.9} parent=11 // pred_region
        _
      $region52: #{transformer_forward.9} parent=11 // pred_fallthru
        _
      // Predicated region
      $region53: #{transformer_forward.9} parent=11 // pred_check
        %p483 = pneg %p307
      $region54: #{transformer_forward.9} parent=11 // pred_check_branch
        %485 = sbr.rel (%p483) target = $region56
      $region55: #{transformer_forward.9} parent=11 // pred_region
        _
      $region56: #{transformer_forward.9} parent=11 // pred_fallthru
        _
      // Predicated region
      $region57: #{transformer_forward.9} parent=11 // pred_check
        %p486 = pneg %p328
      $region58: #{transformer_forward.9} parent=11 // pred_check_branch
        %488 = sbr.rel (%p486) target = $region60
      $region59: #{transformer_forward.9} parent=11 // pred_region
        _
      $region60: #{transformer_forward.9} parent=11 // pred_fallthru
        _
      // Predicated region
      $region61: #{transformer_forward.9} parent=11 // pred_check
        %p489 = pneg %p349
      $region62: #{transformer_forward.9} parent=11 // pred_check_branch
        %491 = sbr.rel (%p489) target = $region64
      $region63: #{transformer_forward.9} parent=11 // pred_region
        _
      $region64: #{transformer_forward.9} parent=11 // pred_fallthru
        _
      // Predicated region
      $region65: #{transformer_forward.9} parent=11 // pred_check
        %p492 = pneg %p370
      $region66: #{transformer_forward.9} parent=11 // pred_check_branch
        %494 = sbr.rel (%p492) target = $region68
      $region67: #{transformer_forward.9} parent=11 // pred_region
        _
      $region68: #{transformer_forward.9} parent=11 // pred_fallthru
        _
      // Predicated region
      $region69: #{transformer_forward.9} parent=11 // pred_check
        %p495 = pneg %p391
      $region70: #{transformer_forward.9} parent=11 // pred_check_branch
        %497 = sbr.rel (%p495) target = $region72
      $region71: #{transformer_forward.9} parent=11 // pred_region
        _
      $region72: #{transformer_forward.9} parent=11 // pred_fallthru
        _
      // Predicated region
      $region73: #{transformer_forward.9} parent=11 // pred_check
        %p498 = pneg %p412
      $region74: #{transformer_forward.9} parent=11 // pred_check_branch
        %500 = sbr.rel (%p498) target = $region76
      $region75: #{transformer_forward.9} parent=11 // pred_region
        _
      $region76: #{transformer_forward.9} parent=11 // pred_fallthru
        _
    $region12: #{transformer_forward.9} parent=5 // pred_fallthru
      _
    %p501 = scmp.lt.s32.totalorder %s24, 2
    // Predicated region
    $region77: #{transformer_forward.9} parent=5 // pred_check
      %p502 = pneg %p501
    $region78: #{transformer_forward.9} parent=5 // pred_check_branch
      %504 = sbr.rel (%p502) target = $region80
    $region79: #{transformer_forward.9} parent=5 // pred_region
      // Predicated region
      $region81: #{transformer_forward.9} parent=79 // pred_check
        %p505 = pneg %p44
      $region82: #{transformer_forward.9} parent=79 // pred_check_branch
        %507 = sbr.rel (%p505) target = $region84
      $region83: #{transformer_forward.9} parent=79 // pred_region
        %p508 = scmp.lt.s32.totalorder %s24, 1
        %s509 = scalar_select %p508, %s24, 1
        %s510 = smul.addr %s509, 8
        %s511 = scalar_lea.vmem %s0, %s510
      $region84: #{transformer_forward.9} parent=79 // pred_fallthru
        _
      // Predicated region
      $region85: #{transformer_forward.9} parent=79 // pred_check
        %p512 = pneg %p70
      $region86: #{transformer_forward.9} parent=79 // pred_check_branch
        %514 = sbr.rel (%p512) target = $region88
      $region87: #{transformer_forward.9} parent=79 // pred_region
        %p515 = scmp.lt.s32.totalorder %s24, 1
        %s516 = scalar_select %p515, %s24, 1
        %s517 = scalar_lea.vmem %s1, %s516
      $region88: #{transformer_forward.9} parent=79 // pred_fallthru
        _
    $region80: #{transformer_forward.9} parent=5 // pred_fallthru
      _
    %p518 = scmp.le.s32.totalorder 1, %s24
    %p519 = scmp.lt.s32.totalorder %s24, 3
    %p520 = pnand %p518, %p519
    %p521 = pneg %p520
    // Predicated region
    $region89: #{transformer_forward.9} parent=5 // pred_check
      _
    $region90: #{transformer_forward.9} parent=5 // pred_check_branch
      %523 = sbr.rel (%p520) target = $region92
    $region91: #{transformer_forward.9} parent=5 // pred_region
      %s524 = ssub.s32 %s24, 1
      %p525 = scmp.lt.s32.totalorder %s29, 1
      %s526 = scalar_select %p525, %s29, 1
      %s527 = smul.addr %s526, 8
      %s528 = scalar_lea.vmem %s0, %s527
      %p529 = pneg %p50
      %p530 = pneg %p47
      %p531 = scmp.lt.s32.totalorder %s29, 1
      %s532 = scalar_select %p531, %s29, 1
      %s533 = scalar_lea.vmem %s1, %s532
      %p534 = pneg %p76
      %p535 = pneg %p73
      %p536 = pneg %p97
      %p537 = pneg %p94
      %p538 = pneg %p118
      %p539 = pneg %p115
      %p540 = pneg %p139
      %p541 = pneg %p136
      %p542 = pneg %p160
      %p543 = pneg %p157
      %p544 = pneg %p181
      %p545 = pneg %p178
      %p546 = pneg %p202
      %p547 = pneg %p199
      %p548 = pneg %p223
      %p549 = pneg %p220
      %p550 = pneg %p244
      %p551 = pneg %p241
      %p552 = pneg %p265
      %p553 = pneg %p262
      %p554 = pneg %p286
      %p555 = pneg %p283
      %p556 = pneg %p307
      %p557 = pneg %p304
      %p558 = pneg %p328
      %p559 = pneg %p325
      %p560 = pneg %p349
      %p561 = pneg %p346
      %p562 = pneg %p370
      %p563 = pneg %p367
      %p564 = pneg %p391
      %p565 = pneg %p388
      %p566 = pneg %p412
      %p567 = pneg %p409
      %p568 = pneg %p438
      %p569 = pneg %p435
      %p570 = scmp.lt.s32.totalorder %s29, 1
      %s571 = scalar_select %p570, %s29, 1
      %s572 = smul.addr %s571, 8
      %s573 = scalar_lea.vmem %s18, %s572
      %p574 = scmp.lt.s32.totalorder %s29, 1
      %s575 = scalar_select %p574, %s29, 1
      %s576 = smul.addr %s575, 8
      %s577 = scalar_lea.vmem %s0, %s576
      %p578 = scmp.lt.s32.totalorder %s29, 1
      %s579 = scalar_select %p578, %s29, 1
      %s580 = scalar_lea.vmem %s1, %s579
      %p581 = scmp.lt.s32.totalorder %s29, 1
      %s582 = scalar_select %p581, %s29, 1
      %s583 = smul.addr %s582, 8
      %s584 = scalar_lea.vmem %s18, %s583
      %v586 = vld [vmem:[%s577] sm:$0xff]
      %v587 = vld [vmem:[%s580] sm:$0x1]
      %v588 = vmul.f32 %v587, -1e+30
      %v589 = vld [vmem:[%s2] sm:$0x1]
      %v590 = vld [vmem:[%s3] sm:$0x1]
      %vm591 = vcmask 261120
      %v592 = vsel %vm591, %v586, 0.0
      %593 = vadd.xlane.f32.xlu0 %v592
      %v594 = vpop.xlane.xlu0 %593
      %v595 = vrcp.pop 32.0
      %v596 = vmul.f32 %v594, %v595
      %v597 = vsub.f32 %v586, %v596
      %v598 = vmul.f32 %v597, %v597
      %v599 = vsel %vm591, %v598, 0.0
      %600 = vadd.xlane.f32.xlu0 %v599
      %v601 = vpop.xlane.xlu0 %600
      %v602 = vmul.f32 %v601, %v595
      %v603 = vadd.f32 %v602, 1e-05
      %v604 = vrsqrt.pop %v603
      %v605 = vmul.f32 %v597, %v604
      %v607 = vlaneseq
      %v608 = vshrl.u32 %v607, 7
      %v609 = vsub.s32 0, %v608
      %v610 = vrot.slane %v589, %v609
      %v612 = vmul.f32 %v605, %v610
      %v614 = vlaneseq
      %v615 = vshrl.u32 %v614, 7
      %v616 = vsub.s32 0, %v615
      %v617 = vrot.slane %v590, %v616
      %v619 = vadd.f32 %v612, %v617
      %v620 = vpack.c.bf16 %v619, %v619
      %v621 = vld [vmem:[%s4] sm:$0xf]
      %v622 = vld [vmem:[%s4 + $0x4] sm:$0xf]
      %v623 = vld [vmem:[%s4 + $0x8] sm:$0xf]
      %v624 = vld [vmem:[%s4 + $0xc] sm:$0xf]
      %v625 = vld [vmem:[%s4 + $0x10] sm:$0xf]
      %v626 = vld [vmem:[%s4 + $0x14] sm:$0xf]
      %v627 = vld [vmem:[%s4 + $0x18] sm:$0xf]
      %v628 = vld [vmem:[%s4 + $0x1c] sm:$0xf]
      %v629 = vld [vmem:[%s5] sm:$0x1]
      %v630 = vld [vmem:[%s5 + $0x1] sm:$0x1]
      %v631 = vld [vmem:[%s6] sm:$0xf]
      %v632 = vld [vmem:[%s6 + $0x4] sm:$0xf]
      %v633 = vld [vmem:[%s6 + $0x8] sm:$0xf]
      %v634 = vld [vmem:[%s6 + $0xc] sm:$0xf]
      %v635 = vld [vmem:[%s6 + $0x10] sm:$0xf]
      %v636 = vld [vmem:[%s6 + $0x14] sm:$0xf]
      %v637 = vld [vmem:[%s6 + $0x18] sm:$0xf]
      %v638 = vld [vmem:[%s6 + $0x1c] sm:$0xf]
      %v639 = vld [vmem:[%s7] sm:$0x1]
      %v640 = vld [vmem:[%s7 + $0x1] sm:$0x1]
      %v641 = vld [vmem:[%s8] sm:$0xf]
      %v642 = vld [vmem:[%s8 + $0x4] sm:$0xf]
      %v643 = vld [vmem:[%s8 + $0x8] sm:$0xf]
      %v644 = vld [vmem:[%s8 + $0xc] sm:$0xf]
      %v645 = vld [vmem:[%s8 + $0x10] sm:$0xf]
      %v646 = vld [vmem:[%s8 + $0x14] sm:$0xf]
      %v647 = vld [vmem:[%s8 + $0x18] sm:$0xf]
      %v648 = vld [vmem:[%s8 + $0x1c] sm:$0xf]
      %v649 = vld [vmem:[%s9] sm:$0x1]
      %v650 = vld [vmem:[%s9 + $0x1] sm:$0x1]
      %v651 = vld [vmem:[%s10] sm:$0xf]
      %v652 = vld [vmem:[%s10 + $0x4] sm:$0xf]
      %v653 = vld [vmem:[%s10 + $0x8] sm:$0xf]
      %v654 = vld [vmem:[%s10 + $0xc] sm:$0xf]
      %v655 = vld [vmem:[%s11] sm:$0x1]
      %v658 = vlaneseq
      %v659 = vshrl.u32 %v658, 7
      %v660 = vsub.s32 0, %v659
      %v661 = vrot.slane %v629, %v660
      %v662 = vlaneseq
      %v663 = vshrl.u32 %v662, 7
      %v664 = vsub.s32 0, %v663
      %v665 = vrot.slane %v630, %v664
      %v672 = vunpack.c.l.b16 %v621
      %v673 = vunpack.c.l.b16 %v622
      %v674 = vunpack.c.l.b16 %v623
      %v675 = vunpack.c.l.b16 %v624
      %v676 = vpack.c.b16 %v673, %v672
      %v677 = vpack.c.b16 %v675, %v674
      %v681 = vsel %vm591, %v620, 0
      %683 = vmatprep.subr.bf16.mxu0 0
      %684 = vmatpush1.bf16.msra.mxu0 %v676
      %685 = vmatprep.subr.bf16.mxu0 0
      %686 = vmatpush1.bf16.msra.mxu0 %v677
      %687 = vmatprep.subr.bf16.mxu0 0
      %688 = vmatpush1.bf16.msra.mxu0 0
      %689 = vmatprep.subr.bf16.mxu0 0
      %690 = vmatpush1.bf16.msra.mxu0 0
      %691 = vmatprep.subr.bf16.mxu0 0
      %692 = vmatpush1.bf16.msra.mxu0 0
      %693 = vmatprep.subr.bf16.mxu0 0
      %694 = vmatpush1.bf16.msra.mxu0 0
      %695 = vmatprep.subr.bf16.mxu0 0
      %696 = vmatpush1.bf16.msra.mxu0 0
      %697 = vmatprep.subr.bf16.mxu0 0
      %698 = vmatpush1.bf16.msra.mxu0 0
      %699 = vmatprep.subr.bf16.mxu0 0
      %700 = vmatpush1.bf16.msra.mxu0 0
      %701 = vmatprep.subr.bf16.mxu0 0
      %702 = vmatpush1.bf16.msra.mxu0 0
      %703 = vmatprep.subr.bf16.mxu0 0
      %704 = vmatpush1.bf16.msra.mxu0 0
      %705 = vmatprep.subr.bf16.mxu0 0
      %706 = vmatpush1.bf16.msra.mxu0 0
      %707 = vmatprep.subr.bf16.mxu0 0
      %708 = vmatpush1.bf16.msra.mxu0 0
      %709 = vmatprep.subr.bf16.mxu0 0
      %710 = vmatpush1.bf16.msra.mxu0 0
      %711 = vmatprep.subr.bf16.mxu0 0
      %712 = vmatpush1.bf16.msra.mxu0 0
      %713 = vmatprep.subr.bf16.mxu0 0
      %714 = vmatpush1.bf16.msra.mxu0 0
      %715 = vmatprep.mubr.bf16.mxu0 0
      %716 = vmatmul.mubr.bf16.gmra.mrb[0].mxu0 %v681
      %v717 = vpop.f32.mrb[0].mxu0
      %v718 = vadd.f32 %v661, %v717
      %v719 = vpop.f32.mrb[0].mxu0
      %v720 = vpop.f32.mrb[0].mxu0
      %v721 = vpop.f32.mrb[0].mxu0
      %722 = vdwg.mxu0
      %v727 = vunpack.c.l.b16 %v625
      %v728 = vunpack.c.l.b16 %v626
      %v729 = vunpack.c.l.b16 %v627
      %v730 = vunpack.c.l.b16 %v628
      %v731 = vpack.c.b16 %v728, %v727
      %v732 = vpack.c.b16 %v730, %v729
      %735 = vmatprep.subr.bf16.mxu0 0
      %736 = vmatpush1.bf16.msra.mxu0 %v731
      %737 = vmatprep.subr.bf16.mxu0 0
      %738 = vmatpush1.bf16.msra.mxu0 %v732
      %739 = vmatprep.subr.bf16.mxu0 0
      %740 = vmatpush1.bf16.msra.mxu0 0
      %741 = vmatprep.subr.bf16.mxu0 0
      %742 = vmatpush1.bf16.msra.mxu0 0
      %743 = vmatprep.subr.bf16.mxu0 0
      %744 = vmatpush1.bf16.msra.mxu0 0
      %745 = vmatprep.subr.bf16.mxu0 0
      %746 = vmatpush1.bf16.msra.mxu0 0
      %747 = vmatprep.subr.bf16.mxu0 0
      %748 = vmatpush1.bf16.msra.mxu0 0
      %749 = vmatprep.subr.bf16.mxu0 0
      %750 = vmatpush1.bf16.msra.mxu0 0
      %751 = vmatprep.subr.bf16.mxu0 0
      %752 = vmatpush1.bf16.msra.mxu0 0
      %753 = vmatprep.subr.bf16.mxu0 0
      %754 = vmatpush1.bf16.msra.mxu0 0
      %755 = vmatprep.subr.bf16.mxu0 0
      %756 = vmatpush1.bf16.msra.mxu0 0
      %757 = vmatprep.subr.bf16.mxu0 0
      %758 = vmatpush1.bf16.msra.mxu0 0
      %759 = vmatprep.subr.bf16.mxu0 0
      %760 = vmatpush1.bf16.msra.mxu0 0
      %761 = vmatprep.subr.bf16.mxu0 0
      %762 = vmatpush1.bf16.msra.mxu0 0
      %763 = vmatprep.subr.bf16.mxu0 0
      %764 = vmatpush1.bf16.msra.mxu0 0
      %765 = vmatprep.subr.bf16.mxu0 0
      %766 = vmatpush1.bf16.msra.mxu0 0
      %767 = vmatprep.mubr.bf16.mxu0 0
      %768 = vmatmul.mubr.bf16.gmra.mrb[0].mxu0 %v681
      %v769 = vpop.f32.mrb[0].mxu0
      %v770 = vadd.f32 %v665, %v769
      %v771 = vpop.f32.mrb[0].mxu0
      %v772 = vpop.f32.mrb[0].mxu0
      %v773 = vpop.f32.mrb[0].mxu0
      %774 = vdwg.mxu0
      %v777 = vlaneseq
      %v778 = vshrl.u32 %v777, 7
      %v779 = vsub.s32 0, %v778
      %v780 = vrot.slane %v639, %v779
      %v781 = vlaneseq
      %v782 = vshrl.u32 %v781, 7
      %v783 = vsub.s32 0, %v782
      %v784 = vrot.slane %v640, %v783
      %v791 = vunpack.c.l.b16 %v631
      %v792 = vunpack.c.l.b16 %v632
      %v793 = vunpack.c.l.b16 %v633
      %v794 = vunpack.c.l.b16 %v634
      %v795 = vpack.c.b16 %v792, %v791
      %v796 = vpack.c.b16 %v794, %v793
      %799 = vmatprep.subr.bf16.mxu0 0
      %800 = vmatpush1.bf16.msra.mxu0 %v795
      %801 = vmatprep.subr.bf16.mxu0 0
      %802 = vmatpush1.bf16.msra.mxu0 %v796
      %803 = vmatprep.subr.bf16.mxu0 0
      %804 = vmatpush1.bf16.msra.mxu0 0
      %805 = vmatprep.subr.bf16.mxu0 0
      %806 = vmatpush1.bf16.msra.mxu0 0
      %807 = vmatprep.subr.bf16.mxu0 0
      %808 = vmatpush1.bf16.msra.mxu0 0
      %809 = vmatprep.subr.bf16.mxu0 0
      %810 = vmatpush1.bf16.msra.mxu0 0
      %811 = vmatprep.subr.bf16.mxu0 0
      %812 = vmatpush1.bf16.msra.mxu0 0
      %813 = vmatprep.subr.bf16.mxu0 0
      %814 = vmatpush1.bf16.msra.mxu0 0
      %815 = vmatprep.subr.bf16.mxu0 0
      %816 = vmatpush1.bf16.msra.mxu0 0
      %817 = vmatprep.subr.bf16.mxu0 0
      %818 = vmatpush1.bf16.msra.mxu0 0
      %819 = vmatprep.subr.bf16.mxu0 0
      %820 = vmatpush1.bf16.msra.mxu0 0
      %821 = vmatprep.subr.bf16.mxu0 0
      %822 = vmatpush1.bf16.msra.mxu0 0
      %823 = vmatprep.subr.bf16.mxu0 0
      %824 = vmatpush1.bf16.msra.mxu0 0
      %825 = vmatprep.subr.bf16.mxu0 0
      %826 = vmatpush1.bf16.msra.mxu0 0
      %827 = vmatprep.subr.bf16.mxu0 0
      %828 = vmatpush1.bf16.msra.mxu0 0
      %829 = vmatprep.subr.bf16.mxu0 0
      %830 = vmatpush1.bf16.msra.mxu0 0
      %831 = vmatprep.mubr.bf16.mxu0 0
      %832 = vmatmul.mubr.bf16.gmra.mrb[0].mxu0 %v681
      %v833 = vpop.f32.mrb[0].mxu0
      %v834 = vadd.f32 %v780, %v833
      %v835 = vpop.f32.mrb[0].mxu0
      %v836 = vpop.f32.mrb[0].mxu0
      %v837 = vpop.f32.mrb[0].mxu0
      %838 = vdwg.mxu0
      %v843 = vunpack.c.l.b16 %v635
      %v844 = vunpack.c.l.b16 %v636
      %v845 = vunpack.c.l.b16 %v637
      %v846 = vunpack.c.l.b16 %v638
      %v847 = vpack.c.b16 %v844, %v843
      %v848 = vpack.c.b16 %v846, %v845
      %851 = vmatprep.subr.bf16.mxu0 0
      %852 = vmatpush1.bf16.msra.mxu0 %v847
      %853 = vmatprep.subr.bf16.mxu0 0
      %854 = vmatpush1.bf16.msra.mxu0 %v848
      %855 = vmatprep.subr.bf16.mxu0 0
      %856 = vmatpush1.bf16.msra.mxu0 0
      %857 = vmatprep.subr.bf16.mxu0 0
      %858 = vmatpush1.bf16.msra.mxu0 0
      %859 = vmatprep.subr.bf16.mxu0 0
      %860 = vmatpush1.bf16.msra.mxu0 0
      %861 = vmatprep.subr.bf16.mxu0 0
      %862 = vmatpush1.bf16.msra.mxu0 0
      %863 = vmatprep.subr.bf16.mxu0 0
      %864 = vmatpush1.bf16.msra.mxu0 0
      %865 = vmatprep.subr.bf16.mxu0 0
      %866 = vmatpush1.bf16.msra.mxu0 0
      %867 = vmatprep.subr.bf16.mxu0 0
      %868 = vmatpush1.bf16.msra.mxu0 0
      %869 = vmatprep.subr.bf16.mxu0 0
      %870 = vmatpush1.bf16.msra.mxu0 0
      %871 = vmatprep.subr.bf16.mxu0 0
      %872 = vmatpush1.bf16.msra.mxu0 0
      %873 = vmatprep.subr.bf16.mxu0 0
      %874 = vmatpush1.bf16.msra.mxu0 0
      %875 = vmatprep.subr.bf16.mxu0 0
      %876 = vmatpush1.bf16.msra.mxu0 0
      %877 = vmatprep.subr.bf16.mxu0 0
      %878 = vmatpush1.bf16.msra.mxu0 0
      %879 = vmatprep.subr.bf16.mxu0 0
      %880 = vmatpush1.bf16.msra.mxu0 0
      %881 = vmatprep.subr.bf16.mxu0 0
      %882 = vmatpush1.bf16.msra.mxu0 0
      %883 = vmatprep.mubr.bf16.mxu0 0
      %884 = vmatmul.mubr.bf16.gmra.mrb[0].mxu0 %v681
      %v885 = vpop.f32.mrb[0].mxu0
      %v886 = vadd.f32 %v784, %v885
      %v887 = vpop.f32.mrb[0].mxu0
      %v888 = vpop.f32.mrb[0].mxu0
      %v889 = vpop.f32.mrb[0].mxu0
      %890 = vdwg.mxu0
      %v893 = vlaneseq
      %v894 = vshrl.u32 %v893, 7
      %v895 = vsub.s32 0, %v894
      %v896 = vrot.slane %v649, %v895
      %v897 = vlaneseq
      %v898 = vshrl.u32 %v897, 7
      %v899 = vsub.s32 0, %v898
      %v900 = vrot.slane %v650, %v899
      %v907 = vunpack.c.l.b16 %v641
      %v908 = vunpack.c.l.b16 %v642
      %v909 = vunpack.c.l.b16 %v643
      %v910 = vunpack.c.l.b16 %v644
      %v911 = vpack.c.b16 %v908, %v907
      %v912 = vpack.c.b16 %v910, %v909
      %915 = vmatprep.subr.bf16.mxu0 0
      %916 = vmatpush1.bf16.msra.mxu0 %v911
      %917 = vmatprep.subr.bf16.mxu0 0
      %918 = vmatpush1.bf16.msra.mxu0 %v912
      %919 = vmatprep.subr.bf16.mxu0 0
      %920 = vmatpush1.bf16.msra.mxu0 0
      %921 = vmatprep.subr.bf16.mxu0 0
      %922 = vmatpush1.bf16.msra.mxu0 0
      %923 = vmatprep.subr.bf16.mxu0 0
      %924 = vmatpush1.bf16.msra.mxu0 0
      %925 = vmatprep.subr.bf16.mxu0 0
      %926 = vmatpush1.bf16.msra.mxu0 0
      %927 = vmatprep.subr.bf16.mxu0 0
      %928 = vmatpush1.bf16.msra.mxu0 0
      %929 = vmatprep.subr.bf16.mxu0 0
      %930 = vmatpush1.bf16.msra.mxu0 0
      %931 = vmatprep.subr.bf16.mxu0 0
      %932 = vmatpush1.bf16.msra.mxu0 0
      %933 = vmatprep.subr.bf16.mxu0 0
      %934 = vmatpush1.bf16.msra.mxu0 0
      %935 = vmatprep.subr.bf16.mxu0 0
      %936 = vmatpush1.bf16.msra.mxu0 0
      %937 = vmatprep.subr.bf16.mxu0 0
      %938 = vmatpush1.bf16.msra.mxu0 0
      %939 = vmatprep.subr.bf16.mxu0 0
      %940 = vmatpush1.bf16.msra.mxu0 0
      %941 = vmatprep.subr.bf16.mxu0 0
      %942 = vmatpush1.bf16.msra.mxu0 0
      %943 = vmatprep.subr.bf16.mxu0 0
      %944 = vmatpush1.bf16.msra.mxu0 0
      %945 = vmatprep.subr.bf16.mxu0 0
      %946 = vmatpush1.bf16.msra.mxu0 0
      %947 = vmatprep.mubr.bf16.mxu0 0
      %948 = vmatmul.mubr.bf16.gmra.mrb[0].mxu0 %v681
      %v949 = vpop.f32.mrb[0].mxu0
      %v950 = vadd.f32 %v896, %v949
      %v951 = vpop.f32.mrb[0].mxu0
      %v952 = vpop.f32.mrb[0].mxu0
      %v953 = vpop.f32.mrb[0].mxu0
      %954 = vdwg.mxu0
      %v959 = vunpack.c.l.b16 %v645
      %v960 = vunpack.c.l.b16 %v646
      %v961 = vunpack.c.l.b16 %v647
      %v962 = vunpack.c.l.b16 %v648
      %v963 = vpack.c.b16 %v960, %v959
      %v964 = vpack.c.b16 %v962, %v961
      %967 = vmatprep.subr.bf16.mxu0 0
      %968 = vmatpush1.bf16.msra.mxu0 %v963
      %969 = vmatprep.subr.bf16.mxu0 0
      %970 = vmatpush1.bf16.msra.mxu0 %v964
      %971 = vmatprep.subr.bf16.mxu0 0
      %972 = vmatpush1.bf16.msra.mxu0 0
      %973 = vmatprep.subr.bf16.mxu0 0
      %974 = vmatpush1.bf16.msra.mxu0 0
      %975 = vmatprep.subr.bf16.mxu0 0
      %976 = vmatpush1.bf16.msra.mxu0 0
      %977 = vmatprep.subr.bf16.mxu0 0
      %978 = vmatpush1.bf16.msra.mxu0 0
      %979 = vmatprep.subr.bf16.mxu0 0
      %980 = vmatpush1.bf16.msra.mxu0 0
      %981 = vmatprep.subr.bf16.mxu0 0
      %982 = vmatpush1.bf16.msra.mxu0 0
      %983 = vmatprep.subr.bf16.mxu0 0
      %984 = vmatpush1.bf16.msra.mxu0 0
      %985 = vmatprep.subr.bf16.mxu0 0
      %986 = vmatpush1.bf16.msra.mxu0 0
      %987 = vmatprep.subr.bf16.mxu0 0
      %988 = vmatpush1.bf16.msra.mxu0 0
      %989 = vmatprep.subr.bf16.mxu0 0
      %990 = vmatpush1.bf16.msra.mxu0 0
      %991 = vmatprep.subr.bf16.mxu0 0
      %992 = vmatpush1.bf16.msra.mxu0 0
      %993 = vmatprep.subr.bf16.mxu0 0
      %994 = vmatpush1.bf16.msra.mxu0 0
      %995 = vmatprep.subr.bf16.mxu0 0
      %996 = vmatpush1.bf16.msra.mxu0 0
      %997 = vmatprep.subr.bf16.mxu0 0
      %998 = vmatpush1.bf16.msra.mxu0 0
      %999 = vmatprep.mubr.bf16.mxu0 0
      %1000 = vmatmul.mubr.bf16.gmra.mrb[0].mxu0 %v681
      %v1001 = vpop.f32.mrb[0].mxu0
      %v1002 = vadd.f32 %v900, %v1001
      %v1003 = vpop.f32.mrb[0].mxu0
      %v1004 = vpop.f32.mrb[0].mxu0
      %v1005 = vpop.f32.mrb[0].mxu0
      %1006 = vdwg.mxu0
      %v1007 = vpack.c.bf16 %v718, %v718
      %v1008 = vpack.c.bf16 %v770, %v770
      %v1009 = vpack.c.bf16 %v834, %v834
      %v1010 = vpack.c.bf16 %v886, %v886
      %v1012 = vlaneseq
      %v1013 = vshrl.u32 %v1012, 7
      %v1014 = vsub.s32 0, %v1013
      %v1015 = vrot.slane %v588, %v1014
      %vm1017 = vcmask 130048
      %v1019 = vsel %vm1017, %v1007, 0
      %v1022 = vsel %vm1017, %v1009, 0
      %1024 = vmatprep.subr.bf16.mxu0 0
      %1025 = vmatpush1.bf16.xpose.msra.mxu0 %v1022
      %1026 = vmatprep.subr.bf16.mxu0 0
      %1027 = vmatpush1.bf16.xpose.msra.mxu0 0
      %1028 = vmatprep.subr.bf16.mxu0 0
      %1029 = vmatpush1.bf16.xpose.msra.mxu0 0
      %1030 = vmatprep.subr.bf16.mxu0 0
      %1031 = vmatpush1.bf16.xpose.msra.mxu0 0
      %1032 = vmatprep.subr.bf16.mxu0 0
      %1033 = vmatpush1.bf16.xpose.msra.mxu0 0
      %1034 = vmatprep.subr.bf16.mxu0 0
      %1035 = vmatpush1.bf16.xpose.msra.mxu0 0
      %1036 = vmatprep.subr.bf16.mxu0 0
      %1037 = vmatpush1.bf16.xpose.msra.mxu0 0
      %1038 = vmatprep.subr.bf16.mxu0 0
      %1039 = vmatpush1.bf16.xpose.msra.mxu0 0
      %1040 = vmatprep.subr.bf16.mxu0 0
      %1041 = vmatpush1.bf16.xpose.msra.mxu0 0
      %1042 = vmatprep.subr.bf16.mxu0 0
      %1043 = vmatpush1.bf16.xpose.msra.mxu0 0
      %1044 = vmatprep.subr.bf16.mxu0 0
      %1045 = vmatpush1.bf16.xpose.msra.mxu0 0
      %1046 = vmatprep.subr.bf16.mxu0 0
      %1047 = vmatpush1.bf16.xpose.msra.mxu0 0
      %1048 = vmatprep.subr.bf16.mxu0 0
      %1049 = vmatpush1.bf16.xpose.msra.mxu0 0
      %1050 = vmatprep.subr.bf16.mxu0 0
      %1051 = vmatpush1.bf16.xpose.msra.mxu0 0
      %1052 = vmatprep.subr.bf16.mxu0 0
      %1053 = vmatpush1.bf16.xpose.msra.mxu0 0
      %1054 = vmatprep.subr.bf16.mxu0 0
      %1055 = vmatpush1.bf16.xpose.msra.mxu0 0
      %1056 = vmatprep.mubr.bf16.mxu0 0
      %1057 = vmatmul.mubr.bf16.gmra.mrb[0].mxu0 %v1019
      %v1058 = vpop.f32.mrb[0].mxu0
      %v1059 = vadd.f32 %v1015, %v1058
      %v1060 = vpop.f32.mrb[0].mxu0
      %v1061 = vpop.f32.mrb[0].mxu0
      %v1062 = vpop.f32.mrb[0].mxu0
      %1063 = vdwg.mxu0
      %v1065 = vsel %vm1017, %v1008, 0
      %v1068 = vsel %vm1017, %v1010, 0
      %1070 = vmatprep.subr.bf16.mxu0 0
      %1071 = vmatpush1.bf16.xpose.msra.mxu0 %v1068
      %1072 = vmatprep.subr.bf16.mxu0 0
      %1073 = vmatpush1.bf16.xpose.msra.mxu0 0
      %1074 = vmatprep.subr.bf16.mxu0 0
      %1075 = vmatpush1.bf16.xpose.msra.mxu0 0
      %1076 = vmatprep.subr.bf16.mxu0 0
      %1077 = vmatpush1.bf16.xpose.msra.mxu0 0
      %1078 = vmatprep.subr.bf16.mxu0 0
      %1079 = vmatpush1.bf16.xpose.msra.mxu0 0
      %1080 = vmatprep.subr.bf16.mxu0 0
      %1081 = vmatpush1.bf16.xpose.msra.mxu0 0
      %1082 = vmatprep.subr.bf16.mxu0 0
      %1083 = vmatpush1.bf16.xpose.msra.mxu0 0
      %1084 = vmatprep.subr.bf16.mxu0 0
      %1085 = vmatpush1.bf16.xpose.msra.mxu0 0
      %1086 = vmatprep.subr.bf16.mxu0 0
      %1087 = vmatpush1.bf16.xpose.msra.mxu0 0
      %1088 = vmatprep.subr.bf16.mxu0 0
      %1089 = vmatpush1.bf16.xpose.msra.mxu0 0
      %1090 = vmatprep.subr.bf16.mxu0 0
      %1091 = vmatpush1.bf16.xpose.msra.mxu0 0
      %1092 = vmatprep.subr.bf16.mxu0 0
      %1093 = vmatpush1.bf16.xpose.msra.mxu0 0
      %1094 = vmatprep.subr.bf16.mxu0 0
      %1095 = vmatpush1.bf16.xpose.msra.mxu0 0
      %1096 = vmatprep.subr.bf16.mxu0 0
      %1097 = vmatpush1.bf16.xpose.msra.mxu0 0
      %1098 = vmatprep.subr.bf16.mxu0 0
      %1099 = vmatpush1.bf16.xpose.msra.mxu0 0
      %1100 = vmatprep.subr.bf16.mxu0 0
      %1101 = vmatpush1.bf16.xpose.msra.mxu0 0
      %1102 = vmatprep.mubr.bf16.mxu0 0
      %1103 = vmatmul.mubr.bf16.gmra.mrb[0].mxu0 %v1065
      %v1104 = vpop.f32.mrb[0].mxu0
      %v1105 = vadd.f32 %v1015, %v1104
      %v1106 = vpop.f32.mrb[0].mxu0
      %v1107 = vpop.f32.mrb[0].mxu0
      %v1108 = vpop.f32.mrb[0].mxu0
      %1109 = vdwg.mxu0
      %vm1110 = vcmask 64512
      %v1111 = vsel %vm1110, %v1059, -inf
      %1112 = vmax.xlane.f32.xlu0 %v1111
      %v1113 = vpop.xlane.xlu0 %1112
      %v1114 = vsel %vm1110, %v1105, -inf
      %1115 = vmax.xlane.f32.xlu0 %v1114
      %v1116 = vpop.xlane.xlu0 %1115
      %v1117 = vsub.f32 %v1059, %v1113
      %v1118 = vsub.f32 %v1105, %v1116
      %v1119 = vmul.f32 %v1117, 1.442695
      %v1120 = vpow.pop %v1119
      %v1121 = vmul.f32 %v1118, 1.442695
      %v1122 = vpow.pop %v1121
      %v1123 = vsel %vm1110, %v1120, 0.0
      %1124 = vadd.xlane.f32.xlu0 %v1123
      %v1125 = vpop.xlane.xlu0 %1124
      %v1126 = vsel %vm1110, %v1122, 0.0
      %1127 = vadd.xlane.f32.xlu0 %v1126
      %v1128 = vpop.xlane.xlu0 %1127
      %v1129 = vpack.c.bf16 %v1120, %v1120
      %v1130 = vpack.c.bf16 %v1122, %v1122
      %v1131 = vpack.c.bf16 %v950, %v950
      %v1132 = vpack.c.bf16 %v1002, %v1002
      %v1134 = vsel %vm1110, %v1129, 0
      %vm1136 = vcmask 1043456
      %v1138 = vsel %vm1136, %v1131, 0
      %1140 = vmatprep.subr.bf16.mxu0 0
      %1141 = vmatpush1.bf16.msra.mxu0 %v1138
      %1142 = vmatprep.subr.bf16.mxu0 0
      %1143 = vmatpush1.bf16.msra.mxu0 0
      %1144 = vmatprep.subr.bf16.mxu0 0
      %1145 = vmatpush1.bf16.msra.mxu0 0
      %1146 = vmatprep.subr.bf16.mxu0 0
      %1147 = vmatpush1.bf16.msra.mxu0 0
      %1148 = vmatprep.subr.bf16.mxu0 0
      %1149 = vmatpush1.bf16.msra.mxu0 0
      %1150 = vmatprep.subr.bf16.mxu0 0
      %1151 = vmatpush1.bf16.msra.mxu0 0
      %1152 = vmatprep.subr.bf16.mxu0 0
      %1153 = vmatpush1.bf16.msra.mxu0 0
      %1154 = vmatprep.subr.bf16.mxu0 0
      %1155 = vmatpush1.bf16.msra.mxu0 0
      %1156 = vmatprep.subr.bf16.mxu0 0
      %1157 = vmatpush1.bf16.msra.mxu0 0
      %1158 = vmatprep.subr.bf16.mxu0 0
      %1159 = vmatpush1.bf16.msra.mxu0 0
      %1160 = vmatprep.subr.bf16.mxu0 0
      %1161 = vmatpush1.bf16.msra.mxu0 0
      %1162 = vmatprep.subr.bf16.mxu0 0
      %1163 = vmatpush1.bf16.msra.mxu0 0
      %1164 = vmatprep.subr.bf16.mxu0 0
      %1165 = vmatpush1.bf16.msra.mxu0 0
      %1166 = vmatprep.subr.bf16.mxu0 0
      %1167 = vmatpush1.bf16.msra.mxu0 0
      %1168 = vmatprep.subr.bf16.mxu0 0
      %1169 = vmatpush1.bf16.msra.mxu0 0
      %1170 = vmatprep.subr.bf16.mxu0 0
      %1171 = vmatpush1.bf16.msra.mxu0 0
      %1172 = vmatprep.mubr.bf16.mxu0 0
      %1173 = vmatmul.mubr.bf16.gmra.mrb[0].mxu0 %v1134
      %v1174 = vpop.f32.mrb[0].mxu0
      %v1175 = vadd.f32 0.0, %v1174
      %v1176 = vpop.f32.mrb[0].mxu0
      %v1177 = vpop.f32.mrb[0].mxu0
      %v1178 = vpop.f32.mrb[0].mxu0
      %1179 = vdwg.mxu0
      %v1181 = vsel %vm1110, %v1130, 0
      %v1184 = vsel %vm1136, %v1132, 0
      %1186 = vmatprep.subr.bf16.mxu0 0
      %1187 = vmatpush1.bf16.msra.mxu0 %v1184
      %1188 = vmatprep.subr.bf16.mxu0 0
      %1189 = vmatpush1.bf16.msra.mxu0 0
      %1190 = vmatprep.subr.bf16.mxu0 0
      %1191 = vmatpush1.bf16.msra.mxu0 0
      %1192 = vmatprep.subr.bf16.mxu0 0
      %1193 = vmatpush1.bf16.msra.mxu0 0
      %1194 = vmatprep.subr.bf16.mxu0 0
      %1195 = vmatpush1.bf16.msra.mxu0 0
      %1196 = vmatprep.subr.bf16.mxu0 0
      %1197 = vmatpush1.bf16.msra.mxu0 0
      %1198 = vmatprep.subr.bf16.mxu0 0
      %1199 = vmatpush1.bf16.msra.mxu0 0
      %1200 = vmatprep.subr.bf16.mxu0 0
      %1201 = vmatpush1.bf16.msra.mxu0 0
      %1202 = vmatprep.subr.bf16.mxu0 0
      %1203 = vmatpush1.bf16.msra.mxu0 0
      %1204 = vmatprep.subr.bf16.mxu0 0
      %1205 = vmatpush1.bf16.msra.mxu0 0
      %1206 = vmatprep.subr.bf16.mxu0 0
      %1207 = vmatpush1.bf16.msra.mxu0 0
      %1208 = vmatprep.subr.bf16.mxu0 0
      %1209 = vmatpush1.bf16.msra.mxu0 0
      %1210 = vmatprep.subr.bf16.mxu0 0
      %1211 = vmatpush1.bf16.msra.mxu0 0
      %1212 = vmatprep.subr.bf16.mxu0 0
      %1213 = vmatpush1.bf16.msra.mxu0 0
      %1214 = vmatprep.subr.bf16.mxu0 0
      %1215 = vmatpush1.bf16.msra.mxu0 0
      %1216 = vmatprep.subr.bf16.mxu0 0
      %1217 = vmatpush1.bf16.msra.mxu0 0
      %1218 = vmatprep.mubr.bf16.mxu0 0
      %1219 = vmatmul.mubr.bf16.gmra.mrb[0].mxu0 %v1181
      %v1220 = vpop.f32.mrb[0].mxu0
      %v1221 = vadd.f32 0.0, %v1220
      %v1222 = vpop.f32.mrb[0].mxu0
      %v1223 = vpop.f32.mrb[0].mxu0
      %v1224 = vpop.f32.mrb[0].mxu0
      %1225 = vdwg.mxu0
      %v1226 = vrcp.pop %v1125
      %v1227 = vmul.f32 %v1175, %v1226
      %v1228 = vrcp.pop %v1128
      %v1229 = vmul.f32 %v1221, %v1228
      %v1230 = vpack.c.bf16 %v1227, %v1227
      %v1231 = vpack.c.bf16 %v1229, %v1229
      %v1234 = vunpack.c.l.b16 %v651
      %v1235 = vunpack.c.l.b16 %v652
      %v1236 = vpack.c.b16 %v1235, %v1234
      %v1239 = vsel %vm1017, %v1230, 0
      %1241 = vmatprep.subr.bf16.mxu0 0
      %1242 = vmatpush1.bf16.msra.mxu0 %v1236
      %1243 = vmatprep.subr.bf16.mxu0 0
      %1244 = vmatpush1.bf16.msra.mxu0 0
      %1245 = vmatprep.subr.bf16.mxu0 0
      %1246 = vmatpush1.bf16.msra.mxu0 0
      %1247 = vmatprep.subr.bf16.mxu0 0
      %1248 = vmatpush1.bf16.msra.mxu0 0
      %1249 = vmatprep.subr.bf16.mxu0 0
      %1250 = vmatpush1.bf16.msra.mxu0 0
      %1251 = vmatprep.subr.bf16.mxu0 0
      %1252 = vmatpush1.bf16.msra.mxu0 0
      %1253 = vmatprep.subr.bf16.mxu0 0
      %1254 = vmatpush1.bf16.msra.mxu0 0
      %1255 = vmatprep.subr.bf16.mxu0 0
      %1256 = vmatpush1.bf16.msra.mxu0 0
      %1257 = vmatprep.subr.bf16.mxu0 0
      %1258 = vmatpush1.bf16.msra.mxu0 0
      %1259 = vmatprep.subr.bf16.mxu0 0
      %1260 = vmatpush1.bf16.msra.mxu0 0
      %1261 = vmatprep.subr.bf16.mxu0 0
      %1262 = vmatpush1.bf16.msra.mxu0 0
      %1263 = vmatprep.subr.bf16.mxu0 0
      %1264 = vmatpush1.bf16.msra.mxu0 0
      %1265 = vmatprep.subr.bf16.mxu0 0
      %1266 = vmatpush1.bf16.msra.mxu0 0
      %1267 = vmatprep.subr.bf16.mxu0 0
      %1268 = vmatpush1.bf16.msra.mxu0 0
      %1269 = vmatprep.subr.bf16.mxu0 0
      %1270 = vmatpush1.bf16.msra.mxu0 0
      %1271 = vmatprep.subr.bf16.mxu0 0
      %1272 = vmatpush1.bf16.msra.mxu0 0
      %1273 = vmatprep.mubr.bf16.mxu0 0
      %1274 = vmatmul.mubr.bf16.gmra.mrb[0].mxu0 %v1239
      %v1275 = vpop.f32.mrb[0].mxu0
      %v1276 = vadd.f32 0.0, %v1275
      %v1277 = vpop.f32.mrb[0].mxu0
      %v1278 = vpop.f32.mrb[0].mxu0
      %v1279 = vpop.f32.mrb[0].mxu0
      %1280 = vdwg.mxu0
      %v1283 = vunpack.c.l.b16 %v653
      %v1284 = vunpack.c.l.b16 %v654
      %v1285 = vpack.c.b16 %v1284, %v1283
      %v1288 = vsel %vm1017, %v1231, 0
      %1290 = vmatprep.subr.bf16.mxu0 0
      %1291 = vmatpush1.bf16.msra.mxu0 %v1285
      %1292 = vmatprep.subr.bf16.mxu0 0
      %1293 = vmatpush1.bf16.msra.mxu0 0
      %1294 = vmatprep.subr.bf16.mxu0 0
      %1295 = vmatpush1.bf16.msra.mxu0 0
      %1296 = vmatprep.subr.bf16.mxu0 0
      %1297 = vmatpush1.bf16.msra.mxu0 0
      %1298 = vmatprep.subr.bf16.mxu0 0
      %1299 = vmatpush1.bf16.msra.mxu0 0
      %1300 = vmatprep.subr.bf16.mxu0 0
      %1301 = vmatpush1.bf16.msra.mxu0 0
      %1302 = vmatprep.subr.bf16.mxu0 0
      %1303 = vmatpush1.bf16.msra.mxu0 0
      %1304 = vmatprep.subr.bf16.mxu0 0
      %1305 = vmatpush1.bf16.msra.mxu0 0
      %1306 = vmatprep.subr.bf16.mxu0 0
      %1307 = vmatpush1.bf16.msra.mxu0 0
      %1308 = vmatprep.subr.bf16.mxu0 0
      %1309 = vmatpush1.bf16.msra.mxu0 0
      %1310 = vmatprep.subr.bf16.mxu0 0
      %1311 = vmatpush1.bf16.msra.mxu0 0
      %1312 = vmatprep.subr.bf16.mxu0 0
      %1313 = vmatpush1.bf16.msra.mxu0 0
      %1314 = vmatprep.subr.bf16.mxu0 0
      %1315 = vmatpush1.bf16.msra.mxu0 0
      %1316 = vmatprep.subr.bf16.mxu0 0
      %1317 = vmatpush1.bf16.msra.mxu0 0
      %1318 = vmatprep.subr.bf16.mxu0 0
      %1319 = vmatpush1.bf16.msra.mxu0 0
      %1320 = vmatprep.subr.bf16.mxu0 0
      %1321 = vmatpush1.bf16.msra.mxu0 0
      %1322 = vmatprep.mubr.bf16.mxu0 0
      %1323 = vmatmul.mubr.bf16.gmra.mrb[0].mxu0 %v1288
      %v1324 = vpop.f32.mrb[0].mxu0
      %v1325 = vadd.f32 0.0, %v1324
      %v1326 = vpop.f32.mrb[0].mxu0
      %v1327 = vpop.f32.mrb[0].mxu0
      %v1328 = vpop.f32.mrb[0].mxu0
      %1329 = vdwg.mxu0
      %v1330 = vsel %vm591, %v1276, 0.0
      %v1331 = vsel %vm591, %v1325, 0.0
      %v1332 = vadd.f32 %v1330, %v1331
      %v1334 = vlaneseq
      %v1335 = vshrl.u32 %v1334, 7
      %v1336 = vsub.s32 0, %v1335
      %v1337 = vrot.slane %v655, %v1336
      %v1339 = vadd.f32 %v1332, %v1337
      %v1340 = vadd.f32 %v586, %v1339
      %v1341 = vld [vmem:[%s12] sm:$0x1]
      %v1342 = vld [vmem:[%s13] sm:$0x1]
      %v1343 = vsel %vm591, %v1340, 0.0
      %1344 = vadd.xlane.f32.xlu0 %v1343
      %v1345 = vpop.xlane.xlu0 %1344
      %v1346 = vmul.f32 %v1345, %v595
      %v1347 = vsub.f32 %v1340, %v1346
      %v1348 = vmul.f32 %v1347, %v1347
      %v1349 = vsel %vm591, %v1348, 0.0
      %1350 = vadd.xlane.f32.xlu0 %v1349
      %v1351 = vpop.xlane.xlu0 %1350
      %v1352 = vmul.f32 %v1351, %v595
      %v1353 = vadd.f32 %v1352, 1e-05
      %v1354 = vrsqrt.pop %v1353
      %v1355 = vmul.f32 %v1347, %v1354
      %v1357 = vlaneseq
      %v1358 = vshrl.u32 %v1357, 7
      %v1359 = vsub.s32 0, %v1358
      %v1360 = vrot.slane %v1341, %v1359
      %v1362 = vmul.f32 %v1355, %v1360
      %v1364 = vlaneseq
      %v1365 = vshrl.u32 %v1364, 7
      %v1366 = vsub.s32 0, %v1365
      %v1367 = vrot.slane %v1342, %v1366
      %v1369 = vadd.f32 %v1362, %v1367
      %v1370 = vpack.c.bf16 %v1369, %v1369
      %v1371 = vld [vmem:[%s14] sm:$0xf]
      %v1372 = vld [vmem:[%s14 + $0x4] sm:$0xf]
      %v1373 = vld [vmem:[%s14 + $0x8] sm:$0xf]
      %v1374 = vld [vmem:[%s14 + $0xc] sm:$0xf]
      %v1375 = vld [vmem:[%s15] sm:$0x1]
      %v1377 = vlaneseq
      %v1378 = vshrl.u32 %v1377, 7
      %v1379 = vsub.s32 0, %v1378
      %v1380 = vrot.slane %v1375, %v1379
      %v1386 = vunpack.c.l.b16 %v1371
      %v1387 = vunpack.c.l.b16 %v1372
      %v1388 = vunpack.c.l.b16 %v1373
      %v1389 = vunpack.c.l.b16 %v1374
      %v1390 = vpack.c.b16 %v1387, %v1386
      %v1391 = vpack.c.b16 %v1389, %v1388
      %v1395 = vsel %vm591, %v1370, 0
      %1397 = vmatprep.subr.bf16.mxu0 0
      %1398 = vmatpush1.bf16.msra.mxu0 %v1390
      %1399 = vmatprep.subr.bf16.mxu0 0
      %1400 = vmatpush1.bf16.msra.mxu0 %v1391
      %1401 = vmatprep.subr.bf16.mxu0 0
      %1402 = vmatpush1.bf16.msra.mxu0 0
      %1403 = vmatprep.subr.bf16.mxu0 0
      %1404 = vmatpush1.bf16.msra.mxu0 0
      %1405 = vmatprep.subr.bf16.mxu0 0
      %1406 = vmatpush1.bf16.msra.mxu0 0
      %1407 = vmatprep.subr.bf16.mxu0 0
      %1408 = vmatpush1.bf16.msra.mxu0 0
      %1409 = vmatprep.subr.bf16.mxu0 0
      %1410 = vmatpush1.bf16.msra.mxu0 0
      %1411 = vmatprep.subr.bf16.mxu0 0
      %1412 = vmatpush1.bf16.msra.mxu0 0
      %1413 = vmatprep.subr.bf16.mxu0 0
      %1414 = vmatpush1.bf16.msra.mxu0 0
      %1415 = vmatprep.subr.bf16.mxu0 0
      %1416 = vmatpush1.bf16.msra.mxu0 0
      %1417 = vmatprep.subr.bf16.mxu0 0
      %1418 = vmatpush1.bf16.msra.mxu0 0
      %1419 = vmatprep.subr.bf16.mxu0 0
      %1420 = vmatpush1.bf16.msra.mxu0 0
      %1421 = vmatprep.subr.bf16.mxu0 0
      %1422 = vmatpush1.bf16.msra.mxu0 0
      %1423 = vmatprep.subr.bf16.mxu0 0
      %1424 = vmatpush1.bf16.msra.mxu0 0
      %1425 = vmatprep.subr.bf16.mxu0 0
      %1426 = vmatpush1.bf16.msra.mxu0 0
      %1427 = vmatprep.subr.bf16.mxu0 0
      %1428 = vmatpush1.bf16.msra.mxu0 0
      %1429 = vmatprep.mubr.bf16.mxu0 0
      %1430 = vmatmul.mubr.bf16.gmra.mrb[0].mxu0 %v1395
      %v1431 = vpop.f32.mrb[0].mxu0
      %v1432 = vadd.f32 %v1380, %v1431
      %v1433 = vpop.f32.mrb[0].mxu0
      %v1434 = vpop.f32.mrb[0].mxu0
      %v1435 = vpop.f32.mrb[0].mxu0
      %1436 = vdwg.mxu0
      %v1437 = vmax.f32 %v1432, 0.0
      %v1438 = vpack.c.bf16 %v1437, %v1437
      %v1439 = vld [vmem:[%s16] sm:$0xf]
      %v1440 = vld [vmem:[%s16 + $0x4] sm:$0xf]
      %v1441 = vld [vmem:[%s16 + $0x8] sm:$0xf]
      %v1442 = vld [vmem:[%s16 + $0xc] sm:$0xf]
      %v1443 = vld [vmem:[%s16 + $0x10] sm:$0xf]
      %v1444 = vld [vmem:[%s16 + $0x14] sm:$0xf]
      %v1445 = vld [vmem:[%s16 + $0x18] sm:$0xf]
      %v1446 = vld [vmem:[%s16 + $0x1c] sm:$0xf]
      %v1447 = vld [vmem:[%s17] sm:$0x1]
      %v1449 = vlaneseq
      %v1450 = vshrl.u32 %v1449, 7
      %v1451 = vsub.s32 0, %v1450
      %v1452 = vrot.slane %v1447, %v1451
      %v1462 = vunpack.c.l.b16 %v1439
      %v1463 = vunpack.c.l.b16 %v1440
      %v1464 = vunpack.c.l.b16 %v1441
      %v1465 = vunpack.c.l.b16 %v1442
      %v1466 = vunpack.c.l.b16 %v1443
      %v1467 = vunpack.c.l.b16 %v1444
      %v1468 = vunpack.c.l.b16 %v1445
      %v1469 = vunpack.c.l.b16 %v1446
      %v1470 = vpack.c.b16 %v1463, %v1462
      %v1471 = vpack.c.b16 %v1465, %v1464
      %v1472 = vpack.c.b16 %v1467, %v1466
      %v1473 = vpack.c.b16 %v1469, %v1468
      %vm1478 = vcmask 523264
      %v1480 = vsel %vm1478, %v1438, 0
      %1482 = vmatprep.subr.bf16.mxu0 0
      %1483 = vmatpush1.bf16.msra.mxu0 %v1470
      %1484 = vmatprep.subr.bf16.mxu0 0
      %1485 = vmatpush1.bf16.msra.mxu0 %v1471
      %1486 = vmatprep.subr.bf16.mxu0 0
      %1487 = vmatpush1.bf16.msra.mxu0 %v1472
      %1488 = vmatprep.subr.bf16.mxu0 0
      %1489 = vmatpush1.bf16.msra.mxu0 %v1473
      %1490 = vmatprep.subr.bf16.mxu0 0
      %1491 = vmatpush1.bf16.msra.mxu0 0
      %1492 = vmatprep.subr.bf16.mxu0 0
      %1493 = vmatpush1.bf16.msra.mxu0 0
      %1494 = vmatprep.subr.bf16.mxu0 0
      %1495 = vmatpush1.bf16.msra.mxu0 0
      %1496 = vmatprep.subr.bf16.mxu0 0
      %1497 = vmatpush1.bf16.msra.mxu0 0
      %1498 = vmatprep.subr.bf16.mxu0 0
      %1499 = vmatpush1.bf16.msra.mxu0 0
      %1500 = vmatprep.subr.bf16.mxu0 0
      %1501 = vmatpush1.bf16.msra.mxu0 0
      %1502 = vmatprep.subr.bf16.mxu0 0
      %1503 = vmatpush1.bf16.msra.mxu0 0
      %1504 = vmatprep.subr.bf16.mxu0 0
      %1505 = vmatpush1.bf16.msra.mxu0 0
      %1506 = vmatprep.subr.bf16.mxu0 0
      %1507 = vmatpush1.bf16.msra.mxu0 0
      %1508 = vmatprep.subr.bf16.mxu0 0
      %1509 = vmatpush1.bf16.msra.mxu0 0
      %1510 = vmatprep.subr.bf16.mxu0 0
      %1511 = vmatpush1.bf16.msra.mxu0 0
      %1512 = vmatprep.subr.bf16.mxu0 0
      %1513 = vmatpush1.bf16.msra.mxu0 0
      %1514 = vmatprep.mubr.bf16.mxu0 0
      %1515 = vmatmul.mubr.bf16.gmra.mrb[0].mxu0 %v1480
      %v1516 = vpop.f32.mrb[0].mxu0
      %v1517 = vadd.f32 %v1452, %v1516
      %v1518 = vpop.f32.mrb[0].mxu0
      %v1519 = vpop.f32.mrb[0].mxu0
      %v1520 = vpop.f32.mrb[0].mxu0
      %1521 = vdwg.mxu0
      %v1522 = vadd.f32 %v1340, %v1517
      %1523 = vst.msk [vmem:[%s584] sm:$0xff] %vm591, %v1522
      %p1524 = scmp.lt.s32.totalorder %s29, 1
      %s1525 = scalar_select %p1524, %s29, 1
      %s1526 = smul.addr %s1525, 8
      %s1527 = scalar_lea.vmem %s18, %s1526
      // Predicated region
      $region93: #{transformer_forward.9} parent=91 // pred_check
        %p1528 = pneg %p435
      $region94: #{transformer_forward.9} parent=91 // pred_check_branch
        %1530 = sbr.rel (%p1528) target = $region96
      $region95: #{transformer_forward.9} parent=91 // pred_region
        _
      $region96: #{transformer_forward.9} parent=91 // pred_fallthru
        _
    $region92: #{transformer_forward.9} parent=5 // pred_fallthru
      _
    %p1531 = scmp.le.s32.totalorder 2, %s24
    // Predicated region
    $region97: #{transformer_forward.9} parent=5 // pred_check
      %p1532 = pneg %p1531
    $region98: #{transformer_forward.9} parent=5 // pred_check_branch
      %1534 = sbr.rel (%p1532) target = $region100
    $region99: #{transformer_forward.9} parent=5 // pred_region
      %s1535 = ssub.s32 %s24, 2
      // Predicated region
      $region101: #{transformer_forward.9} parent=99 // pred_check
        %p1536 = pneg %p441
      $region102: #{transformer_forward.9} parent=99 // pred_check_branch
        %1538 = sbr.rel (%p1536) target = $region104
      $region103: #{transformer_forward.9} parent=99 // pred_region
        %p1539 = scmp.lt.s32.totalorder %s30, 1
        %s1540 = scalar_select %p1539, %s30, 1
        %s1541 = smul.addr %s1540, 8
        %s1542 = scalar_lea.vmem %s18, %s1541
      $region104: #{transformer_forward.9} parent=99 // pred_fallthru
        _
    $region100: #{transformer_forward.9} parent=5 // pred_fallthru
      _
  $region6: #{transformer_forward.9} parent=0 // loop_footer
    %s28 = sadd.s32 1, %s24
  $region7: #{transformer_forward.9} parent=0 // loop_footer_branch
    %23 = sbr.rel target = $region3
  $region8: #{transformer_forward.9} parent=0 // loop_exit
    _

// kernel: transformer_forward.11
$region0: #{transformer_forward.11}
  #allocation0 [shape = 'u32[]', space=smem, size = 0x4, offset = 0x4, fixed_abs, tag = 'smem constant byte address 0x4 - core index']
  #allocation1 [shape = 'u32[144,128]{1,0:T(1,128)}', space=vmem, size = 0x12000, scoped, tag = 'internal scratch']
  %s0 = inlined_call_operand.smem [shape: u32[33], index: -1, kind: input, shape index: {}]
  %s1 = sld [smem:[%s0]]
  %s2 = scalar_lea.smem %s0, 1
  %s3 = sld [smem:[%s2]]
  %s4 = scalar_lea.smem %s0, 2
  %s5 = sld [smem:[%s4]]
  %s6 = scalar_lea.smem %s0, 3
  %s7 = sld [smem:[%s6]]
  %s8 = scalar_lea.smem %s0, 4
  %s9 = sld [smem:[%s8]]
  %s10 = scalar_lea.smem %s0, 5
  %s11 = sld [smem:[%s10]]
  %s12 = scalar_lea.smem %s0, 6
  %s13 = sld [smem:[%s12]]
  %s14 = scalar_lea.smem %s0, 7
  %s15 = sld [smem:[%s14]]
  %s16 = scalar_lea.smem %s0, 8
  %s17 = sld [smem:[%s16]]
  %s18 = scalar_lea.smem %s0, 9
  %s19 = sld [smem:[%s18]]
  %s20 = scalar_lea.smem %s0, 10
  %s21 = sld [smem:[%s20]]
  %s22 = scalar_lea.smem %s0, 11
  %s23 = sld [smem:[%s22]]
  %s24 = scalar_lea.smem %s0, 12
  %s25 = sld [smem:[%s24]]
  %s26 = scalar_lea.smem %s0, 13
  %s27 = sld [smem:[%s26]]
  %s28 = scalar_lea.smem %s0, 14
  %s29 = sld [smem:[%s28]]
  %s30 = scalar_lea.smem %s0, 15
  %s31 = sld [smem:[%s30]]
  %s32 = scalar_lea.smem %s0, 16
  %s33 = sld [smem:[%s32]]
  %s34 = scalar_lea.smem %s0, 17
  %s35 = sld [smem:[%s34]]
  %s36 = scalar_lea.smem %s0, 18
  %s37 = sld [smem:[%s36]]
  %s38 = scalar_lea.smem %s0, 19
  %s39 = sld [smem:[%s38]]
  %s40 = scalar_lea.smem %s0, 20
  %s41 = sld [smem:[%s40]]
  %s42 = scalar_lea.smem %s0, 21
  %s43 = sld [smem:[%s42]]
  %s44 = scalar_lea.smem %s0, 22
  %s45 = sld [smem:[%s44]]
  %s46 = scalar_lea.smem %s0, 23
  %s47 = sld [smem:[%s46]]
  %s48 = scalar_lea.smem %s0, 24
  %s49 = sld [smem:[%s48]]
  %s50 = scalar_lea.smem %s0, 25
  %s51 = sld [smem:[%s50]]
  %s52 = scalar_lea.smem %s0, 26
  %s53 = sld [smem:[%s52]]
  %s54 = scalar_lea.smem %s0, 27
  %s55 = sld [smem:[%s54]]
  %s56 = scalar_lea.smem %s0, 28
  %s57 = sld [smem:[%s56]]
  %s58 = scalar_lea.smem %s0, 29
  %s59 = sld [smem:[%s58]]
  %s60 = scalar_lea.smem %s0, 30
  %s61 = sld [smem:[%s60]]
  %s62 = scalar_lea.smem %s0, 31
  %s63 = sld [smem:[%s62]]
  %s64 = scalar_lea.smem %s0, 32
  %s65 = sld [smem:[%s64]]
  %s66 = sld [smem:[#allocation0]]
  $region161: #{transformer_forward.11} parent=0
    _
  %s68 = ssub.s32 1, %s66
  %s69 = scalar_select 0, %s68, %s66
  loop: start=0, step=1, limit=4
  $region2: #{transformer_forward.11} parent=0 // loop_pre_header
    _
  $region3: #{transformer_forward.11} parent=0 // loop_header
    %s71 = sphi 0, %s75
    %p72 = scmp.ge.s32.totalorder %s71, 4
    %s81 = sphi 0, %s83
    %s84 = sphi 0, %s81
    %s85 = sphi 0, %s84
    %s101 = sphi 0, %s85
    %s107 = sphi 0, %s109
    %s110 = sphi 0, %s107
    %s111 = sphi 0, %s110
    %s127 = sphi 0, %s111
    %s133 = sphi 0, %s135
    %s136 = sphi 0, %s133
    %s137 = sphi 0, %s136
    %s153 = sphi 0, %s137
    %s159 = sphi 0, %s161
    %s162 = sphi 0, %s159
    %s163 = sphi 0, %s162
    %s179 = sphi 0, %s163
    %s183 = sphi 0, %s183
    %s185 = sphi 0, %s183
    %s186 = sphi 0, %s185
    %s200 = sphi 0, %s186
    %s204 = sphi 0, %s204
    %s206 = sphi 0, %s204
    %s207 = sphi 0, %s206
    %s221 = sphi 0, %s207
    %s225 = sphi 0, %s225
    %s227 = sphi 0, %s225
    %s228 = sphi 0, %s227
    %s242 = sphi 0, %s228
    %s246 = sphi 0, %s246
    %s248 = sphi 0, %s246
    %s249 = sphi 0, %s248
    %s263 = sphi 0, %s249
    %s267 = sphi 0, %s267
    %s269 = sphi 0, %s267
    %s270 = sphi 0, %s269
    %s284 = sphi 0, %s270
    %s288 = sphi 0, %s288
    %s290 = sphi 0, %s288
    %s291 = sphi 0, %s290
    %s305 = sphi 0, %s291
    %s309 = sphi 0, %s309
    %s311 = sphi 0, %s309
    %s312 = sphi 0, %s311
    %s326 = sphi 0, %s312
    %s330 = sphi 0, %s330
    %s332 = sphi 0, %s330
    %s333 = sphi 0, %s332
    %s347 = sphi 0, %s333
    %s351 = sphi 0, %s351
    %s353 = sphi 0, %s351
    %s354 = sphi 0, %s353
    %s368 = sphi 0, %s354
    %s372 = sphi 0, %s372
    %s374 = sphi 0, %s372
    %s375 = sphi 0, %s374
    %s389 = sphi 0, %s375
    %s393 = sphi 0, %s393
    %s395 = sphi 0, %s393
    %s396 = sphi 0, %s395
    %s410 = sphi 0, %s396
    %s414 = sphi 0, %s414
    %s416 = sphi 0, %s414
    %s417 = sphi 0, %s416
    %s431 = sphi 0, %s417
    %s435 = sphi 0, %s435
    %s437 = sphi 0, %s435
    %s438 = sphi 0, %s437
    %s452 = sphi 0, %s438
    %s456 = sphi 0, %s456
    %s458 = sphi 0, %s456
    %s459 = sphi 0, %s458
    %s473 = sphi 0, %s459
    %s477 = sphi 0, %s477
    %s479 = sphi 0, %s477
    %s480 = sphi 0, %s479
    %s494 = sphi 0, %s480
    %s498 = sphi 0, %s498
    %s500 = sphi 0, %s498
    %s501 = sphi 0, %s500
    %s515 = sphi 0, %s501
    %s519 = sphi 0, %s519
    %s521 = sphi 0, %s519
    %s522 = sphi 0, %s521
    %s536 = sphi 0, %s522
    %s540 = sphi 0, %s540
    %s542 = sphi 0, %s540
    %s543 = sphi 0, %s542
    %s557 = sphi 0, %s543
    %s561 = sphi 0, %s561
    %s563 = sphi 0, %s561
    %s564 = sphi 0, %s563
    %s578 = sphi 0, %s564
    %s582 = sphi 0, %s582
    %s584 = sphi 0, %s582
    %s585 = sphi 0, %s584
    %s599 = sphi 0, %s585
    %s603 = sphi 0, %s603
    %s605 = sphi 0, %s603
    %s606 = sphi 0, %s605
    %s620 = sphi 0, %s606
    %s624 = sphi 0, %s624
    %s626 = sphi 0, %s624
    %s627 = sphi 0, %s626
    %s641 = sphi 0, %s627
    %s645 = sphi 0, %s645
    %s647 = sphi 0, %s645
    %s648 = sphi 0, %s647
    %s662 = sphi 0, %s648
    %s666 = sphi 0, %s666
    %s668 = sphi 0, %s666
    %s669 = sphi 0, %s668
    %s683 = sphi 0, %s669
    %s687 = sphi 0, %s687
    %s689 = sphi 0, %s687
    %s690 = sphi 0, %s689
    %s704 = sphi 0, %s690
    %s708 = sphi 0, %s708
    %s710 = sphi 0, %s708
    %s711 = sphi 0, %s710
    %s725 = sphi 0, %s711
    %s729 = sphi 0, %s729
    %s731 = sphi 0, %s729
    %s732 = sphi 0, %s731
    %s746 = sphi 0, %s732
    %s750 = sphi 0, %s750
    %s752 = sphi 0, %s750
    %s753 = sphi 0, %s752
    %s767 = sphi 0, %s753
    %s773 = sphi 0, %s775
    %s776 = sphi 0, %s773
    %s777 = sphi 0, %s776
    %s793 = sphi 0, %s777
  $region4: #{transformer_forward.11} parent=0 // loop_header_branch
    %74 = sbr.rel (%p72) target = $region8
  $region5: #{transformer_forward.11} parent=0 // loop_body
    %s76 = ssub.s32 %s71, 1
    %s77 = ssub.s32 %s71, 2
    %s78 = sadd.s32 %s71, 1
    %s79 = ssub.s32 %s71, %s78
    %p80 = scmp.eq.s32.totalorder %s79, 0
    %s82 = sadd.s32 %s81, 1
    %s83 = scalar_select %p80, %s81, %s82
    %p86 = pneg %p80
    %p87 = scmp.eq.s32.totalorder %s71, 1
    %p88 = por %p86, %p87
    %p89 = scmp.ne.s32.totalorder %s81, %s84
    %p90 = scmp.eq.s32.totalorder %s71, 0
    %p91 = por %p89, %p90
    %p92 = scmp.ne.s32.totalorder %s81, %s84
    %p93 = scmp.eq.s32.totalorder %s76, 1
    %p94 = por %p92, %p93
    %p95 = scmp.ne.s32.totalorder %s84, %s85
    %p96 = scmp.eq.s32.totalorder %s76, 0
    %p97 = por %p95, %p96
    %p98 = scmp.ne.s32.totalorder %s84, %s85
    %p99 = scmp.eq.s32.totalorder %s77, 1
    %p100 = por %p98, %p99
    %p102 = scmp.ne.s32.totalorder %s85, %s101
    %p103 = scmp.eq.s32.totalorder %s77, 0
    %p104 = por %p102, %p103
    %s105 = ssub.s32 %s71, %s78
    %p106 = scmp.eq.s32.totalorder %s105, 0
    %s108 = sadd.s32 %s107, 1
    %s109 = scalar_select %p106, %s107, %s108
    %p112 = pneg %p106
    %p113 = scmp.eq.s32.totalorder %s71, 1
    %p114 = por %p112, %p113
    %p115 = scmp.ne.s32.totalorder %s107, %s110
    %p116 = scmp.eq.s32.totalorder %s71, 0
    %p117 = por %p115, %p116
    %p118 = scmp.ne.s32.totalorder %s107, %s110
    %p119 = scmp.eq.s32.totalorder %s76, 1
    %p120 = por %p118, %p119
    %p121 = scmp.ne.s32.totalorder %s110, %s111
    %p122 = scmp.eq.s32.totalorder %s76, 0
    %p123 = por %p121, %p122
    %p124 = scmp.ne.s32.totalorder %s110, %s111
    %p125 = scmp.eq.s32.totalorder %s77, 1
    %p126 = por %p124, %p125
    %p128 = scmp.ne.s32.totalorder %s111, %s127
    %p129 = scmp.eq.s32.totalorder %s77, 0
    %p130 = por %p128, %p129
    %s131 = ssub.s32 %s71, %s78
    %p132 = scmp.eq.s32.totalorder %s131, 0
    %s134 = sadd.s32 %s133, 1
    %s135 = scalar_select %p132, %s133, %s134
    %p138 = pneg %p132
    %p139 = scmp.eq.s32.totalorder %s71, 1
    %p140 = por %p138, %p139
    %p141 = scmp.ne.s32.totalorder %s133, %s136
    %p142 = scmp.eq.s32.totalorder %s71, 0
    %p143 = por %p141, %p142
    %p144 = scmp.ne.s32.totalorder %s133, %s136
    %p145 = scmp.eq.s32.totalorder %s76, 1
    %p146 = por %p144, %p145
    %p147 = scmp.ne.s32.totalorder %s136, %s137
    %p148 = scmp.eq.s32.totalorder %s76, 0
    %p149 = por %p147, %p148
    %p150 = scmp.ne.s32.totalorder %s136, %s137
    %p151 = scmp.eq.s32.totalorder %s77, 1
    %p152 = por %p150, %p151
    %p154 = scmp.ne.s32.totalorder %s137, %s153
    %p155 = scmp.eq.s32.totalorder %s77, 0
    %p156 = por %p154, %p155
    %s157 = ssub.s32 %s71, %s78
    %p158 = scmp.eq.s32.totalorder %s157, 0
    %s160 = sadd.s32 %s159, 1
    %s161 = scalar_select %p158, %s159, %s160
    %p164 = pneg %p158
    %p165 = scmp.eq.s32.totalorder %s71, 1
    %p166 = por %p164, %p165
    %p167 = scmp.ne.s32.totalorder %s159, %s162
    %p168 = scmp.eq.s32.totalorder %s71, 0
    %p169 = por %p167, %p168
    %p170 = scmp.ne.s32.totalorder %s159, %s162
    %p171 = scmp.eq.s32.totalorder %s76, 1
    %p172 = por %p170, %p171
    %p173 = scmp.ne.s32.totalorder %s162, %s163
    %p174 = scmp.eq.s32.totalorder %s76, 0
    %p175 = por %p173, %p174
    %p176 = scmp.ne.s32.totalorder %s162, %s163
    %p177 = scmp.eq.s32.totalorder %s77, 1
    %p178 = por %p176, %p177
    %p180 = scmp.ne.s32.totalorder %s163, %s179
    %p181 = scmp.eq.s32.totalorder %s77, 0
    %p182 = por %p180, %p181
    %s184 = sadd.s32 %s183, 1
    %p187 = scmp.eq.s32.totalorder %s71, 1
    %p188 = scmp.ne.s32.totalorder %s183, %s185
    %p189 = scmp.eq.s32.totalorder %s71, 0
    %p190 = por %p188, %p189
    %p191 = scmp.ne.s32.totalorder %s183, %s185
    %p192 = scmp.eq.s32.totalorder %s76, 1
    %p193 = por %p191, %p192
    %p194 = scmp.ne.s32.totalorder %s185, %s186
    %p195 = scmp.eq.s32.totalorder %s76, 0
    %p196 = por %p194, %p195
    %p197 = scmp.ne.s32.totalorder %s185, %s186
    %p198 = scmp.eq.s32.totalorder %s77, 1
    %p199 = por %p197, %p198
    %p201 = scmp.ne.s32.totalorder %s186, %s200
    %p202 = scmp.eq.s32.totalorder %s77, 0
    %p203 = por %p201, %p202
    %s205 = sadd.s32 %s204, 1
    %p208 = scmp.eq.s32.totalorder %s71, 1
    %p209 = scmp.ne.s32.totalorder %s204, %s206
    %p210 = scmp.eq.s32.totalorder %s71, 0
    %p211 = por %p209, %p210
    %p212 = scmp.ne.s32.totalorder %s204, %s206
    %p213 = scmp.eq.s32.totalorder %s76, 1
    %p214 = por %p212, %p213
    %p215 = scmp.ne.s32.totalorder %s206, %s207
    %p216 = scmp.eq.s32.totalorder %s76, 0
    %p217 = por %p215, %p216
    %p218 = scmp.ne.s32.totalorder %s206, %s207
    %p219 = scmp.eq.s32.totalorder %s77, 1
    %p220 = por %p218, %p219
    %p222 = scmp.ne.s32.totalorder %s207, %s221
    %p223 = scmp.eq.s32.totalorder %s77, 0
    %p224 = por %p222, %p223
    %s226 = sadd.s32 %s225, 1
    %p229 = scmp.eq.s32.totalorder %s71, 1
    %p230 = scmp.ne.s32.totalorder %s225, %s227
    %p231 = scmp.eq.s32.totalorder %s71, 0
    %p232 = por %p230, %p231
    %p233 = scmp.ne.s32.totalorder %s225, %s227
    %p234 = scmp.eq.s32.totalorder %s76, 1
    %p235 = por %p233, %p234
    %p236 = scmp.ne.s32.totalorder %s227, %s228
    %p237 = scmp.eq.s32.totalorder %s76, 0
    %p238 = por %p236, %p237
    %p239 = scmp.ne.s32.totalorder %s227, %s228
    %p240 = scmp.eq.s32.totalorder %s77, 1
    %p241 = por %p239, %p240
    %p243 = scmp.ne.s32.totalorder %s228, %s242
    %p244 = scmp.eq.s32.totalorder %s77, 0
    %p245 = por %p243, %p244
    %s247 = sadd.s32 %s246, 1
    %p250 = scmp.eq.s32.totalorder %s71, 1
    %p251 = scmp.ne.s32.totalorder %s246, %s248
    %p252 = scmp.eq.s32.totalorder %s71, 0
    %p253 = por %p251, %p252
    %p254 = scmp.ne.s32.totalorder %s246, %s248
    %p255 = scmp.eq.s32.totalorder %s76, 1
    %p256 = por %p254, %p255
    %p257 = scmp.ne.s32.totalorder %s248, %s249
    %p258 = scmp.eq.s32.totalorder %s76, 0
    %p259 = por %p257, %p258
    %p260 = scmp.ne.s32.totalorder %s248, %s249
    %p261 = scmp.eq.s32.totalorder %s77, 1
    %p262 = por %p260, %p261
    %p264 = scmp.ne.s32.totalorder %s249, %s263
    %p265 = scmp.eq.s32.totalorder %s77, 0
    %p266 = por %p264, %p265
    %s268 = sadd.s32 %s267, 1
    %p271 = scmp.eq.s32.totalorder %s71, 1
    %p272 = scmp.ne.s32.totalorder %s267, %s269
    %p273 = scmp.eq.s32.totalorder %s71, 0
    %p274 = por %p272, %p273
    %p275 = scmp.ne.s32.totalorder %s267, %s269
    %p276 = scmp.eq.s32.totalorder %s76, 1
    %p277 = por %p275, %p276
    %p278 = scmp.ne.s32.totalorder %s269, %s270
    %p279 = scmp.eq.s32.totalorder %s76, 0
    %p280 = por %p278, %p279
    %p281 = scmp.ne.s32.totalorder %s269, %s270
    %p282 = scmp.eq.s32.totalorder %s77, 1
    %p283 = por %p281, %p282
    %p285 = scmp.ne.s32.totalorder %s270, %s284
    %p286 = scmp.eq.s32.totalorder %s77, 0
    %p287 = por %p285, %p286
    %s289 = sadd.s32 %s288, 1
    %p292 = scmp.eq.s32.totalorder %s71, 1
    %p293 = scmp.ne.s32.totalorder %s288, %s290
    %p294 = scmp.eq.s32.totalorder %s71, 0
    %p295 = por %p293, %p294
    %p296 = scmp.ne.s32.totalorder %s288, %s290
    %p297 = scmp.eq.s32.totalorder %s76, 1
    %p298 = por %p296, %p297
    %p299 = scmp.ne.s32.totalorder %s290, %s291
    %p300 = scmp.eq.s32.totalorder %s76, 0
    %p301 = por %p299, %p300
    %p302 = scmp.ne.s32.totalorder %s290, %s291
    %p303 = scmp.eq.s32.totalorder %s77, 1
    %p304 = por %p302, %p303
    %p306 = scmp.ne.s32.totalorder %s291, %s305
    %p307 = scmp.eq.s32.totalorder %s77, 0
    %p308 = por %p306, %p307
    %s310 = sadd.s32 %s309, 1
    %p313 = scmp.eq.s32.totalorder %s71, 1
    %p314 = scmp.ne.s32.totalorder %s309, %s311
    %p315 = scmp.eq.s32.totalorder %s71, 0
    %p316 = por %p314, %p315
    %p317 = scmp.ne.s32.totalorder %s309, %s311
    %p318 = scmp.eq.s32.totalorder %s76, 1
    %p319 = por %p317, %p318
    %p320 = scmp.ne.s32.totalorder %s311, %s312
    %p321 = scmp.eq.s32.totalorder %s76, 0
    %p322 = por %p320, %p321
    %p323 = scmp.ne.s32.totalorder %s311, %s312
    %p324 = scmp.eq.s32.totalorder %s77, 1
    %p325 = por %p323, %p324
    %p327 = scmp.ne.s32.totalorder %s312, %s326
    %p328 = scmp.eq.s32.totalorder %s77, 0
    %p329 = por %p327, %p328
    %s331 = sadd.s32 %s330, 1
    %p334 = scmp.eq.s32.totalorder %s71, 1
    %p335 = scmp.ne.s32.totalorder %s330, %s332
    %p336 = scmp.eq.s32.totalorder %s71, 0
    %p337 = por %p335, %p336
    %p338 = scmp.ne.s32.totalorder %s330, %s332
    %p339 = scmp.eq.s32.totalorder %s76, 1
    %p340 = por %p338, %p339
    %p341 = scmp.ne.s32.totalorder %s332, %s333
    %p342 = scmp.eq.s32.totalorder %s76, 0
    %p343 = por %p341, %p342
    %p344 = scmp.ne.s32.totalorder %s332, %s333
    %p345 = scmp.eq.s32.totalorder %s77, 1
    %p346 = por %p344, %p345
    %p348 = scmp.ne.s32.totalorder %s333, %s347
    %p349 = scmp.eq.s32.totalorder %s77, 0
    %p350 = por %p348, %p349
    %s352 = sadd.s32 %s351, 1
    %p355 = scmp.eq.s32.totalorder %s71, 1
    %p356 = scmp.ne.s32.totalorder %s351, %s353
    %p357 = scmp.eq.s32.totalorder %s71, 0
    %p358 = por %p356, %p357
    %p359 = scmp.ne.s32.totalorder %s351, %s353
    %p360 = scmp.eq.s32.totalorder %s76, 1
    %p361 = por %p359, %p360
    %p362 = scmp.ne.s32.totalorder %s353, %s354
    %p363 = scmp.eq.s32.totalorder %s76, 0
    %p364 = por %p362, %p363
    %p365 = scmp.ne.s32.totalorder %s353, %s354
    %p366 = scmp.eq.s32.totalorder %s77, 1
    %p367 = por %p365, %p366
    %p369 = scmp.ne.s32.totalorder %s354, %s368
    %p370 = scmp.eq.s32.totalorder %s77, 0
    %p371 = por %p369, %p370
    %s373 = sadd.s32 %s372, 1
    %p376 = scmp.eq.s32.totalorder %s71, 1
    %p377 = scmp.ne.s32.totalorder %s372, %s374
    %p378 = scmp.eq.s32.totalorder %s71, 0
    %p379 = por %p377, %p378
    %p380 = scmp.ne.s32.totalorder %s372, %s374
    %p381 = scmp.eq.s32.totalorder %s76, 1
    %p382 = por %p380, %p381
    %p383 = scmp.ne.s32.totalorder %s374, %s375
    %p384 = scmp.eq.s32.totalorder %s76, 0
    %p385 = por %p383, %p384
    %p386 = scmp.ne.s32.totalorder %s374, %s375
    %p387 = scmp.eq.s32.totalorder %s77, 1
    %p388 = por %p386, %p387
    %p390 = scmp.ne.s32.totalorder %s375, %s389
    %p391 = scmp.eq.s32.totalorder %s77, 0
    %p392 = por %p390, %p391
    %s394 = sadd.s32 %s393, 1
    %p397 = scmp.eq.s32.totalorder %s71, 1
    %p398 = scmp.ne.s32.totalorder %s393, %s395
    %p399 = scmp.eq.s32.totalorder %s71, 0
    %p400 = por %p398, %p399
    %p401 = scmp.ne.s32.totalorder %s393, %s395
    %p402 = scmp.eq.s32.totalorder %s76, 1
    %p403 = por %p401, %p402
    %p404 = scmp.ne.s32.totalorder %s395, %s396
    %p405 = scmp.eq.s32.totalorder %s76, 0
    %p406 = por %p404, %p405
    %p407 = scmp.ne.s32.totalorder %s395, %s396
    %p408 = scmp.eq.s32.totalorder %s77, 1
    %p409 = por %p407, %p408
    %p411 = scmp.ne.s32.totalorder %s396, %s410
    %p412 = scmp.eq.s32.totalorder %s77, 0
    %p413 = por %p411, %p412
    %s415 = sadd.s32 %s414, 1
    %p418 = scmp.eq.s32.totalorder %s71, 1
    %p419 = scmp.ne.s32.totalorder %s414, %s416
    %p420 = scmp.eq.s32.totalorder %s71, 0
    %p421 = por %p419, %p420
    %p422 = scmp.ne.s32.totalorder %s414, %s416
    %p423 = scmp.eq.s32.totalorder %s76, 1
    %p424 = por %p422, %p423
    %p425 = scmp.ne.s32.totalorder %s416, %s417
    %p426 = scmp.eq.s32.totalorder %s76, 0
    %p427 = por %p425, %p426
    %p428 = scmp.ne.s32.totalorder %s416, %s417
    %p429 = scmp.eq.s32.totalorder %s77, 1
    %p430 = por %p428, %p429
    %p432 = scmp.ne.s32.totalorder %s417, %s431
    %p433 = scmp.eq.s32.totalorder %s77, 0
    %p434 = por %p432, %p433
    %s436 = sadd.s32 %s435, 1
    %p439 = scmp.eq.s32.totalorder %s71, 1
    %p440 = scmp.ne.s32.totalorder %s435, %s437
    %p441 = scmp.eq.s32.totalorder %s71, 0
    %p442 = por %p440, %p441
    %p443 = scmp.ne.s32.totalorder %s435, %s437
    %p444 = scmp.eq.s32.totalorder %s76, 1
    %p445 = por %p443, %p444
    %p446 = scmp.ne.s32.totalorder %s437, %s438
    %p447 = scmp.eq.s32.totalorder %s76, 0
    %p448 = por %p446, %p447
    %p449 = scmp.ne.s32.totalorder %s437, %s438
    %p450 = scmp.eq.s32.totalorder %s77, 1
    %p451 = por %p449, %p450
    %p453 = scmp.ne.s32.totalorder %s438, %s452
    %p454 = scmp.eq.s32.totalorder %s77, 0
    %p455 = por %p453, %p454
    %s457 = sadd.s32 %s456, 1
    %p460 = scmp.eq.s32.totalorder %s71, 1
    %p461 = scmp.ne.s32.totalorder %s456, %s458
    %p462 = scmp.eq.s32.totalorder %s71, 0
    %p463 = por %p461, %p462
    %p464 = scmp.ne.s32.totalorder %s456, %s458
    %p465 = scmp.eq.s32.totalorder %s76, 1
    %p466 = por %p464, %p465
    %p467 = scmp.ne.s32.totalorder %s458, %s459
    %p468 = scmp.eq.s32.totalorder %s76, 0
    %p469 = por %p467, %p468
    %p470 = scmp.ne.s32.totalorder %s458, %s459
    %p471 = scmp.eq.s32.totalorder %s77, 1
    %p472 = por %p470, %p471
    %p474 = scmp.ne.s32.totalorder %s459, %s473
    %p475 = scmp.eq.s32.totalorder %s77, 0
    %p476 = por %p474, %p475
    %s478 = sadd.s32 %s477, 1
    %p481 = scmp.eq.s32.totalorder %s71, 1
    %p482 = scmp.ne.s32.totalorder %s477, %s479
    %p483 = scmp.eq.s32.totalorder %s71, 0
    %p484 = por %p482, %p483
    %p485 = scmp.ne.s32.totalorder %s477, %s479
    %p486 = scmp.eq.s32.totalorder %s76, 1
    %p487 = por %p485, %p486
    %p488 = scmp.ne.s32.totalorder %s479, %s480
    %p489 = scmp.eq.s32.totalorder %s76, 0
    %p490 = por %p488, %p489
    %p491 = scmp.ne.s32.totalorder %s479, %s480
    %p492 = scmp.eq.s32.totalorder %s77, 1
    %p493 = por %p491, %p492
    %p495 = scmp.ne.s32.totalorder %s480, %s494
    %p496 = scmp.eq.s32.totalorder %s77, 0
    %p497 = por %p495, %p496
    %s499 = sadd.s32 %s498, 1
    %p502 = scmp.eq.s32.totalorder %s71, 1
    %p503 = scmp.ne.s32.totalorder %s498, %s500
    %p504 = scmp.eq.s32.totalorder %s71, 0
    %p505 = por %p503, %p504
    %p506 = scmp.ne.s32.totalorder %s498, %s500
    %p507 = scmp.eq.s32.totalorder %s76, 1
    %p508 = por %p506, %p507
    %p509 = scmp.ne.s32.totalorder %s500, %s501
    %p510 = scmp.eq.s32.totalorder %s76, 0
    %p511 = por %p509, %p510
    %p512 = scmp.ne.s32.totalorder %s500, %s501
    %p513 = scmp.eq.s32.totalorder %s77, 1
    %p514 = por %p512, %p513
    %p516 = scmp.ne.s32.totalorder %s501, %s515
    %p517 = scmp.eq.s32.totalorder %s77, 0
    %p518 = por %p516, %p517
    %s520 = sadd.s32 %s519, 1
    %p523 = scmp.eq.s32.totalorder %s71, 1
    %p524 = scmp.ne.s32.totalorder %s519, %s521
    %p525 = scmp.eq.s32.totalorder %s71, 0
    %p526 = por %p524, %p525
    %p527 = scmp.ne.s32.totalorder %s519, %s521
    %p528 = scmp.eq.s32.totalorder %s76, 1
    %p529 = por %p527, %p528
    %p530 = scmp.ne.s32.totalorder %s521, %s522
    %p531 = scmp.eq.s32.totalorder %s76, 0
    %p532 = por %p530, %p531
    %p533 = scmp.ne.s32.totalorder %s521, %s522
    %p534 = scmp.eq.s32.totalorder %s77, 1
    %p535 = por %p533, %p534
    %p537 = scmp.ne.s32.totalorder %s522, %s536
    %p538 = scmp.eq.s32.totalorder %s77, 0
    %p539 = por %p537, %p538
    %s541 = sadd.s32 %s540, 1
    %p544 = scmp.eq.s32.totalorder %s71, 1
    %p545 = scmp.ne.s32.totalorder %s540, %s542
    %p546 = scmp.eq.s32.totalorder %s71, 0
    %p547 = por %p545, %p546
    %p548 = scmp.ne.s32.totalorder %s540, %s542
    %p549 = scmp.eq.s32.totalorder %s76, 1
    %p550 = por %p548, %p549
    %p551 = scmp.ne.s32.totalorder %s542, %s543
    %p552 = scmp.eq.s32.totalorder %s76, 0
    %p553 = por %p551, %p552
    %p554 = scmp.ne.s32.totalorder %s542, %s543
    %p555 = scmp.eq.s32.totalorder %s77, 1
    %p556 = por %p554, %p555
    %p558 = scmp.ne.s32.totalorder %s543, %s557
    %p559 = scmp.eq.s32.totalorder %s77, 0
    %p560 = por %p558, %p559
    %s562 = sadd.s32 %s561, 1
    %p565 = scmp.eq.s32.totalorder %s71, 1
    %p566 = scmp.ne.s32.totalorder %s561, %s563
    %p567 = scmp.eq.s32.totalorder %s71, 0
    %p568 = por %p566, %p567
    %p569 = scmp.ne.s32.totalorder %s561, %s563
    %p570 = scmp.eq.s32.totalorder %s76, 1
    %p571 = por %p569, %p570
    %p572 = scmp.ne.s32.totalorder %s563, %s564
    %p573 = scmp.eq.s32.totalorder %s76, 0
    %p574 = por %p572, %p573
    %p575 = scmp.ne.s32.totalorder %s563, %s564
    %p576 = scmp.eq.s32.totalorder %s77, 1
    %p577 = por %p575, %p576
    %p579 = scmp.ne.s32.totalorder %s564, %s578
    %p580 = scmp.eq.s32.totalorder %s77, 0
    %p581 = por %p579, %p580
    %s583 = sadd.s32 %s582, 1
    %p586 = scmp.eq.s32.totalorder %s71, 1
    %p587 = scmp.ne.s32.totalorder %s582, %s584
    %p588 = scmp.eq.s32.totalorder %s71, 0
    %p589 = por %p587, %p588
    %p590 = scmp.ne.s32.totalorder %s582, %s584
    %p591 = scmp.eq.s32.totalorder %s76, 1
    %p592 = por %p590, %p591
    %p593 = scmp.ne.s32.totalorder %s584, %s585
    %p594 = scmp.eq.s32.totalorder %s76, 0
    %p595 = por %p593, %p594
    %p596 = scmp.ne.s32.totalorder %s584, %s585
    %p597 = scmp.eq.s32.totalorder %s77, 1
    %p598 = por %p596, %p597
    %p600 = scmp.ne.s32.totalorder %s585, %s599
    %p601 = scmp.eq.s32.totalorder %s77, 0
    %p602 = por %p600, %p601
    %s604 = sadd.s32 %s603, 1
    %p607 = scmp.eq.s32.totalorder %s71, 1
    %p608 = scmp.ne.s32.totalorder %s603, %s605
    %p609 = scmp.eq.s32.totalorder %s71, 0
    %p610 = por %p608, %p609
    %p611 = scmp.ne.s32.totalorder %s603, %s605
    %p612 = scmp.eq.s32.totalorder %s76, 1
    %p613 = por %p611, %p612
    %p614 = scmp.ne.s32.totalorder %s605, %s606
    %p615 = scmp.eq.s32.totalorder %s76, 0
    %p616 = por %p614, %p615
    %p617 = scmp.ne.s32.totalorder %s605, %s606
    %p618 = scmp.eq.s32.totalorder %s77, 1
    %p619 = por %p617, %p618
    %p621 = scmp.ne.s32.totalorder %s606, %s620
    %p622 = scmp.eq.s32.totalorder %s77, 0
    %p623 = por %p621, %p622
    %s625 = sadd.s32 %s624, 1
    %p628 = scmp.eq.s32.totalorder %s71, 1
    %p629 = scmp.ne.s32.totalorder %s624, %s626
    %p630 = scmp.eq.s32.totalorder %s71, 0
    %p631 = por %p629, %p630
    %p632 = scmp.ne.s32.totalorder %s624, %s626
    %p633 = scmp.eq.s32.totalorder %s76, 1
    %p634 = por %p632, %p633
    %p635 = scmp.ne.s32.totalorder %s626, %s627
    %p636 = scmp.eq.s32.totalorder %s76, 0
    %p637 = por %p635, %p636
    %p638 = scmp.ne.s32.totalorder %s626, %s627
    %p639 = scmp.eq.s32.totalorder %s77, 1
    %p640 = por %p638, %p639
    %p642 = scmp.ne.s32.totalorder %s627, %s641
    %p643 = scmp.eq.s32.totalorder %s77, 0
    %p644 = por %p642, %p643
    %s646 = sadd.s32 %s645, 1
    %p649 = scmp.eq.s32.totalorder %s71, 1
    %p650 = scmp.ne.s32.totalorder %s645, %s647
    %p651 = scmp.eq.s32.totalorder %s71, 0
    %p652 = por %p650, %p651
    %p653 = scmp.ne.s32.totalorder %s645, %s647
    %p654 = scmp.eq.s32.totalorder %s76, 1
    %p655 = por %p653, %p654
    %p656 = scmp.ne.s32.totalorder %s647, %s648
    %p657 = scmp.eq.s32.totalorder %s76, 0
    %p658 = por %p656, %p657
    %p659 = scmp.ne.s32.totalorder %s647, %s648
    %p660 = scmp.eq.s32.totalorder %s77, 1
    %p661 = por %p659, %p660
    %p663 = scmp.ne.s32.totalorder %s648, %s662
    %p664 = scmp.eq.s32.totalorder %s77, 0
    %p665 = por %p663, %p664
    %s667 = sadd.s32 %s666, 1
    %p670 = scmp.eq.s32.totalorder %s71, 1
    %p671 = scmp.ne.s32.totalorder %s666, %s668
    %p672 = scmp.eq.s32.totalorder %s71, 0
    %p673 = por %p671, %p672
    %p674 = scmp.ne.s32.totalorder %s666, %s668
    %p675 = scmp.eq.s32.totalorder %s76, 1
    %p676 = por %p674, %p675
    %p677 = scmp.ne.s32.totalorder %s668, %s669
    %p678 = scmp.eq.s32.totalorder %s76, 0
    %p679 = por %p677, %p678
    %p680 = scmp.ne.s32.totalorder %s668, %s669
    %p681 = scmp.eq.s32.totalorder %s77, 1
    %p682 = por %p680, %p681
    %p684 = scmp.ne.s32.totalorder %s669, %s683
    %p685 = scmp.eq.s32.totalorder %s77, 0
    %p686 = por %p684, %p685
    %s688 = sadd.s32 %s687, 1
    %p691 = scmp.eq.s32.totalorder %s71, 1
    %p692 = scmp.ne.s32.totalorder %s687, %s689
    %p693 = scmp.eq.s32.totalorder %s71, 0
    %p694 = por %p692, %p693
    %p695 = scmp.ne.s32.totalorder %s687, %s689
    %p696 = scmp.eq.s32.totalorder %s76, 1
    %p697 = por %p695, %p696
    %p698 = scmp.ne.s32.totalorder %s689, %s690
    %p699 = scmp.eq.s32.totalorder %s76, 0
    %p700 = por %p698, %p699
    %p701 = scmp.ne.s32.totalorder %s689, %s690
    %p702 = scmp.eq.s32.totalorder %s77, 1
    %p703 = por %p701, %p702
    %p705 = scmp.ne.s32.totalorder %s690, %s704
    %p706 = scmp.eq.s32.totalorder %s77, 0
    %p707 = por %p705, %p706
    %s709 = sadd.s32 %s708, 1
    %p712 = scmp.eq.s32.totalorder %s71, 1
    %p713 = scmp.ne.s32.totalorder %s708, %s710
    %p714 = scmp.eq.s32.totalorder %s71, 0
    %p715 = por %p713, %p714
    %p716 = scmp.ne.s32.totalorder %s708, %s710
    %p717 = scmp.eq.s32.totalorder %s76, 1
    %p718 = por %p716, %p717
    %p719 = scmp.ne.s32.totalorder %s710, %s711
    %p720 = scmp.eq.s32.totalorder %s76, 0
    %p721 = por %p719, %p720
    %p722 = scmp.ne.s32.totalorder %s710, %s711
    %p723 = scmp.eq.s32.totalorder %s77, 1
    %p724 = por %p722, %p723
    %p726 = scmp.ne.s32.totalorder %s711, %s725
    %p727 = scmp.eq.s32.totalorder %s77, 0
    %p728 = por %p726, %p727
    %s730 = sadd.s32 %s729, 1
    %p733 = scmp.eq.s32.totalorder %s71, 1
    %p734 = scmp.ne.s32.totalorder %s729, %s731
    %p735 = scmp.eq.s32.totalorder %s71, 0
    %p736 = por %p734, %p735
    %p737 = scmp.ne.s32.totalorder %s729, %s731
    %p738 = scmp.eq.s32.totalorder %s76, 1
    %p739 = por %p737, %p738
    %p740 = scmp.ne.s32.totalorder %s731, %s732
    %p741 = scmp.eq.s32.totalorder %s76, 0
    %p742 = por %p740, %p741
    %p743 = scmp.ne.s32.totalorder %s731, %s732
    %p744 = scmp.eq.s32.totalorder %s77, 1
    %p745 = por %p743, %p744
    %p747 = scmp.ne.s32.totalorder %s732, %s746
    %p748 = scmp.eq.s32.totalorder %s77, 0
    %p749 = por %p747, %p748
    %s751 = sadd.s32 %s750, 1
    %p754 = scmp.eq.s32.totalorder %s71, 1
    %p755 = scmp.ne.s32.totalorder %s750, %s752
    %p756 = scmp.eq.s32.totalorder %s71, 0
    %p757 = por %p755, %p756
    %p758 = scmp.ne.s32.totalorder %s750, %s752
    %p759 = scmp.eq.s32.totalorder %s76, 1
    %p760 = por %p758, %p759
    %p761 = scmp.ne.s32.totalorder %s752, %s753
    %p762 = scmp.eq.s32.totalorder %s76, 0
    %p763 = por %p761, %p762
    %p764 = scmp.ne.s32.totalorder %s752, %s753
    %p765 = scmp.eq.s32.totalorder %s77, 1
    %p766 = por %p764, %p765
    %p768 = scmp.ne.s32.totalorder %s753, %s767
    %p769 = scmp.eq.s32.totalorder %s77, 0
    %p770 = por %p768, %p769
    %s771 = ssub.s32 %s71, %s78
    %p772 = scmp.eq.s32.totalorder %s771, 0
    %s774 = sadd.s32 %s773, 1
    %s775 = scalar_select %p772, %s773, %s774
    %p778 = pneg %p772
    %p779 = scmp.eq.s32.totalorder %s71, 1
    %p780 = por %p778, %p779
    %p781 = scmp.ne.s32.totalorder %s773, %s776
    %p782 = scmp.eq.s32.totalorder %s71, 0
    %p783 = por %p781, %p782
    %p784 = scmp.ne.s32.totalorder %s773, %s776
    %p785 = scmp.eq.s32.totalorder %s76, 1
    %p786 = por %p784, %p785
    %p787 = scmp.ne.s32.totalorder %s776, %s777
    %p788 = scmp.eq.s32.totalorder %s76, 0
    %p789 = por %p787, %p788
    %p790 = scmp.ne.s32.totalorder %s776, %s777
    %p791 = scmp.eq.s32.totalorder %s77, 1
    %p792 = por %p790, %p791
    %p794 = scmp.ne.s32.totalorder %s777, %s793
    %p795 = scmp.eq.s32.totalorder %s77, 0
    %p796 = por %p794, %p795
    %p797 = scmp.le.s32.totalorder 1, %s71
    %p798 = scmp.lt.s32.totalorder %s71, 3
    %p799 = pnand %p797, %p798
    %p800 = pneg %p799
    // Predicated region
    $region9: #{transformer_forward.11} parent=5 // pred_check
      _
    $region10: #{transformer_forward.11} parent=5 // pred_check_branch
      %802 = sbr.rel (%p799) target = $region12
    $region11: #{transformer_forward.11} parent=5 // pred_region
      %s803 = ssub.s32 %s71, 1
      // Predicated region
      $region13: #{transformer_forward.11} parent=11 // pred_check
        %p804 = pneg %p196
      $region14: #{transformer_forward.11} parent=11 // pred_check_branch
        %806 = sbr.rel (%p804) target = $region16
      $region15: #{transformer_forward.11} parent=11 // pred_region
        _
      $region16: #{transformer_forward.11} parent=11 // pred_fallthru
        _
      // Predicated region
      $region17: #{transformer_forward.11} parent=11 // pred_check
        %p807 = pneg %p217
      $region18: #{transformer_forward.11} parent=11 // pred_check_branch
        %809 = sbr.rel (%p807) target = $region20
      $region19: #{transformer_forward.11} parent=11 // pred_region
        _
      $region20: #{transformer_forward.11} parent=11 // pred_fallthru
        _
      // Predicated region
      $region21: #{transformer_forward.11} parent=11 // pred_check
        %p810 = pneg %p238
      $region22: #{transformer_forward.11} parent=11 // pred_check_branch
        %812 = sbr.rel (%p810) target = $region24
      $region23: #{transformer_forward.11} parent=11 // pred_region
        _
      $region24: #{transformer_forward.11} parent=11 // pred_fallthru
        _
      // Predicated region
      $region25: #{transformer_forward.11} parent=11 // pred_check
        %p813 = pneg %p259
      $region26: #{transformer_forward.11} parent=11 // pred_check_branch
        %815 = sbr.rel (%p813) target = $region28
      $region27: #{transformer_forward.11} parent=11 // pred_region
        _
      $region28: #{transformer_forward.11} parent=11 // pred_fallthru
        _
      // Predicated region
      $region29: #{transformer_forward.11} parent=11 // pred_check
        %p816 = pneg %p280
      $region30: #{transformer_forward.11} parent=11 // pred_check_branch
        %818 = sbr.rel (%p816) target = $region32
      $region31: #{transformer_forward.11} parent=11 // pred_region
        _
      $region32: #{transformer_forward.11} parent=11 // pred_fallthru
        _
      // Predicated region
      $region33: #{transformer_forward.11} parent=11 // pred_check
        %p819 = pneg %p301
      $region34: #{transformer_forward.11} parent=11 // pred_check_branch
        %821 = sbr.rel (%p819) target = $region36
      $region35: #{transformer_forward.11} parent=11 // pred_region
        _
      $region36: #{transformer_forward.11} parent=11 // pred_fallthru
        _
      // Predicated region
      $region37: #{transformer_forward.11} parent=11 // pred_check
        %p822 = pneg %p322
      $region38: #{transformer_forward.11} parent=11 // pred_check_branch
        %824 = sbr.rel (%p822) target = $region40
      $region39: #{transformer_forward.11} parent=11 // pred_region
        _
      $region40: #{transformer_forward.11} parent=11 // pred_fallthru
        _
      // Predicated region
      $region41: #{transformer_forward.11} parent=11 // pred_check
        %p825 = pneg %p343
      $region42: #{transformer_forward.11} parent=11 // pred_check_branch
        %827 = sbr.rel (%p825) target = $region44
      $region43: #{transformer_forward.11} parent=11 // pred_region
        _
      $region44: #{transformer_forward.11} parent=11 // pred_fallthru
        _
      // Predicated region
      $region45: #{transformer_forward.11} parent=11 // pred_check
        %p828 = pneg %p364
      $region46: #{transformer_forward.11} parent=11 // pred_check_branch
        %830 = sbr.rel (%p828) target = $region48
      $region47: #{transformer_forward.11} parent=11 // pred_region
        _
      $region48: #{transformer_forward.11} parent=11 // pred_fallthru
        _
      // Predicated region
      $region49: #{transformer_forward.11} parent=11 // pred_check
        %p831 = pneg %p385
      $region50: #{transformer_forward.11} parent=11 // pred_check_branch
        %833 = sbr.rel (%p831) target = $region52
      $region51: #{transformer_forward.11} parent=11 // pred_region
        _
      $region52: #{transformer_forward.11} parent=11 // pred_fallthru
        _
      // Predicated region
      $region53: #{transformer_forward.11} parent=11 // pred_check
        %p834 = pneg %p406
      $region54: #{transformer_forward.11} parent=11 // pred_check_branch
        %836 = sbr.rel (%p834) target = $region56
      $region55: #{transformer_forward.11} parent=11 // pred_region
        _
      $region56: #{transformer_forward.11} parent=11 // pred_fallthru
        _
      // Predicated region
      $region57: #{transformer_forward.11} parent=11 // pred_check
        %p837 = pneg %p427
      $region58: #{transformer_forward.11} parent=11 // pred_check_branch
        %839 = sbr.rel (%p837) target = $region60
      $region59: #{transformer_forward.11} parent=11 // pred_region
        _
      $region60: #{transformer_forward.11} parent=11 // pred_fallthru
        _
      // Predicated region
      $region61: #{transformer_forward.11} parent=11 // pred_check
        %p840 = pneg %p448
      $region62: #{transformer_forward.11} parent=11 // pred_check_branch
        %842 = sbr.rel (%p840) target = $region64
      $region63: #{transformer_forward.11} parent=11 // pred_region
        _
      $region64: #{transformer_forward.11} parent=11 // pred_fallthru
        _
      // Predicated region
      $region65: #{transformer_forward.11} parent=11 // pred_check
        %p843 = pneg %p469
      $region66: #{transformer_forward.11} parent=11 // pred_check_branch
        %845 = sbr.rel (%p843) target = $region68
      $region67: #{transformer_forward.11} parent=11 // pred_region
        _
      $region68: #{transformer_forward.11} parent=11 // pred_fallthru
        _
      // Predicated region
      $region69: #{transformer_forward.11} parent=11 // pred_check
        %p846 = pneg %p490
      $region70: #{transformer_forward.11} parent=11 // pred_check_branch
        %848 = sbr.rel (%p846) target = $region72
      $region71: #{transformer_forward.11} parent=11 // pred_region
        _
      $region72: #{transformer_forward.11} parent=11 // pred_fallthru
        _
      // Predicated region
      $region73: #{transformer_forward.11} parent=11 // pred_check
        %p849 = pneg %p511
      $region74: #{transformer_forward.11} parent=11 // pred_check_branch
        %851 = sbr.rel (%p849) target = $region76
      $region75: #{transformer_forward.11} parent=11 // pred_region
        _
      $region76: #{transformer_forward.11} parent=11 // pred_fallthru
        _
      // Predicated region
      $region77: #{transformer_forward.11} parent=11 // pred_check
        %p852 = pneg %p532
      $region78: #{transformer_forward.11} parent=11 // pred_check_branch
        %854 = sbr.rel (%p852) target = $region80
      $region79: #{transformer_forward.11} parent=11 // pred_region
        _
      $region80: #{transformer_forward.11} parent=11 // pred_fallthru
        _
      // Predicated region
      $region81: #{transformer_forward.11} parent=11 // pred_check
        %p855 = pneg %p553
      $region82: #{transformer_forward.11} parent=11 // pred_check_branch
        %857 = sbr.rel (%p855) target = $region84
      $region83: #{transformer_forward.11} parent=11 // pred_region
        _
      $region84: #{transformer_forward.11} parent=11 // pred_fallthru
        _
      // Predicated region
      $region85: #{transformer_forward.11} parent=11 // pred_check
        %p858 = pneg %p574
      $region86: #{transformer_forward.11} parent=11 // pred_check_branch
        %860 = sbr.rel (%p858) target = $region88
      $region87: #{transformer_forward.11} parent=11 // pred_region
        _
      $region88: #{transformer_forward.11} parent=11 // pred_fallthru
        _
      // Predicated region
      $region89: #{transformer_forward.11} parent=11 // pred_check
        %p861 = pneg %p595
      $region90: #{transformer_forward.11} parent=11 // pred_check_branch
        %863 = sbr.rel (%p861) target = $region92
      $region91: #{transformer_forward.11} parent=11 // pred_region
        _
      $region92: #{transformer_forward.11} parent=11 // pred_fallthru
        _
      // Predicated region
      $region93: #{transformer_forward.11} parent=11 // pred_check
        %p864 = pneg %p616
      $region94: #{transformer_forward.11} parent=11 // pred_check_branch
        %866 = sbr.rel (%p864) target = $region96
      $region95: #{transformer_forward.11} parent=11 // pred_region
        _
      $region96: #{transformer_forward.11} parent=11 // pred_fallthru
        _
      // Predicated region
      $region97: #{transformer_forward.11} parent=11 // pred_check
        %p867 = pneg %p637
      $region98: #{transformer_forward.11} parent=11 // pred_check_branch
        %869 = sbr.rel (%p867) target = $region100
      $region99: #{transformer_forward.11} parent=11 // pred_region
        _
      $region100: #{transformer_forward.11} parent=11 // pred_fallthru
        _
      // Predicated region
      $region101: #{transformer_forward.11} parent=11 // pred_check
        %p870 = pneg %p658
      $region102: #{transformer_forward.11} parent=11 // pred_check_branch
        %872 = sbr.rel (%p870) target = $region104
      $region103: #{transformer_forward.11} parent=11 // pred_region
        _
      $region104: #{transformer_forward.11} parent=11 // pred_fallthru
        _
      // Predicated region
      $region105: #{transformer_forward.11} parent=11 // pred_check
        %p873 = pneg %p679
      $region106: #{transformer_forward.11} parent=11 // pred_check_branch
        %875 = sbr.rel (%p873) target = $region108
      $region107: #{transformer_forward.11} parent=11 // pred_region
        _
      $region108: #{transformer_forward.11} parent=11 // pred_fallthru
        _
      // Predicated region
      $region109: #{transformer_forward.11} parent=11 // pred_check
        %p876 = pneg %p700
      $region110: #{transformer_forward.11} parent=11 // pred_check_branch
        %878 = sbr.rel (%p876) target = $region112
      $region111: #{transformer_forward.11} parent=11 // pred_region
        _
      $region112: #{transformer_forward.11} parent=11 // pred_fallthru
        _
      // Predicated region
      $region113: #{transformer_forward.11} parent=11 // pred_check
        %p879 = pneg %p721
      $region114: #{transformer_forward.11} parent=11 // pred_check_branch
        %881 = sbr.rel (%p879) target = $region116
      $region115: #{transformer_forward.11} parent=11 // pred_region
        _
      $region116: #{transformer_forward.11} parent=11 // pred_fallthru
        _
      // Predicated region
      $region117: #{transformer_forward.11} parent=11 // pred_check
        %p882 = pneg %p742
      $region118: #{transformer_forward.11} parent=11 // pred_check_branch
        %884 = sbr.rel (%p882) target = $region120
      $region119: #{transformer_forward.11} parent=11 // pred_region
        _
      $region120: #{transformer_forward.11} parent=11 // pred_fallthru
        _
      // Predicated region
      $region121: #{transformer_forward.11} parent=11 // pred_check
        %p885 = pneg %p763
      $region122: #{transformer_forward.11} parent=11 // pred_check_branch
        %887 = sbr.rel (%p885) target = $region124
      $region123: #{transformer_forward.11} parent=11 // pred_region
        _
      $region124: #{transformer_forward.11} parent=11 // pred_fallthru
        _
    $region12: #{transformer_forward.11} parent=5 // pred_fallthru
      _
    %p888 = scmp.lt.s32.totalorder %s71, 2
    // Predicated region
    $region125: #{transformer_forward.11} parent=5 // pred_check
      %p889 = pneg %p888
    $region126: #{transformer_forward.11} parent=5 // pred_check_branch
      %891 = sbr.rel (%p889) target = $region128
    $region127: #{transformer_forward.11} parent=5 // pred_region
      // Predicated region
      $region129: #{transformer_forward.11} parent=127 // pred_check
        %p892 = pneg %p91
      $region130: #{transformer_forward.11} parent=127 // pred_check_branch
        %894 = sbr.rel (%p892) target = $region132
      $region131: #{transformer_forward.11} parent=127 // pred_region
        %p895 = scmp.lt.s32.totalorder %s71, 1
        %s896 = scalar_select %p895, %s71, 1
        %s897 = smul.addr %s896, 8
        %s898 = scalar_lea.vmem %s1, %s897
      $region132: #{transformer_forward.11} parent=127 // pred_fallthru
        _
      // Predicated region
      $region133: #{transformer_forward.11} parent=127 // pred_check
        %p899 = pneg %p117
      $region134: #{transformer_forward.11} parent=127 // pred_check_branch
        %901 = sbr.rel (%p899) target = $region136
      $region135: #{transformer_forward.11} parent=127 // pred_region
        %p902 = scmp.lt.s32.totalorder %s71, 1
        %s903 = scalar_select %p902, %s71, 1
        %s904 = smul.addr %s903, 8
        %s905 = scalar_lea.vmem %s3, %s904
      $region136: #{transformer_forward.11} parent=127 // pred_fallthru
        _
      // Predicated region
      $region137: #{transformer_forward.11} parent=127 // pred_check
        %p906 = pneg %p143
      $region138: #{transformer_forward.11} parent=127 // pred_check_branch
        %908 = sbr.rel (%p906) target = $region140
      $region139: #{transformer_forward.11} parent=127 // pred_region
        %p909 = scmp.lt.s32.totalorder %s71, 1
        %s910 = scalar_select %p909, %s71, 1
        %s911 = scalar_lea.vmem %s5, %s910
      $region140: #{transformer_forward.11} parent=127 // pred_fallthru
        _
      // Predicated region
      $region141: #{transformer_forward.11} parent=127 // pred_check
        %p912 = pneg %p169
      $region142: #{transformer_forward.11} parent=127 // pred_check_branch
        %914 = sbr.rel (%p912) target = $region144
      $region143: #{transformer_forward.11} parent=127 // pred_region
        %p915 = scmp.lt.s32.totalorder %s71, 1
        %s916 = scalar_select %p915, %s71, 1
        %s917 = scalar_lea.vmem %s7, %s916
      $region144: #{transformer_forward.11} parent=127 // pred_fallthru
        _
    $region128: #{transformer_forward.11} parent=5 // pred_fallthru
      _
    %p918 = scmp.le.s32.totalorder 1, %s71
    %p919 = scmp.lt.s32.totalorder %s71, 3
    %p920 = pnand %p918, %p919
    %p921 = pneg %p920
    // Predicated region
    $region145: #{transformer_forward.11} parent=5 // pred_check
      _
    $region146: #{transformer_forward.11} parent=5 // pred_check_branch
      %923 = sbr.rel (%p920) target = $region148
    $region147: #{transformer_forward.11} parent=5 // pred_region
      %s924 = ssub.s32 %s71, 1
      %p925 = scmp.lt.s32.totalorder %s76, 1
      %s926 = scalar_select %p925, %s76, 1
      %s927 = smul.addr %s926, 8
      %s928 = scalar_lea.vmem %s1, %s927
      %p929 = pneg %p97
      %p930 = pneg %p94
      %p931 = scmp.lt.s32.totalorder %s76, 1
      %s932 = scalar_select %p931, %s76, 1
      %s933 = smul.addr %s932, 8
      %s934 = scalar_lea.vmem %s3, %s933
      %p935 = pneg %p123
      %p936 = pneg %p120
      %p937 = scmp.lt.s32.totalorder %s76, 1
      %s938 = scalar_select %p937, %s76, 1
      %s939 = scalar_lea.vmem %s5, %s938
      %p940 = pneg %p149
      %p941 = pneg %p146
      %p942 = scmp.lt.s32.totalorder %s76, 1
      %s943 = scalar_select %p942, %s76, 1
      %s944 = scalar_lea.vmem %s7, %s943
      %p945 = pneg %p175
      %p946 = pneg %p172
      %p947 = pneg %p196
      %p948 = pneg %p193
      %p949 = pneg %p217
      %p950 = pneg %p214
      %p951 = pneg %p238
      %p952 = pneg %p235
      %p953 = pneg %p259
      %p954 = pneg %p256
      %p955 = pneg %p280
      %p956 = pneg %p277
      %p957 = pneg %p301
      %p958 = pneg %p298
      %p959 = pneg %p322
      %p960 = pneg %p319
      %p961 = pneg %p343
      %p962 = pneg %p340
      %p963 = pneg %p364
      %p964 = pneg %p361
      %p965 = pneg %p385
      %p966 = pneg %p382
      %p967 = pneg %p406
      %p968 = pneg %p403
      %p969 = pneg %p427
      %p970 = pneg %p424
      %p971 = pneg %p448
      %p972 = pneg %p445
      %p973 = pneg %p469
      %p974 = pneg %p466
      %p975 = pneg %p490
      %p976 = pneg %p487
      %p977 = pneg %p511
      %p978 = pneg %p508
      %p979 = pneg %p532
      %p980 = pneg %p529
      %p981 = pneg %p553
      %p982 = pneg %p550
      %p983 = pneg %p574
      %p984 = pneg %p571
      %p985 = pneg %p595
      %p986 = pneg %p592
      %p987 = pneg %p616
      %p988 = pneg %p613
      %p989 = pneg %p637
      %p990 = pneg %p634
      %p991 = pneg %p658
      %p992 = pneg %p655
      %p993 = pneg %p679
      %p994 = pneg %p676
      %p995 = pneg %p700
      %p996 = pneg %p697
      %p997 = pneg %p721
      %p998 = pneg %p718
      %p999 = pneg %p742
      %p1000 = pneg %p739
      %p1001 = pneg %p763
      %p1002 = pneg %p760
      %p1003 = pneg %p789
      %p1004 = pneg %p786
      %p1005 = scmp.lt.s32.totalorder %s76, 1
      %s1006 = scalar_select %p1005, %s76, 1
      %s1007 = smul.addr %s1006, 8
      %s1008 = scalar_lea.vmem %s65, %s1007
      %p1009 = scmp.lt.s32.totalorder %s76, 1
      %s1010 = scalar_select %p1009, %s76, 1
      %s1011 = smul.addr %s1010, 8
      %s1012 = scalar_lea.vmem %s1, %s1011
      %p1013 = scmp.lt.s32.totalorder %s76, 1
      %s1014 = scalar_select %p1013, %s76, 1
      %s1015 = smul.addr %s1014, 8
      %s1016 = scalar_lea.vmem %s3, %s1015
      %p1017 = scmp.lt.s32.totalorder %s76, 1
      %s1018 = scalar_select %p1017, %s76, 1
      %s1019 = scalar_lea.vmem %s5, %s1018
      %p1020 = scmp.lt.s32.totalorder %s76, 1
      %s1021 = scalar_select %p1020, %s76, 1
      %s1022 = scalar_lea.vmem %s7, %s1021
      %p1023 = scmp.lt.s32.totalorder %s76, 1
      %s1024 = scalar_select %p1023, %s76, 1
      %s1025 = smul.addr %s1024, 8
      %s1026 = scalar_lea.vmem %s65, %s1025
      %v1028 = vld [vmem:[%s1012] sm:$0xff]
      %v1029 = vld [vmem:[%s1019] sm:$0x1]
      %v1030 = vmul.f32 %v1029, -1e+30
      %v1031 = vld [vmem:[%s1022] sm:$0x1]
      %v1032 = vmul.f32 %v1031, -1e+30
      %v1033 = vld [vmem:[%s9] sm:$0x1]
      %v1034 = vld [vmem:[%s11] sm:$0x1]
      %vm1035 = vcmask 261120
      %v1036 = vsel %vm1035, %v1028, 0.0
      %1037 = vadd.xlane.f32.xlu0 %v1036
      %v1038 = vpop.xlane.xlu0 %1037
      %v1039 = vrcp.pop 32.0
      %v1040 = vmul.f32 %v1038, %v1039
      %v1041 = vsub.f32 %v1028, %v1040
      %v1042 = vmul.f32 %v1041, %v1041
      %v1043 = vsel %vm1035, %v1042, 0.0
      %1044 = vadd.xlane.f32.xlu0 %v1043
      %v1045 = vpop.xlane.xlu0 %1044
      %v1046 = vmul.f32 %v1045, %v1039
      %v1047 = vadd.f32 %v1046, 1e-05
      %v1048 = vrsqrt.pop %v1047
      %v1049 = vmul.f32 %v1041, %v1048
      %v1051 = vlaneseq
      %v1052 = vshrl.u32 %v1051, 7
      %v1053 = vsub.s32 0, %v1052
      %v1054 = vrot.slane %v1033, %v1053
      %v1056 = vmul.f32 %v1049, %v1054
      %v1058 = vlaneseq
      %v1059 = vshrl.u32 %v1058, 7
      %v1060 = vsub.s32 0, %v1059
      %v1061 = vrot.slane %v1034, %v1060
      %v1063 = vadd.f32 %v1056, %v1061
      %v1064 = vpack.c.bf16 %v1063, %v1063
      %v1065 = vld [vmem:[%s13] sm:$0xf]
      %v1066 = vld [vmem:[%s13 + $0x4] sm:$0xf]
      %v1067 = vld [vmem:[%s13 + $0x8] sm:$0xf]
      %v1068 = vld [vmem:[%s13 + $0xc] sm:$0xf]
      %v1069 = vld [vmem:[%s13 + $0x10] sm:$0xf]
      %v1070 = vld [vmem:[%s13 + $0x14] sm:$0xf]
      %v1071 = vld [vmem:[%s13 + $0x18] sm:$0xf]
      %v1072 = vld [vmem:[%s13 + $0x1c] sm:$0xf]
      %v1073 = vld [vmem:[%s15] sm:$0x1]
      %v1074 = vld [vmem:[%s15 + $0x1] sm:$0x1]
      %v1075 = vld [vmem:[%s17] sm:$0xf]
      %v1076 = vld [vmem:[%s17 + $0x4] sm:$0xf]
      %v1077 = vld [vmem:[%s17 + $0x8] sm:$0xf]
      %v1078 = vld [vmem:[%s17 + $0xc] sm:$0xf]
      %v1079 = vld [vmem:[%s17 + $0x10] sm:$0xf]
      %v1080 = vld [vmem:[%s17 + $0x14] sm:$0xf]
      %v1081 = vld [vmem:[%s17 + $0x18] sm:$0xf]
      %v1082 = vld [vmem:[%s17 + $0x1c] sm:$0xf]
      %v1083 = vld [vmem:[%s19] sm:$0x1]
      %v1084 = vld [vmem:[%s19 + $0x1] sm:$0x1]
      %v1085 = vld [vmem:[%s21] sm:$0xf]
      %v1086 = vld [vmem:[%s21 + $0x4] sm:$0xf]
      %v1087 = vld [vmem:[%s21 + $0x8] sm:$0xf]
      %v1088 = vld [vmem:[%s21 + $0xc] sm:$0xf]
      %v1089 = vld [vmem:[%s21 + $0x10] sm:$0xf]
      %v1090 = vld [vmem:[%s21 + $0x14] sm:$0xf]
      %v1091 = vld [vmem:[%s21 + $0x18] sm:$0xf]
      %v1092 = vld [vmem:[%s21 + $0x1c] sm:$0xf]
      %v1093 = vld [vmem:[%s23] sm:$0x1]
      %v1094 = vld [vmem:[%s23 + $0x1] sm:$0x1]
      %v1095 = vld [vmem:[%s25] sm:$0xf]
      %v1096 = vld [vmem:[%s25 + $0x4] sm:$0xf]
      %v1097 = vld [vmem:[%s25 + $0x8] sm:$0xf]
      %v1098 = vld [vmem:[%s25 + $0xc] sm:$0xf]
      %v1099 = vld [vmem:[%s27] sm:$0x1]
      %v1102 = vlaneseq
      %v1103 = vshrl.u32 %v1102, 7
      %v1104 = vsub.s32 0, %v1103
      %v1105 = vrot.slane %v1073, %v1104
      %v1106 = vlaneseq
      %v1107 = vshrl.u32 %v1106, 7
      %v1108 = vsub.s32 0, %v1107
      %v1109 = vrot.slane %v1074, %v1108
      %v1116 = vunpack.c.l.b16 %v1065
      %v1117 = vunpack.c.l.b16 %v1066
      %v1118 = vunpack.c.l.b16 %v1067
      %v1119 = vunpack.c.l.b16 %v1068
      %v1120 = vpack.c.b16 %v1117, %v1116
      %v1121 = vpack.c.b16 %v1119, %v1118
      %v1125 = vsel %vm1035, %v1064, 0
      %1127 = vmatprep.subr.bf16.mxu0 0
      %1128 = vmatpush1.bf16.msra.mxu0 %v1120
      %1129 = vmatprep.subr.bf16.mxu0 0
      %1130 = vmatpush1.bf16.msra.mxu0 %v1121
      %1131 = vmatprep.subr.bf16.mxu0 0
      %1132 = vmatpush1.bf16.msra.mxu0 0
      %1133 = vmatprep.subr.bf16.mxu0 0
      %1134 = vmatpush1.bf16.msra.mxu0 0
      %1135 = vmatprep.subr.bf16.mxu0 0
      %1136 = vmatpush1.bf16.msra.mxu0 0
      %1137 = vmatprep.subr.bf16.mxu0 0
      %1138 = vmatpush1.bf16.msra.mxu0 0
      %1139 = vmatprep.subr.bf16.mxu0 0
      %1140 = vmatpush1.bf16.msra.mxu0 0
      %1141 = vmatprep.subr.bf16.mxu0 0
      %1142 = vmatpush1.bf16.msra.mxu0 0
      %1143 = vmatprep.subr.bf16.mxu0 0
      %1144 = vmatpush1.bf16.msra.mxu0 0
      %1145 = vmatprep.subr.bf16.mxu0 0
      %1146 = vmatpush1.bf16.msra.mxu0 0
      %1147 = vmatprep.subr.bf16.mxu0 0
      %1148 = vmatpush1.bf16.msra.mxu0 0
      %1149 = vmatprep.subr.bf16.mxu0 0
      %1150 = vmatpush1.bf16.msra.mxu0 0
      %1151 = vmatprep.subr.bf16.mxu0 0
      %1152 = vmatpush1.bf16.msra.mxu0 0
      %1153 = vmatprep.subr.bf16.mxu0 0
      %1154 = vmatpush1.bf16.msra.mxu0 0
      %1155 = vmatprep.subr.bf16.mxu0 0
      %1156 = vmatpush1.bf16.msra.mxu0 0
      %1157 = vmatprep.subr.bf16.mxu0 0
      %1158 = vmatpush1.bf16.msra.mxu0 0
      %1159 = vmatprep.mubr.bf16.mxu0 0
      %1160 = vmatmul.mubr.bf16.gmra.mrb[0].mxu0 %v1125
      %v1161 = vpop.f32.mrb[0].mxu0
      %v1162 = vadd.f32 %v1105, %v1161
      %v1163 = vpop.f32.mrb[0].mxu0
      %v1164 = vpop.f32.mrb[0].mxu0
      %v1165 = vpop.f32.mrb[0].mxu0
      %1166 = vdwg.mxu0
      %v1171 = vunpack.c.l.b16 %v1069
      %v1172 = vunpack.c.l.b16 %v1070
      %v1173 = vunpack.c.l.b16 %v1071
      %v1174 = vunpack.c.l.b16 %v1072
      %v1175 = vpack.c.b16 %v1172, %v1171
      %v1176 = vpack.c.b16 %v1174, %v1173
      %1179 = vmatprep.subr.bf16.mxu0 0
      %1180 = vmatpush1.bf16.msra.mxu0 %v1175
      %1181 = vmatprep.subr.bf16.mxu0 0
      %1182 = vmatpush1.bf16.msra.mxu0 %v1176
      %1183 = vmatprep.subr.bf16.mxu0 0
      %1184 = vmatpush1.bf16.msra.mxu0 0
      %1185 = vmatprep.subr.bf16.mxu0 0
      %1186 = vmatpush1.bf16.msra.mxu0 0
      %1187 = vmatprep.subr.bf16.mxu0 0
      %1188 = vmatpush1.bf16.msra.mxu0 0
      %1189 = vmatprep.subr.bf16.mxu0 0
      %1190 = vmatpush1.bf16.msra.mxu0 0
      %1191 = vmatprep.subr.bf16.mxu0 0
      %1192 = vmatpush1.bf16.msra.mxu0 0
      %1193 = vmatprep.subr.bf16.mxu0 0
      %1194 = vmatpush1.bf16.msra.mxu0 0
      %1195 = vmatprep.subr.bf16.mxu0 0
      %1196 = vmatpush1.bf16.msra.mxu0 0
      %1197 = vmatprep.subr.bf16.mxu0 0
      %1198 = vmatpush1.bf16.msra.mxu0 0
      %1199 = vmatprep.subr.bf16.mxu0 0
      %1200 = vmatpush1.bf16.msra.mxu0 0
      %1201 = vmatprep.subr.bf16.mxu0 0
      %1202 = vmatpush1.bf16.msra.mxu0 0
      %1203 = vmatprep.subr.bf16.mxu0 0
      %1204 = vmatpush1.bf16.msra.mxu0 0
      %1205 = vmatprep.subr.bf16.mxu0 0
      %1206 = vmatpush1.bf16.msra.mxu0 0
      %1207 = vmatprep.subr.bf16.mxu0 0
      %1208 = vmatpush1.bf16.msra.mxu0 0
      %1209 = vmatprep.subr.bf16.mxu0 0
      %1210 = vmatpush1.bf16.msra.mxu0 0
      %1211 = vmatprep.mubr.bf16.mxu0 0
      %1212 = vmatmul.mubr.bf16.gmra.mrb[0].mxu0 %v1125
      %v1213 = vpop.f32.mrb[0].mxu0
      %v1214 = vadd.f32 %v1109, %v1213
      %v1215 = vpop.f32.mrb[0].mxu0
      %v1216 = vpop.f32.mrb[0].mxu0
      %v1217 = vpop.f32.mrb[0].mxu0
      %1218 = vdwg.mxu0
      %v1221 = vlaneseq
      %v1222 = vshrl.u32 %v1221, 7
      %v1223 = vsub.s32 0, %v1222
      %v1224 = vrot.slane %v1083, %v1223
      %v1225 = vlaneseq
      %v1226 = vshrl.u32 %v1225, 7
      %v1227 = vsub.s32 0, %v1226
      %v1228 = vrot.slane %v1084, %v1227
      %v1235 = vunpack.c.l.b16 %v1075
      %v1236 = vunpack.c.l.b16 %v1076
      %v1237 = vunpack.c.l.b16 %v1077
      %v1238 = vunpack.c.l.b16 %v1078
      %v1239 = vpack.c.b16 %v1236, %v1235
      %v1240 = vpack.c.b16 %v1238, %v1237
      %1243 = vmatprep.subr.bf16.mxu0 0
      %1244 = vmatpush1.bf16.msra.mxu0 %v1239
      %1245 = vmatprep.subr.bf16.mxu0 0
      %1246 = vmatpush1.bf16.msra.mxu0 %v1240
      %1247 = vmatprep.subr.bf16.mxu0 0
      %1248 = vmatpush1.bf16.msra.mxu0 0
      %1249 = vmatprep.subr.bf16.mxu0 0
      %1250 = vmatpush1.bf16.msra.mxu0 0
      %1251 = vmatprep.subr.bf16.mxu0 0
      %1252 = vmatpush1.bf16.msra.mxu0 0
      %1253 = vmatprep.subr.bf16.mxu0 0
      %1254 = vmatpush1.bf16.msra.mxu0 0
      %1255 = vmatprep.subr.bf16.mxu0 0
      %1256 = vmatpush1.bf16.msra.mxu0 0
      %1257 = vmatprep.subr.bf16.mxu0 0
      %1258 = vmatpush1.bf16.msra.mxu0 0
      %1259 = vmatprep.subr.bf16.mxu0 0
      %1260 = vmatpush1.bf16.msra.mxu0 0
      %1261 = vmatprep.subr.bf16.mxu0 0
      %1262 = vmatpush1.bf16.msra.mxu0 0
      %1263 = vmatprep.subr.bf16.mxu0 0
      %1264 = vmatpush1.bf16.msra.mxu0 0
      %1265 = vmatprep.subr.bf16.mxu0 0
      %1266 = vmatpush1.bf16.msra.mxu0 0
      %1267 = vmatprep.subr.bf16.mxu0 0
      %1268 = vmatpush1.bf16.msra.mxu0 0
      %1269 = vmatprep.subr.bf16.mxu0 0
      %1270 = vmatpush1.bf16.msra.mxu0 0
      %1271 = vmatprep.subr.bf16.mxu0 0
      %1272 = vmatpush1.bf16.msra.mxu0 0
      %1273 = vmatprep.subr.bf16.mxu0 0
      %1274 = vmatpush1.bf16.msra.mxu0 0
      %1275 = vmatprep.mubr.bf16.mxu0 0
      %1276 = vmatmul.mubr.bf16.gmra.mrb[0].mxu0 %v1125
      %v1277 = vpop.f32.mrb[0].mxu0
      %v1278 = vadd.f32 %v1224, %v1277
      %v1279 = vpop.f32.mrb[0].mxu0
      %v1280 = vpop.f32.mrb[0].mxu0
      %v1281 = vpop.f32.mrb[0].mxu0
      %1282 = vdwg.mxu0
      %v1287 = vunpack.c.l.b16 %v1079
      %v1288 = vunpack.c.l.b16 %v1080
      %v1289 = vunpack.c.l.b16 %v1081
      %v1290 = vunpack.c.l.b16 %v1082
      %v1291 = vpack.c.b16 %v1288, %v1287
      %v1292 = vpack.c.b16 %v1290, %v1289
      %1295 = vmatprep.subr.bf16.mxu0 0
      %1296 = vmatpush1.bf16.msra.mxu0 %v1291
      %1297 = vmatprep.subr.bf16.mxu0 0
      %1298 = vmatpush1.bf16.msra.mxu0 %v1292
      %1299 = vmatprep.subr.bf16.mxu0 0
      %1300 = vmatpush1.bf16.msra.mxu0 0
      %1301 = vmatprep.subr.bf16.mxu0 0
      %1302 = vmatpush1.bf16.msra.mxu0 0
      %1303 = vmatprep.subr.bf16.mxu0 0
      %1304 = vmatpush1.bf16.msra.mxu0 0
      %1305 = vmatprep.subr.bf16.mxu0 0
      %1306 = vmatpush1.bf16.msra.mxu0 0
      %1307 = vmatprep.subr.bf16.mxu0 0
      %1308 = vmatpush1.bf16.msra.mxu0 0
      %1309 = vmatprep.subr.bf16.mxu0 0
      %1310 = vmatpush1.bf16.msra.mxu0 0
      %1311 = vmatprep.subr.bf16.mxu0 0
      %1312 = vmatpush1.bf16.msra.mxu0 0
      %1313 = vmatprep.subr.bf16.mxu0 0
      %1314 = vmatpush1.bf16.msra.mxu0 0
      %1315 = vmatprep.subr.bf16.mxu0 0
      %1316 = vmatpush1.bf16.msra.mxu0 0
      %1317 = vmatprep.subr.bf16.mxu0 0
      %1318 = vmatpush1.bf16.msra.mxu0 0
      %1319 = vmatprep.subr.bf16.mxu0 0
      %1320 = vmatpush1.bf16.msra.mxu0 0
      %1321 = vmatprep.subr.bf16.mxu0 0
      %1322 = vmatpush1.bf16.msra.mxu0 0
      %1323 = vmatprep.subr.bf16.mxu0 0
      %1324 = vmatpush1.bf16.msra.mxu0 0
      %1325 = vmatprep.subr.bf16.mxu0 0
      %1326 = vmatpush1.bf16.msra.mxu0 0
      %1327 = vmatprep.mubr.bf16.mxu0 0
      %1328 = vmatmul.mubr.bf16.gmra.mrb[0].mxu0 %v1125
      %v1329 = vpop.f32.mrb[0].mxu0
      %v1330 = vadd.f32 %v1228, %v1329
      %v1331 = vpop.f32.mrb[0].mxu0
      %v1332 = vpop.f32.mrb[0].mxu0
      %v1333 = vpop.f32.mrb[0].mxu0
      %1334 = vdwg.mxu0
      %v1337 = vlaneseq
      %v1338 = vshrl.u32 %v1337, 7
      %v1339 = vsub.s32 0, %v1338
      %v1340 = vrot.slane %v1093, %v1339
      %v1341 = vlaneseq
      %v1342 = vshrl.u32 %v1341, 7
      %v1343 = vsub.s32 0, %v1342
      %v1344 = vrot.slane %v1094, %v1343
      %v1351 = vunpack.c.l.b16 %v1085
      %v1352 = vunpack.c.l.b16 %v1086
      %v1353 = vunpack.c.l.b16 %v1087
      %v1354 = vunpack.c.l.b16 %v1088
      %v1355 = vpack.c.b16 %v1352, %v1351
      %v1356 = vpack.c.b16 %v1354, %v1353
      %1359 = vmatprep.subr.bf16.mxu0 0
      %1360 = vmatpush1.bf16.msra.mxu0 %v1355
      %1361 = vmatprep.subr.bf16.mxu0 0
      %1362 = vmatpush1.bf16.msra.mxu0 %v1356
      %1363 = vmatprep.subr.bf16.mxu0 0
      %1364 = vmatpush1.bf16.msra.mxu0 0
      %1365 = vmatprep.subr.bf16.mxu0 0
      %1366 = vmatpush1.bf16.msra.mxu0 0
      %1367 = vmatprep.subr.bf16.mxu0 0
      %1368 = vmatpush1.bf16.msra.mxu0 0
      %1369 = vmatprep.subr.bf16.mxu0 0
      %1370 = vmatpush1.bf16.msra.mxu0 0
      %1371 = vmatprep.subr.bf16.mxu0 0
      %1372 = vmatpush1.bf16.msra.mxu0 0
      %1373 = vmatprep.subr.bf16.mxu0 0
      %1374 = vmatpush1.bf16.msra.mxu0 0
      %1375 = vmatprep.subr.bf16.mxu0 0
      %1376 = vmatpush1.bf16.msra.mxu0 0
      %1377 = vmatprep.subr.bf16.mxu0 0
      %1378 = vmatpush1.bf16.msra.mxu0 0
      %1379 = vmatprep.subr.bf16.mxu0 0
      %1380 = vmatpush1.bf16.msra.mxu0 0
      %1381 = vmatprep.subr.bf16.mxu0 0
      %1382 = vmatpush1.bf16.msra.mxu0 0
      %1383 = vmatprep.subr.bf16.mxu0 0
      %1384 = vmatpush1.bf16.msra.mxu0 0
      %1385 = vmatprep.subr.bf16.mxu0 0
      %1386 = vmatpush1.bf16.msra.mxu0 0
      %1387 = vmatprep.subr.bf16.mxu0 0
      %1388 = vmatpush1.bf16.msra.mxu0 0
      %1389 = vmatprep.subr.bf16.mxu0 0
      %1390 = vmatpush1.bf16.msra.mxu0 0
      %1391 = vmatprep.mubr.bf16.mxu0 0
      %1392 = vmatmul.mubr.bf16.gmra.mrb[0].mxu0 %v1125
      %v1393 = vpop.f32.mrb[0].mxu0
      %v1394 = vadd.f32 %v1340, %v1393
      %v1395 = vpop.f32.mrb[0].mxu0
      %v1396 = vpop.f32.mrb[0].mxu0
      %v1397 = vpop.f32.mrb[0].mxu0
      %1398 = vdwg.mxu0
      %v1403 = vunpack.c.l.b16 %v1089
      %v1404 = vunpack.c.l.b16 %v1090
      %v1405 = vunpack.c.l.b16 %v1091
      %v1406 = vunpack.c.l.b16 %v1092
      %v1407 = vpack.c.b16 %v1404, %v1403
      %v1408 = vpack.c.b16 %v1406, %v1405
      %1411 = vmatprep.subr.bf16.mxu0 0
      %1412 = vmatpush1.bf16.msra.mxu0 %v1407
      %1413 = vmatprep.subr.bf16.mxu0 0
      %1414 = vmatpush1.bf16.msra.mxu0 %v1408
      %1415 = vmatprep.subr.bf16.mxu0 0
      %1416 = vmatpush1.bf16.msra.mxu0 0
      %1417 = vmatprep.subr.bf16.mxu0 0
      %1418 = vmatpush1.bf16.msra.mxu0 0
      %1419 = vmatprep.subr.bf16.mxu0 0
      %1420 = vmatpush1.bf16.msra.mxu0 0
      %1421 = vmatprep.subr.bf16.mxu0 0
      %1422 = vmatpush1.bf16.msra.mxu0 0
      %1423 = vmatprep.subr.bf16.mxu0 0
      %1424 = vmatpush1.bf16.msra.mxu0 0
      %1425 = vmatprep.subr.bf16.mxu0 0
      %1426 = vmatpush1.bf16.msra.mxu0 0
      %1427 = vmatprep.subr.bf16.mxu0 0
      %1428 = vmatpush1.bf16.msra.mxu0 0
      %1429 = vmatprep.subr.bf16.mxu0 0
      %1430 = vmatpush1.bf16.msra.mxu0 0
      %1431 = vmatprep.subr.bf16.mxu0 0
      %1432 = vmatpush1.bf16.msra.mxu0 0
      %1433 = vmatprep.subr.bf16.mxu0 0
      %1434 = vmatpush1.bf16.msra.mxu0 0
      %1435 = vmatprep.subr.bf16.mxu0 0
      %1436 = vmatpush1.bf16.msra.mxu0 0
      %1437 = vmatprep.subr.bf16.mxu0 0
      %1438 = vmatpush1.bf16.msra.mxu0 0
      %1439 = vmatprep.subr.bf16.mxu0 0
      %1440 = vmatpush1.bf16.msra.mxu0 0
      %1441 = vmatprep.subr.bf16.mxu0 0
      %1442 = vmatpush1.bf16.msra.mxu0 0
      %1443 = vmatprep.mubr.bf16.mxu0 0
      %1444 = vmatmul.mubr.bf16.gmra.mrb[0].mxu0 %v1125
      %v1445 = vpop.f32.mrb[0].mxu0
      %v1446 = vadd.f32 %v1344, %v1445
      %v1447 = vpop.f32.mrb[0].mxu0
      %v1448 = vpop.f32.mrb[0].mxu0
      %v1449 = vpop.f32.mrb[0].mxu0
      %1450 = vdwg.mxu0
      %v1451 = vpack.c.bf16 %v1162, %v1162
      %v1452 = vpack.c.bf16 %v1214, %v1214
      %v1453 = vpack.c.bf16 %v1278, %v1278
      %v1454 = vpack.c.bf16 %v1330, %v1330
      %v1455 = vlaneseq
      %v1456 = vshrl.u32 %v1455, 7
      %v1457 = vlaneseq
      %v1458 = vand.u32 %v1457, 127
      %vm1459 = vcmp.gt.s32.totalorder %v1458, %v1456
      %v1460 = vsel %vm1459, -1e+30, 0.0
      %v1462 = vlaneseq
      %v1463 = vshrl.u32 %v1462, 7
      %v1464 = vsub.s32 0, %v1463
      %v1465 = vrot.slane %v1030, %v1464
      %v1467 = vadd.f32 %v1465, %v1460
      %vm1468 = vcmask 130048
      %v1470 = vsel %vm1468, %v1451, 0
      %v1473 = vsel %vm1468, %v1453, 0
      %1475 = vmatprep.subr.bf16.mxu0 0
      %1476 = vmatpush1.bf16.xpose.msra.mxu0 %v1473
      %1477 = vmatprep.subr.bf16.mxu0 0
      %1478 = vmatpush1.bf16.xpose.msra.mxu0 0
      %1479 = vmatprep.subr.bf16.mxu0 0
      %1480 = vmatpush1.bf16.xpose.msra.mxu0 0
      %1481 = vmatprep.subr.bf16.mxu0 0
      %1482 = vmatpush1.bf16.xpose.msra.mxu0 0
      %1483 = vmatprep.subr.bf16.mxu0 0
      %1484 = vmatpush1.bf16.xpose.msra.mxu0 0
      %1485 = vmatprep.subr.bf16.mxu0 0
      %1486 = vmatpush1.bf16.xpose.msra.mxu0 0
      %1487 = vmatprep.subr.bf16.mxu0 0
      %1488 = vmatpush1.bf16.xpose.msra.mxu0 0
      %1489 = vmatprep.subr.bf16.mxu0 0
      %1490 = vmatpush1.bf16.xpose.msra.mxu0 0
      %1491 = vmatprep.subr.bf16.mxu0 0
      %1492 = vmatpush1.bf16.xpose.msra.mxu0 0
      %1493 = vmatprep.subr.bf16.mxu0 0
      %1494 = vmatpush1.bf16.xpose.msra.mxu0 0
      %1495 = vmatprep.subr.bf16.mxu0 0
      %1496 = vmatpush1.bf16.xpose.msra.mxu0 0
      %1497 = vmatprep.subr.bf16.mxu0 0
      %1498 = vmatpush1.bf16.xpose.msra.mxu0 0
      %1499 = vmatprep.subr.bf16.mxu0 0
      %1500 = vmatpush1.bf16.xpose.msra.mxu0 0
      %1501 = vmatprep.subr.bf16.mxu0 0
      %1502 = vmatpush1.bf16.xpose.msra.mxu0 0
      %1503 = vmatprep.subr.bf16.mxu0 0
      %1504 = vmatpush1.bf16.xpose.msra.mxu0 0
      %1505 = vmatprep.subr.bf16.mxu0 0
      %1506 = vmatpush1.bf16.xpose.msra.mxu0 0
      %1507 = vmatprep.mubr.bf16.mxu0 0
      %1508 = vmatmul.mubr.bf16.gmra.mrb[0].mxu0 %v1470
      %v1509 = vpop.f32.mrb[0].mxu0
      %v1510 = vadd.f32 %v1467, %v1509
      %v1511 = vpop.f32.mrb[0].mxu0
      %v1512 = vpop.f32.mrb[0].mxu0
      %v1513 = vpop.f32.mrb[0].mxu0
      %1514 = vdwg.mxu0
      %v1516 = vsel %vm1468, %v1452, 0
      %v1519 = vsel %vm1468, %v1454, 0
      %1521 = vmatprep.subr.bf16.mxu0 0
      %1522 = vmatpush1.bf16.xpose.msra.mxu0 %v1519
      %1523 = vmatprep.subr.bf16.mxu0 0
      %1524 = vmatpush1.bf16.xpose.msra.mxu0 0
      %1525 = vmatprep.subr.bf16.mxu0 0
      %1526 = vmatpush1.bf16.xpose.msra.mxu0 0
      %1527 = vmatprep.subr.bf16.mxu0 0
      %1528 = vmatpush1.bf16.xpose.msra.mxu0 0
      %1529 = vmatprep.subr.bf16.mxu0 0
      %1530 = vmatpush1.bf16.xpose.msra.mxu0 0
      %1531 = vmatprep.subr.bf16.mxu0 0
      %1532 = vmatpush1.bf16.xpose.msra.mxu0 0
      %1533 = vmatprep.subr.bf16.mxu0 0
      %1534 = vmatpush1.bf16.xpose.msra.mxu0 0
      %1535 = vmatprep.subr.bf16.mxu0 0
      %1536 = vmatpush1.bf16.xpose.msra.mxu0 0
      %1537 = vmatprep.subr.bf16.mxu0 0
      %1538 = vmatpush1.bf16.xpose.msra.mxu0 0
      %1539 = vmatprep.subr.bf16.mxu0 0
      %1540 = vmatpush1.bf16.xpose.msra.mxu0 0
      %1541 = vmatprep.subr.bf16.mxu0 0
      %1542 = vmatpush1.bf16.xpose.msra.mxu0 0
      %1543 = vmatprep.subr.bf16.mxu0 0
      %1544 = vmatpush1.bf16.xpose.msra.mxu0 0
      %1545 = vmatprep.subr.bf16.mxu0 0
      %1546 = vmatpush1.bf16.xpose.msra.mxu0 0
      %1547 = vmatprep.subr.bf16.mxu0 0
      %1548 = vmatpush1.bf16.xpose.msra.mxu0 0
      %1549 = vmatprep.subr.bf16.mxu0 0
      %1550 = vmatpush1.bf16.xpose.msra.mxu0 0
      %1551 = vmatprep.subr.bf16.mxu0 0
      %1552 = vmatpush1.bf16.xpose.msra.mxu0 0
      %1553 = vmatprep.mubr.bf16.mxu0 0
      %1554 = vmatmul.mubr.bf16.gmra.mrb[0].mxu0 %v1516
      %v1555 = vpop.f32.mrb[0].mxu0
      %v1556 = vadd.f32 %v1467, %v1555
      %v1557 = vpop.f32.mrb[0].mxu0
      %v1558 = vpop.f32.mrb[0].mxu0
      %v1559 = vpop.f32.mrb[0].mxu0
      %1560 = vdwg.mxu0
      %vm1561 = vcmask 64512
      %v1562 = vsel %vm1561, %v1510, -inf
      %1563 = vmax.xlane.f32.xlu0 %v1562
      %v1564 = vpop.xlane.xlu0 %1563
      %v1565 = vsel %vm1561, %v1556, -inf
      %1566 = vmax.xlane.f32.xlu0 %v1565
      %v1567 = vpop.xlane.xlu0 %1566
      %v1568 = vsub.f32 %v1510, %v1564
      %v1569 = vsub.f32 %v1556, %v1567
      %v1570 = vmul.f32 %v1568, 1.442695
      %v1571 = vpow.pop %v1570
      %v1572 = vmul.f32 %v1569, 1.442695
      %v1573 = vpow.pop %v1572
      %v1574 = vsel %vm1561, %v1571, 0.0
      %1575 = vadd.xlane.f32.xlu0 %v1574
      %v1576 = vpop.xlane.xlu0 %1575
      %v1577 = vsel %vm1561, %v1573, 0.0
      %1578 = vadd.xlane.f32.xlu0 %v1577
      %v1579 = vpop.xlane.xlu0 %1578
      %v1580 = vpack.c.bf16 %v1571, %v1571
      %v1581 = vpack.c.bf16 %v1573, %v1573
      %v1582 = vpack.c.bf16 %v1394, %v1394
      %v1583 = vpack.c.bf16 %v1446, %v1446
      %v1585 = vsel %vm1561, %v1580, 0
      %vm1587 = vcmask 1043456
      %v1589 = vsel %vm1587, %v1582, 0
      %1591 = vmatprep.subr.bf16.mxu0 0
      %1592 = vmatpush1.bf16.msra.mxu0 %v1589
      %1593 = vmatprep.subr.bf16.mxu0 0
      %1594 = vmatpush1.bf16.msra.mxu0 0
      %1595 = vmatprep.subr.bf16.mxu0 0
      %1596 = vmatpush1.bf16.msra.mxu0 0
      %1597 = vmatprep.subr.bf16.mxu0 0
      %1598 = vmatpush1.bf16.msra.mxu0 0
      %1599 = vmatprep.subr.bf16.mxu0 0
      %1600 = vmatpush1.bf16.msra.mxu0 0
      %1601 = vmatprep.subr.bf16.mxu0 0
      %1602 = vmatpush1.bf16.msra.mxu0 0
      %1603 = vmatprep.subr.bf16.mxu0 0
      %1604 = vmatpush1.bf16.msra.mxu0 0
      %1605 = vmatprep.subr.bf16.mxu0 0
      %1606 = vmatpush1.bf16.msra.mxu0 0
      %1607 = vmatprep.subr.bf16.mxu0 0
      %1608 = vmatpush1.bf16.msra.mxu0 0
      %1609 = vmatprep.subr.bf16.mxu0 0
      %1610 = vmatpush1.bf16.msra.mxu0 0
      %1611 = vmatprep.subr.bf16.mxu0 0
      %1612 = vmatpush1.bf16.msra.mxu0 0
      %1613 = vmatprep.subr.bf16.mxu0 0
      %1614 = vmatpush1.bf16.msra.mxu0 0
      %1615 = vmatprep.subr.bf16.mxu0 0
      %1616 = vmatpush1.bf16.msra.mxu0 0
      %1617 = vmatprep.subr.bf16.mxu0 0
      %1618 = vmatpush1.bf16.msra.mxu0 0
      %1619 = vmatprep.subr.bf16.mxu0 0
      %1620 = vmatpush1.bf16.msra.mxu0 0
      %1621 = vmatprep.subr.bf16.mxu0 0
      %1622 = vmatpush1.bf16.msra.mxu0 0
      %1623 = vmatprep.mubr.bf16.mxu0 0
      %1624 = vmatmul.mubr.bf16.gmra.mrb[0].mxu0 %v1585
      %v1625 = vpop.f32.mrb[0].mxu0
      %v1626 = vadd.f32 0.0, %v1625
      %v1627 = vpop.f32.mrb[0].mxu0
      %v1628 = vpop.f32.mrb[0].mxu0
      %v1629 = vpop.f32.mrb[0].mxu0
      %1630 = vdwg.mxu0
      %v1632 = vsel %vm1561, %v1581, 0
      %v1635 = vsel %vm1587, %v1583, 0
      %1637 = vmatprep.subr.bf16.mxu0 0
      %1638 = vmatpush1.bf16.msra.mxu0 %v1635
      %1639 = vmatprep.subr.bf16.mxu0 0
      %1640 = vmatpush1.bf16.msra.mxu0 0
      %1641 = vmatprep.subr.bf16.mxu0 0
      %1642 = vmatpush1.bf16.msra.mxu0 0
      %1643 = vmatprep.subr.bf16.mxu0 0
      %1644 = vmatpush1.bf16.msra.mxu0 0
      %1645 = vmatprep.subr.bf16.mxu0 0
      %1646 = vmatpush1.bf16.msra.mxu0 0
      %1647 = vmatprep.subr.bf16.mxu0 0
      %1648 = vmatpush1.bf16.msra.mxu0 0
      %1649 = vmatprep.subr.bf16.mxu0 0
      %1650 = vmatpush1.bf16.msra.mxu0 0
      %1651 = vmatprep.subr.bf16.mxu0 0
      %1652 = vmatpush1.bf16.msra.mxu0 0
      %1653 = vmatprep.subr.bf16.mxu0 0
      %1654 = vmatpush1.bf16.msra.mxu0 0
      %1655 = vmatprep.subr.bf16.mxu0 0
      %1656 = vmatpush1.bf16.msra.mxu0 0
      %1657 = vmatprep.subr.bf16.mxu0 0
      %1658 = vmatpush1.bf16.msra.mxu0 0
      %1659 = vmatprep.subr.bf16.mxu0 0
      %1660 = vmatpush1.bf16.msra.mxu0 0
      %1661 = vmatprep.subr.bf16.mxu0 0
      %1662 = vmatpush1.bf16.msra.mxu0 0
      %1663 = vmatprep.subr.bf16.mxu0 0
      %1664 = vmatpush1.bf16.msra.mxu0 0
      %1665 = vmatprep.subr.bf16.mxu0 0
      %1666 = vmatpush1.bf16.msra.mxu0 0
      %1667 = vmatprep.subr.bf16.mxu0 0
      %1668 = vmatpush1.bf16.msra.mxu0 0
      %1669 = vmatprep.mubr.bf16.mxu0 0
      %1670 = vmatmul.mubr.bf16.gmra.mrb[0].mxu0 %v1632
      %v1671 = vpop.f32.mrb[0].mxu0
      %v1672 = vadd.f32 0.0, %v1671
      %v1673 = vpop.f32.mrb[0].mxu0
      %v1674 = vpop.f32.mrb[0].mxu0
      %v1675 = vpop.f32.mrb[0].mxu0
      %1676 = vdwg.mxu0
      %v1677 = vrcp.pop %v1576
      %v1678 = vmul.f32 %v1626, %v1677
      %v1679 = vrcp.pop %v1579
      %v1680 = vmul.f32 %v1672, %v1679
      %v1681 = vpack.c.bf16 %v1678, %v1678
      %v1682 = vpack.c.bf16 %v1680, %v1680
      %v1685 = vunpack.c.l.b16 %v1095
      %v1686 = vunpack.c.l.b16 %v1096
      %v1687 = vpack.c.b16 %v1686, %v1685
      %v1690 = vsel %vm1468, %v1681, 0
      %1692 = vmatprep.subr.bf16.mxu0 0
      %1693 = vmatpush1.bf16.msra.mxu0 %v1687
      %1694 = vmatprep.subr.bf16.mxu0 0
      %1695 = vmatpush1.bf16.msra.mxu0 0
      %1696 = vmatprep.subr.bf16.mxu0 0
      %1697 = vmatpush1.bf16.msra.mxu0 0
      %1698 = vmatprep.subr.bf16.mxu0 0
      %1699 = vmatpush1.bf16.msra.mxu0 0
      %1700 = vmatprep.subr.bf16.mxu0 0
      %1701 = vmatpush1.bf16.msra.mxu0 0
      %1702 = vmatprep.subr.bf16.mxu0 0
      %1703 = vmatpush1.bf16.msra.mxu0 0
      %1704 = vmatprep.subr.bf16.mxu0 0
      %1705 = vmatpush1.bf16.msra.mxu0 0
      %1706 = vmatprep.subr.bf16.mxu0 0
      %1707 = vmatpush1.bf16.msra.mxu0 0
      %1708 = vmatprep.subr.bf16.mxu0 0
      %1709 = vmatpush1.bf16.msra.mxu0 0
      %1710 = vmatprep.subr.bf16.mxu0 0
      %1711 = vmatpush1.bf16.msra.mxu0 0
      %1712 = vmatprep.subr.bf16.mxu0 0
      %1713 = vmatpush1.bf16.msra.mxu0 0
      %1714 = vmatprep.subr.bf16.mxu0 0
      %1715 = vmatpush1.bf16.msra.mxu0 0
      %1716 = vmatprep.subr.bf16.mxu0 0
      %1717 = vmatpush1.bf16.msra.mxu0 0
      %1718 = vmatprep.subr.bf16.mxu0 0
      %1719 = vmatpush1.bf16.msra.mxu0 0
      %1720 = vmatprep.subr.bf16.mxu0 0
      %1721 = vmatpush1.bf16.msra.mxu0 0
      %1722 = vmatprep.subr.bf16.mxu0 0
      %1723 = vmatpush1.bf16.msra.mxu0 0
      %1724 = vmatprep.mubr.bf16.mxu0 0
      %1725 = vmatmul.mubr.bf16.gmra.mrb[0].mxu0 %v1690
      %v1726 = vpop.f32.mrb[0].mxu0
      %v1727 = vadd.f32 0.0, %v1726
      %v1728 = vpop.f32.mrb[0].mxu0
      %v1729 = vpop.f32.mrb[0].mxu0
      %v1730 = vpop.f32.mrb[0].mxu0
      %1731 = vdwg.mxu0
      %v1734 = vunpack.c.l.b16 %v1097
      %v1735 = vunpack.c.l.b16 %v1098
      %v1736 = vpack.c.b16 %v1735, %v1734
      %v1739 = vsel %vm1468, %v1682, 0
      %1741 = vmatprep.subr.bf16.mxu0 0
      %1742 = vmatpush1.bf16.msra.mxu0 %v1736
      %1743 = vmatprep.subr.bf16.mxu0 0
      %1744 = vmatpush1.bf16.msra.mxu0 0
      %1745 = vmatprep.subr.bf16.mxu0 0
      %1746 = vmatpush1.bf16.msra.mxu0 0
      %1747 = vmatprep.subr.bf16.mxu0 0
      %1748 = vmatpush1.bf16.msra.mxu0 0
      %1749 = vmatprep.subr.bf16.mxu0 0
      %1750 = vmatpush1.bf16.msra.mxu0 0
      %1751 = vmatprep.subr.bf16.mxu0 0
      %1752 = vmatpush1.bf16.msra.mxu0 0
      %1753 = vmatprep.subr.bf16.mxu0 0
      %1754 = vmatpush1.bf16.msra.mxu0 0
      %1755 = vmatprep.subr.bf16.mxu0 0
      %1756 = vmatpush1.bf16.msra.mxu0 0
      %1757 = vmatprep.subr.bf16.mxu0 0
      %1758 = vmatpush1.bf16.msra.mxu0 0
      %1759 = vmatprep.subr.bf16.mxu0 0
      %1760 = vmatpush1.bf16.msra.mxu0 0
      %1761 = vmatprep.subr.bf16.mxu0 0
      %1762 = vmatpush1.bf16.msra.mxu0 0
      %1763 = vmatprep.subr.bf16.mxu0 0
      %1764 = vmatpush1.bf16.msra.mxu0 0
      %1765 = vmatprep.subr.bf16.mxu0 0
      %1766 = vmatpush1.bf16.msra.mxu0 0
      %1767 = vmatprep.subr.bf16.mxu0 0
      %1768 = vmatpush1.bf16.msra.mxu0 0
      %1769 = vmatprep.subr.bf16.mxu0 0
      %1770 = vmatpush1.bf16.msra.mxu0 0
      %1771 = vmatprep.subr.bf16.mxu0 0
      %1772 = vmatpush1.bf16.msra.mxu0 0
      %1773 = vmatprep.mubr.bf16.mxu0 0
      %1774 = vmatmul.mubr.bf16.gmra.mrb[0].mxu0 %v1739
      %v1775 = vpop.f32.mrb[0].mxu0
      %v1776 = vadd.f32 0.0, %v1775
      %v1777 = vpop.f32.mrb[0].mxu0
      %v1778 = vpop.f32.mrb[0].mxu0
      %v1779 = vpop.f32.mrb[0].mxu0
      %1780 = vdwg.mxu0
      %v1781 = vsel %vm1035, %v1727, 0.0
      %v1782 = vsel %vm1035, %v1776, 0.0
      %v1783 = vadd.f32 %v1781, %v1782
      %v1785 = vlaneseq
      %v1786 = vshrl.u32 %v1785, 7
      %v1787 = vsub.s32 0, %v1786
      %v1788 = vrot.slane %v1099, %v1787
      %v1790 = vadd.f32 %v1783, %v1788
      %v1791 = vadd.f32 %v1028, %v1790
      %v1792 = vld [vmem:[%s29] sm:$0x1]
      %v1793 = vld [vmem:[%s31] sm:$0x1]
      %v1794 = vsel %vm1035, %v1791, 0.0
      %1795 = vadd.xlane.f32.xlu0 %v1794
      %v1796 = vpop.xlane.xlu0 %1795
      %v1797 = vmul.f32 %v1796, %v1039
      %v1798 = vsub.f32 %v1791, %v1797
      %v1799 = vmul.f32 %v1798, %v1798
      %v1800 = vsel %vm1035, %v1799, 0.0
      %1801 = vadd.xlane.f32.xlu0 %v1800
      %v1802 = vpop.xlane.xlu0 %1801
      %v1803 = vmul.f32 %v1802, %v1039
      %v1804 = vadd.f32 %v1803, 1e-05
      %v1805 = vrsqrt.pop %v1804
      %v1806 = vmul.f32 %v1798, %v1805
      %v1808 = vlaneseq
      %v1809 = vshrl.u32 %v1808, 7
      %v1810 = vsub.s32 0, %v1809
      %v1811 = vrot.slane %v1792, %v1810
      %v1813 = vmul.f32 %v1806, %v1811
      %v1815 = vlaneseq
      %v1816 = vshrl.u32 %v1815, 7
      %v1817 = vsub.s32 0, %v1816
      %v1818 = vrot.slane %v1793, %v1817
      %v1820 = vadd.f32 %v1813, %v1818
      %v1821 = vpack.c.bf16 %v1820, %v1820
      %v1822 = vld [vmem:[%s1016] sm:$0xff]
      %v1823 = vld [vmem:[%s33] sm:$0x1]
      %v1824 = vld [vmem:[%s35] sm:$0x1]
      %v1825 = vsel %vm1035, %v1822, 0.0
      %1826 = vadd.xlane.f32.xlu0 %v1825
      %v1827 = vpop.xlane.xlu0 %1826
      %v1828 = vmul.f32 %v1827, %v1039
      %v1829 = vsub.f32 %v1822, %v1828
      %v1830 = vmul.f32 %v1829, %v1829
      %v1831 = vsel %vm1035, %v1830, 0.0
      %1832 = vadd.xlane.f32.xlu0 %v1831
      %v1833 = vpop.xlane.xlu0 %1832
      %v1834 = vmul.f32 %v1833, %v1039
      %v1835 = vadd.f32 %v1834, 1e-05
      %v1836 = vrsqrt.pop %v1835
      %v1837 = vmul.f32 %v1829, %v1836
      %v1839 = vlaneseq
      %v1840 = vshrl.u32 %v1839, 7
      %v1841 = vsub.s32 0, %v1840
      %v1842 = vrot.slane %v1823, %v1841
      %v1844 = vmul.f32 %v1837, %v1842
      %v1846 = vlaneseq
      %v1847 = vshrl.u32 %v1846, 7
      %v1848 = vsub.s32 0, %v1847
      %v1849 = vrot.slane %v1824, %v1848
      %v1851 = vadd.f32 %v1844, %v1849
      %v1852 = vpack.c.bf16 %v1851, %v1851
      %v1853 = vld [vmem:[%s37] sm:$0xf]
      %v1854 = vld [vmem:[%s37 + $0x4] sm:$0xf]
      %v1855 = vld [vmem:[%s37 + $0x8] sm:$0xf]
      %v1856 = vld [vmem:[%s37 + $0xc] sm:$0xf]
      %v1857 = vld [vmem:[%s37 + $0x10] sm:$0xf]
      %v1858 = vld [vmem:[%s37 + $0x14] sm:$0xf]
      %v1859 = vld [vmem:[%s37 + $0x18] sm:$0xf]
      %v1860 = vld [vmem:[%s37 + $0x1c] sm:$0xf]
      %v1861 = vld [vmem:[%s39] sm:$0x1]
      %v1862 = vld [vmem:[%s39 + $0x1] sm:$0x1]
      %v1863 = vld [vmem:[%s41] sm:$0xf]
      %v1864 = vld [vmem:[%s41 + $0x4] sm:$0xf]
      %v1865 = vld [vmem:[%s41 + $0x8] sm:$0xf]
      %v1866 = vld [vmem:[%s41 + $0xc] sm:$0xf]
      %v1867 = vld [vmem:[%s41 + $0x10] sm:$0xf]
      %v1868 = vld [vmem:[%s41 + $0x14] sm:$0xf]
      %v1869 = vld [vmem:[%s41 + $0x18] sm:$0xf]
      %v1870 = vld [vmem:[%s41 + $0x1c] sm:$0xf]
      %v1871 = vld [vmem:[%s43] sm:$0x1]
      %v1872 = vld [vmem:[%s43 + $0x1] sm:$0x1]
      %v1873 = vld [vmem:[%s45] sm:$0xf]
      %v1874 = vld [vmem:[%s45 + $0x4] sm:$0xf]
      %v1875 = vld [vmem:[%s45 + $0x8] sm:$0xf]
      %v1876 = vld [vmem:[%s45 + $0xc] sm:$0xf]
      %v1877 = vld [vmem:[%s45 + $0x10] sm:$0xf]
      %v1878 = vld [vmem:[%s45 + $0x14] sm:$0xf]
      %v1879 = vld [vmem:[%s45 + $0x18] sm:$0xf]
      %v1880 = vld [vmem:[%s45 + $0x1c] sm:$0xf]
      %v1881 = vld [vmem:[%s47] sm:$0x1]
      %v1882 = vld [vmem:[%s47 + $0x1] sm:$0x1]
      %v1883 = vld [vmem:[%s49] sm:$0xf]
      %v1884 = vld [vmem:[%s49 + $0x4] sm:$0xf]
      %v1885 = vld [vmem:[%s49 + $0x8] sm:$0xf]
      %v1886 = vld [vmem:[%s49 + $0xc] sm:$0xf]
      %v1887 = vld [vmem:[%s51] sm:$0x1]
      %v1890 = vlaneseq
      %v1891 = vshrl.u32 %v1890, 7
      %v1892 = vsub.s32 0, %v1891
      %v1893 = vrot.slane %v1861, %v1892
      %v1894 = vlaneseq
      %v1895 = vshrl.u32 %v1894, 7
      %v1896 = vsub.s32 0, %v1895
      %v1897 = vrot.slane %v1862, %v1896
      %v1904 = vunpack.c.l.b16 %v1853
      %v1905 = vunpack.c.l.b16 %v1854
      %v1906 = vunpack.c.l.b16 %v1855
      %v1907 = vunpack.c.l.b16 %v1856
      %v1908 = vpack.c.b16 %v1905, %v1904
      %v1909 = vpack.c.b16 %v1907, %v1906
      %v1913 = vsel %vm1035, %v1821, 0
      %1915 = vmatprep.subr.bf16.mxu0 0
      %1916 = vmatpush1.bf16.msra.mxu0 %v1908
      %1917 = vmatprep.subr.bf16.mxu0 0
      %1918 = vmatpush1.bf16.msra.mxu0 %v1909
      %1919 = vmatprep.subr.bf16.mxu0 0
      %1920 = vmatpush1.bf16.msra.mxu0 0
      %1921 = vmatprep.subr.bf16.mxu0 0
      %1922 = vmatpush1.bf16.msra.mxu0 0
      %1923 = vmatprep.subr.bf16.mxu0 0
      %1924 = vmatpush1.bf16.msra.mxu0 0
      %1925 = vmatprep.subr.bf16.mxu0 0
      %1926 = vmatpush1.bf16.msra.mxu0 0
      %1927 = vmatprep.subr.bf16.mxu0 0
      %1928 = vmatpush1.bf16.msra.mxu0 0
      %1929 = vmatprep.subr.bf16.mxu0 0
      %1930 = vmatpush1.bf16.msra.mxu0 0
      %1931 = vmatprep.subr.bf16.mxu0 0
      %1932 = vmatpush1.bf16.msra.mxu0 0
      %1933 = vmatprep.subr.bf16.mxu0 0
      %1934 = vmatpush1.bf16.msra.mxu0 0
      %1935 = vmatprep.subr.bf16.mxu0 0
      %1936 = vmatpush1.bf16.msra.mxu0 0
      %1937 = vmatprep.subr.bf16.mxu0 0
      %1938 = vmatpush1.bf16.msra.mxu0 0
      %1939 = vmatprep.subr.bf16.mxu0 0
      %1940 = vmatpush1.bf16.msra.mxu0 0
      %1941 = vmatprep.subr.bf16.mxu0 0
      %1942 = vmatpush1.bf16.msra.mxu0 0
      %1943 = vmatprep.subr.bf16.mxu0 0
      %1944 = vmatpush1.bf16.msra.mxu0 0
      %1945 = vmatprep.subr.bf16.mxu0 0
      %1946 = vmatpush1.bf16.msra.mxu0 0
      %1947 = vmatprep.mubr.bf16.mxu0 0
      %1948 = vmatmul.mubr.bf16.gmra.mrb[0].mxu0 %v1913
      %v1949 = vpop.f32.mrb[0].mxu0
      %v1950 = vadd.f32 %v1893, %v1949
      %v1951 = vpop.f32.mrb[0].mxu0
      %v1952 = vpop.f32.mrb[0].mxu0
      %v1953 = vpop.f32.mrb[0].mxu0
      %1954 = vdwg.mxu0
      %v1959 = vunpack.c.l.b16 %v1857
      %v1960 = vunpack.c.l.b16 %v1858
      %v1961 = vunpack.c.l.b16 %v1859
      %v1962 = vunpack.c.l.b16 %v1860
      %v1963 = vpack.c.b16 %v1960, %v1959
      %v1964 = vpack.c.b16 %v1962, %v1961
      %1967 = vmatprep.subr.bf16.mxu0 0
      %1968 = vmatpush1.bf16.msra.mxu0 %v1963
      %1969 = vmatprep.subr.bf16.mxu0 0
      %1970 = vmatpush1.bf16.msra.mxu0 %v1964
      %1971 = vmatprep.subr.bf16.mxu0 0
      %1972 = vmatpush1.bf16.msra.mxu0 0
      %1973 = vmatprep.subr.bf16.mxu0 0
      %1974 = vmatpush1.bf16.msra.mxu0 0
      %1975 = vmatprep.subr.bf16.mxu0 0
      %1976 = vmatpush1.bf16.msra.mxu0 0
      %1977 = vmatprep.subr.bf16.mxu0 0
      %1978 = vmatpush1.bf16.msra.mxu0 0
      %1979 = vmatprep.subr.bf16.mxu0 0
      %1980 = vmatpush1.bf16.msra.mxu0 0
      %1981 = vmatprep.subr.bf16.mxu0 0
      %1982 = vmatpush1.bf16.msra.mxu0 0
      %1983 = vmatprep.subr.bf16.mxu0 0
      %1984 = vmatpush1.bf16.msra.mxu0 0
      %1985 = vmatprep.subr.bf16.mxu0 0
      %1986 = vmatpush1.bf16.msra.mxu0 0
      %1987 = vmatprep.subr.bf16.mxu0 0
      %1988 = vmatpush1.bf16.msra.mxu0 0
      %1989 = vmatprep.subr.bf16.mxu0 0
      %1990 = vmatpush1.bf16.msra.mxu0 0
      %1991 = vmatprep.subr.bf16.mxu0 0
      %1992 = vmatpush1.bf16.msra.mxu0 0
      %1993 = vmatprep.subr.bf16.mxu0 0
      %1994 = vmatpush1.bf16.msra.mxu0 0
      %1995 = vmatprep.subr.bf16.mxu0 0
      %1996 = vmatpush1.bf16.msra.mxu0 0
      %1997 = vmatprep.subr.bf16.mxu0 0
      %1998 = vmatpush1.bf16.msra.mxu0 0
      %1999 = vmatprep.mubr.bf16.mxu0 0
      %2000 = vmatmul.mubr.bf16.gmra.mrb[0].mxu0 %v1913
      %v2001 = vpop.f32.mrb[0].mxu0
      %v2002 = vadd.f32 %v1897, %v2001
      %v2003 = vpop.f32.mrb[0].mxu0
      %v2004 = vpop.f32.mrb[0].mxu0
      %v2005 = vpop.f32.mrb[0].mxu0
      %2006 = vdwg.mxu0
      %v2009 = vlaneseq
      %v2010 = vshrl.u32 %v2009, 7
      %v2011 = vsub.s32 0, %v2010
      %v2012 = vrot.slane %v1871, %v2011
      %v2013 = vlaneseq
      %v2014 = vshrl.u32 %v2013, 7
      %v2015 = vsub.s32 0, %v2014
      %v2016 = vrot.slane %v1872, %v2015
      %v2023 = vunpack.c.l.b16 %v1863
      %v2024 = vunpack.c.l.b16 %v1864
      %v2025 = vunpack.c.l.b16 %v1865
      %v2026 = vunpack.c.l.b16 %v1866
      %v2027 = vpack.c.b16 %v2024, %v2023
      %v2028 = vpack.c.b16 %v2026, %v2025
      %v2032 = vsel %vm1035, %v1852, 0
      %2034 = vmatprep.subr.bf16.mxu0 0
      %2035 = vmatpush1.bf16.msra.mxu0 %v2027
      %2036 = vmatprep.subr.bf16.mxu0 0
      %2037 = vmatpush1.bf16.msra.mxu0 %v2028
      %2038 = vmatprep.subr.bf16.mxu0 0
      %2039 = vmatpush1.bf16.msra.mxu0 0
      %2040 = vmatprep.subr.bf16.mxu0 0
      %2041 = vmatpush1.bf16.msra.mxu0 0
      %2042 = vmatprep.subr.bf16.mxu0 0
      %2043 = vmatpush1.bf16.msra.mxu0 0
      %2044 = vmatprep.subr.bf16.mxu0 0
      %2045 = vmatpush1.bf16.msra.mxu0 0
      %2046 = vmatprep.subr.bf16.mxu0 0
      %2047 = vmatpush1.bf16.msra.mxu0 0
      %2048 = vmatprep.subr.bf16.mxu0 0
      %2049 = vmatpush1.bf16.msra.mxu0 0
      %2050 = vmatprep.subr.bf16.mxu0 0
      %2051 = vmatpush1.bf16.msra.mxu0 0
      %2052 = vmatprep.subr.bf16.mxu0 0
      %2053 = vmatpush1.bf16.msra.mxu0 0
      %2054 = vmatprep.subr.bf16.mxu0 0
      %2055 = vmatpush1.bf16.msra.mxu0 0
      %2056 = vmatprep.subr.bf16.mxu0 0
      %2057 = vmatpush1.bf16.msra.mxu0 0
      %2058 = vmatprep.subr.bf16.mxu0 0
      %2059 = vmatpush1.bf16.msra.mxu0 0
      %2060 = vmatprep.subr.bf16.mxu0 0
      %2061 = vmatpush1.bf16.msra.mxu0 0
      %2062 = vmatprep.subr.bf16.mxu0 0
      %2063 = vmatpush1.bf16.msra.mxu0 0
      %2064 = vmatprep.subr.bf16.mxu0 0
      %2065 = vmatpush1.bf16.msra.mxu0 0
      %2066 = vmatprep.mubr.bf16.mxu0 0
      %2067 = vmatmul.mubr.bf16.gmra.mrb[0].mxu0 %v2032
      %v2068 = vpop.f32.mrb[0].mxu0
      %v2069 = vadd.f32 %v2012, %v2068
      %v2070 = vpop.f32.mrb[0].mxu0
      %v2071 = vpop.f32.mrb[0].mxu0
      %v2072 = vpop.f32.mrb[0].mxu0
      %2073 = vdwg.mxu0
      %v2078 = vunpack.c.l.b16 %v1867
      %v2079 = vunpack.c.l.b16 %v1868
      %v2080 = vunpack.c.l.b16 %v1869
      %v2081 = vunpack.c.l.b16 %v1870
      %v2082 = vpack.c.b16 %v2079, %v2078
      %v2083 = vpack.c.b16 %v2081, %v2080
      %2086 = vmatprep.subr.bf16.mxu0 0
      %2087 = vmatpush1.bf16.msra.mxu0 %v2082
      %2088 = vmatprep.subr.bf16.mxu0 0
      %2089 = vmatpush1.bf16.msra.mxu0 %v2083
      %2090 = vmatprep.subr.bf16.mxu0 0
      %2091 = vmatpush1.bf16.msra.mxu0 0
      %2092 = vmatprep.subr.bf16.mxu0 0
      %2093 = vmatpush1.bf16.msra.mxu0 0
      %2094 = vmatprep.subr.bf16.mxu0 0
      %2095 = vmatpush1.bf16.msra.mxu0 0
      %2096 = vmatprep.subr.bf16.mxu0 0
      %2097 = vmatpush1.bf16.msra.mxu0 0
      %2098 = vmatprep.subr.bf16.mxu0 0
      %2099 = vmatpush1.bf16.msra.mxu0 0
      %2100 = vmatprep.subr.bf16.mxu0 0
      %2101 = vmatpush1.bf16.msra.mxu0 0
      %2102 = vmatprep.subr.bf16.mxu0 0
      %2103 = vmatpush1.bf16.msra.mxu0 0
      %2104 = vmatprep.subr.bf16.mxu0 0
      %2105 = vmatpush1.bf16.msra.mxu0 0
      %2106 = vmatprep.subr.bf16.mxu0 0
      %2107 = vmatpush1.bf16.msra.mxu0 0
      %2108 = vmatprep.subr.bf16.mxu0 0
      %2109 = vmatpush1.bf16.msra.mxu0 0
      %2110 = vmatprep.subr.bf16.mxu0 0
      %2111 = vmatpush1.bf16.msra.mxu0 0
      %2112 = vmatprep.subr.bf16.mxu0 0
      %2113 = vmatpush1.bf16.msra.mxu0 0
      %2114 = vmatprep.subr.bf16.mxu0 0
      %2115 = vmatpush1.bf16.msra.mxu0 0
      %2116 = vmatprep.subr.bf16.mxu0 0
      %2117 = vmatpush1.bf16.msra.mxu0 0
      %2118 = vmatprep.mubr.bf16.mxu0 0
      %2119 = vmatmul.mubr.bf16.gmra.mrb[0].mxu0 %v2032
      %v2120 = vpop.f32.mrb[0].mxu0
      %v2121 = vadd.f32 %v2016, %v2120
      %v2122 = vpop.f32.mrb[0].mxu0
      %v2123 = vpop.f32.mrb[0].mxu0
      %v2124 = vpop.f32.mrb[0].mxu0
      %2125 = vdwg.mxu0
      %v2128 = vlaneseq
      %v2129 = vshrl.u32 %v2128, 7
      %v2130 = vsub.s32 0, %v2129
      %v2131 = vrot.slane %v1881, %v2130
      %v2132 = vlaneseq
      %v2133 = vshrl.u32 %v2132, 7
      %v2134 = vsub.s32 0, %v2133
      %v2135 = vrot.slane %v1882, %v2134
      %v2142 = vunpack.c.l.b16 %v1873
      %v2143 = vunpack.c.l.b16 %v1874
      %v2144 = vunpack.c.l.b16 %v1875
      %v2145 = vunpack.c.l.b16 %v1876
      %v2146 = vpack.c.b16 %v2143, %v2142
      %v2147 = vpack.c.b16 %v2145, %v2144
      %2150 = vmatprep.subr.bf16.mxu0 0
      %2151 = vmatpush1.bf16.msra.mxu0 %v2146
      %2152 = vmatprep.subr.bf16.mxu0 0
      %2153 = vmatpush1.bf16.msra.mxu0 %v2147
      %2154 = vmatprep.subr.bf16.mxu0 0
      %2155 = vmatpush1.bf16.msra.mxu0 0
      %2156 = vmatprep.subr.bf16.mxu0 0
      %2157 = vmatpush1.bf16.msra.mxu0 0
      %2158 = vmatprep.subr.bf16.mxu0 0
      %2159 = vmatpush1.bf16.msra.mxu0 0
      %2160 = vmatprep.subr.bf16.mxu0 0
      %2161 = vmatpush1.bf16.msra.mxu0 0
      %2162 = vmatprep.subr.bf16.mxu0 0
      %2163 = vmatpush1.bf16.msra.mxu0 0
      %2164 = vmatprep.subr.bf16.mxu0 0
      %2165 = vmatpush1.bf16.msra.mxu0 0
      %2166 = vmatprep.subr.bf16.mxu0 0
      %2167 = vmatpush1.bf16.msra.mxu0 0
      %2168 = vmatprep.subr.bf16.mxu0 0
      %2169 = vmatpush1.bf16.msra.mxu0 0
      %2170 = vmatprep.subr.bf16.mxu0 0
      %2171 = vmatpush1.bf16.msra.mxu0 0
      %2172 = vmatprep.subr.bf16.mxu0 0
      %2173 = vmatpush1.bf16.msra.mxu0 0
      %2174 = vmatprep.subr.bf16.mxu0 0
      %2175 = vmatpush1.bf16.msra.mxu0 0
      %2176 = vmatprep.subr.bf16.mxu0 0
      %2177 = vmatpush1.bf16.msra.mxu0 0
      %2178 = vmatprep.subr.bf16.mxu0 0
      %2179 = vmatpush1.bf16.msra.mxu0 0
      %2180 = vmatprep.subr.bf16.mxu0 0
      %2181 = vmatpush1.bf16.msra.mxu0 0
      %2182 = vmatprep.mubr.bf16.mxu0 0
      %2183 = vmatmul.mubr.bf16.gmra.mrb[0].mxu0 %v2032
      %v2184 = vpop.f32.mrb[0].mxu0
      %v2185 = vadd.f32 %v2131, %v2184
      %v2186 = vpop.f32.mrb[0].mxu0
      %v2187 = vpop.f32.mrb[0].mxu0
      %v2188 = vpop.f32.mrb[0].mxu0
      %2189 = vdwg.mxu0
      %v2194 = vunpack.c.l.b16 %v1877
      %v2195 = vunpack.c.l.b16 %v1878
      %v2196 = vunpack.c.l.b16 %v1879
      %v2197 = vunpack.c.l.b16 %v1880
      %v2198 = vpack.c.b16 %v2195, %v2194
      %v2199 = vpack.c.b16 %v2197, %v2196
      %2202 = vmatprep.subr.bf16.mxu0 0
      %2203 = vmatpush1.bf16.msra.mxu0 %v2198
      %2204 = vmatprep.subr.bf16.mxu0 0
      %2205 = vmatpush1.bf16.msra.mxu0 %v2199
      %2206 = vmatprep.subr.bf16.mxu0 0
      %2207 = vmatpush1.bf16.msra.mxu0 0
      %2208 = vmatprep.subr.bf16.mxu0 0
      %2209 = vmatpush1.bf16.msra.mxu0 0
      %2210 = vmatprep.subr.bf16.mxu0 0
      %2211 = vmatpush1.bf16.msra.mxu0 0
      %2212 = vmatprep.subr.bf16.mxu0 0
      %2213 = vmatpush1.bf16.msra.mxu0 0
      %2214 = vmatprep.subr.bf16.mxu0 0
      %2215 = vmatpush1.bf16.msra.mxu0 0
      %2216 = vmatprep.subr.bf16.mxu0 0
      %2217 = vmatpush1.bf16.msra.mxu0 0
      %2218 = vmatprep.subr.bf16.mxu0 0
      %2219 = vmatpush1.bf16.msra.mxu0 0
      %2220 = vmatprep.subr.bf16.mxu0 0
      %2221 = vmatpush1.bf16.msra.mxu0 0
      %2222 = vmatprep.subr.bf16.mxu0 0
      %2223 = vmatpush1.bf16.msra.mxu0 0
      %2224 = vmatprep.subr.bf16.mxu0 0
      %2225 = vmatpush1.bf16.msra.mxu0 0
      %2226 = vmatprep.subr.bf16.mxu0 0
      %2227 = vmatpush1.bf16.msra.mxu0 0
      %2228 = vmatprep.subr.bf16.mxu0 0
      %2229 = vmatpush1.bf16.msra.mxu0 0
      %2230 = vmatprep.subr.bf16.mxu0 0
      %2231 = vmatpush1.bf16.msra.mxu0 0
      %2232 = vmatprep.subr.bf16.mxu0 0
      %2233 = vmatpush1.bf16.msra.mxu0 0
      %2234 = vmatprep.mubr.bf16.mxu0 0
      %2235 = vmatmul.mubr.bf16.gmra.mrb[0].mxu0 %v2032
      %v2236 = vpop.f32.mrb[0].mxu0
      %v2237 = vadd.f32 %v2135, %v2236
      %v2238 = vpop.f32.mrb[0].mxu0
      %v2239 = vpop.f32.mrb[0].mxu0
      %v2240 = vpop.f32.mrb[0].mxu0
      %2241 = vdwg.mxu0
      %v2242 = vpack.c.bf16 %v1950, %v1950
      %v2243 = vpack.c.bf16 %v2002, %v2002
      %v2244 = vpack.c.bf16 %v2069, %v2069
      %v2245 = vpack.c.bf16 %v2121, %v2121
      %v2247 = vlaneseq
      %v2248 = vshrl.u32 %v2247, 7
      %v2249 = vsub.s32 0, %v2248
      %v2250 = vrot.slane %v1032, %v2249
      %v2253 = vsel %vm1468, %v2242, 0
      %v2256 = vsel %vm1468, %v2244, 0
      %2258 = vmatprep.subr.bf16.mxu0 0
      %2259 = vmatpush1.bf16.xpose.msra.mxu0 %v2256
      %2260 = vmatprep.subr.bf16.mxu0 0
      %2261 = vmatpush1.bf16.xpose.msra.mxu0 0
      %2262 = vmatprep.subr.bf16.mxu0 0
      %2263 = vmatpush1.bf16.xpose.msra.mxu0 0
      %2264 = vmatprep.subr.bf16.mxu0 0
      %2265 = vmatpush1.bf16.xpose.msra.mxu0 0
      %2266 = vmatprep.subr.bf16.mxu0 0
      %2267 = vmatpush1.bf16.xpose.msra.mxu0 0
      %2268 = vmatprep.subr.bf16.mxu0 0
      %2269 = vmatpush1.bf16.xpose.msra.mxu0 0
      %2270 = vmatprep.subr.bf16.mxu0 0
      %2271 = vmatpush1.bf16.xpose.msra.mxu0 0
      %2272 = vmatprep.subr.bf16.mxu0 0
      %2273 = vmatpush1.bf16.xpose.msra.mxu0 0
      %2274 = vmatprep.subr.bf16.mxu0 0
      %2275 = vmatpush1.bf16.xpose.msra.mxu0 0
      %2276 = vmatprep.subr.bf16.mxu0 0
      %2277 = vmatpush1.bf16.xpose.msra.mxu0 0
      %2278 = vmatprep.subr.bf16.mxu0 0
      %2279 = vmatpush1.bf16.xpose.msra.mxu0 0
      %2280 = vmatprep.subr.bf16.mxu0 0
      %2281 = vmatpush1.bf16.xpose.msra.mxu0 0
      %2282 = vmatprep.subr.bf16.mxu0 0
      %2283 = vmatpush1.bf16.xpose.msra.mxu0 0
      %2284 = vmatprep.subr.bf16.mxu0 0
      %2285 = vmatpush1.bf16.xpose.msra.mxu0 0
      %2286 = vmatprep.subr.bf16.mxu0 0
      %2287 = vmatpush1.bf16.xpose.msra.mxu0 0
      %2288 = vmatprep.subr.bf16.mxu0 0
      %2289 = vmatpush1.bf16.xpose.msra.mxu0 0
      %2290 = vmatprep.mubr.bf16.mxu0 0
      %2291 = vmatmul.mubr.bf16.gmra.mrb[0].mxu0 %v2253
      %v2292 = vpop.f32.mrb[0].mxu0
      %v2293 = vadd.f32 %v2250, %v2292
      %v2294 = vpop.f32.mrb[0].mxu0
      %v2295 = vpop.f32.mrb[0].mxu0
      %v2296 = vpop.f32.mrb[0].mxu0
      %2297 = vdwg.mxu0
      %v2299 = vsel %vm1468, %v2243, 0
      %v2302 = vsel %vm1468, %v2245, 0
      %2304 = vmatprep.subr.bf16.mxu0 0
      %2305 = vmatpush1.bf16.xpose.msra.mxu0 %v2302
      %2306 = vmatprep.subr.bf16.mxu0 0
      %2307 = vmatpush1.bf16.xpose.msra.mxu0 0
      %2308 = vmatprep.subr.bf16.mxu0 0
      %2309 = vmatpush1.bf16.xpose.msra.mxu0 0
      %2310 = vmatprep.subr.bf16.mxu0 0
      %2311 = vmatpush1.bf16.xpose.msra.mxu0 0
      %2312 = vmatprep.subr.bf16.mxu0 0
      %2313 = vmatpush1.bf16.xpose.msra.mxu0 0
      %2314 = vmatprep.subr.bf16.mxu0 0
      %2315 = vmatpush1.bf16.xpose.msra.mxu0 0
      %2316 = vmatprep.subr.bf16.mxu0 0
      %2317 = vmatpush1.bf16.xpose.msra.mxu0 0
      %2318 = vmatprep.subr.bf16.mxu0 0
      %2319 = vmatpush1.bf16.xpose.msra.mxu0 0
      %2320 = vmatprep.subr.bf16.mxu0 0
      %2321 = vmatpush1.bf16.xpose.msra.mxu0 0
      %2322 = vmatprep.subr.bf16.mxu0 0
      %2323 = vmatpush1.bf16.xpose.msra.mxu0 0
      %2324 = vmatprep.subr.bf16.mxu0 0
      %2325 = vmatpush1.bf16.xpose.msra.mxu0 0
      %2326 = vmatprep.subr.bf16.mxu0 0
      %2327 = vmatpush1.bf16.xpose.msra.mxu0 0
      %2328 = vmatprep.subr.bf16.mxu0 0
      %2329 = vmatpush1.bf16.xpose.msra.mxu0 0
      %2330 = vmatprep.subr.bf16.mxu0 0
      %2331 = vmatpush1.bf16.xpose.msra.mxu0 0
      %2332 = vmatprep.subr.bf16.mxu0 0
      %2333 = vmatpush1.bf16.xpose.msra.mxu0 0
      %2334 = vmatprep.subr.bf16.mxu0 0
      %2335 = vmatpush1.bf16.xpose.msra.mxu0 0
      %2336 = vmatprep.mubr.bf16.mxu0 0
      %2337 = vmatmul.mubr.bf16.gmra.mrb[0].mxu0 %v2299
      %v2338 = vpop.f32.mrb[0].mxu0
      %v2339 = vadd.f32 %v2250, %v2338
      %v2340 = vpop.f32.mrb[0].mxu0
      %v2341 = vpop.f32.mrb[0].mxu0
      %v2342 = vpop.f32.mrb[0].mxu0
      %2343 = vdwg.mxu0
      %v2344 = vsel %vm1561, %v2293, -inf
      %2345 = vmax.xlane.f32.xlu0 %v2344
      %v2346 = vpop.xlane.xlu0 %2345
      %v2347 = vsel %vm1561, %v2339, -inf
      %2348 = vmax.xlane.f32.xlu0 %v2347
      %v2349 = vpop.xlane.xlu0 %2348
      %v2350 = vsub.f32 %v2293, %v2346
      %v2351 = vsub.f32 %v2339, %v2349
      %v2352 = vmul.f32 %v2350, 1.442695
      %v2353 = vpow.pop %v2352
      %v2354 = vmul.f32 %v2351, 1.442695
      %v2355 = vpow.pop %v2354
      %v2356 = vsel %vm1561, %v2353, 0.0
      %2357 = vadd.xlane.f32.xlu0 %v2356
      %v2358 = vpop.xlane.xlu0 %2357
      %v2359 = vsel %vm1561, %v2355, 0.0
      %2360 = vadd.xlane.f32.xlu0 %v2359
      %v2361 = vpop.xlane.xlu0 %2360
      %v2362 = vpack.c.bf16 %v2353, %v2353
      %v2363 = vpack.c.bf16 %v2355, %v2355
      %v2364 = vpack.c.bf16 %v2185, %v2185
      %v2365 = vpack.c.bf16 %v2237, %v2237
      %v2367 = vsel %vm1561, %v2362, 0
      %v2370 = vsel %vm1587, %v2364, 0
      %2372 = vmatprep.subr.bf16.mxu0 0
      %2373 = vmatpush1.bf16.msra.mxu0 %v2370
      %2374 = vmatprep.subr.bf16.mxu0 0
      %2375 = vmatpush1.bf16.msra.mxu0 0
      %2376 = vmatprep.subr.bf16.mxu0 0
      %2377 = vmatpush1.bf16.msra.mxu0 0
      %2378 = vmatprep.subr.bf16.mxu0 0
      %2379 = vmatpush1.bf16.msra.mxu0 0
      %2380 = vmatprep.subr.bf16.mxu0 0
      %2381 = vmatpush1.bf16.msra.mxu0 0
      %2382 = vmatprep.subr.bf16.mxu0 0
      %2383 = vmatpush1.bf16.msra.mxu0 0
      %2384 = vmatprep.subr.bf16.mxu0 0
      %2385 = vmatpush1.bf16.msra.mxu0 0
      %2386 = vmatprep.subr.bf16.mxu0 0
      %2387 = vmatpush1.bf16.msra.mxu0 0
      %2388 = vmatprep.subr.bf16.mxu0 0
      %2389 = vmatpush1.bf16.msra.mxu0 0
      %2390 = vmatprep.subr.bf16.mxu0 0
      %2391 = vmatpush1.bf16.msra.mxu0 0
      %2392 = vmatprep.subr.bf16.mxu0 0
      %2393 = vmatpush1.bf16.msra.mxu0 0
      %2394 = vmatprep.subr.bf16.mxu0 0
      %2395 = vmatpush1.bf16.msra.mxu0 0
      %2396 = vmatprep.subr.bf16.mxu0 0
      %2397 = vmatpush1.bf16.msra.mxu0 0
      %2398 = vmatprep.subr.bf16.mxu0 0
      %2399 = vmatpush1.bf16.msra.mxu0 0
      %2400 = vmatprep.subr.bf16.mxu0 0
      %2401 = vmatpush1.bf16.msra.mxu0 0
      %2402 = vmatprep.subr.bf16.mxu0 0
      %2403 = vmatpush1.bf16.msra.mxu0 0
      %2404 = vmatprep.mubr.bf16.mxu0 0
      %2405 = vmatmul.mubr.bf16.gmra.mrb[0].mxu0 %v2367
      %v2406 = vpop.f32.mrb[0].mxu0
      %v2407 = vadd.f32 0.0, %v2406
      %v2408 = vpop.f32.mrb[0].mxu0
      %v2409 = vpop.f32.mrb[0].mxu0
      %v2410 = vpop.f32.mrb[0].mxu0
      %2411 = vdwg.mxu0
      %v2413 = vsel %vm1561, %v2363, 0
      %v2416 = vsel %vm1587, %v2365, 0
      %2418 = vmatprep.subr.bf16.mxu0 0
      %2419 = vmatpush1.bf16.msra.mxu0 %v2416
      %2420 = vmatprep.subr.bf16.mxu0 0
      %2421 = vmatpush1.bf16.msra.mxu0 0
      %2422 = vmatprep.subr.bf16.mxu0 0
      %2423 = vmatpush1.bf16.msra.mxu0 0
      %2424 = vmatprep.subr.bf16.mxu0 0
      %2425 = vmatpush1.bf16.msra.mxu0 0
      %2426 = vmatprep.subr.bf16.mxu0 0
      %2427 = vmatpush1.bf16.msra.mxu0 0
      %2428 = vmatprep.subr.bf16.mxu0 0
      %2429 = vmatpush1.bf16.msra.mxu0 0
      %2430 = vmatprep.subr.bf16.mxu0 0
      %2431 = vmatpush1.bf16.msra.mxu0 0
      %2432 = vmatprep.subr.bf16.mxu0 0
      %2433 = vmatpush1.bf16.msra.mxu0 0
      %2434 = vmatprep.subr.bf16.mxu0 0
      %2435 = vmatpush1.bf16.msra.mxu0 0
      %2436 = vmatprep.subr.bf16.mxu0 0
      %2437 = vmatpush1.bf16.msra.mxu0 0
      %2438 = vmatprep.subr.bf16.mxu0 0
      %2439 = vmatpush1.bf16.msra.mxu0 0
      %2440 = vmatprep.subr.bf16.mxu0 0
      %2441 = vmatpush1.bf16.msra.mxu0 0
      %2442 = vmatprep.subr.bf16.mxu0 0
      %2443 = vmatpush1.bf16.msra.mxu0 0
      %2444 = vmatprep.subr.bf16.mxu0 0
      %2445 = vmatpush1.bf16.msra.mxu0 0
      %2446 = vmatprep.subr.bf16.mxu0 0
      %2447 = vmatpush1.bf16.msra.mxu0 0
      %2448 = vmatprep.subr.bf16.mxu0 0
      %2449 = vmatpush1.bf16.msra.mxu0 0
      %2450 = vmatprep.mubr.bf16.mxu0 0
      %2451 = vmatmul.mubr.bf16.gmra.mrb[0].mxu0 %v2413
      %v2452 = vpop.f32.mrb[0].mxu0
      %v2453 = vadd.f32 0.0, %v2452
      %v2454 = vpop.f32.mrb[0].mxu0
      %v2455 = vpop.f32.mrb[0].mxu0
      %v2456 = vpop.f32.mrb[0].mxu0
      %2457 = vdwg.mxu0
      %v2458 = vrcp.pop %v2358
      %v2459 = vmul.f32 %v2407, %v2458
      %v2460 = vrcp.pop %v2361
      %v2461 = vmul.f32 %v2453, %v2460
      %v2462 = vpack.c.bf16 %v2459, %v2459
      %v2463 = vpack.c.bf16 %v2461, %v2461
      %v2466 = vunpack.c.l.b16 %v1883
      %v2467 = vunpack.c.l.b16 %v1884
      %v2468 = vpack.c.b16 %v2467, %v2466
      %v2471 = vsel %vm1468, %v2462, 0
      %2473 = vmatprep.subr.bf16.mxu0 0
      %2474 = vmatpush1.bf16.msra.mxu0 %v2468
      %2475 = vmatprep.subr.bf16.mxu0 0
      %2476 = vmatpush1.bf16.msra.mxu0 0
      %2477 = vmatprep.subr.bf16.mxu0 0
      %2478 = vmatpush1.bf16.msra.mxu0 0
      %2479 = vmatprep.subr.bf16.mxu0 0
      %2480 = vmatpush1.bf16.msra.mxu0 0
      %2481 = vmatprep.subr.bf16.mxu0 0
      %2482 = vmatpush1.bf16.msra.mxu0 0
      %2483 = vmatprep.subr.bf16.mxu0 0
      %2484 = vmatpush1.bf16.msra.mxu0 0
      %2485 = vmatprep.subr.bf16.mxu0 0
      %2486 = vmatpush1.bf16.msra.mxu0 0
      %2487 = vmatprep.subr.bf16.mxu0 0
      %2488 = vmatpush1.bf16.msra.mxu0 0
      %2489 = vmatprep.subr.bf16.mxu0 0
      %2490 = vmatpush1.bf16.msra.mxu0 0
      %2491 = vmatprep.subr.bf16.mxu0 0
      %2492 = vmatpush1.bf16.msra.mxu0 0
      %2493 = vmatprep.subr.bf16.mxu0 0
      %2494 = vmatpush1.bf16.msra.mxu0 0
      %2495 = vmatprep.subr.bf16.mxu0 0
      %2496 = vmatpush1.bf16.msra.mxu0 0
      %2497 = vmatprep.subr.bf16.mxu0 0
      %2498 = vmatpush1.bf16.msra.mxu0 0
      %2499 = vmatprep.subr.bf16.mxu0 0
      %2500 = vmatpush1.bf16.msra.mxu0 0
      %2501 = vmatprep.subr.bf16.mxu0 0
      %2502 = vmatpush1.bf16.msra.mxu0 0
      %2503 = vmatprep.subr.bf16.mxu0 0
      %2504 = vmatpush1.bf16.msra.mxu0 0
      %2505 = vmatprep.mubr.bf16.mxu0 0
      %2506 = vmatmul.mubr.bf16.gmra.mrb[0].mxu0 %v2471
      %v2507 = vpop.f32.mrb[0].mxu0
      %v2508 = vadd.f32 0.0, %v2507
      %v2509 = vpop.f32.mrb[0].mxu0
      %v2510 = vpop.f32.mrb[0].mxu0
      %v2511 = vpop.f32.mrb[0].mxu0
      %2512 = vdwg.mxu0
      %v2515 = vunpack.c.l.b16 %v1885
      %v2516 = vunpack.c.l.b16 %v1886
      %v2517 = vpack.c.b16 %v2516, %v2515
      %v2520 = vsel %vm1468, %v2463, 0
      %2522 = vmatprep.subr.bf16.mxu0 0
      %2523 = vmatpush1.bf16.msra.mxu0 %v2517
      %2524 = vmatprep.subr.bf16.mxu0 0
      %2525 = vmatpush1.bf16.msra.mxu0 0
      %2526 = vmatprep.subr.bf16.mxu0 0
      %2527 = vmatpush1.bf16.msra.mxu0 0
      %2528 = vmatprep.subr.bf16.mxu0 0
      %2529 = vmatpush1.bf16.msra.mxu0 0
      %2530 = vmatprep.subr.bf16.mxu0 0
      %2531 = vmatpush1.bf16.msra.mxu0 0
      %2532 = vmatprep.subr.bf16.mxu0 0
      %2533 = vmatpush1.bf16.msra.mxu0 0
      %2534 = vmatprep.subr.bf16.mxu0 0
      %2535 = vmatpush1.bf16.msra.mxu0 0
      %2536 = vmatprep.subr.bf16.mxu0 0
      %2537 = vmatpush1.bf16.msra.mxu0 0
      %2538 = vmatprep.subr.bf16.mxu0 0
      %2539 = vmatpush1.bf16.msra.mxu0 0
      %2540 = vmatprep.subr.bf16.mxu0 0
      %2541 = vmatpush1.bf16.msra.mxu0 0
      %2542 = vmatprep.subr.bf16.mxu0 0
      %2543 = vmatpush1.bf16.msra.mxu0 0
      %2544 = vmatprep.subr.bf16.mxu0 0
      %2545 = vmatpush1.bf16.msra.mxu0 0
      %2546 = vmatprep.subr.bf16.mxu0 0
      %2547 = vmatpush1.bf16.msra.mxu0 0
      %2548 = vmatprep.subr.bf16.mxu0 0
      %2549 = vmatpush1.bf16.msra.mxu0 0
      %2550 = vmatprep.subr.bf16.mxu0 0
      %2551 = vmatpush1.bf16.msra.mxu0 0
      %2552 = vmatprep.subr.bf16.mxu0 0
      %2553 = vmatpush1.bf16.msra.mxu0 0
      %2554 = vmatprep.mubr.bf16.mxu0 0
      %2555 = vmatmul.mubr.bf16.gmra.mrb[0].mxu0 %v2520
      %v2556 = vpop.f32.mrb[0].mxu0
      %v2557 = vadd.f32 0.0, %v2556
      %v2558 = vpop.f32.mrb[0].mxu0
      %v2559 = vpop.f32.mrb[0].mxu0
      %v2560 = vpop.f32.mrb[0].mxu0
      %2561 = vdwg.mxu0
      %v2562 = vsel %vm1035, %v2508, 0.0
      %v2563 = vsel %vm1035, %v2557, 0.0
      %v2564 = vadd.f32 %v2562, %v2563
      %v2566 = vlaneseq
      %v2567 = vshrl.u32 %v2566, 7
      %v2568 = vsub.s32 0, %v2567
      %v2569 = vrot.slane %v1887, %v2568
      %v2571 = vadd.f32 %v2564, %v2569
      %v2572 = vadd.f32 %v1791, %v2571
      %v2573 = vld [vmem:[%s53] sm:$0x1]
      %v2574 = vld [vmem:[%s55] sm:$0x1]
      %v2575 = vsel %vm1035, %v2572, 0.0
      %2576 = vadd.xlane.f32.xlu0 %v2575
      %v2577 = vpop.xlane.xlu0 %2576
      %v2578 = vmul.f32 %v2577, %v1039
      %v2579 = vsub.f32 %v2572, %v2578
      %v2580 = vmul.f32 %v2579, %v2579
      %v2581 = vsel %vm1035, %v2580, 0.0
      %2582 = vadd.xlane.f32.xlu0 %v2581
      %v2583 = vpop.xlane.xlu0 %2582
      %v2584 = vmul.f32 %v2583, %v1039
      %v2585 = vadd.f32 %v2584, 1e-05
      %v2586 = vrsqrt.pop %v2585
      %v2587 = vmul.f32 %v2579, %v2586
      %v2589 = vlaneseq
      %v2590 = vshrl.u32 %v2589, 7
      %v2591 = vsub.s32 0, %v2590
      %v2592 = vrot.slane %v2573, %v2591
      %v2594 = vmul.f32 %v2587, %v2592
      %v2596 = vlaneseq
      %v2597 = vshrl.u32 %v2596, 7
      %v2598 = vsub.s32 0, %v2597
      %v2599 = vrot.slane %v2574, %v2598
      %v2601 = vadd.f32 %v2594, %v2599
      %v2602 = vpack.c.bf16 %v2601, %v2601
      %v2603 = vld [vmem:[%s57] sm:$0xf]
      %v2604 = vld [vmem:[%s57 + $0x4] sm:$0xf]
      %v2605 = vld [vmem:[%s57 + $0x8] sm:$0xf]
      %v2606 = vld [vmem:[%s57 + $0xc] sm:$0xf]
      %v2607 = vld [vmem:[%s59] sm:$0x1]
      %v2609 = vlaneseq
      %v2610 = vshrl.u32 %v2609, 7
      %v2611 = vsub.s32 0, %v2610
      %v2612 = vrot.slane %v2607, %v2611
      %v2618 = vunpack.c.l.b16 %v2603
      %v2619 = vunpack.c.l.b16 %v2604
      %v2620 = vunpack.c.l.b16 %v2605
      %v2621 = vunpack.c.l.b16 %v2606
      %v2622 = vpack.c.b16 %v2619, %v2618
      %v2623 = vpack.c.b16 %v2621, %v2620
      %v2627 = vsel %vm1035, %v2602, 0
      %2629 = vmatprep.subr.bf16.mxu0 0
      %2630 = vmatpush1.bf16.msra.mxu0 %v2622
      %2631 = vmatprep.subr.bf16.mxu0 0
      %2632 = vmatpush1.bf16.msra.mxu0 %v2623
      %2633 = vmatprep.subr.bf16.mxu0 0
      %2634 = vmatpush1.bf16.msra.mxu0 0
      %2635 = vmatprep.subr.bf16.mxu0 0
      %2636 = vmatpush1.bf16.msra.mxu0 0
      %2637 = vmatprep.subr.bf16.mxu0 0
      %2638 = vmatpush1.bf16.msra.mxu0 0
      %2639 = vmatprep.subr.bf16.mxu0 0
      %2640 = vmatpush1.bf16.msra.mxu0 0
      %2641 = vmatprep.subr.bf16.mxu0 0
      %2642 = vmatpush1.bf16.msra.mxu0 0
      %2643 = vmatprep.subr.bf16.mxu0 0
      %2644 = vmatpush1.bf16.msra.mxu0 0
      %2645 = vmatprep.subr.bf16.mxu0 0
      %2646 = vmatpush1.bf16.msra.mxu0 0
      %2647 = vmatprep.subr.bf16.mxu0 0
      %2648 = vmatpush1.bf16.msra.mxu0 0
      %2649 = vmatprep.subr.bf16.mxu0 0
      %2650 = vmatpush1.bf16.msra.mxu0 0
      %2651 = vmatprep.subr.bf16.mxu0 0
      %2652 = vmatpush1.bf16.msra.mxu0 0
      %2653 = vmatprep.subr.bf16.mxu0 0
      %2654 = vmatpush1.bf16.msra.mxu0 0
      %2655 = vmatprep.subr.bf16.mxu0 0
      %2656 = vmatpush1.bf16.msra.mxu0 0
      %2657 = vmatprep.subr.bf16.mxu0 0
      %2658 = vmatpush1.bf16.msra.mxu0 0
      %2659 = vmatprep.subr.bf16.mxu0 0
      %2660 = vmatpush1.bf16.msra.mxu0 0
      %2661 = vmatprep.mubr.bf16.mxu0 0
      %2662 = vmatmul.mubr.bf16.gmra.mrb[0].mxu0 %v2627
      %v2663 = vpop.f32.mrb[0].mxu0
      %v2664 = vadd.f32 %v2612, %v2663
      %v2665 = vpop.f32.mrb[0].mxu0
      %v2666 = vpop.f32.mrb[0].mxu0
      %v2667 = vpop.f32.mrb[0].mxu0
      %2668 = vdwg.mxu0
      %v2669 = vmax.f32 %v2664, 0.0
      %v2670 = vpack.c.bf16 %v2669, %v2669
      %v2671 = vld [vmem:[%s61] sm:$0xf]
      %v2672 = vld [vmem:[%s61 + $0x4] sm:$0xf]
      %v2673 = vld [vmem:[%s61 + $0x8] sm:$0xf]
      %v2674 = vld [vmem:[%s61 + $0xc] sm:$0xf]
      %v2675 = vld [vmem:[%s61 + $0x10] sm:$0xf]
      %v2676 = vld [vmem:[%s61 + $0x14] sm:$0xf]
      %v2677 = vld [vmem:[%s61 + $0x18] sm:$0xf]
      %v2678 = vld [vmem:[%s61 + $0x1c] sm:$0xf]
      %v2679 = vld [vmem:[%s63] sm:$0x1]
      %v2681 = vlaneseq
      %v2682 = vshrl.u32 %v2681, 7
      %v2683 = vsub.s32 0, %v2682
      %v2684 = vrot.slane %v2679, %v2683
      %v2694 = vunpack.c.l.b16 %v2671
      %v2695 = vunpack.c.l.b16 %v2672
      %v2696 = vunpack.c.l.b16 %v2673
      %v2697 = vunpack.c.l.b16 %v2674
      %v2698 = vunpack.c.l.b16 %v2675
      %v2699 = vunpack.c.l.b16 %v2676
      %v2700 = vunpack.c.l.b16 %v2677
      %v2701 = vunpack.c.l.b16 %v2678
      %v2702 = vpack.c.b16 %v2695, %v2694
      %v2703 = vpack.c.b16 %v2697, %v2696
      %v2704 = vpack.c.b16 %v2699, %v2698
      %v2705 = vpack.c.b16 %v2701, %v2700
      %vm2710 = vcmask 523264
      %v2712 = vsel %vm2710, %v2670, 0
      %2714 = vmatprep.subr.bf16.mxu0 0
      %2715 = vmatpush1.bf16.msra.mxu0 %v2702
      %2716 = vmatprep.subr.bf16.mxu0 0
      %2717 = vmatpush1.bf16.msra.mxu0 %v2703
      %2718 = vmatprep.subr.bf16.mxu0 0
      %2719 = vmatpush1.bf16.msra.mxu0 %v2704
      %2720 = vmatprep.subr.bf16.mxu0 0
      %2721 = vmatpush1.bf16.msra.mxu0 %v2705
      %2722 = vmatprep.subr.bf16.mxu0 0
      %2723 = vmatpush1.bf16.msra.mxu0 0
      %2724 = vmatprep.subr.bf16.mxu0 0
      %2725 = vmatpush1.bf16.msra.mxu0 0
      %2726 = vmatprep.subr.bf16.mxu0 0
      %2727 = vmatpush1.bf16.msra.mxu0 0
      %2728 = vmatprep.subr.bf16.mxu0 0
      %2729 = vmatpush1.bf16.msra.mxu0 0
      %2730 = vmatprep.subr.bf16.mxu0 0
      %2731 = vmatpush1.bf16.msra.mxu0 0
      %2732 = vmatprep.subr.bf16.mxu0 0
      %2733 = vmatpush1.bf16.msra.mxu0 0
      %2734 = vmatprep.subr.bf16.mxu0 0
      %2735 = vmatpush1.bf16.msra.mxu0 0
      %2736 = vmatprep.subr.bf16.mxu0 0
      %2737 = vmatpush1.bf16.msra.mxu0 0
      %2738 = vmatprep.subr.bf16.mxu0 0
      %2739 = vmatpush1.bf16.msra.mxu0 0
      %2740 = vmatprep.subr.bf16.mxu0 0
      %2741 = vmatpush1.bf16.msra.mxu0 0
      %2742 = vmatprep.subr.bf16.mxu0 0
      %2743 = vmatpush1.bf16.msra.mxu0 0
      %2744 = vmatprep.subr.bf16.mxu0 0
      %2745 = vmatpush1.bf16.msra.mxu0 0
      %2746 = vmatprep.mubr.bf16.mxu0 0
      %2747 = vmatmul.mubr.bf16.gmra.mrb[0].mxu0 %v2712
      %v2748 = vpop.f32.mrb[0].mxu0
      %v2749 = vadd.f32 %v2684, %v2748
      %v2750 = vpop.f32.mrb[0].mxu0
      %v2751 = vpop.f32.mrb[0].mxu0
      %v2752 = vpop.f32.mrb[0].mxu0
      %2753 = vdwg.mxu0
      %v2754 = vadd.f32 %v2572, %v2749
      %2755 = vst.msk [vmem:[%s1026] sm:$0xff] %vm1035, %v2754
      %p2756 = scmp.lt.s32.totalorder %s76, 1
      %s2757 = scalar_select %p2756, %s76, 1
      %s2758 = smul.addr %s2757, 8
      %s2759 = scalar_lea.vmem %s65, %s2758
      // Predicated region
      $region149: #{transformer_forward.11} parent=147 // pred_check
        %p2760 = pneg %p786
      $region150: #{transformer_forward.11} parent=147 // pred_check_branch
        %2762 = sbr.rel (%p2760) target = $region152
      $region151: #{transformer_forward.11} parent=147 // pred_region
        _
      $region152: #{transformer_forward.11} parent=147 // pred_fallthru
        _
    $region148: #{transformer_forward.11} parent=5 // pred_fallthru
      _
    %p2763 = scmp.le.s32.totalorder 2, %s71
    // Predicated region
    $region153: #{transformer_forward.11} parent=5 // pred_check
      %p2764 = pneg %p2763
    $region154: #{transformer_forward.11} parent=5 // pred_check_branch
      %2766 = sbr.rel (%p2764) target = $region156
    $region155: #{transformer_forward.11} parent=5 // pred_region
      %s2767 = ssub.s32 %s71, 2
      // Predicated region
      $region157: #{transformer_forward.11} parent=155 // pred_check
        %p2768 = pneg %p792
      $region158: #{transformer_forward.11} parent=155 // pred_check_branch
        %2770 = sbr.rel (%p2768) target = $region160
      $region159: #{transformer_forward.11} parent=155 // pred_region
        %p2771 = scmp.lt.s32.totalorder %s77, 1
        %s2772 = scalar_select %p2771, %s77, 1
        %s2773 = smul.addr %s2772, 8
        %s2774 = scalar_lea.vmem %s65, %s2773
      $region160: #{transformer_forward.11} parent=155 // pred_fallthru
        _
    $region156: #{transformer_forward.11} parent=5 // pred_fallthru
      _
  $region6: #{transformer_forward.11} parent=0 // loop_footer
    %s75 = sadd.s32 1, %s71
  $region7: #{transformer_forward.11} parent=0 // loop_footer_branch
    %70 = sbr.rel target = $region3
  $region8: #{transformer_forward.11} parent=0 // loop_exit
    _

</llo_original>
